<compile_context>
chip_gen: v7x
topology: tpu7x:2x2x1
jax: 0.10.0
libtpu: 0.0.40
codegen_flags: <defaults>
</compile_context>

<pallas_src>
import functools
import math

import jax
import jax.numpy as jnp
from jax.experimental import pallas as pl
from jax.experimental.pallas import tpu as pltpu


def _odenet_kernel(h_ref, wqkv_ref, bqkv_ref, wout_ref, bout_ref, o_ref, *,
                   n_agents, n_heads, mxu_dtype):
    """One grid step: `block_b` independent agent systems as a 2-D row slab."""
    rows, D = h_ref.shape               # rows = block_b * n_agents
    N, H = n_agents, n_heads
    Bb = rows // N
    hd = D // H
    f32 = jnp.float32

    h2 = h_ref[...]                                                  # (rows, D)

    # --- Fused q/k/v projection: one (rows, D) @ (D, 3D) MXU pass. ----------
    # 1/sqrt(hd) is already folded into the q columns of wqkv/bqkv.
    qkv = jnp.dot(h2.astype(mxu_dtype), wqkv_ref[...].astype(mxu_dtype),
                  preferred_element_type=f32) + bqkv_ref[...]        # (rows,3D)

    # Static lane splits; column order is head-major, matching the reference's
    # chunk(3) + view(N, H, hd).
    q = qkv[:, :D].reshape(Bb, N, D)
    k = qkv[:, D:2 * D].reshape(Bb, N, D)
    v = qkv[:, 2 * D:].reshape(Bb, N, D)

    # --- Attention core: per head (statically unrolled), Bb-batched dots. ---
    # TODO(synk): second-order opt from the review (fold the H softmaxes into
    # one (Bb, N, H*N) lane-segmented softmax) not applied; matmul fusions
    # above dominate at these sizes.
    ctx_heads = []
    for hh in range(H):
        sl = slice(hh * hd, (hh + 1) * hd)
        qh, kh, vh = q[:, :, sl], k[:, :, sl], v[:, :, sl]
        s = jnp.einsum('bqd,bkd->bqk', qh.astype(mxu_dtype),
                       kh.astype(mxu_dtype), preferred_element_type=f32)
        m = jnp.max(s, axis=-1, keepdims=True)
        e = jnp.exp(s - m)                                           # f32
        p = e * pl.reciprocal(jnp.sum(e, axis=-1, keepdims=True), approx=True)
        ctx_heads.append(jnp.einsum('bqk,bkd->bqd', p.astype(mxu_dtype),
                                    vh.astype(mxu_dtype),
                                    preferred_element_type=f32))

    # Lane-axis concat reproduces the reference's head-major context layout.
    ctx = jnp.concatenate(ctx_heads, axis=-1).reshape(rows, D)

    # --- Output projection: one (rows, D) @ (D, D) MXU pass + tanh. ---------
    upd = jnp.dot(ctx.astype(mxu_dtype), wout_ref[...].astype(mxu_dtype),
                  preferred_element_type=f32) + bout_ref[...]
    o_ref[...] = jnp.tanh(upd)


def prepare_odenet_params(w_qkv, b_qkv, w_out, b_out, *, n_heads):
    """One-time parameter prep (at init, NOT per forward call).

    Folds 1/sqrt(head_dim) into the q columns of the fused qkv weight/bias.
    The head-major column order of w_qkv already matches the reference, so no
    per-head repacking is needed.
    """
    D, D3 = w_qkv.shape
    assert D3 == 3 * D and D % n_heads == 0
    hd = D // n_heads
    scale = 1.0 / math.sqrt(hd)
    f32 = jnp.float32

    col_scale = jnp.concatenate([jnp.full((D,), scale, f32),
                                 jnp.ones((2 * D,), f32)])
    w_qkv_f = w_qkv.astype(f32) * col_scale[None, :]          # (D, 3D)
    b_qkv_f = (b_qkv.astype(f32) * col_scale)[None, :]        # (1, 3D)
    return (w_qkv_f, b_qkv_f, w_out.astype(f32), b_out.astype(f32)[None, :])


def _default_block_b(B):
    """grid=(1,) on single-TC chips; one block per TensorCore on v7x."""
    num_tc = 1
    try:
        if "v7" in jax.devices()[0].device_kind.lower():
            num_tc = 2
    except Exception:
        pass
    if num_tc > 1 and B >= num_tc and B % num_tc == 0:
        return B // num_tc
    return B


def odenet_forward_batched(h_batch, params, *, n_heads, block_b=None,
                           mxu_dtype=jnp.bfloat16):
    """Forward for a batch of independent systems: h_batch is (B, N, D)."""
    B, N, D = h_batch.shape
    assert D % n_heads == 0
    if block_b is None:
        block_b = _default_block_b(B)
    assert B % block_b == 0, "batch must divide evenly into blocks"
    w_qkv_f, b_qkv_f, w_out_f, b_out_f = params

    rows = block_b * N
    const2 = lambda b: (0, 0)          # weights: same block every step -> resident
    in_specs = [
        pl.BlockSpec((rows, D), lambda b: (b, 0)),
        pl.BlockSpec((D, 3 * D), const2),
        pl.BlockSpec((1, 3 * D), const2),
        pl.BlockSpec((D, D), const2),
        pl.BlockSpec((1, D), const2),
    ]
    out_spec = pl.BlockSpec((rows, D), lambda b: (b, 0))

    kern = functools.partial(_odenet_kernel, n_agents=N, n_heads=n_heads,
                             mxu_dtype=mxu_dtype)
    out2d = pl.pallas_call(
        kern,
        out_shape=jax.ShapeDtypeStruct((B * N, D), jnp.float32),
        grid=(B // block_b,),
        in_specs=in_specs,
        out_specs=out_spec,
        compiler_params=pltpu.CompilerParams(
            dimension_semantics=("parallel",)),
    )(h_batch.reshape(B * N, D), w_qkv_f, b_qkv_f, w_out_f, b_out_f)
    return out2d.reshape(B, N, D)


def odenet_forward(h, params, *, n_heads, mxu_dtype=jnp.bfloat16):
    """Single-system forward matching ODENet.forward(t, h).

    TODO(synk): the `t` argument of ODENet.forward is unused by the math and
    is therefore not threaded through the kernel.
    """
    return odenet_forward_batched(h[None], params, n_heads=n_heads,
                                  block_b=1, mxu_dtype=mxu_dtype)[0]


def odenet_reference(h, w_qkv, b_qkv, w_out, b_out, *, n_heads):
    """Pure-JAX reference matching the PyTorch forward semantics."""
    num_agents, vibe_dim = h.shape
    head_dim = vibe_dim // n_heads
    qkv = h @ w_qkv + b_qkv
    q, k, v = jnp.split(qkv, 3, axis=-1)
    q = q.reshape(num_agents, n_heads, head_dim).transpose(1, 0, 2)
    k = k.reshape(num_agents, n_heads, head_dim).transpose(1, 0, 2)
    v = v.reshape(num_agents, n_heads, head_dim).transpose(1, 0, 2)
    scores = jnp.einsum("hqd,hkd->hqk", q, k) / math.sqrt(head_dim)
    probs = jax.nn.softmax(scores, axis=-1)
    context = jnp.einsum("hqk,hkd->hqd", probs, v)
    context = context.transpose(1, 0, 2).reshape(num_agents, vibe_dim)
    return jnp.tanh(context @ w_out + b_out)


if __name__ == "__main__":
    num_agents = 8
    vibe_dim = 32
    n_heads = 4
    batch_systems = 16     # independent agent systems processed in one call

    key = jax.random.PRNGKey(0)
    k_h, k_wqkv, k_bqkv, k_wout, k_bout = jax.random.split(key, 5)

    bound = 1.0 / math.sqrt(vibe_dim)
    h_batch = jax.random.normal(
        k_h, (batch_systems, num_agents, vibe_dim), dtype=jnp.float32)
    w_qkv = jax.random.uniform(k_wqkv, (vibe_dim, 3 * vibe_dim),
                               minval=-bound, maxval=bound, dtype=jnp.float32)
    b_qkv = jax.random.uniform(k_bqkv, (3 * vibe_dim,),
                               minval=-bound, maxval=bound, dtype=jnp.float32)
    w_out = jax.random.uniform(k_wout, (vibe_dim, vibe_dim),
                               minval=-bound, maxval=bound, dtype=jnp.float32)
    b_out = jax.random.uniform(k_bout, (vibe_dim,),
                               minval=-bound, maxval=bound, dtype=jnp.float32)

    # One-time parameter prep (scale folding into fused qkv weight).
    params = prepare_odenet_params(w_qkv, b_qkv, w_out, b_out, n_heads=n_heads)

    ref_b = jax.vmap(
        lambda hh: odenet_reference(hh, w_qkv, b_qkv, w_out, b_out,
                                    n_heads=n_heads))(h_batch)

    # Fast path: bf16 MXU feed, f32 accumulate / softmax / tanh.
    out_b = jax.block_until_ready(
        odenet_forward_batched(h_batch, params, n_heads=n_heads))
    assert out_b.shape == (batch_systems, num_agents, vibe_dim)
    # Output is tanh-bounded in [-1, 1]; 1e-2 abs covers bf16-fed dots plus the
    # EUP approx reciprocal in the softmax denominator.
    assert jnp.allclose(out_b, ref_b, atol=1e-2, rtol=1e-2), \
        "batched (bf16 feed) mismatch"

    # Strict numerical check: identical kernel with f32 MXU feed.
    out_f32 = jax.block_until_ready(
        odenet_forward_batched(h_batch, params, n_heads=n_heads,
                               mxu_dtype=jnp.float32))
    assert jnp.allclose(out_f32, ref_b, atol=2e-3, rtol=2e-3), \
        "batched (f32 feed) mismatch"

    # Single-system path (matches the PyTorch module's forward signature).
    out_1 = jax.block_until_ready(
        odenet_forward(h_batch[0], params, n_heads=n_heads))
    assert jnp.allclose(out_1, ref_b[0], atol=1e-2, rtol=1e-2), "single mismatch"

    print("KERNEL_OK")
</pallas_src>

<mosaic_0001>
module attributes {stable_mosaic.version = 11 : i64} {
  func.func @_odenet_kernel(%arg0: i32, %arg1: memref<128x32xf32, #tpu.memory_space<vmem>>, %arg2: memref<32x96xf32, #tpu.memory_space<vmem>>, %arg3: memref<1x96xf32, #tpu.memory_space<vmem>>, %arg4: memref<32x32xf32, #tpu.memory_space<vmem>>, %arg5: memref<1x32xf32, #tpu.memory_space<vmem>>, %arg6: memref<128x32xf32, #tpu.memory_space<vmem>>) attributes {dimension_semantics = [#tpu.dimension_semantics<parallel>], iteration_bounds = array<i64: 1>, scalar_prefetch = 0 : i64, scratch_operands = 0 : i64, tpu.core_type = #tpu.core_type<tc>, window_params = [{transform_indices = @transform_0, window_bounds = array<i64: 128, 32>}, {pipeline_mode = #tpu.pipeline_mode<synchronous>, transform_indices = @transform_1, window_bounds = array<i64: 32, 96>}, {pipeline_mode = #tpu.pipeline_mode<synchronous>, transform_indices = @transform_2, window_bounds = array<i64: 1, 96>}, {pipeline_mode = #tpu.pipeline_mode<synchronous>, transform_indices = @transform_3, window_bounds = array<i64: 32, 32>}, {pipeline_mode = #tpu.pipeline_mode<synchronous>, transform_indices = @transform_4, window_bounds = array<i64: 1, 32>}, {transform_indices = @transform_5, window_bounds = array<i64: 128, 32>}]} {
    %c0 = arith.constant 0 : index
    %c0_0 = arith.constant 0 : index
    %0 = vector.load %arg1[%c0, %c0_0] : memref<128x32xf32, #tpu.memory_space<vmem>>, vector<128x32xf32>
    %1 = arith.truncf %0 : vector<128x32xf32> to vector<128x32xbf16>
    %c0_1 = arith.constant 0 : index
    %c0_2 = arith.constant 0 : index
    %2 = vector.load %arg2[%c0_1, %c0_2] : memref<32x96xf32, #tpu.memory_space<vmem>>, vector<32x96xf32>
    %3 = arith.truncf %2 : vector<32x96xf32> to vector<32x96xbf16>
    %cst = arith.constant dense<0.000000e+00> : vector<128x96xf32>
    %4 = tpu.matmul %1, %3, %cst {dimension_numbers = #tpu.dot_dimension_numbers<[1], [0], [0], [1], [0, 0, 1, 1], [], []>} : vector<128x32xbf16>, vector<32x96xbf16>, vector<128x96xf32> -> vector<128x96xf32>
    %c0_3 = arith.constant 0 : index
    %c0_4 = arith.constant 0 : index
    %5 = vector.load %arg3[%c0_3, %c0_4] : memref<1x96xf32, #tpu.memory_space<vmem>>, vector<1x96xf32>
    %6 = vector.broadcast %5 : vector<1x96xf32> to vector<128x96xf32>
    %7 = arith.addf %4, %6 : vector<128x96xf32>
    %8 = vector.extract_strided_slice %7 {offsets = [0, 0], sizes = [128, 32], strides = [1, 1]} : vector<128x96xf32> to vector<128x32xf32>
    %9 = vector.shape_cast %8 : vector<128x32xf32> to vector<16x8x32xf32>
    %10 = vector.extract_strided_slice %7 {offsets = [0, 32], sizes = [128, 32], strides = [1, 1]} : vector<128x96xf32> to vector<128x32xf32>
    %11 = vector.shape_cast %10 : vector<128x32xf32> to vector<16x8x32xf32>
    %12 = vector.extract_strided_slice %7 {offsets = [0, 64], sizes = [128, 32], strides = [1, 1]} : vector<128x96xf32> to vector<128x32xf32>
    %13 = vector.shape_cast %12 : vector<128x32xf32> to vector<16x8x32xf32>
    %14 = vector.extract_strided_slice %9 {offsets = [0, 0, 0], sizes = [16, 8, 8], strides = [1, 1, 1]} : vector<16x8x32xf32> to vector<16x8x8xf32>
    %15 = vector.extract_strided_slice %11 {offsets = [0, 0, 0], sizes = [16, 8, 8], strides = [1, 1, 1]} : vector<16x8x32xf32> to vector<16x8x8xf32>
    %16 = vector.extract_strided_slice %13 {offsets = [0, 0, 0], sizes = [16, 8, 8], strides = [1, 1, 1]} : vector<16x8x32xf32> to vector<16x8x8xf32>
    %17 = arith.truncf %14 : vector<16x8x8xf32> to vector<16x8x8xbf16>
    %18 = arith.truncf %15 : vector<16x8x8xf32> to vector<16x8x8xbf16>
    "tpu.trace_start"() <{level = 10 : i32, message = "bqd,bkd->bqk"}> : () -> ()
    %cst_5 = arith.constant dense<0.000000e+00> : vector<16x8x8xf32>
    %19 = tpu.matmul %17, %18, %cst_5 {dimension_numbers = #tpu.dot_dimension_numbers<[2], [2], [1], [1], [0, 0, 0, 1, 1, 1], [0], [0]>} : vector<16x8x8xbf16>, vector<16x8x8xbf16>, vector<16x8x8xf32> -> vector<16x8x8xf32>
    "tpu.trace_stop"() : () -> ()
    %cst_6 = arith.constant dense<0xFF800000> : vector<16x8xf32>
    %20 = vector.multi_reduction <maximumf>, %19, %cst_6 [2] : vector<16x8x8xf32> to vector<16x8xf32>
    %21 = vector.shape_cast %20 : vector<16x8xf32> to vector<16x8x1xf32>
    %22 = vector.broadcast %21 : vector<16x8x1xf32> to vector<16x8x8xf32>
    %23 = arith.subf %19, %22 : vector<16x8x8xf32>
    %24 = math.exp %23 : vector<16x8x8xf32>
    %cst_7 = arith.constant dense<0.000000e+00> : vector<16x8xf32>
    %25 = vector.multi_reduction <add>, %24, %cst_7 [2] : vector<16x8x8xf32> to vector<16x8xf32>
    %26 = vector.shape_cast %25 : vector<16x8xf32> to vector<16x8x1xf32>
    %27 = tpu.reciprocal %26 {approx = true} : vector<16x8x1xf32> -> vector<16x8x1xf32>
    %28 = vector.broadcast %27 : vector<16x8x1xf32> to vector<16x8x8xf32>
    %29 = arith.mulf %24, %28 : vector<16x8x8xf32>
    %30 = arith.truncf %29 : vector<16x8x8xf32> to vector<16x8x8xbf16>
    %31 = arith.truncf %16 : vector<16x8x8xf32> to vector<16x8x8xbf16>
    "tpu.trace_start"() <{level = 10 : i32, message = "bqk,bkd->bqd"}> : () -> ()
    %cst_8 = arith.constant dense<0.000000e+00> : vector<16x8x8xf32>
    %32 = tpu.matmul %30, %31, %cst_8 {dimension_numbers = #tpu.dot_dimension_numbers<[2], [1], [1], [2], [0, 0, 0, 1, 1, 2], [0], [0]>} : vector<16x8x8xbf16>, vector<16x8x8xbf16>, vector<16x8x8xf32> -> vector<16x8x8xf32>
    "tpu.trace_stop"() : () -> ()
    %33 = vector.extract_strided_slice %9 {offsets = [0, 0, 8], sizes = [16, 8, 8], strides = [1, 1, 1]} : vector<16x8x32xf32> to vector<16x8x8xf32>
    %34 = vector.extract_strided_slice %11 {offsets = [0, 0, 8], sizes = [16, 8, 8], strides = [1, 1, 1]} : vector<16x8x32xf32> to vector<16x8x8xf32>
    %35 = vector.extract_strided_slice %13 {offsets = [0, 0, 8], sizes = [16, 8, 8], strides = [1, 1, 1]} : vector<16x8x32xf32> to vector<16x8x8xf32>
    %36 = arith.truncf %33 : vector<16x8x8xf32> to vector<16x8x8xbf16>
    %37 = arith.truncf %34 : vector<16x8x8xf32> to vector<16x8x8xbf16>
    "tpu.trace_start"() <{level = 10 : i32, message = "bqd,bkd->bqk"}> : () -> ()
    %cst_9 = arith.constant dense<0.000000e+00> : vector<16x8x8xf32>
    %38 = tpu.matmul %36, %37, %cst_9 {dimension_numbers = #tpu.dot_dimension_numbers<[2], [2], [1], [1], [0, 0, 0, 1, 1, 1], [0], [0]>} : vector<16x8x8xbf16>, vector<16x8x8xbf16>, vector<16x8x8xf32> -> vector<16x8x8xf32>
    "tpu.trace_stop"() : () -> ()
    %cst_10 = arith.constant dense<0xFF800000> : vector<16x8xf32>
    %39 = vector.multi_reduction <maximumf>, %38, %cst_10 [2] : vector<16x8x8xf32> to vector<16x8xf32>
    %40 = vector.shape_cast %39 : vector<16x8xf32> to vector<16x8x1xf32>
    %41 = vector.broadcast %40 : vector<16x8x1xf32> to vector<16x8x8xf32>
    %42 = arith.subf %38, %41 : vector<16x8x8xf32>
    %43 = math.exp %42 : vector<16x8x8xf32>
    %cst_11 = arith.constant dense<0.000000e+00> : vector<16x8xf32>
    %44 = vector.multi_reduction <add>, %43, %cst_11 [2] : vector<16x8x8xf32> to vector<16x8xf32>
    %45 = vector.shape_cast %44 : vector<16x8xf32> to vector<16x8x1xf32>
    %46 = tpu.reciprocal %45 {approx = true} : vector<16x8x1xf32> -> vector<16x8x1xf32>
    %47 = vector.broadcast %46 : vector<16x8x1xf32> to vector<16x8x8xf32>
    %48 = arith.mulf %43, %47 : vector<16x8x8xf32>
    %49 = arith.truncf %48 : vector<16x8x8xf32> to vector<16x8x8xbf16>
    %50 = arith.truncf %35 : vector<16x8x8xf32> to vector<16x8x8xbf16>
    "tpu.trace_start"() <{level = 10 : i32, message = "bqk,bkd->bqd"}> : () -> ()
    %cst_12 = arith.constant dense<0.000000e+00> : vector<16x8x8xf32>
    %51 = tpu.matmul %49, %50, %cst_12 {dimension_numbers = #tpu.dot_dimension_numbers<[2], [1], [1], [2], [0, 0, 0, 1, 1, 2], [0], [0]>} : vector<16x8x8xbf16>, vector<16x8x8xbf16>, vector<16x8x8xf32> -> vector<16x8x8xf32>
    "tpu.trace_stop"() : () -> ()
    %52 = vector.extract_strided_slice %9 {offsets = [0, 0, 16], sizes = [16, 8, 8], strides = [1, 1, 1]} : vector<16x8x32xf32> to vector<16x8x8xf32>
    %53 = vector.extract_strided_slice %11 {offsets = [0, 0, 16], sizes = [16, 8, 8], strides = [1, 1, 1]} : vector<16x8x32xf32> to vector<16x8x8xf32>
    %54 = vector.extract_strided_slice %13 {offsets = [0, 0, 16], sizes = [16, 8, 8], strides = [1, 1, 1]} : vector<16x8x32xf32> to vector<16x8x8xf32>
    %55 = arith.truncf %52 : vector<16x8x8xf32> to vector<16x8x8xbf16>
    %56 = arith.truncf %53 : vector<16x8x8xf32> to vector<16x8x8xbf16>
    "tpu.trace_start"() <{level = 10 : i32, message = "bqd,bkd->bqk"}> : () -> ()
    %cst_13 = arith.constant dense<0.000000e+00> : vector<16x8x8xf32>
    %57 = tpu.matmul %55, %56, %cst_13 {dimension_numbers = #tpu.dot_dimension_numbers<[2], [2], [1], [1], [0, 0, 0, 1, 1, 1], [0], [0]>} : vector<16x8x8xbf16>, vector<16x8x8xbf16>, vector<16x8x8xf32> -> vector<16x8x8xf32>
    "tpu.trace_stop"() : () -> ()
    %cst_14 = arith.constant dense<0xFF800000> : vector<16x8xf32>
    %58 = vector.multi_reduction <maximumf>, %57, %cst_14 [2] : vector<16x8x8xf32> to vector<16x8xf32>
    %59 = vector.shape_cast %58 : vector<16x8xf32> to vector<16x8x1xf32>
    %60 = vector.broadcast %59 : vector<16x8x1xf32> to vector<16x8x8xf32>
    %61 = arith.subf %57, %60 : vector<16x8x8xf32>
    %62 = math.exp %61 : vector<16x8x8xf32>
    %cst_15 = arith.constant dense<0.000000e+00> : vector<16x8xf32>
    %63 = vector.multi_reduction <add>, %62, %cst_15 [2] : vector<16x8x8xf32> to vector<16x8xf32>
    %64 = vector.shape_cast %63 : vector<16x8xf32> to vector<16x8x1xf32>
    %65 = tpu.reciprocal %64 {approx = true} : vector<16x8x1xf32> -> vector<16x8x1xf32>
    %66 = vector.broadcast %65 : vector<16x8x1xf32> to vector<16x8x8xf32>
    %67 = arith.mulf %62, %66 : vector<16x8x8xf32>
    %68 = arith.truncf %67 : vector<16x8x8xf32> to vector<16x8x8xbf16>
    %69 = arith.truncf %54 : vector<16x8x8xf32> to vector<16x8x8xbf16>
    "tpu.trace_start"() <{level = 10 : i32, message = "bqk,bkd->bqd"}> : () -> ()
    %cst_16 = arith.constant dense<0.000000e+00> : vector<16x8x8xf32>
    %70 = tpu.matmul %68, %69, %cst_16 {dimension_numbers = #tpu.dot_dimension_numbers<[2], [1], [1], [2], [0, 0, 0, 1, 1, 2], [0], [0]>} : vector<16x8x8xbf16>, vector<16x8x8xbf16>, vector<16x8x8xf32> -> vector<16x8x8xf32>
    "tpu.trace_stop"() : () -> ()
    %71 = vector.extract_strided_slice %9 {offsets = [0, 0, 24], sizes = [16, 8, 8], strides = [1, 1, 1]} : vector<16x8x32xf32> to vector<16x8x8xf32>
    %72 = vector.extract_strided_slice %11 {offsets = [0, 0, 24], sizes = [16, 8, 8], strides = [1, 1, 1]} : vector<16x8x32xf32> to vector<16x8x8xf32>
    %73 = vector.extract_strided_slice %13 {offsets = [0, 0, 24], sizes = [16, 8, 8], strides = [1, 1, 1]} : vector<16x8x32xf32> to vector<16x8x8xf32>
    %74 = arith.truncf %71 : vector<16x8x8xf32> to vector<16x8x8xbf16>
    %75 = arith.truncf %72 : vector<16x8x8xf32> to vector<16x8x8xbf16>
    "tpu.trace_start"() <{level = 10 : i32, message = "bqd,bkd->bqk"}> : () -> ()
    %cst_17 = arith.constant dense<0.000000e+00> : vector<16x8x8xf32>
    %76 = tpu.matmul %74, %75, %cst_17 {dimension_numbers = #tpu.dot_dimension_numbers<[2], [2], [1], [1], [0, 0, 0, 1, 1, 1], [0], [0]>} : vector<16x8x8xbf16>, vector<16x8x8xbf16>, vector<16x8x8xf32> -> vector<16x8x8xf32>
    "tpu.trace_stop"() : () -> ()
    %cst_18 = arith.constant dense<0xFF800000> : vector<16x8xf32>
    %77 = vector.multi_reduction <maximumf>, %76, %cst_18 [2] : vector<16x8x8xf32> to vector<16x8xf32>
    %78 = vector.shape_cast %77 : vector<16x8xf32> to vector<16x8x1xf32>
    %79 = vector.broadcast %78 : vector<16x8x1xf32> to vector<16x8x8xf32>
    %80 = arith.subf %76, %79 : vector<16x8x8xf32>
    %81 = math.exp %80 : vector<16x8x8xf32>
    %cst_19 = arith.constant dense<0.000000e+00> : vector<16x8xf32>
    %82 = vector.multi_reduction <add>, %81, %cst_19 [2] : vector<16x8x8xf32> to vector<16x8xf32>
    %83 = vector.shape_cast %82 : vector<16x8xf32> to vector<16x8x1xf32>
    %84 = tpu.reciprocal %83 {approx = true} : vector<16x8x1xf32> -> vector<16x8x1xf32>
    %85 = vector.broadcast %84 : vector<16x8x1xf32> to vector<16x8x8xf32>
    %86 = arith.mulf %81, %85 : vector<16x8x8xf32>
    %87 = arith.truncf %86 : vector<16x8x8xf32> to vector<16x8x8xbf16>
    %88 = arith.truncf %73 : vector<16x8x8xf32> to vector<16x8x8xbf16>
    "tpu.trace_start"() <{level = 10 : i32, message = "bqk,bkd->bqd"}> : () -> ()
    %cst_20 = arith.constant dense<0.000000e+00> : vector<16x8x8xf32>
    %89 = tpu.matmul %87, %88, %cst_20 {dimension_numbers = #tpu.dot_dimension_numbers<[2], [1], [1], [2], [0, 0, 0, 1, 1, 2], [0], [0]>} : vector<16x8x8xbf16>, vector<16x8x8xbf16>, vector<16x8x8xf32> -> vector<16x8x8xf32>
    "tpu.trace_stop"() : () -> ()
    %90 = tpu.concatenate %32, %51, %70, %89 in 2 : vector<16x8x8xf32>, vector<16x8x8xf32>, vector<16x8x8xf32>, vector<16x8x8xf32> -> vector<16x8x32xf32>
    %91 = vector.shape_cast %90 : vector<16x8x32xf32> to vector<128x32xf32>
    %92 = arith.truncf %91 : vector<128x32xf32> to vector<128x32xbf16>
    %c0_21 = arith.constant 0 : index
    %c0_22 = arith.constant 0 : index
    %93 = vector.load %arg4[%c0_21, %c0_22] : memref<32x32xf32, #tpu.memory_space<vmem>>, vector<32x32xf32>
    %94 = arith.truncf %93 : vector<32x32xf32> to vector<32x32xbf16>
    %cst_23 = arith.constant dense<0.000000e+00> : vector<128x32xf32>
    %95 = tpu.matmul %92, %94, %cst_23 {dimension_numbers = #tpu.dot_dimension_numbers<[1], [0], [0], [1], [0, 0, 1, 1], [], []>} : vector<128x32xbf16>, vector<32x32xbf16>, vector<128x32xf32> -> vector<128x32xf32>
    %c0_24 = arith.constant 0 : index
    %c0_25 = arith.constant 0 : index
    %96 = vector.load %arg5[%c0_24, %c0_25] : memref<1x32xf32, #tpu.memory_space<vmem>>, vector<1x32xf32>
    %97 = vector.broadcast %96 : vector<1x32xf32> to vector<128x32xf32>
    %98 = arith.addf %95, %97 : vector<128x32xf32>
    %99 = math.tanh %98 : vector<128x32xf32>
    %c0_26 = arith.constant 0 : index
    %c0_27 = arith.constant 0 : index
    %100 = vector.load %arg6[%c0_26, %c0_27] : memref<128x32xf32, #tpu.memory_space<vmem>>, vector<128x32xf32>
    tpu.vector_store %arg6[%c0_26, %c0_27], %99 {strides = array<i32>} : memref<128x32xf32, #tpu.memory_space<vmem>>, vector<128x32xf32>,
    return
  }
  func.func @transform_0(%arg0: i32) -> (i32, i32) {
    %c0_i32 = arith.constant 0 : i32
    %c0_i32_0 = arith.constant 0 : i32
    return %arg0, %c0_i32 : i32, i32
  }
  func.func @transform_1(%arg0: i32) -> (i32, i32) {
    %c0_i32 = arith.constant 0 : i32
    %c0_i32_0 = arith.constant 0 : i32
    %c0_i32_1 = arith.constant 0 : i32
    return %c0_i32, %c0_i32_0 : i32, i32
  }
  func.func @transform_2(%arg0: i32) -> (i32, i32) {
    %c0_i32 = arith.constant 0 : i32
    %c0_i32_0 = arith.constant 0 : i32
    %c0_i32_1 = arith.constant 0 : i32
    return %c0_i32, %c0_i32_0 : i32, i32
  }
  func.func @transform_3(%arg0: i32) -> (i32, i32) {
    %c0_i32 = arith.constant 0 : i32
    %c0_i32_0 = arith.constant 0 : i32
    %c0_i32_1 = arith.constant 0 : i32
    return %c0_i32, %c0_i32_0 : i32, i32
  }
  func.func @transform_4(%arg0: i32) -> (i32, i32) {
    %c0_i32 = arith.constant 0 : i32
    %c0_i32_0 = arith.constant 0 : i32
    %c0_i32_1 = arith.constant 0 : i32
    return %c0_i32, %c0_i32_0 : i32, i32
  }
  func.func @transform_5(%arg0: i32) -> (i32, i32) {
    %c0_i32 = arith.constant 0 : i32
    %c0_i32_0 = arith.constant 0 : i32
    return %arg0, %c0_i32 : i32, i32
  }
}

</mosaic_0001>

<llo_original>
// kernel: tpu_custom_call.1
$region0: #{tpu_custom_call.1}
  #allocation0 [shape = 'u32[]', space=smem, size = 0x4, offset = 0x4, fixed_abs, tag = 'smem constant byte address 0x4 - core index']
  #allocation1 [shape = 'u32[144,128]{1,0:T(1,128)}', space=vmem, size = 0x12000, scoped, tag = 'internal scratch']
  %s0 = inlined_call_operand.vmem [shape: f32[128,32], index: 0, kind: input, shape index: {}]
  %s1 = inlined_call_operand.vmem [shape: f32[32,96], index: 1, kind: input, shape index: {}]
  %s2 = inlined_call_operand.vmem [shape: f32[1,96], index: 2, kind: input, shape index: {}]
  %s3 = inlined_call_operand.vmem [shape: f32[32,32], index: 3, kind: input, shape index: {}]
  %s4 = inlined_call_operand.vmem [shape: f32[1,32], index: 4, kind: input, shape index: {}]
  %s5 = inlined_call_operand.vmem [shape: f32[128,32], index: 5, kind: output, shape index: {}]
  %s6 = sld [smem:[#allocation0]]
  $region30: #{tpu_custom_call.1} parent=0
    _
  %s8 = ssub.s32 1, %s6
  %s9 = scalar_select 0, %s8, %s6
  // Predicated region
  $region2: #{tpu_custom_call.1} parent=0 // pred_check
    _
  $region3: #{tpu_custom_call.1} parent=0 // pred_check_branch
    %11 = sbr.rel (0) target = $region5
  $region4: #{tpu_custom_call.1} parent=0 // pred_region
    _
  $region5: #{tpu_custom_call.1} parent=0 // pred_fallthru
    _
  // Predicated region
  $region6: #{tpu_custom_call.1} parent=0 // pred_check
    _
  $region7: #{tpu_custom_call.1} parent=0 // pred_check_branch
    %13 = sbr.rel (0) target = $region9
  $region8: #{tpu_custom_call.1} parent=0 // pred_region
    _
  $region9: #{tpu_custom_call.1} parent=0 // pred_fallthru
    _
  // Predicated region
  $region10: #{tpu_custom_call.1} parent=0 // pred_check
    _
  $region11: #{tpu_custom_call.1} parent=0 // pred_check_branch
    %15 = sbr.rel (0) target = $region13
  $region12: #{tpu_custom_call.1} parent=0 // pred_region
    _
  $region13: #{tpu_custom_call.1} parent=0 // pred_fallthru
    _
  // Predicated region
  $region14: #{tpu_custom_call.1} parent=0 // pred_check
    _
  $region15: #{tpu_custom_call.1} parent=0 // pred_check_branch
    %17 = sbr.rel (0) target = $region17
  $region16: #{tpu_custom_call.1} parent=0 // pred_region
    _
  $region17: #{tpu_custom_call.1} parent=0 // pred_fallthru
    _
  // Predicated region
  $region18: #{tpu_custom_call.1} parent=0 // pred_check
    _
  $region19: #{tpu_custom_call.1} parent=0 // pred_check_branch
    %19 = sbr.rel (0) target = $region21
  $region20: #{tpu_custom_call.1} parent=0 // pred_region
    _
  $region21: #{tpu_custom_call.1} parent=0 // pred_fallthru
    _
  %v21 = vld [vmem:[%s0] sm:$0xff]
  %v22 = vld [vmem:[%s0 + $0x8] sm:$0xff]
  %v23 = vld [vmem:[%s0 + $0x10] sm:$0xff]
  %v24 = vld [vmem:[%s0 + $0x18] sm:$0xff]
  %v25 = vld [vmem:[%s0 + $0x20] sm:$0xff]
  %v26 = vld [vmem:[%s0 + $0x28] sm:$0xff]
  %v27 = vld [vmem:[%s0 + $0x30] sm:$0xff]
  %v28 = vld [vmem:[%s0 + $0x38] sm:$0xff]
  %v29 = vld [vmem:[%s0 + $0x40] sm:$0xff]
  %v30 = vld [vmem:[%s0 + $0x48] sm:$0xff]
  %v31 = vld [vmem:[%s0 + $0x50] sm:$0xff]
  %v32 = vld [vmem:[%s0 + $0x58] sm:$0xff]
  %v33 = vld [vmem:[%s0 + $0x60] sm:$0xff]
  %v34 = vld [vmem:[%s0 + $0x68] sm:$0xff]
  %v35 = vld [vmem:[%s0 + $0x70] sm:$0xff]
  %v36 = vld [vmem:[%s0 + $0x78] sm:$0xff]
  %v37 = vpack.c.bf16 %v22, %v21
  %v38 = vpack.c.bf16 %v24, %v23
  %v39 = vpack.c.bf16 %v26, %v25
  %v40 = vpack.c.bf16 %v28, %v27
  %v41 = vpack.c.bf16 %v30, %v29
  %v42 = vpack.c.bf16 %v32, %v31
  %v43 = vpack.c.bf16 %v34, %v33
  %v44 = vpack.c.bf16 %v36, %v35
  %v45 = vld [vmem:[%s1] sm:$0xff]
  %v46 = vld [vmem:[%s1 + $0x8] sm:$0xff]
  %v47 = vld [vmem:[%s1 + $0x10] sm:$0xff]
  %v48 = vld [vmem:[%s1 + $0x18] sm:$0xff]
  %v49 = vpack.c.bf16 %v46, %v45
  %v50 = vpack.c.bf16 %v48, %v47
  %v51 = vld [vmem:[%s2] sm:$0x1]
  %v53 = vlaneseq
  %v54 = vshrl.u32 %v53, 7
  %v55 = vsub.s32 0, %v54
  %v56 = vrot.slane %v51, %v55
  %vm58 = vcmask 261120
  %v60 = vsel %vm58, %v37, 0
  %v63 = vsel %vm58, %v38, 0
  %v66 = vsel %vm58, %v39, 0
  %v69 = vsel %vm58, %v40, 0
  %v72 = vsel %vm58, %v41, 0
  %v75 = vsel %vm58, %v42, 0
  %v78 = vsel %vm58, %v43, 0
  %v81 = vsel %vm58, %v44, 0
  %83 = vmatprep.subr.bf16.mxu0 0
  %84 = vmatpush1.bf16.msra.mxu0 %v49
  %85 = vmatprep.subr.bf16.mxu0 0
  %86 = vmatpush1.bf16.msra.mxu0 %v50
  %87 = vmatprep.subr.bf16.mxu0 0
  %88 = vmatpush1.bf16.msra.mxu0 0
  %89 = vmatprep.subr.bf16.mxu0 0
  %90 = vmatpush1.bf16.msra.mxu0 0
  %91 = vmatprep.subr.bf16.mxu0 0
  %92 = vmatpush1.bf16.msra.mxu0 0
  %93 = vmatprep.subr.bf16.mxu0 0
  %94 = vmatpush1.bf16.msra.mxu0 0
  %95 = vmatprep.subr.bf16.mxu0 0
  %96 = vmatpush1.bf16.msra.mxu0 0
  %97 = vmatprep.subr.bf16.mxu0 0
  %98 = vmatpush1.bf16.msra.mxu0 0
  %99 = vmatprep.subr.bf16.mxu0 0
  %100 = vmatpush1.bf16.msra.mxu0 0
  %101 = vmatprep.subr.bf16.mxu0 0
  %102 = vmatpush1.bf16.msra.mxu0 0
  %103 = vmatprep.subr.bf16.mxu0 0
  %104 = vmatpush1.bf16.msra.mxu0 0
  %105 = vmatprep.subr.bf16.mxu0 0
  %106 = vmatpush1.bf16.msra.mxu0 0
  %107 = vmatprep.subr.bf16.mxu0 0
  %108 = vmatpush1.bf16.msra.mxu0 0
  %109 = vmatprep.subr.bf16.mxu0 0
  %110 = vmatpush1.bf16.msra.mxu0 0
  %111 = vmatprep.subr.bf16.mxu0 0
  %112 = vmatpush1.bf16.msra.mxu0 0
  %113 = vmatprep.subr.bf16.mxu0 0
  %114 = vmatpush1.bf16.msra.mxu0 0
  %115 = vmatprep.mubr.bf16.mxu0 0
  %116 = vmatmul.mubr.bf16.gmra.mrb[0].mxu0 %v60
  %v117 = vpop.f32.mrb[0].mxu0
  %v118 = vadd.f32 %v56, %v117
  %v119 = vpop.f32.mrb[0].mxu0
  %v120 = vpop.f32.mrb[0].mxu0
  %v121 = vadd.f32 %v56, %v120
  %v122 = vpop.f32.mrb[0].mxu0
  %123 = vmatprep.mubr.bf16.mxu0 0
  %124 = vmatmul.mubr.bf16.gmra.mrb[0].mxu0 %v63
  %v125 = vpop.f32.mrb[0].mxu0
  %v126 = vadd.f32 %v56, %v125
  %v127 = vpop.f32.mrb[0].mxu0
  %v128 = vpop.f32.mrb[0].mxu0
  %v129 = vadd.f32 %v56, %v128
  %v130 = vpop.f32.mrb[0].mxu0
  %131 = vmatprep.mubr.bf16.mxu0 0
  %132 = vmatmul.mubr.bf16.gmra.mrb[0].mxu0 %v66
  %v133 = vpop.f32.mrb[0].mxu0
  %v134 = vadd.f32 %v56, %v133
  %v135 = vpop.f32.mrb[0].mxu0
  %v136 = vpop.f32.mrb[0].mxu0
  %v137 = vadd.f32 %v56, %v136
  %v138 = vpop.f32.mrb[0].mxu0
  %139 = vmatprep.mubr.bf16.mxu0 0
  %140 = vmatmul.mubr.bf16.gmra.mrb[0].mxu0 %v69
  %v141 = vpop.f32.mrb[0].mxu0
  %v142 = vadd.f32 %v56, %v141
  %v143 = vpop.f32.mrb[0].mxu0
  %v144 = vpop.f32.mrb[0].mxu0
  %v145 = vadd.f32 %v56, %v144
  %v146 = vpop.f32.mrb[0].mxu0
  %147 = vmatprep.mubr.bf16.mxu0 0
  %148 = vmatmul.mubr.bf16.gmra.mrb[0].mxu0 %v72
  %v149 = vpop.f32.mrb[0].mxu0
  %v150 = vadd.f32 %v56, %v149
  %v151 = vpop.f32.mrb[0].mxu0
  %v152 = vpop.f32.mrb[0].mxu0
  %v153 = vadd.f32 %v56, %v152
  %v154 = vpop.f32.mrb[0].mxu0
  %155 = vmatprep.mubr.bf16.mxu0 0
  %156 = vmatmul.mubr.bf16.gmra.mrb[0].mxu0 %v75
  %v157 = vpop.f32.mrb[0].mxu0
  %v158 = vadd.f32 %v56, %v157
  %v159 = vpop.f32.mrb[0].mxu0
  %v160 = vpop.f32.mrb[0].mxu0
  %v161 = vadd.f32 %v56, %v160
  %v162 = vpop.f32.mrb[0].mxu0
  %163 = vmatprep.mubr.bf16.mxu0 0
  %164 = vmatmul.mubr.bf16.gmra.mrb[0].mxu0 %v78
  %v165 = vpop.f32.mrb[0].mxu0
  %v166 = vadd.f32 %v56, %v165
  %v167 = vpop.f32.mrb[0].mxu0
  %v168 = vpop.f32.mrb[0].mxu0
  %v169 = vadd.f32 %v56, %v168
  %v170 = vpop.f32.mrb[0].mxu0
  %171 = vmatprep.mubr.bf16.mxu0 0
  %172 = vmatmul.mubr.bf16.gmra.mrb[0].mxu0 %v81
  %v173 = vpop.f32.mrb[0].mxu0
  %v174 = vadd.f32 %v56, %v173
  %v175 = vpop.f32.mrb[0].mxu0
  %v176 = vpop.f32.mrb[0].mxu0
  %v177 = vadd.f32 %v56, %v176
  %v178 = vpop.f32.mrb[0].mxu0
  %179 = vdwg.mxu0
  %v180 = vpack.c.bf16 %v118, %v118
  %v181 = vpack.c.bf16 %v121, %v121
  %v182 = vpack.c.bf16 %v126, %v126
  %v183 = vpack.c.bf16 %v129, %v129
  %v184 = vpack.c.bf16 %v134, %v134
  %v185 = vpack.c.bf16 %v137, %v137
  %v186 = vpack.c.bf16 %v142, %v142
  %v187 = vpack.c.bf16 %v145, %v145
  %v188 = vpack.c.bf16 %v150, %v150
  %v189 = vpack.c.bf16 %v153, %v153
  %v190 = vpack.c.bf16 %v158, %v158
  %v191 = vpack.c.bf16 %v161, %v161
  %v192 = vpack.c.bf16 %v166, %v166
  %v193 = vpack.c.bf16 %v169, %v169
  %v194 = vpack.c.bf16 %v174, %v174
  %v195 = vpack.c.bf16 %v177, %v177
  %197 = vrot.lane.b32.xlu0 %v180, 96
  %v198 = vpop.permute.xlu0 %197
  %vm199 = vcmask 64512
  %v201 = vsel %vm199, %v180, 0
  %v204 = vsel %vm199, %v198, 0
  %206 = vmatprep.subr.bf16.mxu0 0
  %207 = vmatpush1.bf16.xpose.msra.mxu0 %v204
  %208 = vmatprep.subr.bf16.mxu0 0
  %209 = vmatpush1.bf16.xpose.msra.mxu0 0
  %210 = vmatprep.subr.bf16.mxu0 0
  %211 = vmatpush1.bf16.xpose.msra.mxu0 0
  %212 = vmatprep.subr.bf16.mxu0 0
  %213 = vmatpush1.bf16.xpose.msra.mxu0 0
  %214 = vmatprep.subr.bf16.mxu0 0
  %215 = vmatpush1.bf16.xpose.msra.mxu0 0
  %216 = vmatprep.subr.bf16.mxu0 0
  %217 = vmatpush1.bf16.xpose.msra.mxu0 0
  %218 = vmatprep.subr.bf16.mxu0 0
  %219 = vmatpush1.bf16.xpose.msra.mxu0 0
  %220 = vmatprep.subr.bf16.mxu0 0
  %221 = vmatpush1.bf16.xpose.msra.mxu0 0
  %222 = vmatprep.subr.bf16.mxu0 0
  %223 = vmatpush1.bf16.xpose.msra.mxu0 0
  %224 = vmatprep.subr.bf16.mxu0 0
  %225 = vmatpush1.bf16.xpose.msra.mxu0 0
  %226 = vmatprep.subr.bf16.mxu0 0
  %227 = vmatpush1.bf16.xpose.msra.mxu0 0
  %228 = vmatprep.subr.bf16.mxu0 0
  %229 = vmatpush1.bf16.xpose.msra.mxu0 0
  %230 = vmatprep.subr.bf16.mxu0 0
  %231 = vmatpush1.bf16.xpose.msra.mxu0 0
  %232 = vmatprep.subr.bf16.mxu0 0
  %233 = vmatpush1.bf16.xpose.msra.mxu0 0
  %234 = vmatprep.subr.bf16.mxu0 0
  %235 = vmatpush1.bf16.xpose.msra.mxu0 0
  %236 = vmatprep.subr.bf16.mxu0 0
  %237 = vmatpush1.bf16.xpose.msra.mxu0 0
  %238 = vmatprep.mubr.bf16.mxu0 0
  %239 = vmatmul.mubr.bf16.gmra.mrb[0].mxu0 %v201
  %v240 = vpop.f32.mrb[0].mxu0
  %v241 = vadd.f32 0.0, %v240
  %v242 = vpop.f32.mrb[0].mxu0
  %v243 = vpop.f32.mrb[0].mxu0
  %v244 = vpop.f32.mrb[0].mxu0
  %245 = vdwg.mxu0
  %247 = vrot.lane.b32.xlu0 %v181, 96
  %v248 = vpop.permute.xlu0 %247
  %v250 = vsel %vm199, %v181, 0
  %v253 = vsel %vm199, %v248, 0
  %255 = vmatprep.subr.bf16.mxu0 0
  %256 = vmatpush1.bf16.xpose.msra.mxu0 %v253
  %257 = vmatprep.subr.bf16.mxu0 0
  %258 = vmatpush1.bf16.xpose.msra.mxu0 0
  %259 = vmatprep.subr.bf16.mxu0 0
  %260 = vmatpush1.bf16.xpose.msra.mxu0 0
  %261 = vmatprep.subr.bf16.mxu0 0
  %262 = vmatpush1.bf16.xpose.msra.mxu0 0
  %263 = vmatprep.subr.bf16.mxu0 0
  %264 = vmatpush1.bf16.xpose.msra.mxu0 0
  %265 = vmatprep.subr.bf16.mxu0 0
  %266 = vmatpush1.bf16.xpose.msra.mxu0 0
  %267 = vmatprep.subr.bf16.mxu0 0
  %268 = vmatpush1.bf16.xpose.msra.mxu0 0
  %269 = vmatprep.subr.bf16.mxu0 0
  %270 = vmatpush1.bf16.xpose.msra.mxu0 0
  %271 = vmatprep.subr.bf16.mxu0 0
  %272 = vmatpush1.bf16.xpose.msra.mxu0 0
  %273 = vmatprep.subr.bf16.mxu0 0
  %274 = vmatpush1.bf16.xpose.msra.mxu0 0
  %275 = vmatprep.subr.bf16.mxu0 0
  %276 = vmatpush1.bf16.xpose.msra.mxu0 0
  %277 = vmatprep.subr.bf16.mxu0 0
  %278 = vmatpush1.bf16.xpose.msra.mxu0 0
  %279 = vmatprep.subr.bf16.mxu0 0
  %280 = vmatpush1.bf16.xpose.msra.mxu0 0
  %281 = vmatprep.subr.bf16.mxu0 0
  %282 = vmatpush1.bf16.xpose.msra.mxu0 0
  %283 = vmatprep.subr.bf16.mxu0 0
  %284 = vmatpush1.bf16.xpose.msra.mxu0 0
  %285 = vmatprep.subr.bf16.mxu0 0
  %286 = vmatpush1.bf16.xpose.msra.mxu0 0
  %287 = vmatprep.mubr.bf16.mxu0 0
  %288 = vmatmul.mubr.bf16.gmra.mrb[0].mxu0 %v250
  %v289 = vpop.f32.mrb[0].mxu0
  %v290 = vadd.f32 0.0, %v289
  %v291 = vpop.f32.mrb[0].mxu0
  %v292 = vpop.f32.mrb[0].mxu0
  %v293 = vpop.f32.mrb[0].mxu0
  %294 = vdwg.mxu0
  %296 = vrot.lane.b32.xlu0 %v182, 96
  %v297 = vpop.permute.xlu0 %296
  %v299 = vsel %vm199, %v182, 0
  %v302 = vsel %vm199, %v297, 0
  %304 = vmatprep.subr.bf16.mxu0 0
  %305 = vmatpush1.bf16.xpose.msra.mxu0 %v302
  %306 = vmatprep.subr.bf16.mxu0 0
  %307 = vmatpush1.bf16.xpose.msra.mxu0 0
  %308 = vmatprep.subr.bf16.mxu0 0
  %309 = vmatpush1.bf16.xpose.msra.mxu0 0
  %310 = vmatprep.subr.bf16.mxu0 0
  %311 = vmatpush1.bf16.xpose.msra.mxu0 0
  %312 = vmatprep.subr.bf16.mxu0 0
  %313 = vmatpush1.bf16.xpose.msra.mxu0 0
  %314 = vmatprep.subr.bf16.mxu0 0
  %315 = vmatpush1.bf16.xpose.msra.mxu0 0
  %316 = vmatprep.subr.bf16.mxu0 0
  %317 = vmatpush1.bf16.xpose.msra.mxu0 0
  %318 = vmatprep.subr.bf16.mxu0 0
  %319 = vmatpush1.bf16.xpose.msra.mxu0 0
  %320 = vmatprep.subr.bf16.mxu0 0
  %321 = vmatpush1.bf16.xpose.msra.mxu0 0
  %322 = vmatprep.subr.bf16.mxu0 0
  %323 = vmatpush1.bf16.xpose.msra.mxu0 0
  %324 = vmatprep.subr.bf16.mxu0 0
  %325 = vmatpush1.bf16.xpose.msra.mxu0 0
  %326 = vmatprep.subr.bf16.mxu0 0
  %327 = vmatpush1.bf16.xpose.msra.mxu0 0
  %328 = vmatprep.subr.bf16.mxu0 0
  %329 = vmatpush1.bf16.xpose.msra.mxu0 0
  %330 = vmatprep.subr.bf16.mxu0 0
  %331 = vmatpush1.bf16.xpose.msra.mxu0 0
  %332 = vmatprep.subr.bf16.mxu0 0
  %333 = vmatpush1.bf16.xpose.msra.mxu0 0
  %334 = vmatprep.subr.bf16.mxu0 0
  %335 = vmatpush1.bf16.xpose.msra.mxu0 0
  %336 = vmatprep.mubr.bf16.mxu0 0
  %337 = vmatmul.mubr.bf16.gmra.mrb[0].mxu0 %v299
  %v338 = vpop.f32.mrb[0].mxu0
  %v339 = vadd.f32 0.0, %v338
  %v340 = vpop.f32.mrb[0].mxu0
  %v341 = vpop.f32.mrb[0].mxu0
  %v342 = vpop.f32.mrb[0].mxu0
  %343 = vdwg.mxu0
  %345 = vrot.lane.b32.xlu0 %v183, 96
  %v346 = vpop.permute.xlu0 %345
  %v348 = vsel %vm199, %v183, 0
  %v351 = vsel %vm199, %v346, 0
  %353 = vmatprep.subr.bf16.mxu0 0
  %354 = vmatpush1.bf16.xpose.msra.mxu0 %v351
  %355 = vmatprep.subr.bf16.mxu0 0
  %356 = vmatpush1.bf16.xpose.msra.mxu0 0
  %357 = vmatprep.subr.bf16.mxu0 0
  %358 = vmatpush1.bf16.xpose.msra.mxu0 0
  %359 = vmatprep.subr.bf16.mxu0 0
  %360 = vmatpush1.bf16.xpose.msra.mxu0 0
  %361 = vmatprep.subr.bf16.mxu0 0
  %362 = vmatpush1.bf16.xpose.msra.mxu0 0
  %363 = vmatprep.subr.bf16.mxu0 0
  %364 = vmatpush1.bf16.xpose.msra.mxu0 0
  %365 = vmatprep.subr.bf16.mxu0 0
  %366 = vmatpush1.bf16.xpose.msra.mxu0 0
  %367 = vmatprep.subr.bf16.mxu0 0
  %368 = vmatpush1.bf16.xpose.msra.mxu0 0
  %369 = vmatprep.subr.bf16.mxu0 0
  %370 = vmatpush1.bf16.xpose.msra.mxu0 0
  %371 = vmatprep.subr.bf16.mxu0 0
  %372 = vmatpush1.bf16.xpose.msra.mxu0 0
  %373 = vmatprep.subr.bf16.mxu0 0
  %374 = vmatpush1.bf16.xpose.msra.mxu0 0
  %375 = vmatprep.subr.bf16.mxu0 0
  %376 = vmatpush1.bf16.xpose.msra.mxu0 0
  %377 = vmatprep.subr.bf16.mxu0 0
  %378 = vmatpush1.bf16.xpose.msra.mxu0 0
  %379 = vmatprep.subr.bf16.mxu0 0
  %380 = vmatpush1.bf16.xpose.msra.mxu0 0
  %381 = vmatprep.subr.bf16.mxu0 0
  %382 = vmatpush1.bf16.xpose.msra.mxu0 0
  %383 = vmatprep.subr.bf16.mxu0 0
  %384 = vmatpush1.bf16.xpose.msra.mxu0 0
  %385 = vmatprep.mubr.bf16.mxu0 0
  %386 = vmatmul.mubr.bf16.gmra.mrb[0].mxu0 %v348
  %v387 = vpop.f32.mrb[0].mxu0
  %v388 = vadd.f32 0.0, %v387
  %v389 = vpop.f32.mrb[0].mxu0
  %v390 = vpop.f32.mrb[0].mxu0
  %v391 = vpop.f32.mrb[0].mxu0
  %392 = vdwg.mxu0
  %394 = vrot.lane.b32.xlu0 %v184, 96
  %v395 = vpop.permute.xlu0 %394
  %v397 = vsel %vm199, %v184, 0
  %v400 = vsel %vm199, %v395, 0
  %402 = vmatprep.subr.bf16.mxu0 0
  %403 = vmatpush1.bf16.xpose.msra.mxu0 %v400
  %404 = vmatprep.subr.bf16.mxu0 0
  %405 = vmatpush1.bf16.xpose.msra.mxu0 0
  %406 = vmatprep.subr.bf16.mxu0 0
  %407 = vmatpush1.bf16.xpose.msra.mxu0 0
  %408 = vmatprep.subr.bf16.mxu0 0
  %409 = vmatpush1.bf16.xpose.msra.mxu0 0
  %410 = vmatprep.subr.bf16.mxu0 0
  %411 = vmatpush1.bf16.xpose.msra.mxu0 0
  %412 = vmatprep.subr.bf16.mxu0 0
  %413 = vmatpush1.bf16.xpose.msra.mxu0 0
  %414 = vmatprep.subr.bf16.mxu0 0
  %415 = vmatpush1.bf16.xpose.msra.mxu0 0
  %416 = vmatprep.subr.bf16.mxu0 0
  %417 = vmatpush1.bf16.xpose.msra.mxu0 0
  %418 = vmatprep.subr.bf16.mxu0 0
  %419 = vmatpush1.bf16.xpose.msra.mxu0 0
  %420 = vmatprep.subr.bf16.mxu0 0
  %421 = vmatpush1.bf16.xpose.msra.mxu0 0
  %422 = vmatprep.subr.bf16.mxu0 0
  %423 = vmatpush1.bf16.xpose.msra.mxu0 0
  %424 = vmatprep.subr.bf16.mxu0 0
  %425 = vmatpush1.bf16.xpose.msra.mxu0 0
  %426 = vmatprep.subr.bf16.mxu0 0
  %427 = vmatpush1.bf16.xpose.msra.mxu0 0
  %428 = vmatprep.subr.bf16.mxu0 0
  %429 = vmatpush1.bf16.xpose.msra.mxu0 0
  %430 = vmatprep.subr.bf16.mxu0 0
  %431 = vmatpush1.bf16.xpose.msra.mxu0 0
  %432 = vmatprep.subr.bf16.mxu0 0
  %433 = vmatpush1.bf16.xpose.msra.mxu0 0
  %434 = vmatprep.mubr.bf16.mxu0 0
  %435 = vmatmul.mubr.bf16.gmra.mrb[0].mxu0 %v397
  %v436 = vpop.f32.mrb[0].mxu0
  %v437 = vadd.f32 0.0, %v436
  %v438 = vpop.f32.mrb[0].mxu0
  %v439 = vpop.f32.mrb[0].mxu0
  %v440 = vpop.f32.mrb[0].mxu0
  %441 = vdwg.mxu0
  %443 = vrot.lane.b32.xlu0 %v185, 96
  %v444 = vpop.permute.xlu0 %443
  %v446 = vsel %vm199, %v185, 0
  %v449 = vsel %vm199, %v444, 0
  %451 = vmatprep.subr.bf16.mxu0 0
  %452 = vmatpush1.bf16.xpose.msra.mxu0 %v449
  %453 = vmatprep.subr.bf16.mxu0 0
  %454 = vmatpush1.bf16.xpose.msra.mxu0 0
  %455 = vmatprep.subr.bf16.mxu0 0
  %456 = vmatpush1.bf16.xpose.msra.mxu0 0
  %457 = vmatprep.subr.bf16.mxu0 0
  %458 = vmatpush1.bf16.xpose.msra.mxu0 0
  %459 = vmatprep.subr.bf16.mxu0 0
  %460 = vmatpush1.bf16.xpose.msra.mxu0 0
  %461 = vmatprep.subr.bf16.mxu0 0
  %462 = vmatpush1.bf16.xpose.msra.mxu0 0
  %463 = vmatprep.subr.bf16.mxu0 0
  %464 = vmatpush1.bf16.xpose.msra.mxu0 0
  %465 = vmatprep.subr.bf16.mxu0 0
  %466 = vmatpush1.bf16.xpose.msra.mxu0 0
  %467 = vmatprep.subr.bf16.mxu0 0
  %468 = vmatpush1.bf16.xpose.msra.mxu0 0
  %469 = vmatprep.subr.bf16.mxu0 0
  %470 = vmatpush1.bf16.xpose.msra.mxu0 0
  %471 = vmatprep.subr.bf16.mxu0 0
  %472 = vmatpush1.bf16.xpose.msra.mxu0 0
  %473 = vmatprep.subr.bf16.mxu0 0
  %474 = vmatpush1.bf16.xpose.msra.mxu0 0
  %475 = vmatprep.subr.bf16.mxu0 0
  %476 = vmatpush1.bf16.xpose.msra.mxu0 0
  %477 = vmatprep.subr.bf16.mxu0 0
  %478 = vmatpush1.bf16.xpose.msra.mxu0 0
  %479 = vmatprep.subr.bf16.mxu0 0
  %480 = vmatpush1.bf16.xpose.msra.mxu0 0
  %481 = vmatprep.subr.bf16.mxu0 0
  %482 = vmatpush1.bf16.xpose.msra.mxu0 0
  %483 = vmatprep.mubr.bf16.mxu0 0
  %484 = vmatmul.mubr.bf16.gmra.mrb[0].mxu0 %v446
  %v485 = vpop.f32.mrb[0].mxu0
  %v486 = vadd.f32 0.0, %v485
  %v487 = vpop.f32.mrb[0].mxu0
  %v488 = vpop.f32.mrb[0].mxu0
  %v489 = vpop.f32.mrb[0].mxu0
  %490 = vdwg.mxu0
  %492 = vrot.lane.b32.xlu0 %v186, 96
  %v493 = vpop.permute.xlu0 %492
  %v495 = vsel %vm199, %v186, 0
  %v498 = vsel %vm199, %v493, 0
  %500 = vmatprep.subr.bf16.mxu0 0
  %501 = vmatpush1.bf16.xpose.msra.mxu0 %v498
  %502 = vmatprep.subr.bf16.mxu0 0
  %503 = vmatpush1.bf16.xpose.msra.mxu0 0
  %504 = vmatprep.subr.bf16.mxu0 0
  %505 = vmatpush1.bf16.xpose.msra.mxu0 0
  %506 = vmatprep.subr.bf16.mxu0 0
  %507 = vmatpush1.bf16.xpose.msra.mxu0 0
  %508 = vmatprep.subr.bf16.mxu0 0
  %509 = vmatpush1.bf16.xpose.msra.mxu0 0
  %510 = vmatprep.subr.bf16.mxu0 0
  %511 = vmatpush1.bf16.xpose.msra.mxu0 0
  %512 = vmatprep.subr.bf16.mxu0 0
  %513 = vmatpush1.bf16.xpose.msra.mxu0 0
  %514 = vmatprep.subr.bf16.mxu0 0
  %515 = vmatpush1.bf16.xpose.msra.mxu0 0
  %516 = vmatprep.subr.bf16.mxu0 0
  %517 = vmatpush1.bf16.xpose.msra.mxu0 0
  %518 = vmatprep.subr.bf16.mxu0 0
  %519 = vmatpush1.bf16.xpose.msra.mxu0 0
  %520 = vmatprep.subr.bf16.mxu0 0
  %521 = vmatpush1.bf16.xpose.msra.mxu0 0
  %522 = vmatprep.subr.bf16.mxu0 0
  %523 = vmatpush1.bf16.xpose.msra.mxu0 0
  %524 = vmatprep.subr.bf16.mxu0 0
  %525 = vmatpush1.bf16.xpose.msra.mxu0 0
  %526 = vmatprep.subr.bf16.mxu0 0
  %527 = vmatpush1.bf16.xpose.msra.mxu0 0
  %528 = vmatprep.subr.bf16.mxu0 0
  %529 = vmatpush1.bf16.xpose.msra.mxu0 0
  %530 = vmatprep.subr.bf16.mxu0 0
  %531 = vmatpush1.bf16.xpose.msra.mxu0 0
  %532 = vmatprep.mubr.bf16.mxu0 0
  %533 = vmatmul.mubr.bf16.gmra.mrb[0].mxu0 %v495
  %v534 = vpop.f32.mrb[0].mxu0
  %v535 = vadd.f32 0.0, %v534
  %v536 = vpop.f32.mrb[0].mxu0
  %v537 = vpop.f32.mrb[0].mxu0
  %v538 = vpop.f32.mrb[0].mxu0
  %539 = vdwg.mxu0
  %541 = vrot.lane.b32.xlu0 %v187, 96
  %v542 = vpop.permute.xlu0 %541
  %v544 = vsel %vm199, %v187, 0
  %v547 = vsel %vm199, %v542, 0
  %549 = vmatprep.subr.bf16.mxu0 0
  %550 = vmatpush1.bf16.xpose.msra.mxu0 %v547
  %551 = vmatprep.subr.bf16.mxu0 0
  %552 = vmatpush1.bf16.xpose.msra.mxu0 0
  %553 = vmatprep.subr.bf16.mxu0 0
  %554 = vmatpush1.bf16.xpose.msra.mxu0 0
  %555 = vmatprep.subr.bf16.mxu0 0
  %556 = vmatpush1.bf16.xpose.msra.mxu0 0
  %557 = vmatprep.subr.bf16.mxu0 0
  %558 = vmatpush1.bf16.xpose.msra.mxu0 0
  %559 = vmatprep.subr.bf16.mxu0 0
  %560 = vmatpush1.bf16.xpose.msra.mxu0 0
  %561 = vmatprep.subr.bf16.mxu0 0
  %562 = vmatpush1.bf16.xpose.msra.mxu0 0
  %563 = vmatprep.subr.bf16.mxu0 0
  %564 = vmatpush1.bf16.xpose.msra.mxu0 0
  %565 = vmatprep.subr.bf16.mxu0 0
  %566 = vmatpush1.bf16.xpose.msra.mxu0 0
  %567 = vmatprep.subr.bf16.mxu0 0
  %568 = vmatpush1.bf16.xpose.msra.mxu0 0
  %569 = vmatprep.subr.bf16.mxu0 0
  %570 = vmatpush1.bf16.xpose.msra.mxu0 0
  %571 = vmatprep.subr.bf16.mxu0 0
  %572 = vmatpush1.bf16.xpose.msra.mxu0 0
  %573 = vmatprep.subr.bf16.mxu0 0
  %574 = vmatpush1.bf16.xpose.msra.mxu0 0
  %575 = vmatprep.subr.bf16.mxu0 0
  %576 = vmatpush1.bf16.xpose.msra.mxu0 0
  %577 = vmatprep.subr.bf16.mxu0 0
  %578 = vmatpush1.bf16.xpose.msra.mxu0 0
  %579 = vmatprep.subr.bf16.mxu0 0
  %580 = vmatpush1.bf16.xpose.msra.mxu0 0
  %581 = vmatprep.mubr.bf16.mxu0 0
  %582 = vmatmul.mubr.bf16.gmra.mrb[0].mxu0 %v544
  %v583 = vpop.f32.mrb[0].mxu0
  %v584 = vadd.f32 0.0, %v583
  %v585 = vpop.f32.mrb[0].mxu0
  %v586 = vpop.f32.mrb[0].mxu0
  %v587 = vpop.f32.mrb[0].mxu0
  %588 = vdwg.mxu0
  %590 = vrot.lane.b32.xlu0 %v188, 96
  %v591 = vpop.permute.xlu0 %590
  %v593 = vsel %vm199, %v188, 0
  %v596 = vsel %vm199, %v591, 0
  %598 = vmatprep.subr.bf16.mxu0 0
  %599 = vmatpush1.bf16.xpose.msra.mxu0 %v596
  %600 = vmatprep.subr.bf16.mxu0 0
  %601 = vmatpush1.bf16.xpose.msra.mxu0 0
  %602 = vmatprep.subr.bf16.mxu0 0
  %603 = vmatpush1.bf16.xpose.msra.mxu0 0
  %604 = vmatprep.subr.bf16.mxu0 0
  %605 = vmatpush1.bf16.xpose.msra.mxu0 0
  %606 = vmatprep.subr.bf16.mxu0 0
  %607 = vmatpush1.bf16.xpose.msra.mxu0 0
  %608 = vmatprep.subr.bf16.mxu0 0
  %609 = vmatpush1.bf16.xpose.msra.mxu0 0
  %610 = vmatprep.subr.bf16.mxu0 0
  %611 = vmatpush1.bf16.xpose.msra.mxu0 0
  %612 = vmatprep.subr.bf16.mxu0 0
  %613 = vmatpush1.bf16.xpose.msra.mxu0 0
  %614 = vmatprep.subr.bf16.mxu0 0
  %615 = vmatpush1.bf16.xpose.msra.mxu0 0
  %616 = vmatprep.subr.bf16.mxu0 0
  %617 = vmatpush1.bf16.xpose.msra.mxu0 0
  %618 = vmatprep.subr.bf16.mxu0 0
  %619 = vmatpush1.bf16.xpose.msra.mxu0 0
  %620 = vmatprep.subr.bf16.mxu0 0
  %621 = vmatpush1.bf16.xpose.msra.mxu0 0
  %622 = vmatprep.subr.bf16.mxu0 0
  %623 = vmatpush1.bf16.xpose.msra.mxu0 0
  %624 = vmatprep.subr.bf16.mxu0 0
  %625 = vmatpush1.bf16.xpose.msra.mxu0 0
  %626 = vmatprep.subr.bf16.mxu0 0
  %627 = vmatpush1.bf16.xpose.msra.mxu0 0
  %628 = vmatprep.subr.bf16.mxu0 0
  %629 = vmatpush1.bf16.xpose.msra.mxu0 0
  %630 = vmatprep.mubr.bf16.mxu0 0
  %631 = vmatmul.mubr.bf16.gmra.mrb[0].mxu0 %v593
  %v632 = vpop.f32.mrb[0].mxu0
  %v633 = vadd.f32 0.0, %v632
  %v634 = vpop.f32.mrb[0].mxu0
  %v635 = vpop.f32.mrb[0].mxu0
  %v636 = vpop.f32.mrb[0].mxu0
  %637 = vdwg.mxu0
  %639 = vrot.lane.b32.xlu0 %v189, 96
  %v640 = vpop.permute.xlu0 %639
  %v642 = vsel %vm199, %v189, 0
  %v645 = vsel %vm199, %v640, 0
  %647 = vmatprep.subr.bf16.mxu0 0
  %648 = vmatpush1.bf16.xpose.msra.mxu0 %v645
  %649 = vmatprep.subr.bf16.mxu0 0
  %650 = vmatpush1.bf16.xpose.msra.mxu0 0
  %651 = vmatprep.subr.bf16.mxu0 0
  %652 = vmatpush1.bf16.xpose.msra.mxu0 0
  %653 = vmatprep.subr.bf16.mxu0 0
  %654 = vmatpush1.bf16.xpose.msra.mxu0 0
  %655 = vmatprep.subr.bf16.mxu0 0
  %656 = vmatpush1.bf16.xpose.msra.mxu0 0
  %657 = vmatprep.subr.bf16.mxu0 0
  %658 = vmatpush1.bf16.xpose.msra.mxu0 0
  %659 = vmatprep.subr.bf16.mxu0 0
  %660 = vmatpush1.bf16.xpose.msra.mxu0 0
  %661 = vmatprep.subr.bf16.mxu0 0
  %662 = vmatpush1.bf16.xpose.msra.mxu0 0
  %663 = vmatprep.subr.bf16.mxu0 0
  %664 = vmatpush1.bf16.xpose.msra.mxu0 0
  %665 = vmatprep.subr.bf16.mxu0 0
  %666 = vmatpush1.bf16.xpose.msra.mxu0 0
  %667 = vmatprep.subr.bf16.mxu0 0
  %668 = vmatpush1.bf16.xpose.msra.mxu0 0
  %669 = vmatprep.subr.bf16.mxu0 0
  %670 = vmatpush1.bf16.xpose.msra.mxu0 0
  %671 = vmatprep.subr.bf16.mxu0 0
  %672 = vmatpush1.bf16.xpose.msra.mxu0 0
  %673 = vmatprep.subr.bf16.mxu0 0
  %674 = vmatpush1.bf16.xpose.msra.mxu0 0
  %675 = vmatprep.subr.bf16.mxu0 0
  %676 = vmatpush1.bf16.xpose.msra.mxu0 0
  %677 = vmatprep.subr.bf16.mxu0 0
  %678 = vmatpush1.bf16.xpose.msra.mxu0 0
  %679 = vmatprep.mubr.bf16.mxu0 0
  %680 = vmatmul.mubr.bf16.gmra.mrb[0].mxu0 %v642
  %v681 = vpop.f32.mrb[0].mxu0
  %v682 = vadd.f32 0.0, %v681
  %v683 = vpop.f32.mrb[0].mxu0
  %v684 = vpop.f32.mrb[0].mxu0
  %v685 = vpop.f32.mrb[0].mxu0
  %686 = vdwg.mxu0
  %688 = vrot.lane.b32.xlu0 %v190, 96
  %v689 = vpop.permute.xlu0 %688
  %v691 = vsel %vm199, %v190, 0
  %v694 = vsel %vm199, %v689, 0
  %696 = vmatprep.subr.bf16.mxu0 0
  %697 = vmatpush1.bf16.xpose.msra.mxu0 %v694
  %698 = vmatprep.subr.bf16.mxu0 0
  %699 = vmatpush1.bf16.xpose.msra.mxu0 0
  %700 = vmatprep.subr.bf16.mxu0 0
  %701 = vmatpush1.bf16.xpose.msra.mxu0 0
  %702 = vmatprep.subr.bf16.mxu0 0
  %703 = vmatpush1.bf16.xpose.msra.mxu0 0
  %704 = vmatprep.subr.bf16.mxu0 0
  %705 = vmatpush1.bf16.xpose.msra.mxu0 0
  %706 = vmatprep.subr.bf16.mxu0 0
  %707 = vmatpush1.bf16.xpose.msra.mxu0 0
  %708 = vmatprep.subr.bf16.mxu0 0
  %709 = vmatpush1.bf16.xpose.msra.mxu0 0
  %710 = vmatprep.subr.bf16.mxu0 0
  %711 = vmatpush1.bf16.xpose.msra.mxu0 0
  %712 = vmatprep.subr.bf16.mxu0 0
  %713 = vmatpush1.bf16.xpose.msra.mxu0 0
  %714 = vmatprep.subr.bf16.mxu0 0
  %715 = vmatpush1.bf16.xpose.msra.mxu0 0
  %716 = vmatprep.subr.bf16.mxu0 0
  %717 = vmatpush1.bf16.xpose.msra.mxu0 0
  %718 = vmatprep.subr.bf16.mxu0 0
  %719 = vmatpush1.bf16.xpose.msra.mxu0 0
  %720 = vmatprep.subr.bf16.mxu0 0
  %721 = vmatpush1.bf16.xpose.msra.mxu0 0
  %722 = vmatprep.subr.bf16.mxu0 0
  %723 = vmatpush1.bf16.xpose.msra.mxu0 0
  %724 = vmatprep.subr.bf16.mxu0 0
  %725 = vmatpush1.bf16.xpose.msra.mxu0 0
  %726 = vmatprep.subr.bf16.mxu0 0
  %727 = vmatpush1.bf16.xpose.msra.mxu0 0
  %728 = vmatprep.mubr.bf16.mxu0 0
  %729 = vmatmul.mubr.bf16.gmra.mrb[0].mxu0 %v691
  %v730 = vpop.f32.mrb[0].mxu0
  %v731 = vadd.f32 0.0, %v730
  %v732 = vpop.f32.mrb[0].mxu0
  %v733 = vpop.f32.mrb[0].mxu0
  %v734 = vpop.f32.mrb[0].mxu0
  %735 = vdwg.mxu0
  %737 = vrot.lane.b32.xlu0 %v191, 96
  %v738 = vpop.permute.xlu0 %737
  %v740 = vsel %vm199, %v191, 0
  %v743 = vsel %vm199, %v738, 0
  %745 = vmatprep.subr.bf16.mxu0 0
  %746 = vmatpush1.bf16.xpose.msra.mxu0 %v743
  %747 = vmatprep.subr.bf16.mxu0 0
  %748 = vmatpush1.bf16.xpose.msra.mxu0 0
  %749 = vmatprep.subr.bf16.mxu0 0
  %750 = vmatpush1.bf16.xpose.msra.mxu0 0
  %751 = vmatprep.subr.bf16.mxu0 0
  %752 = vmatpush1.bf16.xpose.msra.mxu0 0
  %753 = vmatprep.subr.bf16.mxu0 0
  %754 = vmatpush1.bf16.xpose.msra.mxu0 0
  %755 = vmatprep.subr.bf16.mxu0 0
  %756 = vmatpush1.bf16.xpose.msra.mxu0 0
  %757 = vmatprep.subr.bf16.mxu0 0
  %758 = vmatpush1.bf16.xpose.msra.mxu0 0
  %759 = vmatprep.subr.bf16.mxu0 0
  %760 = vmatpush1.bf16.xpose.msra.mxu0 0
  %761 = vmatprep.subr.bf16.mxu0 0
  %762 = vmatpush1.bf16.xpose.msra.mxu0 0
  %763 = vmatprep.subr.bf16.mxu0 0
  %764 = vmatpush1.bf16.xpose.msra.mxu0 0
  %765 = vmatprep.subr.bf16.mxu0 0
  %766 = vmatpush1.bf16.xpose.msra.mxu0 0
  %767 = vmatprep.subr.bf16.mxu0 0
  %768 = vmatpush1.bf16.xpose.msra.mxu0 0
  %769 = vmatprep.subr.bf16.mxu0 0
  %770 = vmatpush1.bf16.xpose.msra.mxu0 0
  %771 = vmatprep.subr.bf16.mxu0 0
  %772 = vmatpush1.bf16.xpose.msra.mxu0 0
  %773 = vmatprep.subr.bf16.mxu0 0
  %774 = vmatpush1.bf16.xpose.msra.mxu0 0
  %775 = vmatprep.subr.bf16.mxu0 0
  %776 = vmatpush1.bf16.xpose.msra.mxu0 0
  %777 = vmatprep.mubr.bf16.mxu0 0
  %778 = vmatmul.mubr.bf16.gmra.mrb[0].mxu0 %v740
  %v779 = vpop.f32.mrb[0].mxu0
  %v780 = vadd.f32 0.0, %v779
  %v781 = vpop.f32.mrb[0].mxu0
  %v782 = vpop.f32.mrb[0].mxu0
  %v783 = vpop.f32.mrb[0].mxu0
  %784 = vdwg.mxu0
  %786 = vrot.lane.b32.xlu0 %v192, 96
  %v787 = vpop.permute.xlu0 %786
  %v789 = vsel %vm199, %v192, 0
  %v792 = vsel %vm199, %v787, 0
  %794 = vmatprep.subr.bf16.mxu0 0
  %795 = vmatpush1.bf16.xpose.msra.mxu0 %v792
  %796 = vmatprep.subr.bf16.mxu0 0
  %797 = vmatpush1.bf16.xpose.msra.mxu0 0
  %798 = vmatprep.subr.bf16.mxu0 0
  %799 = vmatpush1.bf16.xpose.msra.mxu0 0
  %800 = vmatprep.subr.bf16.mxu0 0
  %801 = vmatpush1.bf16.xpose.msra.mxu0 0
  %802 = vmatprep.subr.bf16.mxu0 0
  %803 = vmatpush1.bf16.xpose.msra.mxu0 0
  %804 = vmatprep.subr.bf16.mxu0 0
  %805 = vmatpush1.bf16.xpose.msra.mxu0 0
  %806 = vmatprep.subr.bf16.mxu0 0
  %807 = vmatpush1.bf16.xpose.msra.mxu0 0
  %808 = vmatprep.subr.bf16.mxu0 0
  %809 = vmatpush1.bf16.xpose.msra.mxu0 0
  %810 = vmatprep.subr.bf16.mxu0 0
  %811 = vmatpush1.bf16.xpose.msra.mxu0 0
  %812 = vmatprep.subr.bf16.mxu0 0
  %813 = vmatpush1.bf16.xpose.msra.mxu0 0
  %814 = vmatprep.subr.bf16.mxu0 0
  %815 = vmatpush1.bf16.xpose.msra.mxu0 0
  %816 = vmatprep.subr.bf16.mxu0 0
  %817 = vmatpush1.bf16.xpose.msra.mxu0 0
  %818 = vmatprep.subr.bf16.mxu0 0
  %819 = vmatpush1.bf16.xpose.msra.mxu0 0
  %820 = vmatprep.subr.bf16.mxu0 0
  %821 = vmatpush1.bf16.xpose.msra.mxu0 0
  %822 = vmatprep.subr.bf16.mxu0 0
  %823 = vmatpush1.bf16.xpose.msra.mxu0 0
  %824 = vmatprep.subr.bf16.mxu0 0
  %825 = vmatpush1.bf16.xpose.msra.mxu0 0
  %826 = vmatprep.mubr.bf16.mxu0 0
  %827 = vmatmul.mubr.bf16.gmra.mrb[0].mxu0 %v789
  %v828 = vpop.f32.mrb[0].mxu0
  %v829 = vadd.f32 0.0, %v828
  %v830 = vpop.f32.mrb[0].mxu0
  %v831 = vpop.f32.mrb[0].mxu0
  %v832 = vpop.f32.mrb[0].mxu0
  %833 = vdwg.mxu0
  %835 = vrot.lane.b32.xlu0 %v193, 96
  %v836 = vpop.permute.xlu0 %835
  %v838 = vsel %vm199, %v193, 0
  %v841 = vsel %vm199, %v836, 0
  %843 = vmatprep.subr.bf16.mxu0 0
  %844 = vmatpush1.bf16.xpose.msra.mxu0 %v841
  %845 = vmatprep.subr.bf16.mxu0 0
  %846 = vmatpush1.bf16.xpose.msra.mxu0 0
  %847 = vmatprep.subr.bf16.mxu0 0
  %848 = vmatpush1.bf16.xpose.msra.mxu0 0
  %849 = vmatprep.subr.bf16.mxu0 0
  %850 = vmatpush1.bf16.xpose.msra.mxu0 0
  %851 = vmatprep.subr.bf16.mxu0 0
  %852 = vmatpush1.bf16.xpose.msra.mxu0 0
  %853 = vmatprep.subr.bf16.mxu0 0
  %854 = vmatpush1.bf16.xpose.msra.mxu0 0
  %855 = vmatprep.subr.bf16.mxu0 0
  %856 = vmatpush1.bf16.xpose.msra.mxu0 0
  %857 = vmatprep.subr.bf16.mxu0 0
  %858 = vmatpush1.bf16.xpose.msra.mxu0 0
  %859 = vmatprep.subr.bf16.mxu0 0
  %860 = vmatpush1.bf16.xpose.msra.mxu0 0
  %861 = vmatprep.subr.bf16.mxu0 0
  %862 = vmatpush1.bf16.xpose.msra.mxu0 0
  %863 = vmatprep.subr.bf16.mxu0 0
  %864 = vmatpush1.bf16.xpose.msra.mxu0 0
  %865 = vmatprep.subr.bf16.mxu0 0
  %866 = vmatpush1.bf16.xpose.msra.mxu0 0
  %867 = vmatprep.subr.bf16.mxu0 0
  %868 = vmatpush1.bf16.xpose.msra.mxu0 0
  %869 = vmatprep.subr.bf16.mxu0 0
  %870 = vmatpush1.bf16.xpose.msra.mxu0 0
  %871 = vmatprep.subr.bf16.mxu0 0
  %872 = vmatpush1.bf16.xpose.msra.mxu0 0
  %873 = vmatprep.subr.bf16.mxu0 0
  %874 = vmatpush1.bf16.xpose.msra.mxu0 0
  %875 = vmatprep.mubr.bf16.mxu0 0
  %876 = vmatmul.mubr.bf16.gmra.mrb[0].mxu0 %v838
  %v877 = vpop.f32.mrb[0].mxu0
  %v878 = vadd.f32 0.0, %v877
  %v879 = vpop.f32.mrb[0].mxu0
  %v880 = vpop.f32.mrb[0].mxu0
  %v881 = vpop.f32.mrb[0].mxu0
  %882 = vdwg.mxu0
  %884 = vrot.lane.b32.xlu0 %v194, 96
  %v885 = vpop.permute.xlu0 %884
  %v887 = vsel %vm199, %v194, 0
  %v890 = vsel %vm199, %v885, 0
  %892 = vmatprep.subr.bf16.mxu0 0
  %893 = vmatpush1.bf16.xpose.msra.mxu0 %v890
  %894 = vmatprep.subr.bf16.mxu0 0
  %895 = vmatpush1.bf16.xpose.msra.mxu0 0
  %896 = vmatprep.subr.bf16.mxu0 0
  %897 = vmatpush1.bf16.xpose.msra.mxu0 0
  %898 = vmatprep.subr.bf16.mxu0 0
  %899 = vmatpush1.bf16.xpose.msra.mxu0 0
  %900 = vmatprep.subr.bf16.mxu0 0
  %901 = vmatpush1.bf16.xpose.msra.mxu0 0
  %902 = vmatprep.subr.bf16.mxu0 0
  %903 = vmatpush1.bf16.xpose.msra.mxu0 0
  %904 = vmatprep.subr.bf16.mxu0 0
  %905 = vmatpush1.bf16.xpose.msra.mxu0 0
  %906 = vmatprep.subr.bf16.mxu0 0
  %907 = vmatpush1.bf16.xpose.msra.mxu0 0
  %908 = vmatprep.subr.bf16.mxu0 0
  %909 = vmatpush1.bf16.xpose.msra.mxu0 0
  %910 = vmatprep.subr.bf16.mxu0 0
  %911 = vmatpush1.bf16.xpose.msra.mxu0 0
  %912 = vmatprep.subr.bf16.mxu0 0
  %913 = vmatpush1.bf16.xpose.msra.mxu0 0
  %914 = vmatprep.subr.bf16.mxu0 0
  %915 = vmatpush1.bf16.xpose.msra.mxu0 0
  %916 = vmatprep.subr.bf16.mxu0 0
  %917 = vmatpush1.bf16.xpose.msra.mxu0 0
  %918 = vmatprep.subr.bf16.mxu0 0
  %919 = vmatpush1.bf16.xpose.msra.mxu0 0
  %920 = vmatprep.subr.bf16.mxu0 0
  %921 = vmatpush1.bf16.xpose.msra.mxu0 0
  %922 = vmatprep.subr.bf16.mxu0 0
  %923 = vmatpush1.bf16.xpose.msra.mxu0 0
  %924 = vmatprep.mubr.bf16.mxu0 0
  %925 = vmatmul.mubr.bf16.gmra.mrb[0].mxu0 %v887
  %v926 = vpop.f32.mrb[0].mxu0
  %v927 = vadd.f32 0.0, %v926
  %v928 = vpop.f32.mrb[0].mxu0
  %v929 = vpop.f32.mrb[0].mxu0
  %v930 = vpop.f32.mrb[0].mxu0
  %931 = vdwg.mxu0
  %933 = vrot.lane.b32.xlu0 %v195, 96
  %v934 = vpop.permute.xlu0 %933
  %v936 = vsel %vm199, %v195, 0
  %v939 = vsel %vm199, %v934, 0
  %941 = vmatprep.subr.bf16.mxu0 0
  %942 = vmatpush1.bf16.xpose.msra.mxu0 %v939
  %943 = vmatprep.subr.bf16.mxu0 0
  %944 = vmatpush1.bf16.xpose.msra.mxu0 0
  %945 = vmatprep.subr.bf16.mxu0 0
  %946 = vmatpush1.bf16.xpose.msra.mxu0 0
  %947 = vmatprep.subr.bf16.mxu0 0
  %948 = vmatpush1.bf16.xpose.msra.mxu0 0
  %949 = vmatprep.subr.bf16.mxu0 0
  %950 = vmatpush1.bf16.xpose.msra.mxu0 0
  %951 = vmatprep.subr.bf16.mxu0 0
  %952 = vmatpush1.bf16.xpose.msra.mxu0 0
  %953 = vmatprep.subr.bf16.mxu0 0
  %954 = vmatpush1.bf16.xpose.msra.mxu0 0
  %955 = vmatprep.subr.bf16.mxu0 0
  %956 = vmatpush1.bf16.xpose.msra.mxu0 0
  %957 = vmatprep.subr.bf16.mxu0 0
  %958 = vmatpush1.bf16.xpose.msra.mxu0 0
  %959 = vmatprep.subr.bf16.mxu0 0
  %960 = vmatpush1.bf16.xpose.msra.mxu0 0
  %961 = vmatprep.subr.bf16.mxu0 0
  %962 = vmatpush1.bf16.xpose.msra.mxu0 0
  %963 = vmatprep.subr.bf16.mxu0 0
  %964 = vmatpush1.bf16.xpose.msra.mxu0 0
  %965 = vmatprep.subr.bf16.mxu0 0
  %966 = vmatpush1.bf16.xpose.msra.mxu0 0
  %967 = vmatprep.subr.bf16.mxu0 0
  %968 = vmatpush1.bf16.xpose.msra.mxu0 0
  %969 = vmatprep.subr.bf16.mxu0 0
  %970 = vmatpush1.bf16.xpose.msra.mxu0 0
  %971 = vmatprep.subr.bf16.mxu0 0
  %972 = vmatpush1.bf16.xpose.msra.mxu0 0
  %973 = vmatprep.mubr.bf16.mxu0 0
  %974 = vmatmul.mubr.bf16.gmra.mrb[0].mxu0 %v936
  %v975 = vpop.f32.mrb[0].mxu0
  %v976 = vadd.f32 0.0, %v975
  %v977 = vpop.f32.mrb[0].mxu0
  %v978 = vpop.f32.mrb[0].mxu0
  %v979 = vpop.f32.mrb[0].mxu0
  %980 = vdwg.mxu0
  %v981 = vsel %vm199, %v241, -inf
  %982 = vmax.xlane.f32.xlu0 %v981
  %v983 = vpop.xlane.xlu0 %982
  %v984 = vsel %vm199, %v290, -inf
  %985 = vmax.xlane.f32.xlu0 %v984
  %v986 = vpop.xlane.xlu0 %985
  %v987 = vsel %vm199, %v339, -inf
  %988 = vmax.xlane.f32.xlu0 %v987
  %v989 = vpop.xlane.xlu0 %988
  %v990 = vsel %vm199, %v388, -inf
  %991 = vmax.xlane.f32.xlu0 %v990
  %v992 = vpop.xlane.xlu0 %991
  %v993 = vsel %vm199, %v437, -inf
  %994 = vmax.xlane.f32.xlu0 %v993
  %v995 = vpop.xlane.xlu0 %994
  %v996 = vsel %vm199, %v486, -inf
  %997 = vmax.xlane.f32.xlu0 %v996
  %v998 = vpop.xlane.xlu0 %997
  %v999 = vsel %vm199, %v535, -inf
  %1000 = vmax.xlane.f32.xlu0 %v999
  %v1001 = vpop.xlane.xlu0 %1000
  %v1002 = vsel %vm199, %v584, -inf
  %1003 = vmax.xlane.f32.xlu0 %v1002
  %v1004 = vpop.xlane.xlu0 %1003
  %v1005 = vsel %vm199, %v633, -inf
  %1006 = vmax.xlane.f32.xlu0 %v1005
  %v1007 = vpop.xlane.xlu0 %1006
  %v1008 = vsel %vm199, %v682, -inf
  %1009 = vmax.xlane.f32.xlu0 %v1008
  %v1010 = vpop.xlane.xlu0 %1009
  %v1011 = vsel %vm199, %v731, -inf
  %1012 = vmax.xlane.f32.xlu0 %v1011
  %v1013 = vpop.xlane.xlu0 %1012
  %v1014 = vsel %vm199, %v780, -inf
  %1015 = vmax.xlane.f32.xlu0 %v1014
  %v1016 = vpop.xlane.xlu0 %1015
  %v1017 = vsel %vm199, %v829, -inf
  %1018 = vmax.xlane.f32.xlu0 %v1017
  %v1019 = vpop.xlane.xlu0 %1018
  %v1020 = vsel %vm199, %v878, -inf
  %1021 = vmax.xlane.f32.xlu0 %v1020
  %v1022 = vpop.xlane.xlu0 %1021
  %v1023 = vsel %vm199, %v927, -inf
  %1024 = vmax.xlane.f32.xlu0 %v1023
  %v1025 = vpop.xlane.xlu0 %1024
  %v1026 = vsel %vm199, %v976, -inf
  %1027 = vmax.xlane.f32.xlu0 %v1026
  %v1028 = vpop.xlane.xlu0 %1027
  %v1029 = vsub.f32 %v241, %v983
  %v1030 = vsub.f32 %v290, %v986
  %v1031 = vsub.f32 %v339, %v989
  %v1032 = vsub.f32 %v388, %v992
  %v1033 = vsub.f32 %v437, %v995
  %v1034 = vsub.f32 %v486, %v998
  %v1035 = vsub.f32 %v535, %v1001
  %v1036 = vsub.f32 %v584, %v1004
  %v1037 = vsub.f32 %v633, %v1007
  %v1038 = vsub.f32 %v682, %v1010
  %v1039 = vsub.f32 %v731, %v1013
  %v1040 = vsub.f32 %v780, %v1016
  %v1041 = vsub.f32 %v829, %v1019
  %v1042 = vsub.f32 %v878, %v1022
  %v1043 = vsub.f32 %v927, %v1025
  %v1044 = vsub.f32 %v976, %v1028
  %v1045 = vmul.f32 %v1029, 1.442695
  %v1046 = vpow.pop %v1045
  %v1047 = vmul.f32 %v1030, 1.442695
  %v1048 = vpow.pop %v1047
  %v1049 = vmul.f32 %v1031, 1.442695
  %v1050 = vpow.pop %v1049
  %v1051 = vmul.f32 %v1032, 1.442695
  %v1052 = vpow.pop %v1051
  %v1053 = vmul.f32 %v1033, 1.442695
  %v1054 = vpow.pop %v1053
  %v1055 = vmul.f32 %v1034, 1.442695
  %v1056 = vpow.pop %v1055
  %v1057 = vmul.f32 %v1035, 1.442695
  %v1058 = vpow.pop %v1057
  %v1059 = vmul.f32 %v1036, 1.442695
  %v1060 = vpow.pop %v1059
  %v1061 = vmul.f32 %v1037, 1.442695
  %v1062 = vpow.pop %v1061
  %v1063 = vmul.f32 %v1038, 1.442695
  %v1064 = vpow.pop %v1063
  %v1065 = vmul.f32 %v1039, 1.442695
  %v1066 = vpow.pop %v1065
  %v1067 = vmul.f32 %v1040, 1.442695
  %v1068 = vpow.pop %v1067
  %v1069 = vmul.f32 %v1041, 1.442695
  %v1070 = vpow.pop %v1069
  %v1071 = vmul.f32 %v1042, 1.442695
  %v1072 = vpow.pop %v1071
  %v1073 = vmul.f32 %v1043, 1.442695
  %v1074 = vpow.pop %v1073
  %v1075 = vmul.f32 %v1044, 1.442695
  %v1076 = vpow.pop %v1075
  %v1077 = vsel %vm199, %v1046, 0.0
  %1078 = vadd.xlane.f32.xlu0 %v1077
  %v1079 = vpop.xlane.xlu0 %1078
  %v1080 = vsel %vm199, %v1048, 0.0
  %1081 = vadd.xlane.f32.xlu0 %v1080
  %v1082 = vpop.xlane.xlu0 %1081
  %v1083 = vsel %vm199, %v1050, 0.0
  %1084 = vadd.xlane.f32.xlu0 %v1083
  %v1085 = vpop.xlane.xlu0 %1084
  %v1086 = vsel %vm199, %v1052, 0.0
  %1087 = vadd.xlane.f32.xlu0 %v1086
  %v1088 = vpop.xlane.xlu0 %1087
  %v1089 = vsel %vm199, %v1054, 0.0
  %1090 = vadd.xlane.f32.xlu0 %v1089
  %v1091 = vpop.xlane.xlu0 %1090
  %v1092 = vsel %vm199, %v1056, 0.0
  %1093 = vadd.xlane.f32.xlu0 %v1092
  %v1094 = vpop.xlane.xlu0 %1093
  %v1095 = vsel %vm199, %v1058, 0.0
  %1096 = vadd.xlane.f32.xlu0 %v1095
  %v1097 = vpop.xlane.xlu0 %1096
  %v1098 = vsel %vm199, %v1060, 0.0
  %1099 = vadd.xlane.f32.xlu0 %v1098
  %v1100 = vpop.xlane.xlu0 %1099
  %v1101 = vsel %vm199, %v1062, 0.0
  %1102 = vadd.xlane.f32.xlu0 %v1101
  %v1103 = vpop.xlane.xlu0 %1102
  %v1104 = vsel %vm199, %v1064, 0.0
  %1105 = vadd.xlane.f32.xlu0 %v1104
  %v1106 = vpop.xlane.xlu0 %1105
  %v1107 = vsel %vm199, %v1066, 0.0
  %1108 = vadd.xlane.f32.xlu0 %v1107
  %v1109 = vpop.xlane.xlu0 %1108
  %v1110 = vsel %vm199, %v1068, 0.0
  %1111 = vadd.xlane.f32.xlu0 %v1110
  %v1112 = vpop.xlane.xlu0 %1111
  %v1113 = vsel %vm199, %v1070, 0.0
  %1114 = vadd.xlane.f32.xlu0 %v1113
  %v1115 = vpop.xlane.xlu0 %1114
  %v1116 = vsel %vm199, %v1072, 0.0
  %1117 = vadd.xlane.f32.xlu0 %v1116
  %v1118 = vpop.xlane.xlu0 %1117
  %v1119 = vsel %vm199, %v1074, 0.0
  %1120 = vadd.xlane.f32.xlu0 %v1119
  %v1121 = vpop.xlane.xlu0 %1120
  %v1122 = vsel %vm199, %v1076, 0.0
  %1123 = vadd.xlane.f32.xlu0 %v1122
  %v1124 = vpop.xlane.xlu0 %1123
  %v1125 = vrcp.pop %v1079
  %v1126 = vrcp.pop %v1082
  %v1127 = vrcp.pop %v1085
  %v1128 = vrcp.pop %v1088
  %v1129 = vrcp.pop %v1091
  %v1130 = vrcp.pop %v1094
  %v1131 = vrcp.pop %v1097
  %v1132 = vrcp.pop %v1100
  %v1133 = vrcp.pop %v1103
  %v1134 = vrcp.pop %v1106
  %v1135 = vrcp.pop %v1109
  %v1136 = vrcp.pop %v1112
  %v1137 = vrcp.pop %v1115
  %v1138 = vrcp.pop %v1118
  %v1139 = vrcp.pop %v1121
  %v1140 = vrcp.pop %v1124
  %v1141 = vmul.f32 %v1046, %v1125
  %v1142 = vmul.f32 %v1048, %v1126
  %v1143 = vmul.f32 %v1050, %v1127
  %v1144 = vmul.f32 %v1052, %v1128
  %v1145 = vmul.f32 %v1054, %v1129
  %v1146 = vmul.f32 %v1056, %v1130
  %v1147 = vmul.f32 %v1058, %v1131
  %v1148 = vmul.f32 %v1060, %v1132
  %v1149 = vmul.f32 %v1062, %v1133
  %v1150 = vmul.f32 %v1064, %v1134
  %v1151 = vmul.f32 %v1066, %v1135
  %v1152 = vmul.f32 %v1068, %v1136
  %v1153 = vmul.f32 %v1070, %v1137
  %v1154 = vmul.f32 %v1072, %v1138
  %v1155 = vmul.f32 %v1074, %v1139
  %v1156 = vmul.f32 %v1076, %v1140
  %v1157 = vpack.c.bf16 %v1141, %v1141
  %v1158 = vpack.c.bf16 %v1142, %v1142
  %v1159 = vpack.c.bf16 %v1143, %v1143
  %v1160 = vpack.c.bf16 %v1144, %v1144
  %v1161 = vpack.c.bf16 %v1145, %v1145
  %v1162 = vpack.c.bf16 %v1146, %v1146
  %v1163 = vpack.c.bf16 %v1147, %v1147
  %v1164 = vpack.c.bf16 %v1148, %v1148
  %v1165 = vpack.c.bf16 %v1149, %v1149
  %v1166 = vpack.c.bf16 %v1150, %v1150
  %v1167 = vpack.c.bf16 %v1151, %v1151
  %v1168 = vpack.c.bf16 %v1152, %v1152
  %v1169 = vpack.c.bf16 %v1153, %v1153
  %v1170 = vpack.c.bf16 %v1154, %v1154
  %v1171 = vpack.c.bf16 %v1155, %v1155
  %v1172 = vpack.c.bf16 %v1156, %v1156
  %1173 = vrot.lane.b32.xlu0 %v180, 64
  %v1174 = vpop.permute.xlu0 %1173
  %v1176 = vsel %vm199, %v1157, 0
  %vm1178 = vcmask 1043456
  %v1180 = vsel %vm1178, %v1174, 0
  %1182 = vmatprep.subr.bf16.mxu0 0
  %1183 = vmatpush1.bf16.msra.mxu0 %v1180
  %1184 = vmatprep.subr.bf16.mxu0 0
  %1185 = vmatpush1.bf16.msra.mxu0 0
  %1186 = vmatprep.subr.bf16.mxu0 0
  %1187 = vmatpush1.bf16.msra.mxu0 0
  %1188 = vmatprep.subr.bf16.mxu0 0
  %1189 = vmatpush1.bf16.msra.mxu0 0
  %1190 = vmatprep.subr.bf16.mxu0 0
  %1191 = vmatpush1.bf16.msra.mxu0 0
  %1192 = vmatprep.subr.bf16.mxu0 0
  %1193 = vmatpush1.bf16.msra.mxu0 0
  %1194 = vmatprep.subr.bf16.mxu0 0
  %1195 = vmatpush1.bf16.msra.mxu0 0
  %1196 = vmatprep.subr.bf16.mxu0 0
  %1197 = vmatpush1.bf16.msra.mxu0 0
  %1198 = vmatprep.subr.bf16.mxu0 0
  %1199 = vmatpush1.bf16.msra.mxu0 0
  %1200 = vmatprep.subr.bf16.mxu0 0
  %1201 = vmatpush1.bf16.msra.mxu0 0
  %1202 = vmatprep.subr.bf16.mxu0 0
  %1203 = vmatpush1.bf16.msra.mxu0 0
  %1204 = vmatprep.subr.bf16.mxu0 0
  %1205 = vmatpush1.bf16.msra.mxu0 0
  %1206 = vmatprep.subr.bf16.mxu0 0
  %1207 = vmatpush1.bf16.msra.mxu0 0
  %1208 = vmatprep.subr.bf16.mxu0 0
  %1209 = vmatpush1.bf16.msra.mxu0 0
  %1210 = vmatprep.subr.bf16.mxu0 0
  %1211 = vmatpush1.bf16.msra.mxu0 0
  %1212 = vmatprep.subr.bf16.mxu0 0
  %1213 = vmatpush1.bf16.msra.mxu0 0
  %1214 = vmatprep.mubr.bf16.mxu0 0
  %1215 = vmatmul.mubr.bf16.gmra.mrb[0].mxu0 %v1176
  %v1216 = vpop.f32.mrb[0].mxu0
  %v1217 = vadd.f32 0.0, %v1216
  %v1218 = vpop.f32.mrb[0].mxu0
  %v1219 = vpop.f32.mrb[0].mxu0
  %v1220 = vpop.f32.mrb[0].mxu0
  %1221 = vdwg.mxu0
  %1222 = vrot.lane.b32.xlu0 %v181, 64
  %v1223 = vpop.permute.xlu0 %1222
  %v1225 = vsel %vm199, %v1158, 0
  %v1228 = vsel %vm1178, %v1223, 0
  %1230 = vmatprep.subr.bf16.mxu0 0
  %1231 = vmatpush1.bf16.msra.mxu0 %v1228
  %1232 = vmatprep.subr.bf16.mxu0 0
  %1233 = vmatpush1.bf16.msra.mxu0 0
  %1234 = vmatprep.subr.bf16.mxu0 0
  %1235 = vmatpush1.bf16.msra.mxu0 0
  %1236 = vmatprep.subr.bf16.mxu0 0
  %1237 = vmatpush1.bf16.msra.mxu0 0
  %1238 = vmatprep.subr.bf16.mxu0 0
  %1239 = vmatpush1.bf16.msra.mxu0 0
  %1240 = vmatprep.subr.bf16.mxu0 0
  %1241 = vmatpush1.bf16.msra.mxu0 0
  %1242 = vmatprep.subr.bf16.mxu0 0
  %1243 = vmatpush1.bf16.msra.mxu0 0
  %1244 = vmatprep.subr.bf16.mxu0 0
  %1245 = vmatpush1.bf16.msra.mxu0 0
  %1246 = vmatprep.subr.bf16.mxu0 0
  %1247 = vmatpush1.bf16.msra.mxu0 0
  %1248 = vmatprep.subr.bf16.mxu0 0
  %1249 = vmatpush1.bf16.msra.mxu0 0
  %1250 = vmatprep.subr.bf16.mxu0 0
  %1251 = vmatpush1.bf16.msra.mxu0 0
  %1252 = vmatprep.subr.bf16.mxu0 0
  %1253 = vmatpush1.bf16.msra.mxu0 0
  %1254 = vmatprep.subr.bf16.mxu0 0
  %1255 = vmatpush1.bf16.msra.mxu0 0
  %1256 = vmatprep.subr.bf16.mxu0 0
  %1257 = vmatpush1.bf16.msra.mxu0 0
  %1258 = vmatprep.subr.bf16.mxu0 0
  %1259 = vmatpush1.bf16.msra.mxu0 0
  %1260 = vmatprep.subr.bf16.mxu0 0
  %1261 = vmatpush1.bf16.msra.mxu0 0
  %1262 = vmatprep.mubr.bf16.mxu0 0
  %1263 = vmatmul.mubr.bf16.gmra.mrb[0].mxu0 %v1225
  %v1264 = vpop.f32.mrb[0].mxu0
  %v1265 = vadd.f32 0.0, %v1264
  %v1266 = vpop.f32.mrb[0].mxu0
  %v1267 = vpop.f32.mrb[0].mxu0
  %v1268 = vpop.f32.mrb[0].mxu0
  %1269 = vdwg.mxu0
  %1270 = vrot.lane.b32.xlu0 %v182, 64
  %v1271 = vpop.permute.xlu0 %1270
  %v1273 = vsel %vm199, %v1159, 0
  %v1276 = vsel %vm1178, %v1271, 0
  %1278 = vmatprep.subr.bf16.mxu0 0
  %1279 = vmatpush1.bf16.msra.mxu0 %v1276
  %1280 = vmatprep.subr.bf16.mxu0 0
  %1281 = vmatpush1.bf16.msra.mxu0 0
  %1282 = vmatprep.subr.bf16.mxu0 0
  %1283 = vmatpush1.bf16.msra.mxu0 0
  %1284 = vmatprep.subr.bf16.mxu0 0
  %1285 = vmatpush1.bf16.msra.mxu0 0
  %1286 = vmatprep.subr.bf16.mxu0 0
  %1287 = vmatpush1.bf16.msra.mxu0 0
  %1288 = vmatprep.subr.bf16.mxu0 0
  %1289 = vmatpush1.bf16.msra.mxu0 0
  %1290 = vmatprep.subr.bf16.mxu0 0
  %1291 = vmatpush1.bf16.msra.mxu0 0
  %1292 = vmatprep.subr.bf16.mxu0 0
  %1293 = vmatpush1.bf16.msra.mxu0 0
  %1294 = vmatprep.subr.bf16.mxu0 0
  %1295 = vmatpush1.bf16.msra.mxu0 0
  %1296 = vmatprep.subr.bf16.mxu0 0
  %1297 = vmatpush1.bf16.msra.mxu0 0
  %1298 = vmatprep.subr.bf16.mxu0 0
  %1299 = vmatpush1.bf16.msra.mxu0 0
  %1300 = vmatprep.subr.bf16.mxu0 0
  %1301 = vmatpush1.bf16.msra.mxu0 0
  %1302 = vmatprep.subr.bf16.mxu0 0
  %1303 = vmatpush1.bf16.msra.mxu0 0
  %1304 = vmatprep.subr.bf16.mxu0 0
  %1305 = vmatpush1.bf16.msra.mxu0 0
  %1306 = vmatprep.subr.bf16.mxu0 0
  %1307 = vmatpush1.bf16.msra.mxu0 0
  %1308 = vmatprep.subr.bf16.mxu0 0
  %1309 = vmatpush1.bf16.msra.mxu0 0
  %1310 = vmatprep.mubr.bf16.mxu0 0
  %1311 = vmatmul.mubr.bf16.gmra.mrb[0].mxu0 %v1273
  %v1312 = vpop.f32.mrb[0].mxu0
  %v1313 = vadd.f32 0.0, %v1312
  %v1314 = vpop.f32.mrb[0].mxu0
  %v1315 = vpop.f32.mrb[0].mxu0
  %v1316 = vpop.f32.mrb[0].mxu0
  %1317 = vdwg.mxu0
  %1318 = vrot.lane.b32.xlu0 %v183, 64
  %v1319 = vpop.permute.xlu0 %1318
  %v1321 = vsel %vm199, %v1160, 0
  %v1324 = vsel %vm1178, %v1319, 0
  %1326 = vmatprep.subr.bf16.mxu0 0
  %1327 = vmatpush1.bf16.msra.mxu0 %v1324
  %1328 = vmatprep.subr.bf16.mxu0 0
  %1329 = vmatpush1.bf16.msra.mxu0 0
  %1330 = vmatprep.subr.bf16.mxu0 0
  %1331 = vmatpush1.bf16.msra.mxu0 0
  %1332 = vmatprep.subr.bf16.mxu0 0
  %1333 = vmatpush1.bf16.msra.mxu0 0
  %1334 = vmatprep.subr.bf16.mxu0 0
  %1335 = vmatpush1.bf16.msra.mxu0 0
  %1336 = vmatprep.subr.bf16.mxu0 0
  %1337 = vmatpush1.bf16.msra.mxu0 0
  %1338 = vmatprep.subr.bf16.mxu0 0
  %1339 = vmatpush1.bf16.msra.mxu0 0
  %1340 = vmatprep.subr.bf16.mxu0 0
  %1341 = vmatpush1.bf16.msra.mxu0 0
  %1342 = vmatprep.subr.bf16.mxu0 0
  %1343 = vmatpush1.bf16.msra.mxu0 0
  %1344 = vmatprep.subr.bf16.mxu0 0
  %1345 = vmatpush1.bf16.msra.mxu0 0
  %1346 = vmatprep.subr.bf16.mxu0 0
  %1347 = vmatpush1.bf16.msra.mxu0 0
  %1348 = vmatprep.subr.bf16.mxu0 0
  %1349 = vmatpush1.bf16.msra.mxu0 0
  %1350 = vmatprep.subr.bf16.mxu0 0
  %1351 = vmatpush1.bf16.msra.mxu0 0
  %1352 = vmatprep.subr.bf16.mxu0 0
  %1353 = vmatpush1.bf16.msra.mxu0 0
  %1354 = vmatprep.subr.bf16.mxu0 0
  %1355 = vmatpush1.bf16.msra.mxu0 0
  %1356 = vmatprep.subr.bf16.mxu0 0
  %1357 = vmatpush1.bf16.msra.mxu0 0
  %1358 = vmatprep.mubr.bf16.mxu0 0
  %1359 = vmatmul.mubr.bf16.gmra.mrb[0].mxu0 %v1321
  %v1360 = vpop.f32.mrb[0].mxu0
  %v1361 = vadd.f32 0.0, %v1360
  %v1362 = vpop.f32.mrb[0].mxu0
  %v1363 = vpop.f32.mrb[0].mxu0
  %v1364 = vpop.f32.mrb[0].mxu0
  %1365 = vdwg.mxu0
  %1366 = vrot.lane.b32.xlu0 %v184, 64
  %v1367 = vpop.permute.xlu0 %1366
  %v1369 = vsel %vm199, %v1161, 0
  %v1372 = vsel %vm1178, %v1367, 0
  %1374 = vmatprep.subr.bf16.mxu0 0
  %1375 = vmatpush1.bf16.msra.mxu0 %v1372
  %1376 = vmatprep.subr.bf16.mxu0 0
  %1377 = vmatpush1.bf16.msra.mxu0 0
  %1378 = vmatprep.subr.bf16.mxu0 0
  %1379 = vmatpush1.bf16.msra.mxu0 0
  %1380 = vmatprep.subr.bf16.mxu0 0
  %1381 = vmatpush1.bf16.msra.mxu0 0
  %1382 = vmatprep.subr.bf16.mxu0 0
  %1383 = vmatpush1.bf16.msra.mxu0 0
  %1384 = vmatprep.subr.bf16.mxu0 0
  %1385 = vmatpush1.bf16.msra.mxu0 0
  %1386 = vmatprep.subr.bf16.mxu0 0
  %1387 = vmatpush1.bf16.msra.mxu0 0
  %1388 = vmatprep.subr.bf16.mxu0 0
  %1389 = vmatpush1.bf16.msra.mxu0 0
  %1390 = vmatprep.subr.bf16.mxu0 0
  %1391 = vmatpush1.bf16.msra.mxu0 0
  %1392 = vmatprep.subr.bf16.mxu0 0
  %1393 = vmatpush1.bf16.msra.mxu0 0
  %1394 = vmatprep.subr.bf16.mxu0 0
  %1395 = vmatpush1.bf16.msra.mxu0 0
  %1396 = vmatprep.subr.bf16.mxu0 0
  %1397 = vmatpush1.bf16.msra.mxu0 0
  %1398 = vmatprep.subr.bf16.mxu0 0
  %1399 = vmatpush1.bf16.msra.mxu0 0
  %1400 = vmatprep.subr.bf16.mxu0 0
  %1401 = vmatpush1.bf16.msra.mxu0 0
  %1402 = vmatprep.subr.bf16.mxu0 0
  %1403 = vmatpush1.bf16.msra.mxu0 0
  %1404 = vmatprep.subr.bf16.mxu0 0
  %1405 = vmatpush1.bf16.msra.mxu0 0
  %1406 = vmatprep.mubr.bf16.mxu0 0
  %1407 = vmatmul.mubr.bf16.gmra.mrb[0].mxu0 %v1369
  %v1408 = vpop.f32.mrb[0].mxu0
  %v1409 = vadd.f32 0.0, %v1408
  %v1410 = vpop.f32.mrb[0].mxu0
  %v1411 = vpop.f32.mrb[0].mxu0
  %v1412 = vpop.f32.mrb[0].mxu0
  %1413 = vdwg.mxu0
  %1414 = vrot.lane.b32.xlu0 %v185, 64
  %v1415 = vpop.permute.xlu0 %1414
  %v1417 = vsel %vm199, %v1162, 0
  %v1420 = vsel %vm1178, %v1415, 0
  %1422 = vmatprep.subr.bf16.mxu0 0
  %1423 = vmatpush1.bf16.msra.mxu0 %v1420
  %1424 = vmatprep.subr.bf16.mxu0 0
  %1425 = vmatpush1.bf16.msra.mxu0 0
  %1426 = vmatprep.subr.bf16.mxu0 0
  %1427 = vmatpush1.bf16.msra.mxu0 0
  %1428 = vmatprep.subr.bf16.mxu0 0
  %1429 = vmatpush1.bf16.msra.mxu0 0
  %1430 = vmatprep.subr.bf16.mxu0 0
  %1431 = vmatpush1.bf16.msra.mxu0 0
  %1432 = vmatprep.subr.bf16.mxu0 0
  %1433 = vmatpush1.bf16.msra.mxu0 0
  %1434 = vmatprep.subr.bf16.mxu0 0
  %1435 = vmatpush1.bf16.msra.mxu0 0
  %1436 = vmatprep.subr.bf16.mxu0 0
  %1437 = vmatpush1.bf16.msra.mxu0 0
  %1438 = vmatprep.subr.bf16.mxu0 0
  %1439 = vmatpush1.bf16.msra.mxu0 0
  %1440 = vmatprep.subr.bf16.mxu0 0
  %1441 = vmatpush1.bf16.msra.mxu0 0
  %1442 = vmatprep.subr.bf16.mxu0 0
  %1443 = vmatpush1.bf16.msra.mxu0 0
  %1444 = vmatprep.subr.bf16.mxu0 0
  %1445 = vmatpush1.bf16.msra.mxu0 0
  %1446 = vmatprep.subr.bf16.mxu0 0
  %1447 = vmatpush1.bf16.msra.mxu0 0
  %1448 = vmatprep.subr.bf16.mxu0 0
  %1449 = vmatpush1.bf16.msra.mxu0 0
  %1450 = vmatprep.subr.bf16.mxu0 0
  %1451 = vmatpush1.bf16.msra.mxu0 0
  %1452 = vmatprep.subr.bf16.mxu0 0
  %1453 = vmatpush1.bf16.msra.mxu0 0
  %1454 = vmatprep.mubr.bf16.mxu0 0
  %1455 = vmatmul.mubr.bf16.gmra.mrb[0].mxu0 %v1417
  %v1456 = vpop.f32.mrb[0].mxu0
  %v1457 = vadd.f32 0.0, %v1456
  %v1458 = vpop.f32.mrb[0].mxu0
  %v1459 = vpop.f32.mrb[0].mxu0
  %v1460 = vpop.f32.mrb[0].mxu0
  %1461 = vdwg.mxu0
  %1462 = vrot.lane.b32.xlu0 %v186, 64
  %v1463 = vpop.permute.xlu0 %1462
  %v1465 = vsel %vm199, %v1163, 0
  %v1468 = vsel %vm1178, %v1463, 0
  %1470 = vmatprep.subr.bf16.mxu0 0
  %1471 = vmatpush1.bf16.msra.mxu0 %v1468
  %1472 = vmatprep.subr.bf16.mxu0 0
  %1473 = vmatpush1.bf16.msra.mxu0 0
  %1474 = vmatprep.subr.bf16.mxu0 0
  %1475 = vmatpush1.bf16.msra.mxu0 0
  %1476 = vmatprep.subr.bf16.mxu0 0
  %1477 = vmatpush1.bf16.msra.mxu0 0
  %1478 = vmatprep.subr.bf16.mxu0 0
  %1479 = vmatpush1.bf16.msra.mxu0 0
  %1480 = vmatprep.subr.bf16.mxu0 0
  %1481 = vmatpush1.bf16.msra.mxu0 0
  %1482 = vmatprep.subr.bf16.mxu0 0
  %1483 = vmatpush1.bf16.msra.mxu0 0
  %1484 = vmatprep.subr.bf16.mxu0 0
  %1485 = vmatpush1.bf16.msra.mxu0 0
  %1486 = vmatprep.subr.bf16.mxu0 0
  %1487 = vmatpush1.bf16.msra.mxu0 0
  %1488 = vmatprep.subr.bf16.mxu0 0
  %1489 = vmatpush1.bf16.msra.mxu0 0
  %1490 = vmatprep.subr.bf16.mxu0 0
  %1491 = vmatpush1.bf16.msra.mxu0 0
  %1492 = vmatprep.subr.bf16.mxu0 0
  %1493 = vmatpush1.bf16.msra.mxu0 0
  %1494 = vmatprep.subr.bf16.mxu0 0
  %1495 = vmatpush1.bf16.msra.mxu0 0
  %1496 = vmatprep.subr.bf16.mxu0 0
  %1497 = vmatpush1.bf16.msra.mxu0 0
  %1498 = vmatprep.subr.bf16.mxu0 0
  %1499 = vmatpush1.bf16.msra.mxu0 0
  %1500 = vmatprep.subr.bf16.mxu0 0
  %1501 = vmatpush1.bf16.msra.mxu0 0
  %1502 = vmatprep.mubr.bf16.mxu0 0
  %1503 = vmatmul.mubr.bf16.gmra.mrb[0].mxu0 %v1465
  %v1504 = vpop.f32.mrb[0].mxu0
  %v1505 = vadd.f32 0.0, %v1504
  %v1506 = vpop.f32.mrb[0].mxu0
  %v1507 = vpop.f32.mrb[0].mxu0
  %v1508 = vpop.f32.mrb[0].mxu0
  %1509 = vdwg.mxu0
  %1510 = vrot.lane.b32.xlu0 %v187, 64
  %v1511 = vpop.permute.xlu0 %1510
  %v1513 = vsel %vm199, %v1164, 0
  %v1516 = vsel %vm1178, %v1511, 0
  %1518 = vmatprep.subr.bf16.mxu0 0
  %1519 = vmatpush1.bf16.msra.mxu0 %v1516
  %1520 = vmatprep.subr.bf16.mxu0 0
  %1521 = vmatpush1.bf16.msra.mxu0 0
  %1522 = vmatprep.subr.bf16.mxu0 0
  %1523 = vmatpush1.bf16.msra.mxu0 0
  %1524 = vmatprep.subr.bf16.mxu0 0
  %1525 = vmatpush1.bf16.msra.mxu0 0
  %1526 = vmatprep.subr.bf16.mxu0 0
  %1527 = vmatpush1.bf16.msra.mxu0 0
  %1528 = vmatprep.subr.bf16.mxu0 0
  %1529 = vmatpush1.bf16.msra.mxu0 0
  %1530 = vmatprep.subr.bf16.mxu0 0
  %1531 = vmatpush1.bf16.msra.mxu0 0
  %1532 = vmatprep.subr.bf16.mxu0 0
  %1533 = vmatpush1.bf16.msra.mxu0 0
  %1534 = vmatprep.subr.bf16.mxu0 0
  %1535 = vmatpush1.bf16.msra.mxu0 0
  %1536 = vmatprep.subr.bf16.mxu0 0
  %1537 = vmatpush1.bf16.msra.mxu0 0
  %1538 = vmatprep.subr.bf16.mxu0 0
  %1539 = vmatpush1.bf16.msra.mxu0 0
  %1540 = vmatprep.subr.bf16.mxu0 0
  %1541 = vmatpush1.bf16.msra.mxu0 0
  %1542 = vmatprep.subr.bf16.mxu0 0
  %1543 = vmatpush1.bf16.msra.mxu0 0
  %1544 = vmatprep.subr.bf16.mxu0 0
  %1545 = vmatpush1.bf16.msra.mxu0 0
  %1546 = vmatprep.subr.bf16.mxu0 0
  %1547 = vmatpush1.bf16.msra.mxu0 0
  %1548 = vmatprep.subr.bf16.mxu0 0
  %1549 = vmatpush1.bf16.msra.mxu0 0
  %1550 = vmatprep.mubr.bf16.mxu0 0
  %1551 = vmatmul.mubr.bf16.gmra.mrb[0].mxu0 %v1513
  %v1552 = vpop.f32.mrb[0].mxu0
  %v1553 = vadd.f32 0.0, %v1552
  %v1554 = vpop.f32.mrb[0].mxu0
  %v1555 = vpop.f32.mrb[0].mxu0
  %v1556 = vpop.f32.mrb[0].mxu0
  %1557 = vdwg.mxu0
  %1558 = vrot.lane.b32.xlu0 %v188, 64
  %v1559 = vpop.permute.xlu0 %1558
  %v1561 = vsel %vm199, %v1165, 0
  %v1564 = vsel %vm1178, %v1559, 0
  %1566 = vmatprep.subr.bf16.mxu0 0
  %1567 = vmatpush1.bf16.msra.mxu0 %v1564
  %1568 = vmatprep.subr.bf16.mxu0 0
  %1569 = vmatpush1.bf16.msra.mxu0 0
  %1570 = vmatprep.subr.bf16.mxu0 0
  %1571 = vmatpush1.bf16.msra.mxu0 0
  %1572 = vmatprep.subr.bf16.mxu0 0
  %1573 = vmatpush1.bf16.msra.mxu0 0
  %1574 = vmatprep.subr.bf16.mxu0 0
  %1575 = vmatpush1.bf16.msra.mxu0 0
  %1576 = vmatprep.subr.bf16.mxu0 0
  %1577 = vmatpush1.bf16.msra.mxu0 0
  %1578 = vmatprep.subr.bf16.mxu0 0
  %1579 = vmatpush1.bf16.msra.mxu0 0
  %1580 = vmatprep.subr.bf16.mxu0 0
  %1581 = vmatpush1.bf16.msra.mxu0 0
  %1582 = vmatprep.subr.bf16.mxu0 0
  %1583 = vmatpush1.bf16.msra.mxu0 0
  %1584 = vmatprep.subr.bf16.mxu0 0
  %1585 = vmatpush1.bf16.msra.mxu0 0
  %1586 = vmatprep.subr.bf16.mxu0 0
  %1587 = vmatpush1.bf16.msra.mxu0 0
  %1588 = vmatprep.subr.bf16.mxu0 0
  %1589 = vmatpush1.bf16.msra.mxu0 0
  %1590 = vmatprep.subr.bf16.mxu0 0
  %1591 = vmatpush1.bf16.msra.mxu0 0
  %1592 = vmatprep.subr.bf16.mxu0 0
  %1593 = vmatpush1.bf16.msra.mxu0 0
  %1594 = vmatprep.subr.bf16.mxu0 0
  %1595 = vmatpush1.bf16.msra.mxu0 0
  %1596 = vmatprep.subr.bf16.mxu0 0
  %1597 = vmatpush1.bf16.msra.mxu0 0
  %1598 = vmatprep.mubr.bf16.mxu0 0
  %1599 = vmatmul.mubr.bf16.gmra.mrb[0].mxu0 %v1561
  %v1600 = vpop.f32.mrb[0].mxu0
  %v1601 = vadd.f32 0.0, %v1600
  %v1602 = vpop.f32.mrb[0].mxu0
  %v1603 = vpop.f32.mrb[0].mxu0
  %v1604 = vpop.f32.mrb[0].mxu0
  %1605 = vdwg.mxu0
  %1606 = vrot.lane.b32.xlu0 %v189, 64
  %v1607 = vpop.permute.xlu0 %1606
  %v1609 = vsel %vm199, %v1166, 0
  %v1612 = vsel %vm1178, %v1607, 0
  %1614 = vmatprep.subr.bf16.mxu0 0
  %1615 = vmatpush1.bf16.msra.mxu0 %v1612
  %1616 = vmatprep.subr.bf16.mxu0 0
  %1617 = vmatpush1.bf16.msra.mxu0 0
  %1618 = vmatprep.subr.bf16.mxu0 0
  %1619 = vmatpush1.bf16.msra.mxu0 0
  %1620 = vmatprep.subr.bf16.mxu0 0
  %1621 = vmatpush1.bf16.msra.mxu0 0
  %1622 = vmatprep.subr.bf16.mxu0 0
  %1623 = vmatpush1.bf16.msra.mxu0 0
  %1624 = vmatprep.subr.bf16.mxu0 0
  %1625 = vmatpush1.bf16.msra.mxu0 0
  %1626 = vmatprep.subr.bf16.mxu0 0
  %1627 = vmatpush1.bf16.msra.mxu0 0
  %1628 = vmatprep.subr.bf16.mxu0 0
  %1629 = vmatpush1.bf16.msra.mxu0 0
  %1630 = vmatprep.subr.bf16.mxu0 0
  %1631 = vmatpush1.bf16.msra.mxu0 0
  %1632 = vmatprep.subr.bf16.mxu0 0
  %1633 = vmatpush1.bf16.msra.mxu0 0
  %1634 = vmatprep.subr.bf16.mxu0 0
  %1635 = vmatpush1.bf16.msra.mxu0 0
  %1636 = vmatprep.subr.bf16.mxu0 0
  %1637 = vmatpush1.bf16.msra.mxu0 0
  %1638 = vmatprep.subr.bf16.mxu0 0
  %1639 = vmatpush1.bf16.msra.mxu0 0
  %1640 = vmatprep.subr.bf16.mxu0 0
  %1641 = vmatpush1.bf16.msra.mxu0 0
  %1642 = vmatprep.subr.bf16.mxu0 0
  %1643 = vmatpush1.bf16.msra.mxu0 0
  %1644 = vmatprep.subr.bf16.mxu0 0
  %1645 = vmatpush1.bf16.msra.mxu0 0
  %1646 = vmatprep.mubr.bf16.mxu0 0
  %1647 = vmatmul.mubr.bf16.gmra.mrb[0].mxu0 %v1609
  %v1648 = vpop.f32.mrb[0].mxu0
  %v1649 = vadd.f32 0.0, %v1648
  %v1650 = vpop.f32.mrb[0].mxu0
  %v1651 = vpop.f32.mrb[0].mxu0
  %v1652 = vpop.f32.mrb[0].mxu0
  %1653 = vdwg.mxu0
  %1654 = vrot.lane.b32.xlu0 %v190, 64
  %v1655 = vpop.permute.xlu0 %1654
  %v1657 = vsel %vm199, %v1167, 0
  %v1660 = vsel %vm1178, %v1655, 0
  %1662 = vmatprep.subr.bf16.mxu0 0
  %1663 = vmatpush1.bf16.msra.mxu0 %v1660
  %1664 = vmatprep.subr.bf16.mxu0 0
  %1665 = vmatpush1.bf16.msra.mxu0 0
  %1666 = vmatprep.subr.bf16.mxu0 0
  %1667 = vmatpush1.bf16.msra.mxu0 0
  %1668 = vmatprep.subr.bf16.mxu0 0
  %1669 = vmatpush1.bf16.msra.mxu0 0
  %1670 = vmatprep.subr.bf16.mxu0 0
  %1671 = vmatpush1.bf16.msra.mxu0 0
  %1672 = vmatprep.subr.bf16.mxu0 0
  %1673 = vmatpush1.bf16.msra.mxu0 0
  %1674 = vmatprep.subr.bf16.mxu0 0
  %1675 = vmatpush1.bf16.msra.mxu0 0
  %1676 = vmatprep.subr.bf16.mxu0 0
  %1677 = vmatpush1.bf16.msra.mxu0 0
  %1678 = vmatprep.subr.bf16.mxu0 0
  %1679 = vmatpush1.bf16.msra.mxu0 0
  %1680 = vmatprep.subr.bf16.mxu0 0
  %1681 = vmatpush1.bf16.msra.mxu0 0
  %1682 = vmatprep.subr.bf16.mxu0 0
  %1683 = vmatpush1.bf16.msra.mxu0 0
  %1684 = vmatprep.subr.bf16.mxu0 0
  %1685 = vmatpush1.bf16.msra.mxu0 0
  %1686 = vmatprep.subr.bf16.mxu0 0
  %1687 = vmatpush1.bf16.msra.mxu0 0
  %1688 = vmatprep.subr.bf16.mxu0 0
  %1689 = vmatpush1.bf16.msra.mxu0 0
  %1690 = vmatprep.subr.bf16.mxu0 0
  %1691 = vmatpush1.bf16.msra.mxu0 0
  %1692 = vmatprep.subr.bf16.mxu0 0
  %1693 = vmatpush1.bf16.msra.mxu0 0
  %1694 = vmatprep.mubr.bf16.mxu0 0
  %1695 = vmatmul.mubr.bf16.gmra.mrb[0].mxu0 %v1657
  %v1696 = vpop.f32.mrb[0].mxu0
  %v1697 = vadd.f32 0.0, %v1696
  %v1698 = vpop.f32.mrb[0].mxu0
  %v1699 = vpop.f32.mrb[0].mxu0
  %v1700 = vpop.f32.mrb[0].mxu0
  %1701 = vdwg.mxu0
  %1702 = vrot.lane.b32.xlu0 %v191, 64
  %v1703 = vpop.permute.xlu0 %1702
  %v1705 = vsel %vm199, %v1168, 0
  %v1708 = vsel %vm1178, %v1703, 0
  %1710 = vmatprep.subr.bf16.mxu0 0
  %1711 = vmatpush1.bf16.msra.mxu0 %v1708
  %1712 = vmatprep.subr.bf16.mxu0 0
  %1713 = vmatpush1.bf16.msra.mxu0 0
  %1714 = vmatprep.subr.bf16.mxu0 0
  %1715 = vmatpush1.bf16.msra.mxu0 0
  %1716 = vmatprep.subr.bf16.mxu0 0
  %1717 = vmatpush1.bf16.msra.mxu0 0
  %1718 = vmatprep.subr.bf16.mxu0 0
  %1719 = vmatpush1.bf16.msra.mxu0 0
  %1720 = vmatprep.subr.bf16.mxu0 0
  %1721 = vmatpush1.bf16.msra.mxu0 0
  %1722 = vmatprep.subr.bf16.mxu0 0
  %1723 = vmatpush1.bf16.msra.mxu0 0
  %1724 = vmatprep.subr.bf16.mxu0 0
  %1725 = vmatpush1.bf16.msra.mxu0 0
  %1726 = vmatprep.subr.bf16.mxu0 0
  %1727 = vmatpush1.bf16.msra.mxu0 0
  %1728 = vmatprep.subr.bf16.mxu0 0
  %1729 = vmatpush1.bf16.msra.mxu0 0
  %1730 = vmatprep.subr.bf16.mxu0 0
  %1731 = vmatpush1.bf16.msra.mxu0 0
  %1732 = vmatprep.subr.bf16.mxu0 0
  %1733 = vmatpush1.bf16.msra.mxu0 0
  %1734 = vmatprep.subr.bf16.mxu0 0
  %1735 = vmatpush1.bf16.msra.mxu0 0
  %1736 = vmatprep.subr.bf16.mxu0 0
  %1737 = vmatpush1.bf16.msra.mxu0 0
  %1738 = vmatprep.subr.bf16.mxu0 0
  %1739 = vmatpush1.bf16.msra.mxu0 0
  %1740 = vmatprep.subr.bf16.mxu0 0
  %1741 = vmatpush1.bf16.msra.mxu0 0
  %1742 = vmatprep.mubr.bf16.mxu0 0
  %1743 = vmatmul.mubr.bf16.gmra.mrb[0].mxu0 %v1705
  %v1744 = vpop.f32.mrb[0].mxu0
  %v1745 = vadd.f32 0.0, %v1744
  %v1746 = vpop.f32.mrb[0].mxu0
  %v1747 = vpop.f32.mrb[0].mxu0
  %v1748 = vpop.f32.mrb[0].mxu0
  %1749 = vdwg.mxu0
  %1750 = vrot.lane.b32.xlu0 %v192, 64
  %v1751 = vpop.permute.xlu0 %1750
  %v1753 = vsel %vm199, %v1169, 0
  %v1756 = vsel %vm1178, %v1751, 0
  %1758 = vmatprep.subr.bf16.mxu0 0
  %1759 = vmatpush1.bf16.msra.mxu0 %v1756
  %1760 = vmatprep.subr.bf16.mxu0 0
  %1761 = vmatpush1.bf16.msra.mxu0 0
  %1762 = vmatprep.subr.bf16.mxu0 0
  %1763 = vmatpush1.bf16.msra.mxu0 0
  %1764 = vmatprep.subr.bf16.mxu0 0
  %1765 = vmatpush1.bf16.msra.mxu0 0
  %1766 = vmatprep.subr.bf16.mxu0 0
  %1767 = vmatpush1.bf16.msra.mxu0 0
  %1768 = vmatprep.subr.bf16.mxu0 0
  %1769 = vmatpush1.bf16.msra.mxu0 0
  %1770 = vmatprep.subr.bf16.mxu0 0
  %1771 = vmatpush1.bf16.msra.mxu0 0
  %1772 = vmatprep.subr.bf16.mxu0 0
  %1773 = vmatpush1.bf16.msra.mxu0 0
  %1774 = vmatprep.subr.bf16.mxu0 0
  %1775 = vmatpush1.bf16.msra.mxu0 0
  %1776 = vmatprep.subr.bf16.mxu0 0
  %1777 = vmatpush1.bf16.msra.mxu0 0
  %1778 = vmatprep.subr.bf16.mxu0 0
  %1779 = vmatpush1.bf16.msra.mxu0 0
  %1780 = vmatprep.subr.bf16.mxu0 0
  %1781 = vmatpush1.bf16.msra.mxu0 0
  %1782 = vmatprep.subr.bf16.mxu0 0
  %1783 = vmatpush1.bf16.msra.mxu0 0
  %1784 = vmatprep.subr.bf16.mxu0 0
  %1785 = vmatpush1.bf16.msra.mxu0 0
  %1786 = vmatprep.subr.bf16.mxu0 0
  %1787 = vmatpush1.bf16.msra.mxu0 0
  %1788 = vmatprep.subr.bf16.mxu0 0
  %1789 = vmatpush1.bf16.msra.mxu0 0
  %1790 = vmatprep.mubr.bf16.mxu0 0
  %1791 = vmatmul.mubr.bf16.gmra.mrb[0].mxu0 %v1753
  %v1792 = vpop.f32.mrb[0].mxu0
  %v1793 = vadd.f32 0.0, %v1792
  %v1794 = vpop.f32.mrb[0].mxu0
  %v1795 = vpop.f32.mrb[0].mxu0
  %v1796 = vpop.f32.mrb[0].mxu0
  %1797 = vdwg.mxu0
  %1798 = vrot.lane.b32.xlu0 %v193, 64
  %v1799 = vpop.permute.xlu0 %1798
  %v1801 = vsel %vm199, %v1170, 0
  %v1804 = vsel %vm1178, %v1799, 0
  %1806 = vmatprep.subr.bf16.mxu0 0
  %1807 = vmatpush1.bf16.msra.mxu0 %v1804
  %1808 = vmatprep.subr.bf16.mxu0 0
  %1809 = vmatpush1.bf16.msra.mxu0 0
  %1810 = vmatprep.subr.bf16.mxu0 0
  %1811 = vmatpush1.bf16.msra.mxu0 0
  %1812 = vmatprep.subr.bf16.mxu0 0
  %1813 = vmatpush1.bf16.msra.mxu0 0
  %1814 = vmatprep.subr.bf16.mxu0 0
  %1815 = vmatpush1.bf16.msra.mxu0 0
  %1816 = vmatprep.subr.bf16.mxu0 0
  %1817 = vmatpush1.bf16.msra.mxu0 0
  %1818 = vmatprep.subr.bf16.mxu0 0
  %1819 = vmatpush1.bf16.msra.mxu0 0
  %1820 = vmatprep.subr.bf16.mxu0 0
  %1821 = vmatpush1.bf16.msra.mxu0 0
  %1822 = vmatprep.subr.bf16.mxu0 0
  %1823 = vmatpush1.bf16.msra.mxu0 0
  %1824 = vmatprep.subr.bf16.mxu0 0
  %1825 = vmatpush1.bf16.msra.mxu0 0
  %1826 = vmatprep.subr.bf16.mxu0 0
  %1827 = vmatpush1.bf16.msra.mxu0 0
  %1828 = vmatprep.subr.bf16.mxu0 0
  %1829 = vmatpush1.bf16.msra.mxu0 0
  %1830 = vmatprep.subr.bf16.mxu0 0
  %1831 = vmatpush1.bf16.msra.mxu0 0
  %1832 = vmatprep.subr.bf16.mxu0 0
  %1833 = vmatpush1.bf16.msra.mxu0 0
  %1834 = vmatprep.subr.bf16.mxu0 0
  %1835 = vmatpush1.bf16.msra.mxu0 0
  %1836 = vmatprep.subr.bf16.mxu0 0
  %1837 = vmatpush1.bf16.msra.mxu0 0
  %1838 = vmatprep.mubr.bf16.mxu0 0
  %1839 = vmatmul.mubr.bf16.gmra.mrb[0].mxu0 %v1801
  %v1840 = vpop.f32.mrb[0].mxu0
  %v1841 = vadd.f32 0.0, %v1840
  %v1842 = vpop.f32.mrb[0].mxu0
  %v1843 = vpop.f32.mrb[0].mxu0
  %v1844 = vpop.f32.mrb[0].mxu0
  %1845 = vdwg.mxu0
  %1846 = vrot.lane.b32.xlu0 %v194, 64
  %v1847 = vpop.permute.xlu0 %1846
  %v1849 = vsel %vm199, %v1171, 0
  %v1852 = vsel %vm1178, %v1847, 0
  %1854 = vmatprep.subr.bf16.mxu0 0
  %1855 = vmatpush1.bf16.msra.mxu0 %v1852
  %1856 = vmatprep.subr.bf16.mxu0 0
  %1857 = vmatpush1.bf16.msra.mxu0 0
  %1858 = vmatprep.subr.bf16.mxu0 0
  %1859 = vmatpush1.bf16.msra.mxu0 0
  %1860 = vmatprep.subr.bf16.mxu0 0
  %1861 = vmatpush1.bf16.msra.mxu0 0
  %1862 = vmatprep.subr.bf16.mxu0 0
  %1863 = vmatpush1.bf16.msra.mxu0 0
  %1864 = vmatprep.subr.bf16.mxu0 0
  %1865 = vmatpush1.bf16.msra.mxu0 0
  %1866 = vmatprep.subr.bf16.mxu0 0
  %1867 = vmatpush1.bf16.msra.mxu0 0
  %1868 = vmatprep.subr.bf16.mxu0 0
  %1869 = vmatpush1.bf16.msra.mxu0 0
  %1870 = vmatprep.subr.bf16.mxu0 0
  %1871 = vmatpush1.bf16.msra.mxu0 0
  %1872 = vmatprep.subr.bf16.mxu0 0
  %1873 = vmatpush1.bf16.msra.mxu0 0
  %1874 = vmatprep.subr.bf16.mxu0 0
  %1875 = vmatpush1.bf16.msra.mxu0 0
  %1876 = vmatprep.subr.bf16.mxu0 0
  %1877 = vmatpush1.bf16.msra.mxu0 0
  %1878 = vmatprep.subr.bf16.mxu0 0
  %1879 = vmatpush1.bf16.msra.mxu0 0
  %1880 = vmatprep.subr.bf16.mxu0 0
  %1881 = vmatpush1.bf16.msra.mxu0 0
  %1882 = vmatprep.subr.bf16.mxu0 0
  %1883 = vmatpush1.bf16.msra.mxu0 0
  %1884 = vmatprep.subr.bf16.mxu0 0
  %1885 = vmatpush1.bf16.msra.mxu0 0
  %1886 = vmatprep.mubr.bf16.mxu0 0
  %1887 = vmatmul.mubr.bf16.gmra.mrb[0].mxu0 %v1849
  %v1888 = vpop.f32.mrb[0].mxu0
  %v1889 = vadd.f32 0.0, %v1888
  %v1890 = vpop.f32.mrb[0].mxu0
  %v1891 = vpop.f32.mrb[0].mxu0
  %v1892 = vpop.f32.mrb[0].mxu0
  %1893 = vdwg.mxu0
  %1894 = vrot.lane.b32.xlu0 %v195, 64
  %v1895 = vpop.permute.xlu0 %1894
  %v1897 = vsel %vm199, %v1172, 0
  %v1900 = vsel %vm1178, %v1895, 0
  %1902 = vmatprep.subr.bf16.mxu0 0
  %1903 = vmatpush1.bf16.msra.mxu0 %v1900
  %1904 = vmatprep.subr.bf16.mxu0 0
  %1905 = vmatpush1.bf16.msra.mxu0 0
  %1906 = vmatprep.subr.bf16.mxu0 0
  %1907 = vmatpush1.bf16.msra.mxu0 0
  %1908 = vmatprep.subr.bf16.mxu0 0
  %1909 = vmatpush1.bf16.msra.mxu0 0
  %1910 = vmatprep.subr.bf16.mxu0 0
  %1911 = vmatpush1.bf16.msra.mxu0 0
  %1912 = vmatprep.subr.bf16.mxu0 0
  %1913 = vmatpush1.bf16.msra.mxu0 0
  %1914 = vmatprep.subr.bf16.mxu0 0
  %1915 = vmatpush1.bf16.msra.mxu0 0
  %1916 = vmatprep.subr.bf16.mxu0 0
  %1917 = vmatpush1.bf16.msra.mxu0 0
  %1918 = vmatprep.subr.bf16.mxu0 0
  %1919 = vmatpush1.bf16.msra.mxu0 0
  %1920 = vmatprep.subr.bf16.mxu0 0
  %1921 = vmatpush1.bf16.msra.mxu0 0
  %1922 = vmatprep.subr.bf16.mxu0 0
  %1923 = vmatpush1.bf16.msra.mxu0 0
  %1924 = vmatprep.subr.bf16.mxu0 0
  %1925 = vmatpush1.bf16.msra.mxu0 0
  %1926 = vmatprep.subr.bf16.mxu0 0
  %1927 = vmatpush1.bf16.msra.mxu0 0
  %1928 = vmatprep.subr.bf16.mxu0 0
  %1929 = vmatpush1.bf16.msra.mxu0 0
  %1930 = vmatprep.subr.bf16.mxu0 0
  %1931 = vmatpush1.bf16.msra.mxu0 0
  %1932 = vmatprep.subr.bf16.mxu0 0
  %1933 = vmatpush1.bf16.msra.mxu0 0
  %1934 = vmatprep.mubr.bf16.mxu0 0
  %1935 = vmatmul.mubr.bf16.gmra.mrb[0].mxu0 %v1897
  %v1936 = vpop.f32.mrb[0].mxu0
  %v1937 = vadd.f32 0.0, %v1936
  %v1938 = vpop.f32.mrb[0].mxu0
  %v1939 = vpop.f32.mrb[0].mxu0
  %v1940 = vpop.f32.mrb[0].mxu0
  %1941 = vdwg.mxu0
  %1942 = vrot.lane.b32.xlu0 %v180, 120
  %v1943 = vpop.permute.xlu0 %1942
  %1944 = vrot.lane.b32.xlu0 %v180, 88
  %v1945 = vpop.permute.xlu0 %1944
  %v1947 = vsel %vm199, %v1943, 0
  %v1950 = vsel %vm199, %v1945, 0
  %1952 = vmatprep.subr.bf16.mxu0 0
  %1953 = vmatpush1.bf16.xpose.msra.mxu0 %v1950
  %1954 = vmatprep.subr.bf16.mxu0 0
  %1955 = vmatpush1.bf16.xpose.msra.mxu0 0
  %1956 = vmatprep.subr.bf16.mxu0 0
  %1957 = vmatpush1.bf16.xpose.msra.mxu0 0
  %1958 = vmatprep.subr.bf16.mxu0 0
  %1959 = vmatpush1.bf16.xpose.msra.mxu0 0
  %1960 = vmatprep.subr.bf16.mxu0 0
  %1961 = vmatpush1.bf16.xpose.msra.mxu0 0
  %1962 = vmatprep.subr.bf16.mxu0 0
  %1963 = vmatpush1.bf16.xpose.msra.mxu0 0
  %1964 = vmatprep.subr.bf16.mxu0 0
  %1965 = vmatpush1.bf16.xpose.msra.mxu0 0
  %1966 = vmatprep.subr.bf16.mxu0 0
  %1967 = vmatpush1.bf16.xpose.msra.mxu0 0
  %1968 = vmatprep.subr.bf16.mxu0 0
  %1969 = vmatpush1.bf16.xpose.msra.mxu0 0
  %1970 = vmatprep.subr.bf16.mxu0 0
  %1971 = vmatpush1.bf16.xpose.msra.mxu0 0
  %1972 = vmatprep.subr.bf16.mxu0 0
  %1973 = vmatpush1.bf16.xpose.msra.mxu0 0
  %1974 = vmatprep.subr.bf16.mxu0 0
  %1975 = vmatpush1.bf16.xpose.msra.mxu0 0
  %1976 = vmatprep.subr.bf16.mxu0 0
  %1977 = vmatpush1.bf16.xpose.msra.mxu0 0
  %1978 = vmatprep.subr.bf16.mxu0 0
  %1979 = vmatpush1.bf16.xpose.msra.mxu0 0
  %1980 = vmatprep.subr.bf16.mxu0 0
  %1981 = vmatpush1.bf16.xpose.msra.mxu0 0
  %1982 = vmatprep.subr.bf16.mxu0 0
  %1983 = vmatpush1.bf16.xpose.msra.mxu0 0
  %1984 = vmatprep.mubr.bf16.mxu0 0
  %1985 = vmatmul.mubr.bf16.gmra.mrb[0].mxu0 %v1947
  %v1986 = vpop.f32.mrb[0].mxu0
  %v1987 = vadd.f32 0.0, %v1986
  %v1988 = vpop.f32.mrb[0].mxu0
  %v1989 = vpop.f32.mrb[0].mxu0
  %v1990 = vpop.f32.mrb[0].mxu0
  %1991 = vdwg.mxu0
  %1992 = vrot.lane.b32.xlu0 %v181, 120
  %v1993 = vpop.permute.xlu0 %1992
  %1994 = vrot.lane.b32.xlu0 %v181, 88
  %v1995 = vpop.permute.xlu0 %1994
  %v1997 = vsel %vm199, %v1993, 0
  %v2000 = vsel %vm199, %v1995, 0
  %2002 = vmatprep.subr.bf16.mxu0 0
  %2003 = vmatpush1.bf16.xpose.msra.mxu0 %v2000
  %2004 = vmatprep.subr.bf16.mxu0 0
  %2005 = vmatpush1.bf16.xpose.msra.mxu0 0
  %2006 = vmatprep.subr.bf16.mxu0 0
  %2007 = vmatpush1.bf16.xpose.msra.mxu0 0
  %2008 = vmatprep.subr.bf16.mxu0 0
  %2009 = vmatpush1.bf16.xpose.msra.mxu0 0
  %2010 = vmatprep.subr.bf16.mxu0 0
  %2011 = vmatpush1.bf16.xpose.msra.mxu0 0
  %2012 = vmatprep.subr.bf16.mxu0 0
  %2013 = vmatpush1.bf16.xpose.msra.mxu0 0
  %2014 = vmatprep.subr.bf16.mxu0 0
  %2015 = vmatpush1.bf16.xpose.msra.mxu0 0
  %2016 = vmatprep.subr.bf16.mxu0 0
  %2017 = vmatpush1.bf16.xpose.msra.mxu0 0
  %2018 = vmatprep.subr.bf16.mxu0 0
  %2019 = vmatpush1.bf16.xpose.msra.mxu0 0
  %2020 = vmatprep.subr.bf16.mxu0 0
  %2021 = vmatpush1.bf16.xpose.msra.mxu0 0
  %2022 = vmatprep.subr.bf16.mxu0 0
  %2023 = vmatpush1.bf16.xpose.msra.mxu0 0
  %2024 = vmatprep.subr.bf16.mxu0 0
  %2025 = vmatpush1.bf16.xpose.msra.mxu0 0
  %2026 = vmatprep.subr.bf16.mxu0 0
  %2027 = vmatpush1.bf16.xpose.msra.mxu0 0
  %2028 = vmatprep.subr.bf16.mxu0 0
  %2029 = vmatpush1.bf16.xpose.msra.mxu0 0
  %2030 = vmatprep.subr.bf16.mxu0 0
  %2031 = vmatpush1.bf16.xpose.msra.mxu0 0
  %2032 = vmatprep.subr.bf16.mxu0 0
  %2033 = vmatpush1.bf16.xpose.msra.mxu0 0
  %2034 = vmatprep.mubr.bf16.mxu0 0
  %2035 = vmatmul.mubr.bf16.gmra.mrb[0].mxu0 %v1997
  %v2036 = vpop.f32.mrb[0].mxu0
  %v2037 = vadd.f32 0.0, %v2036
  %v2038 = vpop.f32.mrb[0].mxu0
  %v2039 = vpop.f32.mrb[0].mxu0
  %v2040 = vpop.f32.mrb[0].mxu0
  %2041 = vdwg.mxu0
  %2042 = vrot.lane.b32.xlu0 %v182, 120
  %v2043 = vpop.permute.xlu0 %2042
  %2044 = vrot.lane.b32.xlu0 %v182, 88
  %v2045 = vpop.permute.xlu0 %2044
  %v2047 = vsel %vm199, %v2043, 0
  %v2050 = vsel %vm199, %v2045, 0
  %2052 = vmatprep.subr.bf16.mxu0 0
  %2053 = vmatpush1.bf16.xpose.msra.mxu0 %v2050
  %2054 = vmatprep.subr.bf16.mxu0 0
  %2055 = vmatpush1.bf16.xpose.msra.mxu0 0
  %2056 = vmatprep.subr.bf16.mxu0 0
  %2057 = vmatpush1.bf16.xpose.msra.mxu0 0
  %2058 = vmatprep.subr.bf16.mxu0 0
  %2059 = vmatpush1.bf16.xpose.msra.mxu0 0
  %2060 = vmatprep.subr.bf16.mxu0 0
  %2061 = vmatpush1.bf16.xpose.msra.mxu0 0
  %2062 = vmatprep.subr.bf16.mxu0 0
  %2063 = vmatpush1.bf16.xpose.msra.mxu0 0
  %2064 = vmatprep.subr.bf16.mxu0 0
  %2065 = vmatpush1.bf16.xpose.msra.mxu0 0
  %2066 = vmatprep.subr.bf16.mxu0 0
  %2067 = vmatpush1.bf16.xpose.msra.mxu0 0
  %2068 = vmatprep.subr.bf16.mxu0 0
  %2069 = vmatpush1.bf16.xpose.msra.mxu0 0
  %2070 = vmatprep.subr.bf16.mxu0 0
  %2071 = vmatpush1.bf16.xpose.msra.mxu0 0
  %2072 = vmatprep.subr.bf16.mxu0 0
  %2073 = vmatpush1.bf16.xpose.msra.mxu0 0
  %2074 = vmatprep.subr.bf16.mxu0 0
  %2075 = vmatpush1.bf16.xpose.msra.mxu0 0
  %2076 = vmatprep.subr.bf16.mxu0 0
  %2077 = vmatpush1.bf16.xpose.msra.mxu0 0
  %2078 = vmatprep.subr.bf16.mxu0 0
  %2079 = vmatpush1.bf16.xpose.msra.mxu0 0
  %2080 = vmatprep.subr.bf16.mxu0 0
  %2081 = vmatpush1.bf16.xpose.msra.mxu0 0
  %2082 = vmatprep.subr.bf16.mxu0 0
  %2083 = vmatpush1.bf16.xpose.msra.mxu0 0
  %2084 = vmatprep.mubr.bf16.mxu0 0
  %2085 = vmatmul.mubr.bf16.gmra.mrb[0].mxu0 %v2047
  %v2086 = vpop.f32.mrb[0].mxu0
  %v2087 = vadd.f32 0.0, %v2086
  %v2088 = vpop.f32.mrb[0].mxu0
  %v2089 = vpop.f32.mrb[0].mxu0
  %v2090 = vpop.f32.mrb[0].mxu0
  %2091 = vdwg.mxu0
  %2092 = vrot.lane.b32.xlu0 %v183, 120
  %v2093 = vpop.permute.xlu0 %2092
  %2094 = vrot.lane.b32.xlu0 %v183, 88
  %v2095 = vpop.permute.xlu0 %2094
  %v2097 = vsel %vm199, %v2093, 0
  %v2100 = vsel %vm199, %v2095, 0
  %2102 = vmatprep.subr.bf16.mxu0 0
  %2103 = vmatpush1.bf16.xpose.msra.mxu0 %v2100
  %2104 = vmatprep.subr.bf16.mxu0 0
  %2105 = vmatpush1.bf16.xpose.msra.mxu0 0
  %2106 = vmatprep.subr.bf16.mxu0 0
  %2107 = vmatpush1.bf16.xpose.msra.mxu0 0
  %2108 = vmatprep.subr.bf16.mxu0 0
  %2109 = vmatpush1.bf16.xpose.msra.mxu0 0
  %2110 = vmatprep.subr.bf16.mxu0 0
  %2111 = vmatpush1.bf16.xpose.msra.mxu0 0
  %2112 = vmatprep.subr.bf16.mxu0 0
  %2113 = vmatpush1.bf16.xpose.msra.mxu0 0
  %2114 = vmatprep.subr.bf16.mxu0 0
  %2115 = vmatpush1.bf16.xpose.msra.mxu0 0
  %2116 = vmatprep.subr.bf16.mxu0 0
  %2117 = vmatpush1.bf16.xpose.msra.mxu0 0
  %2118 = vmatprep.subr.bf16.mxu0 0
  %2119 = vmatpush1.bf16.xpose.msra.mxu0 0
  %2120 = vmatprep.subr.bf16.mxu0 0
  %2121 = vmatpush1.bf16.xpose.msra.mxu0 0
  %2122 = vmatprep.subr.bf16.mxu0 0
  %2123 = vmatpush1.bf16.xpose.msra.mxu0 0
  %2124 = vmatprep.subr.bf16.mxu0 0
  %2125 = vmatpush1.bf16.xpose.msra.mxu0 0
  %2126 = vmatprep.subr.bf16.mxu0 0
  %2127 = vmatpush1.bf16.xpose.msra.mxu0 0
  %2128 = vmatprep.subr.bf16.mxu0 0
  %2129 = vmatpush1.bf16.xpose.msra.mxu0 0
  %2130 = vmatprep.subr.bf16.mxu0 0
  %2131 = vmatpush1.bf16.xpose.msra.mxu0 0
  %2132 = vmatprep.subr.bf16.mxu0 0
  %2133 = vmatpush1.bf16.xpose.msra.mxu0 0
  %2134 = vmatprep.mubr.bf16.mxu0 0
  %2135 = vmatmul.mubr.bf16.gmra.mrb[0].mxu0 %v2097
  %v2136 = vpop.f32.mrb[0].mxu0
  %v2137 = vadd.f32 0.0, %v2136
  %v2138 = vpop.f32.mrb[0].mxu0
  %v2139 = vpop.f32.mrb[0].mxu0
  %v2140 = vpop.f32.mrb[0].mxu0
  %2141 = vdwg.mxu0
  %2142 = vrot.lane.b32.xlu0 %v184, 120
  %v2143 = vpop.permute.xlu0 %2142
  %2144 = vrot.lane.b32.xlu0 %v184, 88
  %v2145 = vpop.permute.xlu0 %2144
  %v2147 = vsel %vm199, %v2143, 0
  %v2150 = vsel %vm199, %v2145, 0
  %2152 = vmatprep.subr.bf16.mxu0 0
  %2153 = vmatpush1.bf16.xpose.msra.mxu0 %v2150
  %2154 = vmatprep.subr.bf16.mxu0 0
  %2155 = vmatpush1.bf16.xpose.msra.mxu0 0
  %2156 = vmatprep.subr.bf16.mxu0 0
  %2157 = vmatpush1.bf16.xpose.msra.mxu0 0
  %2158 = vmatprep.subr.bf16.mxu0 0
  %2159 = vmatpush1.bf16.xpose.msra.mxu0 0
  %2160 = vmatprep.subr.bf16.mxu0 0
  %2161 = vmatpush1.bf16.xpose.msra.mxu0 0
  %2162 = vmatprep.subr.bf16.mxu0 0
  %2163 = vmatpush1.bf16.xpose.msra.mxu0 0
  %2164 = vmatprep.subr.bf16.mxu0 0
  %2165 = vmatpush1.bf16.xpose.msra.mxu0 0
  %2166 = vmatprep.subr.bf16.mxu0 0
  %2167 = vmatpush1.bf16.xpose.msra.mxu0 0
  %2168 = vmatprep.subr.bf16.mxu0 0
  %2169 = vmatpush1.bf16.xpose.msra.mxu0 0
  %2170 = vmatprep.subr.bf16.mxu0 0
  %2171 = vmatpush1.bf16.xpose.msra.mxu0 0
  %2172 = vmatprep.subr.bf16.mxu0 0
  %2173 = vmatpush1.bf16.xpose.msra.mxu0 0
  %2174 = vmatprep.subr.bf16.mxu0 0
  %2175 = vmatpush1.bf16.xpose.msra.mxu0 0
  %2176 = vmatprep.subr.bf16.mxu0 0
  %2177 = vmatpush1.bf16.xpose.msra.mxu0 0
  %2178 = vmatprep.subr.bf16.mxu0 0
  %2179 = vmatpush1.bf16.xpose.msra.mxu0 0
  %2180 = vmatprep.subr.bf16.mxu0 0
  %2181 = vmatpush1.bf16.xpose.msra.mxu0 0
  %2182 = vmatprep.subr.bf16.mxu0 0
  %2183 = vmatpush1.bf16.xpose.msra.mxu0 0
  %2184 = vmatprep.mubr.bf16.mxu0 0
  %2185 = vmatmul.mubr.bf16.gmra.mrb[0].mxu0 %v2147
  %v2186 = vpop.f32.mrb[0].mxu0
  %v2187 = vadd.f32 0.0, %v2186
  %v2188 = vpop.f32.mrb[0].mxu0
  %v2189 = vpop.f32.mrb[0].mxu0
  %v2190 = vpop.f32.mrb[0].mxu0
  %2191 = vdwg.mxu0
  %2192 = vrot.lane.b32.xlu0 %v185, 120
  %v2193 = vpop.permute.xlu0 %2192
  %2194 = vrot.lane.b32.xlu0 %v185, 88
  %v2195 = vpop.permute.xlu0 %2194
  %v2197 = vsel %vm199, %v2193, 0
  %v2200 = vsel %vm199, %v2195, 0
  %2202 = vmatprep.subr.bf16.mxu0 0
  %2203 = vmatpush1.bf16.xpose.msra.mxu0 %v2200
  %2204 = vmatprep.subr.bf16.mxu0 0
  %2205 = vmatpush1.bf16.xpose.msra.mxu0 0
  %2206 = vmatprep.subr.bf16.mxu0 0
  %2207 = vmatpush1.bf16.xpose.msra.mxu0 0
  %2208 = vmatprep.subr.bf16.mxu0 0
  %2209 = vmatpush1.bf16.xpose.msra.mxu0 0
  %2210 = vmatprep.subr.bf16.mxu0 0
  %2211 = vmatpush1.bf16.xpose.msra.mxu0 0
  %2212 = vmatprep.subr.bf16.mxu0 0
  %2213 = vmatpush1.bf16.xpose.msra.mxu0 0
  %2214 = vmatprep.subr.bf16.mxu0 0
  %2215 = vmatpush1.bf16.xpose.msra.mxu0 0
  %2216 = vmatprep.subr.bf16.mxu0 0
  %2217 = vmatpush1.bf16.xpose.msra.mxu0 0
  %2218 = vmatprep.subr.bf16.mxu0 0
  %2219 = vmatpush1.bf16.xpose.msra.mxu0 0
  %2220 = vmatprep.subr.bf16.mxu0 0
  %2221 = vmatpush1.bf16.xpose.msra.mxu0 0
  %2222 = vmatprep.subr.bf16.mxu0 0
  %2223 = vmatpush1.bf16.xpose.msra.mxu0 0
  %2224 = vmatprep.subr.bf16.mxu0 0
  %2225 = vmatpush1.bf16.xpose.msra.mxu0 0
  %2226 = vmatprep.subr.bf16.mxu0 0
  %2227 = vmatpush1.bf16.xpose.msra.mxu0 0
  %2228 = vmatprep.subr.bf16.mxu0 0
  %2229 = vmatpush1.bf16.xpose.msra.mxu0 0
  %2230 = vmatprep.subr.bf16.mxu0 0
  %2231 = vmatpush1.bf16.xpose.msra.mxu0 0
  %2232 = vmatprep.subr.bf16.mxu0 0
  %2233 = vmatpush1.bf16.xpose.msra.mxu0 0
  %2234 = vmatprep.mubr.bf16.mxu0 0
  %2235 = vmatmul.mubr.bf16.gmra.mrb[0].mxu0 %v2197
  %v2236 = vpop.f32.mrb[0].mxu0
  %v2237 = vadd.f32 0.0, %v2236
  %v2238 = vpop.f32.mrb[0].mxu0
  %v2239 = vpop.f32.mrb[0].mxu0
  %v2240 = vpop.f32.mrb[0].mxu0
  %2241 = vdwg.mxu0
  %2242 = vrot.lane.b32.xlu0 %v186, 120
  %v2243 = vpop.permute.xlu0 %2242
  %2244 = vrot.lane.b32.xlu0 %v186, 88
  %v2245 = vpop.permute.xlu0 %2244
  %v2247 = vsel %vm199, %v2243, 0
  %v2250 = vsel %vm199, %v2245, 0
  %2252 = vmatprep.subr.bf16.mxu0 0
  %2253 = vmatpush1.bf16.xpose.msra.mxu0 %v2250
  %2254 = vmatprep.subr.bf16.mxu0 0
  %2255 = vmatpush1.bf16.xpose.msra.mxu0 0
  %2256 = vmatprep.subr.bf16.mxu0 0
  %2257 = vmatpush1.bf16.xpose.msra.mxu0 0
  %2258 = vmatprep.subr.bf16.mxu0 0
  %2259 = vmatpush1.bf16.xpose.msra.mxu0 0
  %2260 = vmatprep.subr.bf16.mxu0 0
  %2261 = vmatpush1.bf16.xpose.msra.mxu0 0
  %2262 = vmatprep.subr.bf16.mxu0 0
  %2263 = vmatpush1.bf16.xpose.msra.mxu0 0
  %2264 = vmatprep.subr.bf16.mxu0 0
  %2265 = vmatpush1.bf16.xpose.msra.mxu0 0
  %2266 = vmatprep.subr.bf16.mxu0 0
  %2267 = vmatpush1.bf16.xpose.msra.mxu0 0
  %2268 = vmatprep.subr.bf16.mxu0 0
  %2269 = vmatpush1.bf16.xpose.msra.mxu0 0
  %2270 = vmatprep.subr.bf16.mxu0 0
  %2271 = vmatpush1.bf16.xpose.msra.mxu0 0
  %2272 = vmatprep.subr.bf16.mxu0 0
  %2273 = vmatpush1.bf16.xpose.msra.mxu0 0
  %2274 = vmatprep.subr.bf16.mxu0 0
  %2275 = vmatpush1.bf16.xpose.msra.mxu0 0
  %2276 = vmatprep.subr.bf16.mxu0 0
  %2277 = vmatpush1.bf16.xpose.msra.mxu0 0
  %2278 = vmatprep.subr.bf16.mxu0 0
  %2279 = vmatpush1.bf16.xpose.msra.mxu0 0
  %2280 = vmatprep.subr.bf16.mxu0 0
  %2281 = vmatpush1.bf16.xpose.msra.mxu0 0
  %2282 = vmatprep.subr.bf16.mxu0 0
  %2283 = vmatpush1.bf16.xpose.msra.mxu0 0
  %2284 = vmatprep.mubr.bf16.mxu0 0
  %2285 = vmatmul.mubr.bf16.gmra.mrb[0].mxu0 %v2247
  %v2286 = vpop.f32.mrb[0].mxu0
  %v2287 = vadd.f32 0.0, %v2286
  %v2288 = vpop.f32.mrb[0].mxu0
  %v2289 = vpop.f32.mrb[0].mxu0
  %v2290 = vpop.f32.mrb[0].mxu0
  %2291 = vdwg.mxu0
  %2292 = vrot.lane.b32.xlu0 %v187, 120
  %v2293 = vpop.permute.xlu0 %2292
  %2294 = vrot.lane.b32.xlu0 %v187, 88
  %v2295 = vpop.permute.xlu0 %2294
  %v2297 = vsel %vm199, %v2293, 0
  %v2300 = vsel %vm199, %v2295, 0
  %2302 = vmatprep.subr.bf16.mxu0 0
  %2303 = vmatpush1.bf16.xpose.msra.mxu0 %v2300
  %2304 = vmatprep.subr.bf16.mxu0 0
  %2305 = vmatpush1.bf16.xpose.msra.mxu0 0
  %2306 = vmatprep.subr.bf16.mxu0 0
  %2307 = vmatpush1.bf16.xpose.msra.mxu0 0
  %2308 = vmatprep.subr.bf16.mxu0 0
  %2309 = vmatpush1.bf16.xpose.msra.mxu0 0
  %2310 = vmatprep.subr.bf16.mxu0 0
  %2311 = vmatpush1.bf16.xpose.msra.mxu0 0
  %2312 = vmatprep.subr.bf16.mxu0 0
  %2313 = vmatpush1.bf16.xpose.msra.mxu0 0
  %2314 = vmatprep.subr.bf16.mxu0 0
  %2315 = vmatpush1.bf16.xpose.msra.mxu0 0
  %2316 = vmatprep.subr.bf16.mxu0 0
  %2317 = vmatpush1.bf16.xpose.msra.mxu0 0
  %2318 = vmatprep.subr.bf16.mxu0 0
  %2319 = vmatpush1.bf16.xpose.msra.mxu0 0
  %2320 = vmatprep.subr.bf16.mxu0 0
  %2321 = vmatpush1.bf16.xpose.msra.mxu0 0
  %2322 = vmatprep.subr.bf16.mxu0 0
  %2323 = vmatpush1.bf16.xpose.msra.mxu0 0
  %2324 = vmatprep.subr.bf16.mxu0 0
  %2325 = vmatpush1.bf16.xpose.msra.mxu0 0
  %2326 = vmatprep.subr.bf16.mxu0 0
  %2327 = vmatpush1.bf16.xpose.msra.mxu0 0
  %2328 = vmatprep.subr.bf16.mxu0 0
  %2329 = vmatpush1.bf16.xpose.msra.mxu0 0
  %2330 = vmatprep.subr.bf16.mxu0 0
  %2331 = vmatpush1.bf16.xpose.msra.mxu0 0
  %2332 = vmatprep.subr.bf16.mxu0 0
  %2333 = vmatpush1.bf16.xpose.msra.mxu0 0
  %2334 = vmatprep.mubr.bf16.mxu0 0
  %2335 = vmatmul.mubr.bf16.gmra.mrb[0].mxu0 %v2297
  %v2336 = vpop.f32.mrb[0].mxu0
  %v2337 = vadd.f32 0.0, %v2336
  %v2338 = vpop.f32.mrb[0].mxu0
  %v2339 = vpop.f32.mrb[0].mxu0
  %v2340 = vpop.f32.mrb[0].mxu0
  %2341 = vdwg.mxu0
  %2342 = vrot.lane.b32.xlu0 %v188, 120
  %v2343 = vpop.permute.xlu0 %2342
  %2344 = vrot.lane.b32.xlu0 %v188, 88
  %v2345 = vpop.permute.xlu0 %2344
  %v2347 = vsel %vm199, %v2343, 0
  %v2350 = vsel %vm199, %v2345, 0
  %2352 = vmatprep.subr.bf16.mxu0 0
  %2353 = vmatpush1.bf16.xpose.msra.mxu0 %v2350
  %2354 = vmatprep.subr.bf16.mxu0 0
  %2355 = vmatpush1.bf16.xpose.msra.mxu0 0
  %2356 = vmatprep.subr.bf16.mxu0 0
  %2357 = vmatpush1.bf16.xpose.msra.mxu0 0
  %2358 = vmatprep.subr.bf16.mxu0 0
  %2359 = vmatpush1.bf16.xpose.msra.mxu0 0
  %2360 = vmatprep.subr.bf16.mxu0 0
  %2361 = vmatpush1.bf16.xpose.msra.mxu0 0
  %2362 = vmatprep.subr.bf16.mxu0 0
  %2363 = vmatpush1.bf16.xpose.msra.mxu0 0
  %2364 = vmatprep.subr.bf16.mxu0 0
  %2365 = vmatpush1.bf16.xpose.msra.mxu0 0
  %2366 = vmatprep.subr.bf16.mxu0 0
  %2367 = vmatpush1.bf16.xpose.msra.mxu0 0
  %2368 = vmatprep.subr.bf16.mxu0 0
  %2369 = vmatpush1.bf16.xpose.msra.mxu0 0
  %2370 = vmatprep.subr.bf16.mxu0 0
  %2371 = vmatpush1.bf16.xpose.msra.mxu0 0
  %2372 = vmatprep.subr.bf16.mxu0 0
  %2373 = vmatpush1.bf16.xpose.msra.mxu0 0
  %2374 = vmatprep.subr.bf16.mxu0 0
  %2375 = vmatpush1.bf16.xpose.msra.mxu0 0
  %2376 = vmatprep.subr.bf16.mxu0 0
  %2377 = vmatpush1.bf16.xpose.msra.mxu0 0
  %2378 = vmatprep.subr.bf16.mxu0 0
  %2379 = vmatpush1.bf16.xpose.msra.mxu0 0
  %2380 = vmatprep.subr.bf16.mxu0 0
  %2381 = vmatpush1.bf16.xpose.msra.mxu0 0
  %2382 = vmatprep.subr.bf16.mxu0 0
  %2383 = vmatpush1.bf16.xpose.msra.mxu0 0
  %2384 = vmatprep.mubr.bf16.mxu0 0
  %2385 = vmatmul.mubr.bf16.gmra.mrb[0].mxu0 %v2347
  %v2386 = vpop.f32.mrb[0].mxu0
  %v2387 = vadd.f32 0.0, %v2386
  %v2388 = vpop.f32.mrb[0].mxu0
  %v2389 = vpop.f32.mrb[0].mxu0
  %v2390 = vpop.f32.mrb[0].mxu0
  %2391 = vdwg.mxu0
  %2392 = vrot.lane.b32.xlu0 %v189, 120
  %v2393 = vpop.permute.xlu0 %2392
  %2394 = vrot.lane.b32.xlu0 %v189, 88
  %v2395 = vpop.permute.xlu0 %2394
  %v2397 = vsel %vm199, %v2393, 0
  %v2400 = vsel %vm199, %v2395, 0
  %2402 = vmatprep.subr.bf16.mxu0 0
  %2403 = vmatpush1.bf16.xpose.msra.mxu0 %v2400
  %2404 = vmatprep.subr.bf16.mxu0 0
  %2405 = vmatpush1.bf16.xpose.msra.mxu0 0
  %2406 = vmatprep.subr.bf16.mxu0 0
  %2407 = vmatpush1.bf16.xpose.msra.mxu0 0
  %2408 = vmatprep.subr.bf16.mxu0 0
  %2409 = vmatpush1.bf16.xpose.msra.mxu0 0
  %2410 = vmatprep.subr.bf16.mxu0 0
  %2411 = vmatpush1.bf16.xpose.msra.mxu0 0
  %2412 = vmatprep.subr.bf16.mxu0 0
  %2413 = vmatpush1.bf16.xpose.msra.mxu0 0
  %2414 = vmatprep.subr.bf16.mxu0 0
  %2415 = vmatpush1.bf16.xpose.msra.mxu0 0
  %2416 = vmatprep.subr.bf16.mxu0 0
  %2417 = vmatpush1.bf16.xpose.msra.mxu0 0
  %2418 = vmatprep.subr.bf16.mxu0 0
  %2419 = vmatpush1.bf16.xpose.msra.mxu0 0
  %2420 = vmatprep.subr.bf16.mxu0 0
  %2421 = vmatpush1.bf16.xpose.msra.mxu0 0
  %2422 = vmatprep.subr.bf16.mxu0 0
  %2423 = vmatpush1.bf16.xpose.msra.mxu0 0
  %2424 = vmatprep.subr.bf16.mxu0 0
  %2425 = vmatpush1.bf16.xpose.msra.mxu0 0
  %2426 = vmatprep.subr.bf16.mxu0 0
  %2427 = vmatpush1.bf16.xpose.msra.mxu0 0
  %2428 = vmatprep.subr.bf16.mxu0 0
  %2429 = vmatpush1.bf16.xpose.msra.mxu0 0
  %2430 = vmatprep.subr.bf16.mxu0 0
  %2431 = vmatpush1.bf16.xpose.msra.mxu0 0
  %2432 = vmatprep.subr.bf16.mxu0 0
  %2433 = vmatpush1.bf16.xpose.msra.mxu0 0
  %2434 = vmatprep.mubr.bf16.mxu0 0
  %2435 = vmatmul.mubr.bf16.gmra.mrb[0].mxu0 %v2397
  %v2436 = vpop.f32.mrb[0].mxu0
  %v2437 = vadd.f32 0.0, %v2436
  %v2438 = vpop.f32.mrb[0].mxu0
  %v2439 = vpop.f32.mrb[0].mxu0
  %v2440 = vpop.f32.mrb[0].mxu0
  %2441 = vdwg.mxu0
  %2442 = vrot.lane.b32.xlu0 %v190, 120
  %v2443 = vpop.permute.xlu0 %2442
  %2444 = vrot.lane.b32.xlu0 %v190, 88
  %v2445 = vpop.permute.xlu0 %2444
  %v2447 = vsel %vm199, %v2443, 0
  %v2450 = vsel %vm199, %v2445, 0
  %2452 = vmatprep.subr.bf16.mxu0 0
  %2453 = vmatpush1.bf16.xpose.msra.mxu0 %v2450
  %2454 = vmatprep.subr.bf16.mxu0 0
  %2455 = vmatpush1.bf16.xpose.msra.mxu0 0
  %2456 = vmatprep.subr.bf16.mxu0 0
  %2457 = vmatpush1.bf16.xpose.msra.mxu0 0
  %2458 = vmatprep.subr.bf16.mxu0 0
  %2459 = vmatpush1.bf16.xpose.msra.mxu0 0
  %2460 = vmatprep.subr.bf16.mxu0 0
  %2461 = vmatpush1.bf16.xpose.msra.mxu0 0
  %2462 = vmatprep.subr.bf16.mxu0 0
  %2463 = vmatpush1.bf16.xpose.msra.mxu0 0
  %2464 = vmatprep.subr.bf16.mxu0 0
  %2465 = vmatpush1.bf16.xpose.msra.mxu0 0
  %2466 = vmatprep.subr.bf16.mxu0 0
  %2467 = vmatpush1.bf16.xpose.msra.mxu0 0
  %2468 = vmatprep.subr.bf16.mxu0 0
  %2469 = vmatpush1.bf16.xpose.msra.mxu0 0
  %2470 = vmatprep.subr.bf16.mxu0 0
  %2471 = vmatpush1.bf16.xpose.msra.mxu0 0
  %2472 = vmatprep.subr.bf16.mxu0 0
  %2473 = vmatpush1.bf16.xpose.msra.mxu0 0
  %2474 = vmatprep.subr.bf16.mxu0 0
  %2475 = vmatpush1.bf16.xpose.msra.mxu0 0
  %2476 = vmatprep.subr.bf16.mxu0 0
  %2477 = vmatpush1.bf16.xpose.msra.mxu0 0
  %2478 = vmatprep.subr.bf16.mxu0 0
  %2479 = vmatpush1.bf16.xpose.msra.mxu0 0
  %2480 = vmatprep.subr.bf16.mxu0 0
  %2481 = vmatpush1.bf16.xpose.msra.mxu0 0
  %2482 = vmatprep.subr.bf16.mxu0 0
  %2483 = vmatpush1.bf16.xpose.msra.mxu0 0
  %2484 = vmatprep.mubr.bf16.mxu0 0
  %2485 = vmatmul.mubr.bf16.gmra.mrb[0].mxu0 %v2447
  %v2486 = vpop.f32.mrb[0].mxu0
  %v2487 = vadd.f32 0.0, %v2486
  %v2488 = vpop.f32.mrb[0].mxu0
  %v2489 = vpop.f32.mrb[0].mxu0
  %v2490 = vpop.f32.mrb[0].mxu0
  %2491 = vdwg.mxu0
  %2492 = vrot.lane.b32.xlu0 %v191, 120
  %v2493 = vpop.permute.xlu0 %2492
  %2494 = vrot.lane.b32.xlu0 %v191, 88
  %v2495 = vpop.permute.xlu0 %2494
  %v2497 = vsel %vm199, %v2493, 0
  %v2500 = vsel %vm199, %v2495, 0
  %2502 = vmatprep.subr.bf16.mxu0 0
  %2503 = vmatpush1.bf16.xpose.msra.mxu0 %v2500
  %2504 = vmatprep.subr.bf16.mxu0 0
  %2505 = vmatpush1.bf16.xpose.msra.mxu0 0
  %2506 = vmatprep.subr.bf16.mxu0 0
  %2507 = vmatpush1.bf16.xpose.msra.mxu0 0
  %2508 = vmatprep.subr.bf16.mxu0 0
  %2509 = vmatpush1.bf16.xpose.msra.mxu0 0
  %2510 = vmatprep.subr.bf16.mxu0 0
  %2511 = vmatpush1.bf16.xpose.msra.mxu0 0
  %2512 = vmatprep.subr.bf16.mxu0 0
  %2513 = vmatpush1.bf16.xpose.msra.mxu0 0
  %2514 = vmatprep.subr.bf16.mxu0 0
  %2515 = vmatpush1.bf16.xpose.msra.mxu0 0
  %2516 = vmatprep.subr.bf16.mxu0 0
  %2517 = vmatpush1.bf16.xpose.msra.mxu0 0
  %2518 = vmatprep.subr.bf16.mxu0 0
  %2519 = vmatpush1.bf16.xpose.msra.mxu0 0
  %2520 = vmatprep.subr.bf16.mxu0 0
  %2521 = vmatpush1.bf16.xpose.msra.mxu0 0
  %2522 = vmatprep.subr.bf16.mxu0 0
  %2523 = vmatpush1.bf16.xpose.msra.mxu0 0
  %2524 = vmatprep.subr.bf16.mxu0 0
  %2525 = vmatpush1.bf16.xpose.msra.mxu0 0
  %2526 = vmatprep.subr.bf16.mxu0 0
  %2527 = vmatpush1.bf16.xpose.msra.mxu0 0
  %2528 = vmatprep.subr.bf16.mxu0 0
  %2529 = vmatpush1.bf16.xpose.msra.mxu0 0
  %2530 = vmatprep.subr.bf16.mxu0 0
  %2531 = vmatpush1.bf16.xpose.msra.mxu0 0
  %2532 = vmatprep.subr.bf16.mxu0 0
  %2533 = vmatpush1.bf16.xpose.msra.mxu0 0
  %2534 = vmatprep.mubr.bf16.mxu0 0
  %2535 = vmatmul.mubr.bf16.gmra.mrb[0].mxu0 %v2497
  %v2536 = vpop.f32.mrb[0].mxu0
  %v2537 = vadd.f32 0.0, %v2536
  %v2538 = vpop.f32.mrb[0].mxu0
  %v2539 = vpop.f32.mrb[0].mxu0
  %v2540 = vpop.f32.mrb[0].mxu0
  %2541 = vdwg.mxu0
  %2542 = vrot.lane.b32.xlu0 %v192, 120
  %v2543 = vpop.permute.xlu0 %2542
  %2544 = vrot.lane.b32.xlu0 %v192, 88
  %v2545 = vpop.permute.xlu0 %2544
  %v2547 = vsel %vm199, %v2543, 0
  %v2550 = vsel %vm199, %v2545, 0
  %2552 = vmatprep.subr.bf16.mxu0 0
  %2553 = vmatpush1.bf16.xpose.msra.mxu0 %v2550
  %2554 = vmatprep.subr.bf16.mxu0 0
  %2555 = vmatpush1.bf16.xpose.msra.mxu0 0
  %2556 = vmatprep.subr.bf16.mxu0 0
  %2557 = vmatpush1.bf16.xpose.msra.mxu0 0
  %2558 = vmatprep.subr.bf16.mxu0 0
  %2559 = vmatpush1.bf16.xpose.msra.mxu0 0
  %2560 = vmatprep.subr.bf16.mxu0 0
  %2561 = vmatpush1.bf16.xpose.msra.mxu0 0
  %2562 = vmatprep.subr.bf16.mxu0 0
  %2563 = vmatpush1.bf16.xpose.msra.mxu0 0
  %2564 = vmatprep.subr.bf16.mxu0 0
  %2565 = vmatpush1.bf16.xpose.msra.mxu0 0
  %2566 = vmatprep.subr.bf16.mxu0 0
  %2567 = vmatpush1.bf16.xpose.msra.mxu0 0
  %2568 = vmatprep.subr.bf16.mxu0 0
  %2569 = vmatpush1.bf16.xpose.msra.mxu0 0
  %2570 = vmatprep.subr.bf16.mxu0 0
  %2571 = vmatpush1.bf16.xpose.msra.mxu0 0
  %2572 = vmatprep.subr.bf16.mxu0 0
  %2573 = vmatpush1.bf16.xpose.msra.mxu0 0
  %2574 = vmatprep.subr.bf16.mxu0 0
  %2575 = vmatpush1.bf16.xpose.msra.mxu0 0
  %2576 = vmatprep.subr.bf16.mxu0 0
  %2577 = vmatpush1.bf16.xpose.msra.mxu0 0
  %2578 = vmatprep.subr.bf16.mxu0 0
  %2579 = vmatpush1.bf16.xpose.msra.mxu0 0
  %2580 = vmatprep.subr.bf16.mxu0 0
  %2581 = vmatpush1.bf16.xpose.msra.mxu0 0
  %2582 = vmatprep.subr.bf16.mxu0 0
  %2583 = vmatpush1.bf16.xpose.msra.mxu0 0
  %2584 = vmatprep.mubr.bf16.mxu0 0
  %2585 = vmatmul.mubr.bf16.gmra.mrb[0].mxu0 %v2547
  %v2586 = vpop.f32.mrb[0].mxu0
  %v2587 = vadd.f32 0.0, %v2586
  %v2588 = vpop.f32.mrb[0].mxu0
  %v2589 = vpop.f32.mrb[0].mxu0
  %v2590 = vpop.f32.mrb[0].mxu0
  %2591 = vdwg.mxu0
  %2592 = vrot.lane.b32.xlu0 %v193, 120
  %v2593 = vpop.permute.xlu0 %2592
  %2594 = vrot.lane.b32.xlu0 %v193, 88
  %v2595 = vpop.permute.xlu0 %2594
  %v2597 = vsel %vm199, %v2593, 0
  %v2600 = vsel %vm199, %v2595, 0
  %2602 = vmatprep.subr.bf16.mxu0 0
  %2603 = vmatpush1.bf16.xpose.msra.mxu0 %v2600
  %2604 = vmatprep.subr.bf16.mxu0 0
  %2605 = vmatpush1.bf16.xpose.msra.mxu0 0
  %2606 = vmatprep.subr.bf16.mxu0 0
  %2607 = vmatpush1.bf16.xpose.msra.mxu0 0
  %2608 = vmatprep.subr.bf16.mxu0 0
  %2609 = vmatpush1.bf16.xpose.msra.mxu0 0
  %2610 = vmatprep.subr.bf16.mxu0 0
  %2611 = vmatpush1.bf16.xpose.msra.mxu0 0
  %2612 = vmatprep.subr.bf16.mxu0 0
  %2613 = vmatpush1.bf16.xpose.msra.mxu0 0
  %2614 = vmatprep.subr.bf16.mxu0 0
  %2615 = vmatpush1.bf16.xpose.msra.mxu0 0
  %2616 = vmatprep.subr.bf16.mxu0 0
  %2617 = vmatpush1.bf16.xpose.msra.mxu0 0
  %2618 = vmatprep.subr.bf16.mxu0 0
  %2619 = vmatpush1.bf16.xpose.msra.mxu0 0
  %2620 = vmatprep.subr.bf16.mxu0 0
  %2621 = vmatpush1.bf16.xpose.msra.mxu0 0
  %2622 = vmatprep.subr.bf16.mxu0 0
  %2623 = vmatpush1.bf16.xpose.msra.mxu0 0
  %2624 = vmatprep.subr.bf16.mxu0 0
  %2625 = vmatpush1.bf16.xpose.msra.mxu0 0
  %2626 = vmatprep.subr.bf16.mxu0 0
  %2627 = vmatpush1.bf16.xpose.msra.mxu0 0
  %2628 = vmatprep.subr.bf16.mxu0 0
  %2629 = vmatpush1.bf16.xpose.msra.mxu0 0
  %2630 = vmatprep.subr.bf16.mxu0 0
  %2631 = vmatpush1.bf16.xpose.msra.mxu0 0
  %2632 = vmatprep.subr.bf16.mxu0 0
  %2633 = vmatpush1.bf16.xpose.msra.mxu0 0
  %2634 = vmatprep.mubr.bf16.mxu0 0
  %2635 = vmatmul.mubr.bf16.gmra.mrb[0].mxu0 %v2597
  %v2636 = vpop.f32.mrb[0].mxu0
  %v2637 = vadd.f32 0.0, %v2636
  %v2638 = vpop.f32.mrb[0].mxu0
  %v2639 = vpop.f32.mrb[0].mxu0
  %v2640 = vpop.f32.mrb[0].mxu0
  %2641 = vdwg.mxu0
  %2642 = vrot.lane.b32.xlu0 %v194, 120
  %v2643 = vpop.permute.xlu0 %2642
  %2644 = vrot.lane.b32.xlu0 %v194, 88
  %v2645 = vpop.permute.xlu0 %2644
  %v2647 = vsel %vm199, %v2643, 0
  %v2650 = vsel %vm199, %v2645, 0
  %2652 = vmatprep.subr.bf16.mxu0 0
  %2653 = vmatpush1.bf16.xpose.msra.mxu0 %v2650
  %2654 = vmatprep.subr.bf16.mxu0 0
  %2655 = vmatpush1.bf16.xpose.msra.mxu0 0
  %2656 = vmatprep.subr.bf16.mxu0 0
  %2657 = vmatpush1.bf16.xpose.msra.mxu0 0
  %2658 = vmatprep.subr.bf16.mxu0 0
  %2659 = vmatpush1.bf16.xpose.msra.mxu0 0
  %2660 = vmatprep.subr.bf16.mxu0 0
  %2661 = vmatpush1.bf16.xpose.msra.mxu0 0
  %2662 = vmatprep.subr.bf16.mxu0 0
  %2663 = vmatpush1.bf16.xpose.msra.mxu0 0
  %2664 = vmatprep.subr.bf16.mxu0 0
  %2665 = vmatpush1.bf16.xpose.msra.mxu0 0
  %2666 = vmatprep.subr.bf16.mxu0 0
  %2667 = vmatpush1.bf16.xpose.msra.mxu0 0
  %2668 = vmatprep.subr.bf16.mxu0 0
  %2669 = vmatpush1.bf16.xpose.msra.mxu0 0
  %2670 = vmatprep.subr.bf16.mxu0 0
  %2671 = vmatpush1.bf16.xpose.msra.mxu0 0
  %2672 = vmatprep.subr.bf16.mxu0 0
  %2673 = vmatpush1.bf16.xpose.msra.mxu0 0
  %2674 = vmatprep.subr.bf16.mxu0 0
  %2675 = vmatpush1.bf16.xpose.msra.mxu0 0
  %2676 = vmatprep.subr.bf16.mxu0 0
  %2677 = vmatpush1.bf16.xpose.msra.mxu0 0
  %2678 = vmatprep.subr.bf16.mxu0 0
  %2679 = vmatpush1.bf16.xpose.msra.mxu0 0
  %2680 = vmatprep.subr.bf16.mxu0 0
  %2681 = vmatpush1.bf16.xpose.msra.mxu0 0
  %2682 = vmatprep.subr.bf16.mxu0 0
  %2683 = vmatpush1.bf16.xpose.msra.mxu0 0
  %2684 = vmatprep.mubr.bf16.mxu0 0
  %2685 = vmatmul.mubr.bf16.gmra.mrb[0].mxu0 %v2647
  %v2686 = vpop.f32.mrb[0].mxu0
  %v2687 = vadd.f32 0.0, %v2686
  %v2688 = vpop.f32.mrb[0].mxu0
  %v2689 = vpop.f32.mrb[0].mxu0
  %v2690 = vpop.f32.mrb[0].mxu0
  %2691 = vdwg.mxu0
  %2692 = vrot.lane.b32.xlu0 %v195, 120
  %v2693 = vpop.permute.xlu0 %2692
  %2694 = vrot.lane.b32.xlu0 %v195, 88
  %v2695 = vpop.permute.xlu0 %2694
  %v2697 = vsel %vm199, %v2693, 0
  %v2700 = vsel %vm199, %v2695, 0
  %2702 = vmatprep.subr.bf16.mxu0 0
  %2703 = vmatpush1.bf16.xpose.msra.mxu0 %v2700
  %2704 = vmatprep.subr.bf16.mxu0 0
  %2705 = vmatpush1.bf16.xpose.msra.mxu0 0
  %2706 = vmatprep.subr.bf16.mxu0 0
  %2707 = vmatpush1.bf16.xpose.msra.mxu0 0
  %2708 = vmatprep.subr.bf16.mxu0 0
  %2709 = vmatpush1.bf16.xpose.msra.mxu0 0
  %2710 = vmatprep.subr.bf16.mxu0 0
  %2711 = vmatpush1.bf16.xpose.msra.mxu0 0
  %2712 = vmatprep.subr.bf16.mxu0 0
  %2713 = vmatpush1.bf16.xpose.msra.mxu0 0
  %2714 = vmatprep.subr.bf16.mxu0 0
  %2715 = vmatpush1.bf16.xpose.msra.mxu0 0
  %2716 = vmatprep.subr.bf16.mxu0 0
  %2717 = vmatpush1.bf16.xpose.msra.mxu0 0
  %2718 = vmatprep.subr.bf16.mxu0 0
  %2719 = vmatpush1.bf16.xpose.msra.mxu0 0
  %2720 = vmatprep.subr.bf16.mxu0 0
  %2721 = vmatpush1.bf16.xpose.msra.mxu0 0
  %2722 = vmatprep.subr.bf16.mxu0 0
  %2723 = vmatpush1.bf16.xpose.msra.mxu0 0
  %2724 = vmatprep.subr.bf16.mxu0 0
  %2725 = vmatpush1.bf16.xpose.msra.mxu0 0
  %2726 = vmatprep.subr.bf16.mxu0 0
  %2727 = vmatpush1.bf16.xpose.msra.mxu0 0
  %2728 = vmatprep.subr.bf16.mxu0 0
  %2729 = vmatpush1.bf16.xpose.msra.mxu0 0
  %2730 = vmatprep.subr.bf16.mxu0 0
  %2731 = vmatpush1.bf16.xpose.msra.mxu0 0
  %2732 = vmatprep.subr.bf16.mxu0 0
  %2733 = vmatpush1.bf16.xpose.msra.mxu0 0
  %2734 = vmatprep.mubr.bf16.mxu0 0
  %2735 = vmatmul.mubr.bf16.gmra.mrb[0].mxu0 %v2697
  %v2736 = vpop.f32.mrb[0].mxu0
  %v2737 = vadd.f32 0.0, %v2736
  %v2738 = vpop.f32.mrb[0].mxu0
  %v2739 = vpop.f32.mrb[0].mxu0
  %v2740 = vpop.f32.mrb[0].mxu0
  %2741 = vdwg.mxu0
  %v2742 = vsel %vm199, %v1987, -inf
  %2743 = vmax.xlane.f32.xlu0 %v2742
  %v2744 = vpop.xlane.xlu0 %2743
  %v2745 = vsel %vm199, %v2037, -inf
  %2746 = vmax.xlane.f32.xlu0 %v2745
  %v2747 = vpop.xlane.xlu0 %2746
  %v2748 = vsel %vm199, %v2087, -inf
  %2749 = vmax.xlane.f32.xlu0 %v2748
  %v2750 = vpop.xlane.xlu0 %2749
  %v2751 = vsel %vm199, %v2137, -inf
  %2752 = vmax.xlane.f32.xlu0 %v2751
  %v2753 = vpop.xlane.xlu0 %2752
  %v2754 = vsel %vm199, %v2187, -inf
  %2755 = vmax.xlane.f32.xlu0 %v2754
  %v2756 = vpop.xlane.xlu0 %2755
  %v2757 = vsel %vm199, %v2237, -inf
  %2758 = vmax.xlane.f32.xlu0 %v2757
  %v2759 = vpop.xlane.xlu0 %2758
  %v2760 = vsel %vm199, %v2287, -inf
  %2761 = vmax.xlane.f32.xlu0 %v2760
  %v2762 = vpop.xlane.xlu0 %2761
  %v2763 = vsel %vm199, %v2337, -inf
  %2764 = vmax.xlane.f32.xlu0 %v2763
  %v2765 = vpop.xlane.xlu0 %2764
  %v2766 = vsel %vm199, %v2387, -inf
  %2767 = vmax.xlane.f32.xlu0 %v2766
  %v2768 = vpop.xlane.xlu0 %2767
  %v2769 = vsel %vm199, %v2437, -inf
  %2770 = vmax.xlane.f32.xlu0 %v2769
  %v2771 = vpop.xlane.xlu0 %2770
  %v2772 = vsel %vm199, %v2487, -inf
  %2773 = vmax.xlane.f32.xlu0 %v2772
  %v2774 = vpop.xlane.xlu0 %2773
  %v2775 = vsel %vm199, %v2537, -inf
  %2776 = vmax.xlane.f32.xlu0 %v2775
  %v2777 = vpop.xlane.xlu0 %2776
  %v2778 = vsel %vm199, %v2587, -inf
  %2779 = vmax.xlane.f32.xlu0 %v2778
  %v2780 = vpop.xlane.xlu0 %2779
  %v2781 = vsel %vm199, %v2637, -inf
  %2782 = vmax.xlane.f32.xlu0 %v2781
  %v2783 = vpop.xlane.xlu0 %2782
  %v2784 = vsel %vm199, %v2687, -inf
  %2785 = vmax.xlane.f32.xlu0 %v2784
  %v2786 = vpop.xlane.xlu0 %2785
  %v2787 = vsel %vm199, %v2737, -inf
  %2788 = vmax.xlane.f32.xlu0 %v2787
  %v2789 = vpop.xlane.xlu0 %2788
  %v2790 = vsub.f32 %v1987, %v2744
  %v2791 = vsub.f32 %v2037, %v2747
  %v2792 = vsub.f32 %v2087, %v2750
  %v2793 = vsub.f32 %v2137, %v2753
  %v2794 = vsub.f32 %v2187, %v2756
  %v2795 = vsub.f32 %v2237, %v2759
  %v2796 = vsub.f32 %v2287, %v2762
  %v2797 = vsub.f32 %v2337, %v2765
  %v2798 = vsub.f32 %v2387, %v2768
  %v2799 = vsub.f32 %v2437, %v2771
  %v2800 = vsub.f32 %v2487, %v2774
  %v2801 = vsub.f32 %v2537, %v2777
  %v2802 = vsub.f32 %v2587, %v2780
  %v2803 = vsub.f32 %v2637, %v2783
  %v2804 = vsub.f32 %v2687, %v2786
  %v2805 = vsub.f32 %v2737, %v2789
  %v2806 = vmul.f32 %v2790, 1.442695
  %v2807 = vpow.pop %v2806
  %v2808 = vmul.f32 %v2791, 1.442695
  %v2809 = vpow.pop %v2808
  %v2810 = vmul.f32 %v2792, 1.442695
  %v2811 = vpow.pop %v2810
  %v2812 = vmul.f32 %v2793, 1.442695
  %v2813 = vpow.pop %v2812
  %v2814 = vmul.f32 %v2794, 1.442695
  %v2815 = vpow.pop %v2814
  %v2816 = vmul.f32 %v2795, 1.442695
  %v2817 = vpow.pop %v2816
  %v2818 = vmul.f32 %v2796, 1.442695
  %v2819 = vpow.pop %v2818
  %v2820 = vmul.f32 %v2797, 1.442695
  %v2821 = vpow.pop %v2820
  %v2822 = vmul.f32 %v2798, 1.442695
  %v2823 = vpow.pop %v2822
  %v2824 = vmul.f32 %v2799, 1.442695
  %v2825 = vpow.pop %v2824
  %v2826 = vmul.f32 %v2800, 1.442695
  %v2827 = vpow.pop %v2826
  %v2828 = vmul.f32 %v2801, 1.442695
  %v2829 = vpow.pop %v2828
  %v2830 = vmul.f32 %v2802, 1.442695
  %v2831 = vpow.pop %v2830
  %v2832 = vmul.f32 %v2803, 1.442695
  %v2833 = vpow.pop %v2832
  %v2834 = vmul.f32 %v2804, 1.442695
  %v2835 = vpow.pop %v2834
  %v2836 = vmul.f32 %v2805, 1.442695
  %v2837 = vpow.pop %v2836
  %v2838 = vsel %vm199, %v2807, 0.0
  %2839 = vadd.xlane.f32.xlu0 %v2838
  %v2840 = vpop.xlane.xlu0 %2839
  %v2841 = vsel %vm199, %v2809, 0.0
  %2842 = vadd.xlane.f32.xlu0 %v2841
  %v2843 = vpop.xlane.xlu0 %2842
  %v2844 = vsel %vm199, %v2811, 0.0
  %2845 = vadd.xlane.f32.xlu0 %v2844
  %v2846 = vpop.xlane.xlu0 %2845
  %v2847 = vsel %vm199, %v2813, 0.0
  %2848 = vadd.xlane.f32.xlu0 %v2847
  %v2849 = vpop.xlane.xlu0 %2848
  %v2850 = vsel %vm199, %v2815, 0.0
  %2851 = vadd.xlane.f32.xlu0 %v2850
  %v2852 = vpop.xlane.xlu0 %2851
  %v2853 = vsel %vm199, %v2817, 0.0
  %2854 = vadd.xlane.f32.xlu0 %v2853
  %v2855 = vpop.xlane.xlu0 %2854
  %v2856 = vsel %vm199, %v2819, 0.0
  %2857 = vadd.xlane.f32.xlu0 %v2856
  %v2858 = vpop.xlane.xlu0 %2857
  %v2859 = vsel %vm199, %v2821, 0.0
  %2860 = vadd.xlane.f32.xlu0 %v2859
  %v2861 = vpop.xlane.xlu0 %2860
  %v2862 = vsel %vm199, %v2823, 0.0
  %2863 = vadd.xlane.f32.xlu0 %v2862
  %v2864 = vpop.xlane.xlu0 %2863
  %v2865 = vsel %vm199, %v2825, 0.0
  %2866 = vadd.xlane.f32.xlu0 %v2865
  %v2867 = vpop.xlane.xlu0 %2866
  %v2868 = vsel %vm199, %v2827, 0.0
  %2869 = vadd.xlane.f32.xlu0 %v2868
  %v2870 = vpop.xlane.xlu0 %2869
  %v2871 = vsel %vm199, %v2829, 0.0
  %2872 = vadd.xlane.f32.xlu0 %v2871
  %v2873 = vpop.xlane.xlu0 %2872
  %v2874 = vsel %vm199, %v2831, 0.0
  %2875 = vadd.xlane.f32.xlu0 %v2874
  %v2876 = vpop.xlane.xlu0 %2875
  %v2877 = vsel %vm199, %v2833, 0.0
  %2878 = vadd.xlane.f32.xlu0 %v2877
  %v2879 = vpop.xlane.xlu0 %2878
  %v2880 = vsel %vm199, %v2835, 0.0
  %2881 = vadd.xlane.f32.xlu0 %v2880
  %v2882 = vpop.xlane.xlu0 %2881
  %v2883 = vsel %vm199, %v2837, 0.0
  %2884 = vadd.xlane.f32.xlu0 %v2883
  %v2885 = vpop.xlane.xlu0 %2884
  %v2886 = vrcp.pop %v2840
  %v2887 = vrcp.pop %v2843
  %v2888 = vrcp.pop %v2846
  %v2889 = vrcp.pop %v2849
  %v2890 = vrcp.pop %v2852
  %v2891 = vrcp.pop %v2855
  %v2892 = vrcp.pop %v2858
  %v2893 = vrcp.pop %v2861
  %v2894 = vrcp.pop %v2864
  %v2895 = vrcp.pop %v2867
  %v2896 = vrcp.pop %v2870
  %v2897 = vrcp.pop %v2873
  %v2898 = vrcp.pop %v2876
  %v2899 = vrcp.pop %v2879
  %v2900 = vrcp.pop %v2882
  %v2901 = vrcp.pop %v2885
  %v2902 = vmul.f32 %v2807, %v2886
  %v2903 = vmul.f32 %v2809, %v2887
  %v2904 = vmul.f32 %v2811, %v2888
  %v2905 = vmul.f32 %v2813, %v2889
  %v2906 = vmul.f32 %v2815, %v2890
  %v2907 = vmul.f32 %v2817, %v2891
  %v2908 = vmul.f32 %v2819, %v2892
  %v2909 = vmul.f32 %v2821, %v2893
  %v2910 = vmul.f32 %v2823, %v2894
  %v2911 = vmul.f32 %v2825, %v2895
  %v2912 = vmul.f32 %v2827, %v2896
  %v2913 = vmul.f32 %v2829, %v2897
  %v2914 = vmul.f32 %v2831, %v2898
  %v2915 = vmul.f32 %v2833, %v2899
  %v2916 = vmul.f32 %v2835, %v2900
  %v2917 = vmul.f32 %v2837, %v2901
  %v2918 = vpack.c.bf16 %v2902, %v2902
  %v2919 = vpack.c.bf16 %v2903, %v2903
  %v2920 = vpack.c.bf16 %v2904, %v2904
  %v2921 = vpack.c.bf16 %v2905, %v2905
  %v2922 = vpack.c.bf16 %v2906, %v2906
  %v2923 = vpack.c.bf16 %v2907, %v2907
  %v2924 = vpack.c.bf16 %v2908, %v2908
  %v2925 = vpack.c.bf16 %v2909, %v2909
  %v2926 = vpack.c.bf16 %v2910, %v2910
  %v2927 = vpack.c.bf16 %v2911, %v2911
  %v2928 = vpack.c.bf16 %v2912, %v2912
  %v2929 = vpack.c.bf16 %v2913, %v2913
  %v2930 = vpack.c.bf16 %v2914, %v2914
  %v2931 = vpack.c.bf16 %v2915, %v2915
  %v2932 = vpack.c.bf16 %v2916, %v2916
  %v2933 = vpack.c.bf16 %v2917, %v2917
  %2934 = vrot.lane.b32.xlu0 %v180, 56
  %v2935 = vpop.permute.xlu0 %2934
  %v2937 = vsel %vm199, %v2918, 0
  %v2940 = vsel %vm1178, %v2935, 0
  %2942 = vmatprep.subr.bf16.mxu0 0
  %2943 = vmatpush1.bf16.msra.mxu0 %v2940
  %2944 = vmatprep.subr.bf16.mxu0 0
  %2945 = vmatpush1.bf16.msra.mxu0 0
  %2946 = vmatprep.subr.bf16.mxu0 0
  %2947 = vmatpush1.bf16.msra.mxu0 0
  %2948 = vmatprep.subr.bf16.mxu0 0
  %2949 = vmatpush1.bf16.msra.mxu0 0
  %2950 = vmatprep.subr.bf16.mxu0 0
  %2951 = vmatpush1.bf16.msra.mxu0 0
  %2952 = vmatprep.subr.bf16.mxu0 0
  %2953 = vmatpush1.bf16.msra.mxu0 0
  %2954 = vmatprep.subr.bf16.mxu0 0
  %2955 = vmatpush1.bf16.msra.mxu0 0
  %2956 = vmatprep.subr.bf16.mxu0 0
  %2957 = vmatpush1.bf16.msra.mxu0 0
  %2958 = vmatprep.subr.bf16.mxu0 0
  %2959 = vmatpush1.bf16.msra.mxu0 0
  %2960 = vmatprep.subr.bf16.mxu0 0
  %2961 = vmatpush1.bf16.msra.mxu0 0
  %2962 = vmatprep.subr.bf16.mxu0 0
  %2963 = vmatpush1.bf16.msra.mxu0 0
  %2964 = vmatprep.subr.bf16.mxu0 0
  %2965 = vmatpush1.bf16.msra.mxu0 0
  %2966 = vmatprep.subr.bf16.mxu0 0
  %2967 = vmatpush1.bf16.msra.mxu0 0
  %2968 = vmatprep.subr.bf16.mxu0 0
  %2969 = vmatpush1.bf16.msra.mxu0 0
  %2970 = vmatprep.subr.bf16.mxu0 0
  %2971 = vmatpush1.bf16.msra.mxu0 0
  %2972 = vmatprep.subr.bf16.mxu0 0
  %2973 = vmatpush1.bf16.msra.mxu0 0
  %2974 = vmatprep.mubr.bf16.mxu0 0
  %2975 = vmatmul.mubr.bf16.gmra.mrb[0].mxu0 %v2937
  %v2976 = vpop.f32.mrb[0].mxu0
  %v2977 = vadd.f32 0.0, %v2976
  %v2978 = vpop.f32.mrb[0].mxu0
  %v2979 = vpop.f32.mrb[0].mxu0
  %v2980 = vpop.f32.mrb[0].mxu0
  %2981 = vdwg.mxu0
  %2982 = vrot.lane.b32.xlu0 %v181, 56
  %v2983 = vpop.permute.xlu0 %2982
  %v2985 = vsel %vm199, %v2919, 0
  %v2988 = vsel %vm1178, %v2983, 0
  %2990 = vmatprep.subr.bf16.mxu0 0
  %2991 = vmatpush1.bf16.msra.mxu0 %v2988
  %2992 = vmatprep.subr.bf16.mxu0 0
  %2993 = vmatpush1.bf16.msra.mxu0 0
  %2994 = vmatprep.subr.bf16.mxu0 0
  %2995 = vmatpush1.bf16.msra.mxu0 0
  %2996 = vmatprep.subr.bf16.mxu0 0
  %2997 = vmatpush1.bf16.msra.mxu0 0
  %2998 = vmatprep.subr.bf16.mxu0 0
  %2999 = vmatpush1.bf16.msra.mxu0 0
  %3000 = vmatprep.subr.bf16.mxu0 0
  %3001 = vmatpush1.bf16.msra.mxu0 0
  %3002 = vmatprep.subr.bf16.mxu0 0
  %3003 = vmatpush1.bf16.msra.mxu0 0
  %3004 = vmatprep.subr.bf16.mxu0 0
  %3005 = vmatpush1.bf16.msra.mxu0 0
  %3006 = vmatprep.subr.bf16.mxu0 0
  %3007 = vmatpush1.bf16.msra.mxu0 0
  %3008 = vmatprep.subr.bf16.mxu0 0
  %3009 = vmatpush1.bf16.msra.mxu0 0
  %3010 = vmatprep.subr.bf16.mxu0 0
  %3011 = vmatpush1.bf16.msra.mxu0 0
  %3012 = vmatprep.subr.bf16.mxu0 0
  %3013 = vmatpush1.bf16.msra.mxu0 0
  %3014 = vmatprep.subr.bf16.mxu0 0
  %3015 = vmatpush1.bf16.msra.mxu0 0
  %3016 = vmatprep.subr.bf16.mxu0 0
  %3017 = vmatpush1.bf16.msra.mxu0 0
  %3018 = vmatprep.subr.bf16.mxu0 0
  %3019 = vmatpush1.bf16.msra.mxu0 0
  %3020 = vmatprep.subr.bf16.mxu0 0
  %3021 = vmatpush1.bf16.msra.mxu0 0
  %3022 = vmatprep.mubr.bf16.mxu0 0
  %3023 = vmatmul.mubr.bf16.gmra.mrb[0].mxu0 %v2985
  %v3024 = vpop.f32.mrb[0].mxu0
  %v3025 = vadd.f32 0.0, %v3024
  %v3026 = vpop.f32.mrb[0].mxu0
  %v3027 = vpop.f32.mrb[0].mxu0
  %v3028 = vpop.f32.mrb[0].mxu0
  %3029 = vdwg.mxu0
  %3030 = vrot.lane.b32.xlu0 %v182, 56
  %v3031 = vpop.permute.xlu0 %3030
  %v3033 = vsel %vm199, %v2920, 0
  %v3036 = vsel %vm1178, %v3031, 0
  %3038 = vmatprep.subr.bf16.mxu0 0
  %3039 = vmatpush1.bf16.msra.mxu0 %v3036
  %3040 = vmatprep.subr.bf16.mxu0 0
  %3041 = vmatpush1.bf16.msra.mxu0 0
  %3042 = vmatprep.subr.bf16.mxu0 0
  %3043 = vmatpush1.bf16.msra.mxu0 0
  %3044 = vmatprep.subr.bf16.mxu0 0
  %3045 = vmatpush1.bf16.msra.mxu0 0
  %3046 = vmatprep.subr.bf16.mxu0 0
  %3047 = vmatpush1.bf16.msra.mxu0 0
  %3048 = vmatprep.subr.bf16.mxu0 0
  %3049 = vmatpush1.bf16.msra.mxu0 0
  %3050 = vmatprep.subr.bf16.mxu0 0
  %3051 = vmatpush1.bf16.msra.mxu0 0
  %3052 = vmatprep.subr.bf16.mxu0 0
  %3053 = vmatpush1.bf16.msra.mxu0 0
  %3054 = vmatprep.subr.bf16.mxu0 0
  %3055 = vmatpush1.bf16.msra.mxu0 0
  %3056 = vmatprep.subr.bf16.mxu0 0
  %3057 = vmatpush1.bf16.msra.mxu0 0
  %3058 = vmatprep.subr.bf16.mxu0 0
  %3059 = vmatpush1.bf16.msra.mxu0 0
  %3060 = vmatprep.subr.bf16.mxu0 0
  %3061 = vmatpush1.bf16.msra.mxu0 0
  %3062 = vmatprep.subr.bf16.mxu0 0
  %3063 = vmatpush1.bf16.msra.mxu0 0
  %3064 = vmatprep.subr.bf16.mxu0 0
  %3065 = vmatpush1.bf16.msra.mxu0 0
  %3066 = vmatprep.subr.bf16.mxu0 0
  %3067 = vmatpush1.bf16.msra.mxu0 0
  %3068 = vmatprep.subr.bf16.mxu0 0
  %3069 = vmatpush1.bf16.msra.mxu0 0
  %3070 = vmatprep.mubr.bf16.mxu0 0
  %3071 = vmatmul.mubr.bf16.gmra.mrb[0].mxu0 %v3033
  %v3072 = vpop.f32.mrb[0].mxu0
  %v3073 = vadd.f32 0.0, %v3072
  %v3074 = vpop.f32.mrb[0].mxu0
  %v3075 = vpop.f32.mrb[0].mxu0
  %v3076 = vpop.f32.mrb[0].mxu0
  %3077 = vdwg.mxu0
  %3078 = vrot.lane.b32.xlu0 %v183, 56
  %v3079 = vpop.permute.xlu0 %3078
  %v3081 = vsel %vm199, %v2921, 0
  %v3084 = vsel %vm1178, %v3079, 0
  %3086 = vmatprep.subr.bf16.mxu0 0
  %3087 = vmatpush1.bf16.msra.mxu0 %v3084
  %3088 = vmatprep.subr.bf16.mxu0 0
  %3089 = vmatpush1.bf16.msra.mxu0 0
  %3090 = vmatprep.subr.bf16.mxu0 0
  %3091 = vmatpush1.bf16.msra.mxu0 0
  %3092 = vmatprep.subr.bf16.mxu0 0
  %3093 = vmatpush1.bf16.msra.mxu0 0
  %3094 = vmatprep.subr.bf16.mxu0 0
  %3095 = vmatpush1.bf16.msra.mxu0 0
  %3096 = vmatprep.subr.bf16.mxu0 0
  %3097 = vmatpush1.bf16.msra.mxu0 0
  %3098 = vmatprep.subr.bf16.mxu0 0
  %3099 = vmatpush1.bf16.msra.mxu0 0
  %3100 = vmatprep.subr.bf16.mxu0 0
  %3101 = vmatpush1.bf16.msra.mxu0 0
  %3102 = vmatprep.subr.bf16.mxu0 0
  %3103 = vmatpush1.bf16.msra.mxu0 0
  %3104 = vmatprep.subr.bf16.mxu0 0
  %3105 = vmatpush1.bf16.msra.mxu0 0
  %3106 = vmatprep.subr.bf16.mxu0 0
  %3107 = vmatpush1.bf16.msra.mxu0 0
  %3108 = vmatprep.subr.bf16.mxu0 0
  %3109 = vmatpush1.bf16.msra.mxu0 0
  %3110 = vmatprep.subr.bf16.mxu0 0
  %3111 = vmatpush1.bf16.msra.mxu0 0
  %3112 = vmatprep.subr.bf16.mxu0 0
  %3113 = vmatpush1.bf16.msra.mxu0 0
  %3114 = vmatprep.subr.bf16.mxu0 0
  %3115 = vmatpush1.bf16.msra.mxu0 0
  %3116 = vmatprep.subr.bf16.mxu0 0
  %3117 = vmatpush1.bf16.msra.mxu0 0
  %3118 = vmatprep.mubr.bf16.mxu0 0
  %3119 = vmatmul.mubr.bf16.gmra.mrb[0].mxu0 %v3081
  %v3120 = vpop.f32.mrb[0].mxu0
  %v3121 = vadd.f32 0.0, %v3120
  %v3122 = vpop.f32.mrb[0].mxu0
  %v3123 = vpop.f32.mrb[0].mxu0
  %v3124 = vpop.f32.mrb[0].mxu0
  %3125 = vdwg.mxu0
  %3126 = vrot.lane.b32.xlu0 %v184, 56
  %v3127 = vpop.permute.xlu0 %3126
  %v3129 = vsel %vm199, %v2922, 0
  %v3132 = vsel %vm1178, %v3127, 0
  %3134 = vmatprep.subr.bf16.mxu0 0
  %3135 = vmatpush1.bf16.msra.mxu0 %v3132
  %3136 = vmatprep.subr.bf16.mxu0 0
  %3137 = vmatpush1.bf16.msra.mxu0 0
  %3138 = vmatprep.subr.bf16.mxu0 0
  %3139 = vmatpush1.bf16.msra.mxu0 0
  %3140 = vmatprep.subr.bf16.mxu0 0
  %3141 = vmatpush1.bf16.msra.mxu0 0
  %3142 = vmatprep.subr.bf16.mxu0 0
  %3143 = vmatpush1.bf16.msra.mxu0 0
  %3144 = vmatprep.subr.bf16.mxu0 0
  %3145 = vmatpush1.bf16.msra.mxu0 0
  %3146 = vmatprep.subr.bf16.mxu0 0
  %3147 = vmatpush1.bf16.msra.mxu0 0
  %3148 = vmatprep.subr.bf16.mxu0 0
  %3149 = vmatpush1.bf16.msra.mxu0 0
  %3150 = vmatprep.subr.bf16.mxu0 0
  %3151 = vmatpush1.bf16.msra.mxu0 0
  %3152 = vmatprep.subr.bf16.mxu0 0
  %3153 = vmatpush1.bf16.msra.mxu0 0
  %3154 = vmatprep.subr.bf16.mxu0 0
  %3155 = vmatpush1.bf16.msra.mxu0 0
  %3156 = vmatprep.subr.bf16.mxu0 0
  %3157 = vmatpush1.bf16.msra.mxu0 0
  %3158 = vmatprep.subr.bf16.mxu0 0
  %3159 = vmatpush1.bf16.msra.mxu0 0
  %3160 = vmatprep.subr.bf16.mxu0 0
  %3161 = vmatpush1.bf16.msra.mxu0 0
  %3162 = vmatprep.subr.bf16.mxu0 0
  %3163 = vmatpush1.bf16.msra.mxu0 0
  %3164 = vmatprep.subr.bf16.mxu0 0
  %3165 = vmatpush1.bf16.msra.mxu0 0
  %3166 = vmatprep.mubr.bf16.mxu0 0
  %3167 = vmatmul.mubr.bf16.gmra.mrb[0].mxu0 %v3129
  %v3168 = vpop.f32.mrb[0].mxu0
  %v3169 = vadd.f32 0.0, %v3168
  %v3170 = vpop.f32.mrb[0].mxu0
  %v3171 = vpop.f32.mrb[0].mxu0
  %v3172 = vpop.f32.mrb[0].mxu0
  %3173 = vdwg.mxu0
  %3174 = vrot.lane.b32.xlu0 %v185, 56
  %v3175 = vpop.permute.xlu0 %3174
  %v3177 = vsel %vm199, %v2923, 0
  %v3180 = vsel %vm1178, %v3175, 0
  %3182 = vmatprep.subr.bf16.mxu0 0
  %3183 = vmatpush1.bf16.msra.mxu0 %v3180
  %3184 = vmatprep.subr.bf16.mxu0 0
  %3185 = vmatpush1.bf16.msra.mxu0 0
  %3186 = vmatprep.subr.bf16.mxu0 0
  %3187 = vmatpush1.bf16.msra.mxu0 0
  %3188 = vmatprep.subr.bf16.mxu0 0
  %3189 = vmatpush1.bf16.msra.mxu0 0
  %3190 = vmatprep.subr.bf16.mxu0 0
  %3191 = vmatpush1.bf16.msra.mxu0 0
  %3192 = vmatprep.subr.bf16.mxu0 0
  %3193 = vmatpush1.bf16.msra.mxu0 0
  %3194 = vmatprep.subr.bf16.mxu0 0
  %3195 = vmatpush1.bf16.msra.mxu0 0
  %3196 = vmatprep.subr.bf16.mxu0 0
  %3197 = vmatpush1.bf16.msra.mxu0 0
  %3198 = vmatprep.subr.bf16.mxu0 0
  %3199 = vmatpush1.bf16.msra.mxu0 0
  %3200 = vmatprep.subr.bf16.mxu0 0
  %3201 = vmatpush1.bf16.msra.mxu0 0
  %3202 = vmatprep.subr.bf16.mxu0 0
  %3203 = vmatpush1.bf16.msra.mxu0 0
  %3204 = vmatprep.subr.bf16.mxu0 0
  %3205 = vmatpush1.bf16.msra.mxu0 0
  %3206 = vmatprep.subr.bf16.mxu0 0
  %3207 = vmatpush1.bf16.msra.mxu0 0
  %3208 = vmatprep.subr.bf16.mxu0 0
  %3209 = vmatpush1.bf16.msra.mxu0 0
  %3210 = vmatprep.subr.bf16.mxu0 0
  %3211 = vmatpush1.bf16.msra.mxu0 0
  %3212 = vmatprep.subr.bf16.mxu0 0
  %3213 = vmatpush1.bf16.msra.mxu0 0
  %3214 = vmatprep.mubr.bf16.mxu0 0
  %3215 = vmatmul.mubr.bf16.gmra.mrb[0].mxu0 %v3177
  %v3216 = vpop.f32.mrb[0].mxu0
  %v3217 = vadd.f32 0.0, %v3216
  %v3218 = vpop.f32.mrb[0].mxu0
  %v3219 = vpop.f32.mrb[0].mxu0
  %v3220 = vpop.f32.mrb[0].mxu0
  %3221 = vdwg.mxu0
  %3222 = vrot.lane.b32.xlu0 %v186, 56
  %v3223 = vpop.permute.xlu0 %3222
  %v3225 = vsel %vm199, %v2924, 0
  %v3228 = vsel %vm1178, %v3223, 0
  %3230 = vmatprep.subr.bf16.mxu0 0
  %3231 = vmatpush1.bf16.msra.mxu0 %v3228
  %3232 = vmatprep.subr.bf16.mxu0 0
  %3233 = vmatpush1.bf16.msra.mxu0 0
  %3234 = vmatprep.subr.bf16.mxu0 0
  %3235 = vmatpush1.bf16.msra.mxu0 0
  %3236 = vmatprep.subr.bf16.mxu0 0
  %3237 = vmatpush1.bf16.msra.mxu0 0
  %3238 = vmatprep.subr.bf16.mxu0 0
  %3239 = vmatpush1.bf16.msra.mxu0 0
  %3240 = vmatprep.subr.bf16.mxu0 0
  %3241 = vmatpush1.bf16.msra.mxu0 0
  %3242 = vmatprep.subr.bf16.mxu0 0
  %3243 = vmatpush1.bf16.msra.mxu0 0
  %3244 = vmatprep.subr.bf16.mxu0 0
  %3245 = vmatpush1.bf16.msra.mxu0 0
  %3246 = vmatprep.subr.bf16.mxu0 0
  %3247 = vmatpush1.bf16.msra.mxu0 0
  %3248 = vmatprep.subr.bf16.mxu0 0
  %3249 = vmatpush1.bf16.msra.mxu0 0
  %3250 = vmatprep.subr.bf16.mxu0 0
  %3251 = vmatpush1.bf16.msra.mxu0 0
  %3252 = vmatprep.subr.bf16.mxu0 0
  %3253 = vmatpush1.bf16.msra.mxu0 0
  %3254 = vmatprep.subr.bf16.mxu0 0
  %3255 = vmatpush1.bf16.msra.mxu0 0
  %3256 = vmatprep.subr.bf16.mxu0 0
  %3257 = vmatpush1.bf16.msra.mxu0 0
  %3258 = vmatprep.subr.bf16.mxu0 0
  %3259 = vmatpush1.bf16.msra.mxu0 0
  %3260 = vmatprep.subr.bf16.mxu0 0
  %3261 = vmatpush1.bf16.msra.mxu0 0
  %3262 = vmatprep.mubr.bf16.mxu0 0
  %3263 = vmatmul.mubr.bf16.gmra.mrb[0].mxu0 %v3225
  %v3264 = vpop.f32.mrb[0].mxu0
  %v3265 = vadd.f32 0.0, %v3264
  %v3266 = vpop.f32.mrb[0].mxu0
  %v3267 = vpop.f32.mrb[0].mxu0
  %v3268 = vpop.f32.mrb[0].mxu0
  %3269 = vdwg.mxu0
  %3270 = vrot.lane.b32.xlu0 %v187, 56
  %v3271 = vpop.permute.xlu0 %3270
  %v3273 = vsel %vm199, %v2925, 0
  %v3276 = vsel %vm1178, %v3271, 0
  %3278 = vmatprep.subr.bf16.mxu0 0
  %3279 = vmatpush1.bf16.msra.mxu0 %v3276
  %3280 = vmatprep.subr.bf16.mxu0 0
  %3281 = vmatpush1.bf16.msra.mxu0 0
  %3282 = vmatprep.subr.bf16.mxu0 0
  %3283 = vmatpush1.bf16.msra.mxu0 0
  %3284 = vmatprep.subr.bf16.mxu0 0
  %3285 = vmatpush1.bf16.msra.mxu0 0
  %3286 = vmatprep.subr.bf16.mxu0 0
  %3287 = vmatpush1.bf16.msra.mxu0 0
  %3288 = vmatprep.subr.bf16.mxu0 0
  %3289 = vmatpush1.bf16.msra.mxu0 0
  %3290 = vmatprep.subr.bf16.mxu0 0
  %3291 = vmatpush1.bf16.msra.mxu0 0
  %3292 = vmatprep.subr.bf16.mxu0 0
  %3293 = vmatpush1.bf16.msra.mxu0 0
  %3294 = vmatprep.subr.bf16.mxu0 0
  %3295 = vmatpush1.bf16.msra.mxu0 0
  %3296 = vmatprep.subr.bf16.mxu0 0
  %3297 = vmatpush1.bf16.msra.mxu0 0
  %3298 = vmatprep.subr.bf16.mxu0 0
  %3299 = vmatpush1.bf16.msra.mxu0 0
  %3300 = vmatprep.subr.bf16.mxu0 0
  %3301 = vmatpush1.bf16.msra.mxu0 0
  %3302 = vmatprep.subr.bf16.mxu0 0
  %3303 = vmatpush1.bf16.msra.mxu0 0
  %3304 = vmatprep.subr.bf16.mxu0 0
  %3305 = vmatpush1.bf16.msra.mxu0 0
  %3306 = vmatprep.subr.bf16.mxu0 0
  %3307 = vmatpush1.bf16.msra.mxu0 0
  %3308 = vmatprep.subr.bf16.mxu0 0
  %3309 = vmatpush1.bf16.msra.mxu0 0
  %3310 = vmatprep.mubr.bf16.mxu0 0
  %3311 = vmatmul.mubr.bf16.gmra.mrb[0].mxu0 %v3273
  %v3312 = vpop.f32.mrb[0].mxu0
  %v3313 = vadd.f32 0.0, %v3312
  %v3314 = vpop.f32.mrb[0].mxu0
  %v3315 = vpop.f32.mrb[0].mxu0
  %v3316 = vpop.f32.mrb[0].mxu0
  %3317 = vdwg.mxu0
  %3318 = vrot.lane.b32.xlu0 %v188, 56
  %v3319 = vpop.permute.xlu0 %3318
  %v3321 = vsel %vm199, %v2926, 0
  %v3324 = vsel %vm1178, %v3319, 0
  %3326 = vmatprep.subr.bf16.mxu0 0
  %3327 = vmatpush1.bf16.msra.mxu0 %v3324
  %3328 = vmatprep.subr.bf16.mxu0 0
  %3329 = vmatpush1.bf16.msra.mxu0 0
  %3330 = vmatprep.subr.bf16.mxu0 0
  %3331 = vmatpush1.bf16.msra.mxu0 0
  %3332 = vmatprep.subr.bf16.mxu0 0
  %3333 = vmatpush1.bf16.msra.mxu0 0
  %3334 = vmatprep.subr.bf16.mxu0 0
  %3335 = vmatpush1.bf16.msra.mxu0 0
  %3336 = vmatprep.subr.bf16.mxu0 0
  %3337 = vmatpush1.bf16.msra.mxu0 0
  %3338 = vmatprep.subr.bf16.mxu0 0
  %3339 = vmatpush1.bf16.msra.mxu0 0
  %3340 = vmatprep.subr.bf16.mxu0 0
  %3341 = vmatpush1.bf16.msra.mxu0 0
  %3342 = vmatprep.subr.bf16.mxu0 0
  %3343 = vmatpush1.bf16.msra.mxu0 0
  %3344 = vmatprep.subr.bf16.mxu0 0
  %3345 = vmatpush1.bf16.msra.mxu0 0
  %3346 = vmatprep.subr.bf16.mxu0 0
  %3347 = vmatpush1.bf16.msra.mxu0 0
  %3348 = vmatprep.subr.bf16.mxu0 0
  %3349 = vmatpush1.bf16.msra.mxu0 0
  %3350 = vmatprep.subr.bf16.mxu0 0
  %3351 = vmatpush1.bf16.msra.mxu0 0
  %3352 = vmatprep.subr.bf16.mxu0 0
  %3353 = vmatpush1.bf16.msra.mxu0 0
  %3354 = vmatprep.subr.bf16.mxu0 0
  %3355 = vmatpush1.bf16.msra.mxu0 0
  %3356 = vmatprep.subr.bf16.mxu0 0
  %3357 = vmatpush1.bf16.msra.mxu0 0
  %3358 = vmatprep.mubr.bf16.mxu0 0
  %3359 = vmatmul.mubr.bf16.gmra.mrb[0].mxu0 %v3321
  %v3360 = vpop.f32.mrb[0].mxu0
  %v3361 = vadd.f32 0.0, %v3360
  %v3362 = vpop.f32.mrb[0].mxu0
  %v3363 = vpop.f32.mrb[0].mxu0
  %v3364 = vpop.f32.mrb[0].mxu0
  %3365 = vdwg.mxu0
  %3366 = vrot.lane.b32.xlu0 %v189, 56
  %v3367 = vpop.permute.xlu0 %3366
  %v3369 = vsel %vm199, %v2927, 0
  %v3372 = vsel %vm1178, %v3367, 0
  %3374 = vmatprep.subr.bf16.mxu0 0
  %3375 = vmatpush1.bf16.msra.mxu0 %v3372
  %3376 = vmatprep.subr.bf16.mxu0 0
  %3377 = vmatpush1.bf16.msra.mxu0 0
  %3378 = vmatprep.subr.bf16.mxu0 0
  %3379 = vmatpush1.bf16.msra.mxu0 0
  %3380 = vmatprep.subr.bf16.mxu0 0
  %3381 = vmatpush1.bf16.msra.mxu0 0
  %3382 = vmatprep.subr.bf16.mxu0 0
  %3383 = vmatpush1.bf16.msra.mxu0 0
  %3384 = vmatprep.subr.bf16.mxu0 0
  %3385 = vmatpush1.bf16.msra.mxu0 0
  %3386 = vmatprep.subr.bf16.mxu0 0
  %3387 = vmatpush1.bf16.msra.mxu0 0
  %3388 = vmatprep.subr.bf16.mxu0 0
  %3389 = vmatpush1.bf16.msra.mxu0 0
  %3390 = vmatprep.subr.bf16.mxu0 0
  %3391 = vmatpush1.bf16.msra.mxu0 0
  %3392 = vmatprep.subr.bf16.mxu0 0
  %3393 = vmatpush1.bf16.msra.mxu0 0
  %3394 = vmatprep.subr.bf16.mxu0 0
  %3395 = vmatpush1.bf16.msra.mxu0 0
  %3396 = vmatprep.subr.bf16.mxu0 0
  %3397 = vmatpush1.bf16.msra.mxu0 0
  %3398 = vmatprep.subr.bf16.mxu0 0
  %3399 = vmatpush1.bf16.msra.mxu0 0
  %3400 = vmatprep.subr.bf16.mxu0 0
  %3401 = vmatpush1.bf16.msra.mxu0 0
  %3402 = vmatprep.subr.bf16.mxu0 0
  %3403 = vmatpush1.bf16.msra.mxu0 0
  %3404 = vmatprep.subr.bf16.mxu0 0
  %3405 = vmatpush1.bf16.msra.mxu0 0
  %3406 = vmatprep.mubr.bf16.mxu0 0
  %3407 = vmatmul.mubr.bf16.gmra.mrb[0].mxu0 %v3369
  %v3408 = vpop.f32.mrb[0].mxu0
  %v3409 = vadd.f32 0.0, %v3408
  %v3410 = vpop.f32.mrb[0].mxu0
  %v3411 = vpop.f32.mrb[0].mxu0
  %v3412 = vpop.f32.mrb[0].mxu0
  %3413 = vdwg.mxu0
  %3414 = vrot.lane.b32.xlu0 %v190, 56
  %v3415 = vpop.permute.xlu0 %3414
  %v3417 = vsel %vm199, %v2928, 0
  %v3420 = vsel %vm1178, %v3415, 0
  %3422 = vmatprep.subr.bf16.mxu0 0
  %3423 = vmatpush1.bf16.msra.mxu0 %v3420
  %3424 = vmatprep.subr.bf16.mxu0 0
  %3425 = vmatpush1.bf16.msra.mxu0 0
  %3426 = vmatprep.subr.bf16.mxu0 0
  %3427 = vmatpush1.bf16.msra.mxu0 0
  %3428 = vmatprep.subr.bf16.mxu0 0
  %3429 = vmatpush1.bf16.msra.mxu0 0
  %3430 = vmatprep.subr.bf16.mxu0 0
  %3431 = vmatpush1.bf16.msra.mxu0 0
  %3432 = vmatprep.subr.bf16.mxu0 0
  %3433 = vmatpush1.bf16.msra.mxu0 0
  %3434 = vmatprep.subr.bf16.mxu0 0
  %3435 = vmatpush1.bf16.msra.mxu0 0
  %3436 = vmatprep.subr.bf16.mxu0 0
  %3437 = vmatpush1.bf16.msra.mxu0 0
  %3438 = vmatprep.subr.bf16.mxu0 0
  %3439 = vmatpush1.bf16.msra.mxu0 0
  %3440 = vmatprep.subr.bf16.mxu0 0
  %3441 = vmatpush1.bf16.msra.mxu0 0
  %3442 = vmatprep.subr.bf16.mxu0 0
  %3443 = vmatpush1.bf16.msra.mxu0 0
  %3444 = vmatprep.subr.bf16.mxu0 0
  %3445 = vmatpush1.bf16.msra.mxu0 0
  %3446 = vmatprep.subr.bf16.mxu0 0
  %3447 = vmatpush1.bf16.msra.mxu0 0
  %3448 = vmatprep.subr.bf16.mxu0 0
  %3449 = vmatpush1.bf16.msra.mxu0 0
  %3450 = vmatprep.subr.bf16.mxu0 0
  %3451 = vmatpush1.bf16.msra.mxu0 0
  %3452 = vmatprep.subr.bf16.mxu0 0
  %3453 = vmatpush1.bf16.msra.mxu0 0
  %3454 = vmatprep.mubr.bf16.mxu0 0
  %3455 = vmatmul.mubr.bf16.gmra.mrb[0].mxu0 %v3417
  %v3456 = vpop.f32.mrb[0].mxu0
  %v3457 = vadd.f32 0.0, %v3456
  %v3458 = vpop.f32.mrb[0].mxu0
  %v3459 = vpop.f32.mrb[0].mxu0
  %v3460 = vpop.f32.mrb[0].mxu0
  %3461 = vdwg.mxu0
  %3462 = vrot.lane.b32.xlu0 %v191, 56
  %v3463 = vpop.permute.xlu0 %3462
  %v3465 = vsel %vm199, %v2929, 0
  %v3468 = vsel %vm1178, %v3463, 0
  %3470 = vmatprep.subr.bf16.mxu0 0
  %3471 = vmatpush1.bf16.msra.mxu0 %v3468
  %3472 = vmatprep.subr.bf16.mxu0 0
  %3473 = vmatpush1.bf16.msra.mxu0 0
  %3474 = vmatprep.subr.bf16.mxu0 0
  %3475 = vmatpush1.bf16.msra.mxu0 0
  %3476 = vmatprep.subr.bf16.mxu0 0
  %3477 = vmatpush1.bf16.msra.mxu0 0
  %3478 = vmatprep.subr.bf16.mxu0 0
  %3479 = vmatpush1.bf16.msra.mxu0 0
  %3480 = vmatprep.subr.bf16.mxu0 0
  %3481 = vmatpush1.bf16.msra.mxu0 0
  %3482 = vmatprep.subr.bf16.mxu0 0
  %3483 = vmatpush1.bf16.msra.mxu0 0
  %3484 = vmatprep.subr.bf16.mxu0 0
  %3485 = vmatpush1.bf16.msra.mxu0 0
  %3486 = vmatprep.subr.bf16.mxu0 0
  %3487 = vmatpush1.bf16.msra.mxu0 0
  %3488 = vmatprep.subr.bf16.mxu0 0
  %3489 = vmatpush1.bf16.msra.mxu0 0
  %3490 = vmatprep.subr.bf16.mxu0 0
  %3491 = vmatpush1.bf16.msra.mxu0 0
  %3492 = vmatprep.subr.bf16.mxu0 0
  %3493 = vmatpush1.bf16.msra.mxu0 0
  %3494 = vmatprep.subr.bf16.mxu0 0
  %3495 = vmatpush1.bf16.msra.mxu0 0
  %3496 = vmatprep.subr.bf16.mxu0 0
  %3497 = vmatpush1.bf16.msra.mxu0 0
  %3498 = vmatprep.subr.bf16.mxu0 0
  %3499 = vmatpush1.bf16.msra.mxu0 0
  %3500 = vmatprep.subr.bf16.mxu0 0
  %3501 = vmatpush1.bf16.msra.mxu0 0
  %3502 = vmatprep.mubr.bf16.mxu0 0
  %3503 = vmatmul.mubr.bf16.gmra.mrb[0].mxu0 %v3465
  %v3504 = vpop.f32.mrb[0].mxu0
  %v3505 = vadd.f32 0.0, %v3504
  %v3506 = vpop.f32.mrb[0].mxu0
  %v3507 = vpop.f32.mrb[0].mxu0
  %v3508 = vpop.f32.mrb[0].mxu0
  %3509 = vdwg.mxu0
  %3510 = vrot.lane.b32.xlu0 %v192, 56
  %v3511 = vpop.permute.xlu0 %3510
  %v3513 = vsel %vm199, %v2930, 0
  %v3516 = vsel %vm1178, %v3511, 0
  %3518 = vmatprep.subr.bf16.mxu0 0
  %3519 = vmatpush1.bf16.msra.mxu0 %v3516
  %3520 = vmatprep.subr.bf16.mxu0 0
  %3521 = vmatpush1.bf16.msra.mxu0 0
  %3522 = vmatprep.subr.bf16.mxu0 0
  %3523 = vmatpush1.bf16.msra.mxu0 0
  %3524 = vmatprep.subr.bf16.mxu0 0
  %3525 = vmatpush1.bf16.msra.mxu0 0
  %3526 = vmatprep.subr.bf16.mxu0 0
  %3527 = vmatpush1.bf16.msra.mxu0 0
  %3528 = vmatprep.subr.bf16.mxu0 0
  %3529 = vmatpush1.bf16.msra.mxu0 0
  %3530 = vmatprep.subr.bf16.mxu0 0
  %3531 = vmatpush1.bf16.msra.mxu0 0
  %3532 = vmatprep.subr.bf16.mxu0 0
  %3533 = vmatpush1.bf16.msra.mxu0 0
  %3534 = vmatprep.subr.bf16.mxu0 0
  %3535 = vmatpush1.bf16.msra.mxu0 0
  %3536 = vmatprep.subr.bf16.mxu0 0
  %3537 = vmatpush1.bf16.msra.mxu0 0
  %3538 = vmatprep.subr.bf16.mxu0 0
  %3539 = vmatpush1.bf16.msra.mxu0 0
  %3540 = vmatprep.subr.bf16.mxu0 0
  %3541 = vmatpush1.bf16.msra.mxu0 0
  %3542 = vmatprep.subr.bf16.mxu0 0
  %3543 = vmatpush1.bf16.msra.mxu0 0
  %3544 = vmatprep.subr.bf16.mxu0 0
  %3545 = vmatpush1.bf16.msra.mxu0 0
  %3546 = vmatprep.subr.bf16.mxu0 0
  %3547 = vmatpush1.bf16.msra.mxu0 0
  %3548 = vmatprep.subr.bf16.mxu0 0
  %3549 = vmatpush1.bf16.msra.mxu0 0
  %3550 = vmatprep.mubr.bf16.mxu0 0
  %3551 = vmatmul.mubr.bf16.gmra.mrb[0].mxu0 %v3513
  %v3552 = vpop.f32.mrb[0].mxu0
  %v3553 = vadd.f32 0.0, %v3552
  %v3554 = vpop.f32.mrb[0].mxu0
  %v3555 = vpop.f32.mrb[0].mxu0
  %v3556 = vpop.f32.mrb[0].mxu0
  %3557 = vdwg.mxu0
  %3558 = vrot.lane.b32.xlu0 %v193, 56
  %v3559 = vpop.permute.xlu0 %3558
  %v3561 = vsel %vm199, %v2931, 0
  %v3564 = vsel %vm1178, %v3559, 0
  %3566 = vmatprep.subr.bf16.mxu0 0
  %3567 = vmatpush1.bf16.msra.mxu0 %v3564
  %3568 = vmatprep.subr.bf16.mxu0 0
  %3569 = vmatpush1.bf16.msra.mxu0 0
  %3570 = vmatprep.subr.bf16.mxu0 0
  %3571 = vmatpush1.bf16.msra.mxu0 0
  %3572 = vmatprep.subr.bf16.mxu0 0
  %3573 = vmatpush1.bf16.msra.mxu0 0
  %3574 = vmatprep.subr.bf16.mxu0 0
  %3575 = vmatpush1.bf16.msra.mxu0 0
  %3576 = vmatprep.subr.bf16.mxu0 0
  %3577 = vmatpush1.bf16.msra.mxu0 0
  %3578 = vmatprep.subr.bf16.mxu0 0
  %3579 = vmatpush1.bf16.msra.mxu0 0
  %3580 = vmatprep.subr.bf16.mxu0 0
  %3581 = vmatpush1.bf16.msra.mxu0 0
  %3582 = vmatprep.subr.bf16.mxu0 0
  %3583 = vmatpush1.bf16.msra.mxu0 0
  %3584 = vmatprep.subr.bf16.mxu0 0
  %3585 = vmatpush1.bf16.msra.mxu0 0
  %3586 = vmatprep.subr.bf16.mxu0 0
  %3587 = vmatpush1.bf16.msra.mxu0 0
  %3588 = vmatprep.subr.bf16.mxu0 0
  %3589 = vmatpush1.bf16.msra.mxu0 0
  %3590 = vmatprep.subr.bf16.mxu0 0
  %3591 = vmatpush1.bf16.msra.mxu0 0
  %3592 = vmatprep.subr.bf16.mxu0 0
  %3593 = vmatpush1.bf16.msra.mxu0 0
  %3594 = vmatprep.subr.bf16.mxu0 0
  %3595 = vmatpush1.bf16.msra.mxu0 0
  %3596 = vmatprep.subr.bf16.mxu0 0
  %3597 = vmatpush1.bf16.msra.mxu0 0
  %3598 = vmatprep.mubr.bf16.mxu0 0
  %3599 = vmatmul.mubr.bf16.gmra.mrb[0].mxu0 %v3561
  %v3600 = vpop.f32.mrb[0].mxu0
  %v3601 = vadd.f32 0.0, %v3600
  %v3602 = vpop.f32.mrb[0].mxu0
  %v3603 = vpop.f32.mrb[0].mxu0
  %v3604 = vpop.f32.mrb[0].mxu0
  %3605 = vdwg.mxu0
  %3606 = vrot.lane.b32.xlu0 %v194, 56
  %v3607 = vpop.permute.xlu0 %3606
  %v3609 = vsel %vm199, %v2932, 0
  %v3612 = vsel %vm1178, %v3607, 0
  %3614 = vmatprep.subr.bf16.mxu0 0
  %3615 = vmatpush1.bf16.msra.mxu0 %v3612
  %3616 = vmatprep.subr.bf16.mxu0 0
  %3617 = vmatpush1.bf16.msra.mxu0 0
  %3618 = vmatprep.subr.bf16.mxu0 0
  %3619 = vmatpush1.bf16.msra.mxu0 0
  %3620 = vmatprep.subr.bf16.mxu0 0
  %3621 = vmatpush1.bf16.msra.mxu0 0
  %3622 = vmatprep.subr.bf16.mxu0 0
  %3623 = vmatpush1.bf16.msra.mxu0 0
  %3624 = vmatprep.subr.bf16.mxu0 0
  %3625 = vmatpush1.bf16.msra.mxu0 0
  %3626 = vmatprep.subr.bf16.mxu0 0
  %3627 = vmatpush1.bf16.msra.mxu0 0
  %3628 = vmatprep.subr.bf16.mxu0 0
  %3629 = vmatpush1.bf16.msra.mxu0 0
  %3630 = vmatprep.subr.bf16.mxu0 0
  %3631 = vmatpush1.bf16.msra.mxu0 0
  %3632 = vmatprep.subr.bf16.mxu0 0
  %3633 = vmatpush1.bf16.msra.mxu0 0
  %3634 = vmatprep.subr.bf16.mxu0 0
  %3635 = vmatpush1.bf16.msra.mxu0 0
  %3636 = vmatprep.subr.bf16.mxu0 0
  %3637 = vmatpush1.bf16.msra.mxu0 0
  %3638 = vmatprep.subr.bf16.mxu0 0
  %3639 = vmatpush1.bf16.msra.mxu0 0
  %3640 = vmatprep.subr.bf16.mxu0 0
  %3641 = vmatpush1.bf16.msra.mxu0 0
  %3642 = vmatprep.subr.bf16.mxu0 0
  %3643 = vmatpush1.bf16.msra.mxu0 0
  %3644 = vmatprep.subr.bf16.mxu0 0
  %3645 = vmatpush1.bf16.msra.mxu0 0
  %3646 = vmatprep.mubr.bf16.mxu0 0
  %3647 = vmatmul.mubr.bf16.gmra.mrb[0].mxu0 %v3609
  %v3648 = vpop.f32.mrb[0].mxu0
  %v3649 = vadd.f32 0.0, %v3648
  %v3650 = vpop.f32.mrb[0].mxu0
  %v3651 = vpop.f32.mrb[0].mxu0
  %v3652 = vpop.f32.mrb[0].mxu0
  %3653 = vdwg.mxu0
  %3654 = vrot.lane.b32.xlu0 %v195, 56
  %v3655 = vpop.permute.xlu0 %3654
  %v3657 = vsel %vm199, %v2933, 0
  %v3660 = vsel %vm1178, %v3655, 0
  %3662 = vmatprep.subr.bf16.mxu0 0
  %3663 = vmatpush1.bf16.msra.mxu0 %v3660
  %3664 = vmatprep.subr.bf16.mxu0 0
  %3665 = vmatpush1.bf16.msra.mxu0 0
  %3666 = vmatprep.subr.bf16.mxu0 0
  %3667 = vmatpush1.bf16.msra.mxu0 0
  %3668 = vmatprep.subr.bf16.mxu0 0
  %3669 = vmatpush1.bf16.msra.mxu0 0
  %3670 = vmatprep.subr.bf16.mxu0 0
  %3671 = vmatpush1.bf16.msra.mxu0 0
  %3672 = vmatprep.subr.bf16.mxu0 0
  %3673 = vmatpush1.bf16.msra.mxu0 0
  %3674 = vmatprep.subr.bf16.mxu0 0
  %3675 = vmatpush1.bf16.msra.mxu0 0
  %3676 = vmatprep.subr.bf16.mxu0 0
  %3677 = vmatpush1.bf16.msra.mxu0 0
  %3678 = vmatprep.subr.bf16.mxu0 0
  %3679 = vmatpush1.bf16.msra.mxu0 0
  %3680 = vmatprep.subr.bf16.mxu0 0
  %3681 = vmatpush1.bf16.msra.mxu0 0
  %3682 = vmatprep.subr.bf16.mxu0 0
  %3683 = vmatpush1.bf16.msra.mxu0 0
  %3684 = vmatprep.subr.bf16.mxu0 0
  %3685 = vmatpush1.bf16.msra.mxu0 0
  %3686 = vmatprep.subr.bf16.mxu0 0
  %3687 = vmatpush1.bf16.msra.mxu0 0
  %3688 = vmatprep.subr.bf16.mxu0 0
  %3689 = vmatpush1.bf16.msra.mxu0 0
  %3690 = vmatprep.subr.bf16.mxu0 0
  %3691 = vmatpush1.bf16.msra.mxu0 0
  %3692 = vmatprep.subr.bf16.mxu0 0
  %3693 = vmatpush1.bf16.msra.mxu0 0
  %3694 = vmatprep.mubr.bf16.mxu0 0
  %3695 = vmatmul.mubr.bf16.gmra.mrb[0].mxu0 %v3657
  %v3696 = vpop.f32.mrb[0].mxu0
  %v3697 = vadd.f32 0.0, %v3696
  %v3698 = vpop.f32.mrb[0].mxu0
  %v3699 = vpop.f32.mrb[0].mxu0
  %v3700 = vpop.f32.mrb[0].mxu0
  %3701 = vdwg.mxu0
  %3702 = vrot.lane.b32.xlu0 %v180, 112
  %v3703 = vpop.permute.xlu0 %3702
  %3704 = vrot.lane.b32.xlu0 %v180, 80
  %v3705 = vpop.permute.xlu0 %3704
  %v3707 = vsel %vm199, %v3703, 0
  %v3710 = vsel %vm199, %v3705, 0
  %3712 = vmatprep.subr.bf16.mxu0 0
  %3713 = vmatpush1.bf16.xpose.msra.mxu0 %v3710
  %3714 = vmatprep.subr.bf16.mxu0 0
  %3715 = vmatpush1.bf16.xpose.msra.mxu0 0
  %3716 = vmatprep.subr.bf16.mxu0 0
  %3717 = vmatpush1.bf16.xpose.msra.mxu0 0
  %3718 = vmatprep.subr.bf16.mxu0 0
  %3719 = vmatpush1.bf16.xpose.msra.mxu0 0
  %3720 = vmatprep.subr.bf16.mxu0 0
  %3721 = vmatpush1.bf16.xpose.msra.mxu0 0
  %3722 = vmatprep.subr.bf16.mxu0 0
  %3723 = vmatpush1.bf16.xpose.msra.mxu0 0
  %3724 = vmatprep.subr.bf16.mxu0 0
  %3725 = vmatpush1.bf16.xpose.msra.mxu0 0
  %3726 = vmatprep.subr.bf16.mxu0 0
  %3727 = vmatpush1.bf16.xpose.msra.mxu0 0
  %3728 = vmatprep.subr.bf16.mxu0 0
  %3729 = vmatpush1.bf16.xpose.msra.mxu0 0
  %3730 = vmatprep.subr.bf16.mxu0 0
  %3731 = vmatpush1.bf16.xpose.msra.mxu0 0
  %3732 = vmatprep.subr.bf16.mxu0 0
  %3733 = vmatpush1.bf16.xpose.msra.mxu0 0
  %3734 = vmatprep.subr.bf16.mxu0 0
  %3735 = vmatpush1.bf16.xpose.msra.mxu0 0
  %3736 = vmatprep.subr.bf16.mxu0 0
  %3737 = vmatpush1.bf16.xpose.msra.mxu0 0
  %3738 = vmatprep.subr.bf16.mxu0 0
  %3739 = vmatpush1.bf16.xpose.msra.mxu0 0
  %3740 = vmatprep.subr.bf16.mxu0 0
  %3741 = vmatpush1.bf16.xpose.msra.mxu0 0
  %3742 = vmatprep.subr.bf16.mxu0 0
  %3743 = vmatpush1.bf16.xpose.msra.mxu0 0
  %3744 = vmatprep.mubr.bf16.mxu0 0
  %3745 = vmatmul.mubr.bf16.gmra.mrb[0].mxu0 %v3707
  %v3746 = vpop.f32.mrb[0].mxu0
  %v3747 = vadd.f32 0.0, %v3746
  %v3748 = vpop.f32.mrb[0].mxu0
  %v3749 = vpop.f32.mrb[0].mxu0
  %v3750 = vpop.f32.mrb[0].mxu0
  %3751 = vdwg.mxu0
  %3752 = vrot.lane.b32.xlu0 %v181, 112
  %v3753 = vpop.permute.xlu0 %3752
  %3754 = vrot.lane.b32.xlu0 %v181, 80
  %v3755 = vpop.permute.xlu0 %3754
  %v3757 = vsel %vm199, %v3753, 0
  %v3760 = vsel %vm199, %v3755, 0
  %3762 = vmatprep.subr.bf16.mxu0 0
  %3763 = vmatpush1.bf16.xpose.msra.mxu0 %v3760
  %3764 = vmatprep.subr.bf16.mxu0 0
  %3765 = vmatpush1.bf16.xpose.msra.mxu0 0
  %3766 = vmatprep.subr.bf16.mxu0 0
  %3767 = vmatpush1.bf16.xpose.msra.mxu0 0
  %3768 = vmatprep.subr.bf16.mxu0 0
  %3769 = vmatpush1.bf16.xpose.msra.mxu0 0
  %3770 = vmatprep.subr.bf16.mxu0 0
  %3771 = vmatpush1.bf16.xpose.msra.mxu0 0
  %3772 = vmatprep.subr.bf16.mxu0 0
  %3773 = vmatpush1.bf16.xpose.msra.mxu0 0
  %3774 = vmatprep.subr.bf16.mxu0 0
  %3775 = vmatpush1.bf16.xpose.msra.mxu0 0
  %3776 = vmatprep.subr.bf16.mxu0 0
  %3777 = vmatpush1.bf16.xpose.msra.mxu0 0
  %3778 = vmatprep.subr.bf16.mxu0 0
  %3779 = vmatpush1.bf16.xpose.msra.mxu0 0
  %3780 = vmatprep.subr.bf16.mxu0 0
  %3781 = vmatpush1.bf16.xpose.msra.mxu0 0
  %3782 = vmatprep.subr.bf16.mxu0 0
  %3783 = vmatpush1.bf16.xpose.msra.mxu0 0
  %3784 = vmatprep.subr.bf16.mxu0 0
  %3785 = vmatpush1.bf16.xpose.msra.mxu0 0
  %3786 = vmatprep.subr.bf16.mxu0 0
  %3787 = vmatpush1.bf16.xpose.msra.mxu0 0
  %3788 = vmatprep.subr.bf16.mxu0 0
  %3789 = vmatpush1.bf16.xpose.msra.mxu0 0
  %3790 = vmatprep.subr.bf16.mxu0 0
  %3791 = vmatpush1.bf16.xpose.msra.mxu0 0
  %3792 = vmatprep.subr.bf16.mxu0 0
  %3793 = vmatpush1.bf16.xpose.msra.mxu0 0
  %3794 = vmatprep.mubr.bf16.mxu0 0
  %3795 = vmatmul.mubr.bf16.gmra.mrb[0].mxu0 %v3757
  %v3796 = vpop.f32.mrb[0].mxu0
  %v3797 = vadd.f32 0.0, %v3796
  %v3798 = vpop.f32.mrb[0].mxu0
  %v3799 = vpop.f32.mrb[0].mxu0
  %v3800 = vpop.f32.mrb[0].mxu0
  %3801 = vdwg.mxu0
  %3802 = vrot.lane.b32.xlu0 %v182, 112
  %v3803 = vpop.permute.xlu0 %3802
  %3804 = vrot.lane.b32.xlu0 %v182, 80
  %v3805 = vpop.permute.xlu0 %3804
  %v3807 = vsel %vm199, %v3803, 0
  %v3810 = vsel %vm199, %v3805, 0
  %3812 = vmatprep.subr.bf16.mxu0 0
  %3813 = vmatpush1.bf16.xpose.msra.mxu0 %v3810
  %3814 = vmatprep.subr.bf16.mxu0 0
  %3815 = vmatpush1.bf16.xpose.msra.mxu0 0
  %3816 = vmatprep.subr.bf16.mxu0 0
  %3817 = vmatpush1.bf16.xpose.msra.mxu0 0
  %3818 = vmatprep.subr.bf16.mxu0 0
  %3819 = vmatpush1.bf16.xpose.msra.mxu0 0
  %3820 = vmatprep.subr.bf16.mxu0 0
  %3821 = vmatpush1.bf16.xpose.msra.mxu0 0
  %3822 = vmatprep.subr.bf16.mxu0 0
  %3823 = vmatpush1.bf16.xpose.msra.mxu0 0
  %3824 = vmatprep.subr.bf16.mxu0 0
  %3825 = vmatpush1.bf16.xpose.msra.mxu0 0
  %3826 = vmatprep.subr.bf16.mxu0 0
  %3827 = vmatpush1.bf16.xpose.msra.mxu0 0
  %3828 = vmatprep.subr.bf16.mxu0 0
  %3829 = vmatpush1.bf16.xpose.msra.mxu0 0
  %3830 = vmatprep.subr.bf16.mxu0 0
  %3831 = vmatpush1.bf16.xpose.msra.mxu0 0
  %3832 = vmatprep.subr.bf16.mxu0 0
  %3833 = vmatpush1.bf16.xpose.msra.mxu0 0
  %3834 = vmatprep.subr.bf16.mxu0 0
  %3835 = vmatpush1.bf16.xpose.msra.mxu0 0
  %3836 = vmatprep.subr.bf16.mxu0 0
  %3837 = vmatpush1.bf16.xpose.msra.mxu0 0
  %3838 = vmatprep.subr.bf16.mxu0 0
  %3839 = vmatpush1.bf16.xpose.msra.mxu0 0
  %3840 = vmatprep.subr.bf16.mxu0 0
  %3841 = vmatpush1.bf16.xpose.msra.mxu0 0
  %3842 = vmatprep.subr.bf16.mxu0 0
  %3843 = vmatpush1.bf16.xpose.msra.mxu0 0
  %3844 = vmatprep.mubr.bf16.mxu0 0
  %3845 = vmatmul.mubr.bf16.gmra.mrb[0].mxu0 %v3807
  %v3846 = vpop.f32.mrb[0].mxu0
  %v3847 = vadd.f32 0.0, %v3846
  %v3848 = vpop.f32.mrb[0].mxu0
  %v3849 = vpop.f32.mrb[0].mxu0
  %v3850 = vpop.f32.mrb[0].mxu0
  %3851 = vdwg.mxu0
  %3852 = vrot.lane.b32.xlu0 %v183, 112
  %v3853 = vpop.permute.xlu0 %3852
  %3854 = vrot.lane.b32.xlu0 %v183, 80
  %v3855 = vpop.permute.xlu0 %3854
  %v3857 = vsel %vm199, %v3853, 0
  %v3860 = vsel %vm199, %v3855, 0
  %3862 = vmatprep.subr.bf16.mxu0 0
  %3863 = vmatpush1.bf16.xpose.msra.mxu0 %v3860
  %3864 = vmatprep.subr.bf16.mxu0 0
  %3865 = vmatpush1.bf16.xpose.msra.mxu0 0
  %3866 = vmatprep.subr.bf16.mxu0 0
  %3867 = vmatpush1.bf16.xpose.msra.mxu0 0
  %3868 = vmatprep.subr.bf16.mxu0 0
  %3869 = vmatpush1.bf16.xpose.msra.mxu0 0
  %3870 = vmatprep.subr.bf16.mxu0 0
  %3871 = vmatpush1.bf16.xpose.msra.mxu0 0
  %3872 = vmatprep.subr.bf16.mxu0 0
  %3873 = vmatpush1.bf16.xpose.msra.mxu0 0
  %3874 = vmatprep.subr.bf16.mxu0 0
  %3875 = vmatpush1.bf16.xpose.msra.mxu0 0
  %3876 = vmatprep.subr.bf16.mxu0 0
  %3877 = vmatpush1.bf16.xpose.msra.mxu0 0
  %3878 = vmatprep.subr.bf16.mxu0 0
  %3879 = vmatpush1.bf16.xpose.msra.mxu0 0
  %3880 = vmatprep.subr.bf16.mxu0 0
  %3881 = vmatpush1.bf16.xpose.msra.mxu0 0
  %3882 = vmatprep.subr.bf16.mxu0 0
  %3883 = vmatpush1.bf16.xpose.msra.mxu0 0
  %3884 = vmatprep.subr.bf16.mxu0 0
  %3885 = vmatpush1.bf16.xpose.msra.mxu0 0
  %3886 = vmatprep.subr.bf16.mxu0 0
  %3887 = vmatpush1.bf16.xpose.msra.mxu0 0
  %3888 = vmatprep.subr.bf16.mxu0 0
  %3889 = vmatpush1.bf16.xpose.msra.mxu0 0
  %3890 = vmatprep.subr.bf16.mxu0 0
  %3891 = vmatpush1.bf16.xpose.msra.mxu0 0
  %3892 = vmatprep.subr.bf16.mxu0 0
  %3893 = vmatpush1.bf16.xpose.msra.mxu0 0
  %3894 = vmatprep.mubr.bf16.mxu0 0
  %3895 = vmatmul.mubr.bf16.gmra.mrb[0].mxu0 %v3857
  %v3896 = vpop.f32.mrb[0].mxu0
  %v3897 = vadd.f32 0.0, %v3896
  %v3898 = vpop.f32.mrb[0].mxu0
  %v3899 = vpop.f32.mrb[0].mxu0
  %v3900 = vpop.f32.mrb[0].mxu0
  %3901 = vdwg.mxu0
  %3902 = vrot.lane.b32.xlu0 %v184, 112
  %v3903 = vpop.permute.xlu0 %3902
  %3904 = vrot.lane.b32.xlu0 %v184, 80
  %v3905 = vpop.permute.xlu0 %3904
  %v3907 = vsel %vm199, %v3903, 0
  %v3910 = vsel %vm199, %v3905, 0
  %3912 = vmatprep.subr.bf16.mxu0 0
  %3913 = vmatpush1.bf16.xpose.msra.mxu0 %v3910
  %3914 = vmatprep.subr.bf16.mxu0 0
  %3915 = vmatpush1.bf16.xpose.msra.mxu0 0
  %3916 = vmatprep.subr.bf16.mxu0 0
  %3917 = vmatpush1.bf16.xpose.msra.mxu0 0
  %3918 = vmatprep.subr.bf16.mxu0 0
  %3919 = vmatpush1.bf16.xpose.msra.mxu0 0
  %3920 = vmatprep.subr.bf16.mxu0 0
  %3921 = vmatpush1.bf16.xpose.msra.mxu0 0
  %3922 = vmatprep.subr.bf16.mxu0 0
  %3923 = vmatpush1.bf16.xpose.msra.mxu0 0
  %3924 = vmatprep.subr.bf16.mxu0 0
  %3925 = vmatpush1.bf16.xpose.msra.mxu0 0
  %3926 = vmatprep.subr.bf16.mxu0 0
  %3927 = vmatpush1.bf16.xpose.msra.mxu0 0
  %3928 = vmatprep.subr.bf16.mxu0 0
  %3929 = vmatpush1.bf16.xpose.msra.mxu0 0
  %3930 = vmatprep.subr.bf16.mxu0 0
  %3931 = vmatpush1.bf16.xpose.msra.mxu0 0
  %3932 = vmatprep.subr.bf16.mxu0 0
  %3933 = vmatpush1.bf16.xpose.msra.mxu0 0
  %3934 = vmatprep.subr.bf16.mxu0 0
  %3935 = vmatpush1.bf16.xpose.msra.mxu0 0
  %3936 = vmatprep.subr.bf16.mxu0 0
  %3937 = vmatpush1.bf16.xpose.msra.mxu0 0
  %3938 = vmatprep.subr.bf16.mxu0 0
  %3939 = vmatpush1.bf16.xpose.msra.mxu0 0
  %3940 = vmatprep.subr.bf16.mxu0 0
  %3941 = vmatpush1.bf16.xpose.msra.mxu0 0
  %3942 = vmatprep.subr.bf16.mxu0 0
  %3943 = vmatpush1.bf16.xpose.msra.mxu0 0
  %3944 = vmatprep.mubr.bf16.mxu0 0
  %3945 = vmatmul.mubr.bf16.gmra.mrb[0].mxu0 %v3907
  %v3946 = vpop.f32.mrb[0].mxu0
  %v3947 = vadd.f32 0.0, %v3946
  %v3948 = vpop.f32.mrb[0].mxu0
  %v3949 = vpop.f32.mrb[0].mxu0
  %v3950 = vpop.f32.mrb[0].mxu0
  %3951 = vdwg.mxu0
  %3952 = vrot.lane.b32.xlu0 %v185, 112
  %v3953 = vpop.permute.xlu0 %3952
  %3954 = vrot.lane.b32.xlu0 %v185, 80
  %v3955 = vpop.permute.xlu0 %3954
  %v3957 = vsel %vm199, %v3953, 0
  %v3960 = vsel %vm199, %v3955, 0
  %3962 = vmatprep.subr.bf16.mxu0 0
  %3963 = vmatpush1.bf16.xpose.msra.mxu0 %v3960
  %3964 = vmatprep.subr.bf16.mxu0 0
  %3965 = vmatpush1.bf16.xpose.msra.mxu0 0
  %3966 = vmatprep.subr.bf16.mxu0 0
  %3967 = vmatpush1.bf16.xpose.msra.mxu0 0
  %3968 = vmatprep.subr.bf16.mxu0 0
  %3969 = vmatpush1.bf16.xpose.msra.mxu0 0
  %3970 = vmatprep.subr.bf16.mxu0 0
  %3971 = vmatpush1.bf16.xpose.msra.mxu0 0
  %3972 = vmatprep.subr.bf16.mxu0 0
  %3973 = vmatpush1.bf16.xpose.msra.mxu0 0
  %3974 = vmatprep.subr.bf16.mxu0 0
  %3975 = vmatpush1.bf16.xpose.msra.mxu0 0
  %3976 = vmatprep.subr.bf16.mxu0 0
  %3977 = vmatpush1.bf16.xpose.msra.mxu0 0
  %3978 = vmatprep.subr.bf16.mxu0 0
  %3979 = vmatpush1.bf16.xpose.msra.mxu0 0
  %3980 = vmatprep.subr.bf16.mxu0 0
  %3981 = vmatpush1.bf16.xpose.msra.mxu0 0
  %3982 = vmatprep.subr.bf16.mxu0 0
  %3983 = vmatpush1.bf16.xpose.msra.mxu0 0
  %3984 = vmatprep.subr.bf16.mxu0 0
  %3985 = vmatpush1.bf16.xpose.msra.mxu0 0
  %3986 = vmatprep.subr.bf16.mxu0 0
  %3987 = vmatpush1.bf16.xpose.msra.mxu0 0
  %3988 = vmatprep.subr.bf16.mxu0 0
  %3989 = vmatpush1.bf16.xpose.msra.mxu0 0
  %3990 = vmatprep.subr.bf16.mxu0 0
  %3991 = vmatpush1.bf16.xpose.msra.mxu0 0
  %3992 = vmatprep.subr.bf16.mxu0 0
  %3993 = vmatpush1.bf16.xpose.msra.mxu0 0
  %3994 = vmatprep.mubr.bf16.mxu0 0
  %3995 = vmatmul.mubr.bf16.gmra.mrb[0].mxu0 %v3957
  %v3996 = vpop.f32.mrb[0].mxu0
  %v3997 = vadd.f32 0.0, %v3996
  %v3998 = vpop.f32.mrb[0].mxu0
  %v3999 = vpop.f32.mrb[0].mxu0
  %v4000 = vpop.f32.mrb[0].mxu0
  %4001 = vdwg.mxu0
  %4002 = vrot.lane.b32.xlu0 %v186, 112
  %v4003 = vpop.permute.xlu0 %4002
  %4004 = vrot.lane.b32.xlu0 %v186, 80
  %v4005 = vpop.permute.xlu0 %4004
  %v4007 = vsel %vm199, %v4003, 0
  %v4010 = vsel %vm199, %v4005, 0
  %4012 = vmatprep.subr.bf16.mxu0 0
  %4013 = vmatpush1.bf16.xpose.msra.mxu0 %v4010
  %4014 = vmatprep.subr.bf16.mxu0 0
  %4015 = vmatpush1.bf16.xpose.msra.mxu0 0
  %4016 = vmatprep.subr.bf16.mxu0 0
  %4017 = vmatpush1.bf16.xpose.msra.mxu0 0
  %4018 = vmatprep.subr.bf16.mxu0 0
  %4019 = vmatpush1.bf16.xpose.msra.mxu0 0
  %4020 = vmatprep.subr.bf16.mxu0 0
  %4021 = vmatpush1.bf16.xpose.msra.mxu0 0
  %4022 = vmatprep.subr.bf16.mxu0 0
  %4023 = vmatpush1.bf16.xpose.msra.mxu0 0
  %4024 = vmatprep.subr.bf16.mxu0 0
  %4025 = vmatpush1.bf16.xpose.msra.mxu0 0
  %4026 = vmatprep.subr.bf16.mxu0 0
  %4027 = vmatpush1.bf16.xpose.msra.mxu0 0
  %4028 = vmatprep.subr.bf16.mxu0 0
  %4029 = vmatpush1.bf16.xpose.msra.mxu0 0
  %4030 = vmatprep.subr.bf16.mxu0 0
  %4031 = vmatpush1.bf16.xpose.msra.mxu0 0
  %4032 = vmatprep.subr.bf16.mxu0 0
  %4033 = vmatpush1.bf16.xpose.msra.mxu0 0
  %4034 = vmatprep.subr.bf16.mxu0 0
  %4035 = vmatpush1.bf16.xpose.msra.mxu0 0
  %4036 = vmatprep.subr.bf16.mxu0 0
  %4037 = vmatpush1.bf16.xpose.msra.mxu0 0
  %4038 = vmatprep.subr.bf16.mxu0 0
  %4039 = vmatpush1.bf16.xpose.msra.mxu0 0
  %4040 = vmatprep.subr.bf16.mxu0 0
  %4041 = vmatpush1.bf16.xpose.msra.mxu0 0
  %4042 = vmatprep.subr.bf16.mxu0 0
  %4043 = vmatpush1.bf16.xpose.msra.mxu0 0
  %4044 = vmatprep.mubr.bf16.mxu0 0
  %4045 = vmatmul.mubr.bf16.gmra.mrb[0].mxu0 %v4007
  %v4046 = vpop.f32.mrb[0].mxu0
  %v4047 = vadd.f32 0.0, %v4046
  %v4048 = vpop.f32.mrb[0].mxu0
  %v4049 = vpop.f32.mrb[0].mxu0
  %v4050 = vpop.f32.mrb[0].mxu0
  %4051 = vdwg.mxu0
  %4052 = vrot.lane.b32.xlu0 %v187, 112
  %v4053 = vpop.permute.xlu0 %4052
  %4054 = vrot.lane.b32.xlu0 %v187, 80
  %v4055 = vpop.permute.xlu0 %4054
  %v4057 = vsel %vm199, %v4053, 0
  %v4060 = vsel %vm199, %v4055, 0
  %4062 = vmatprep.subr.bf16.mxu0 0
  %4063 = vmatpush1.bf16.xpose.msra.mxu0 %v4060
  %4064 = vmatprep.subr.bf16.mxu0 0
  %4065 = vmatpush1.bf16.xpose.msra.mxu0 0
  %4066 = vmatprep.subr.bf16.mxu0 0
  %4067 = vmatpush1.bf16.xpose.msra.mxu0 0
  %4068 = vmatprep.subr.bf16.mxu0 0
  %4069 = vmatpush1.bf16.xpose.msra.mxu0 0
  %4070 = vmatprep.subr.bf16.mxu0 0
  %4071 = vmatpush1.bf16.xpose.msra.mxu0 0
  %4072 = vmatprep.subr.bf16.mxu0 0
  %4073 = vmatpush1.bf16.xpose.msra.mxu0 0
  %4074 = vmatprep.subr.bf16.mxu0 0
  %4075 = vmatpush1.bf16.xpose.msra.mxu0 0
  %4076 = vmatprep.subr.bf16.mxu0 0
  %4077 = vmatpush1.bf16.xpose.msra.mxu0 0
  %4078 = vmatprep.subr.bf16.mxu0 0
  %4079 = vmatpush1.bf16.xpose.msra.mxu0 0
  %4080 = vmatprep.subr.bf16.mxu0 0
  %4081 = vmatpush1.bf16.xpose.msra.mxu0 0
  %4082 = vmatprep.subr.bf16.mxu0 0
  %4083 = vmatpush1.bf16.xpose.msra.mxu0 0
  %4084 = vmatprep.subr.bf16.mxu0 0
  %4085 = vmatpush1.bf16.xpose.msra.mxu0 0
  %4086 = vmatprep.subr.bf16.mxu0 0
  %4087 = vmatpush1.bf16.xpose.msra.mxu0 0
  %4088 = vmatprep.subr.bf16.mxu0 0
  %4089 = vmatpush1.bf16.xpose.msra.mxu0 0
  %4090 = vmatprep.subr.bf16.mxu0 0
  %4091 = vmatpush1.bf16.xpose.msra.mxu0 0
  %4092 = vmatprep.subr.bf16.mxu0 0
  %4093 = vmatpush1.bf16.xpose.msra.mxu0 0
  %4094 = vmatprep.mubr.bf16.mxu0 0
  %4095 = vmatmul.mubr.bf16.gmra.mrb[0].mxu0 %v4057
  %v4096 = vpop.f32.mrb[0].mxu0
  %v4097 = vadd.f32 0.0, %v4096
  %v4098 = vpop.f32.mrb[0].mxu0
  %v4099 = vpop.f32.mrb[0].mxu0
  %v4100 = vpop.f32.mrb[0].mxu0
  %4101 = vdwg.mxu0
  %4102 = vrot.lane.b32.xlu0 %v188, 112
  %v4103 = vpop.permute.xlu0 %4102
  %4104 = vrot.lane.b32.xlu0 %v188, 80
  %v4105 = vpop.permute.xlu0 %4104
  %v4107 = vsel %vm199, %v4103, 0
  %v4110 = vsel %vm199, %v4105, 0
  %4112 = vmatprep.subr.bf16.mxu0 0
  %4113 = vmatpush1.bf16.xpose.msra.mxu0 %v4110
  %4114 = vmatprep.subr.bf16.mxu0 0
  %4115 = vmatpush1.bf16.xpose.msra.mxu0 0
  %4116 = vmatprep.subr.bf16.mxu0 0
  %4117 = vmatpush1.bf16.xpose.msra.mxu0 0
  %4118 = vmatprep.subr.bf16.mxu0 0
  %4119 = vmatpush1.bf16.xpose.msra.mxu0 0
  %4120 = vmatprep.subr.bf16.mxu0 0
  %4121 = vmatpush1.bf16.xpose.msra.mxu0 0
  %4122 = vmatprep.subr.bf16.mxu0 0
  %4123 = vmatpush1.bf16.xpose.msra.mxu0 0
  %4124 = vmatprep.subr.bf16.mxu0 0
  %4125 = vmatpush1.bf16.xpose.msra.mxu0 0
  %4126 = vmatprep.subr.bf16.mxu0 0
  %4127 = vmatpush1.bf16.xpose.msra.mxu0 0
  %4128 = vmatprep.subr.bf16.mxu0 0
  %4129 = vmatpush1.bf16.xpose.msra.mxu0 0
  %4130 = vmatprep.subr.bf16.mxu0 0
  %4131 = vmatpush1.bf16.xpose.msra.mxu0 0
  %4132 = vmatprep.subr.bf16.mxu0 0
  %4133 = vmatpush1.bf16.xpose.msra.mxu0 0
  %4134 = vmatprep.subr.bf16.mxu0 0
  %4135 = vmatpush1.bf16.xpose.msra.mxu0 0
  %4136 = vmatprep.subr.bf16.mxu0 0
  %4137 = vmatpush1.bf16.xpose.msra.mxu0 0
  %4138 = vmatprep.subr.bf16.mxu0 0
  %4139 = vmatpush1.bf16.xpose.msra.mxu0 0
  %4140 = vmatprep.subr.bf16.mxu0 0
  %4141 = vmatpush1.bf16.xpose.msra.mxu0 0
  %4142 = vmatprep.subr.bf16.mxu0 0
  %4143 = vmatpush1.bf16.xpose.msra.mxu0 0
  %4144 = vmatprep.mubr.bf16.mxu0 0
  %4145 = vmatmul.mubr.bf16.gmra.mrb[0].mxu0 %v4107
  %v4146 = vpop.f32.mrb[0].mxu0
  %v4147 = vadd.f32 0.0, %v4146
  %v4148 = vpop.f32.mrb[0].mxu0
  %v4149 = vpop.f32.mrb[0].mxu0
  %v4150 = vpop.f32.mrb[0].mxu0
  %4151 = vdwg.mxu0
  %4152 = vrot.lane.b32.xlu0 %v189, 112
  %v4153 = vpop.permute.xlu0 %4152
  %4154 = vrot.lane.b32.xlu0 %v189, 80
  %v4155 = vpop.permute.xlu0 %4154
  %v4157 = vsel %vm199, %v4153, 0
  %v4160 = vsel %vm199, %v4155, 0
  %4162 = vmatprep.subr.bf16.mxu0 0
  %4163 = vmatpush1.bf16.xpose.msra.mxu0 %v4160
  %4164 = vmatprep.subr.bf16.mxu0 0
  %4165 = vmatpush1.bf16.xpose.msra.mxu0 0
  %4166 = vmatprep.subr.bf16.mxu0 0
  %4167 = vmatpush1.bf16.xpose.msra.mxu0 0
  %4168 = vmatprep.subr.bf16.mxu0 0
  %4169 = vmatpush1.bf16.xpose.msra.mxu0 0
  %4170 = vmatprep.subr.bf16.mxu0 0
  %4171 = vmatpush1.bf16.xpose.msra.mxu0 0
  %4172 = vmatprep.subr.bf16.mxu0 0
  %4173 = vmatpush1.bf16.xpose.msra.mxu0 0
  %4174 = vmatprep.subr.bf16.mxu0 0
  %4175 = vmatpush1.bf16.xpose.msra.mxu0 0
  %4176 = vmatprep.subr.bf16.mxu0 0
  %4177 = vmatpush1.bf16.xpose.msra.mxu0 0
  %4178 = vmatprep.subr.bf16.mxu0 0
  %4179 = vmatpush1.bf16.xpose.msra.mxu0 0
  %4180 = vmatprep.subr.bf16.mxu0 0
  %4181 = vmatpush1.bf16.xpose.msra.mxu0 0
  %4182 = vmatprep.subr.bf16.mxu0 0
  %4183 = vmatpush1.bf16.xpose.msra.mxu0 0
  %4184 = vmatprep.subr.bf16.mxu0 0
  %4185 = vmatpush1.bf16.xpose.msra.mxu0 0
  %4186 = vmatprep.subr.bf16.mxu0 0
  %4187 = vmatpush1.bf16.xpose.msra.mxu0 0
  %4188 = vmatprep.subr.bf16.mxu0 0
  %4189 = vmatpush1.bf16.xpose.msra.mxu0 0
  %4190 = vmatprep.subr.bf16.mxu0 0
  %4191 = vmatpush1.bf16.xpose.msra.mxu0 0
  %4192 = vmatprep.subr.bf16.mxu0 0
  %4193 = vmatpush1.bf16.xpose.msra.mxu0 0
  %4194 = vmatprep.mubr.bf16.mxu0 0
  %4195 = vmatmul.mubr.bf16.gmra.mrb[0].mxu0 %v4157
  %v4196 = vpop.f32.mrb[0].mxu0
  %v4197 = vadd.f32 0.0, %v4196
  %v4198 = vpop.f32.mrb[0].mxu0
  %v4199 = vpop.f32.mrb[0].mxu0
  %v4200 = vpop.f32.mrb[0].mxu0
  %4201 = vdwg.mxu0
  %4202 = vrot.lane.b32.xlu0 %v190, 112
  %v4203 = vpop.permute.xlu0 %4202
  %4204 = vrot.lane.b32.xlu0 %v190, 80
  %v4205 = vpop.permute.xlu0 %4204
  %v4207 = vsel %vm199, %v4203, 0
  %v4210 = vsel %vm199, %v4205, 0
  %4212 = vmatprep.subr.bf16.mxu0 0
  %4213 = vmatpush1.bf16.xpose.msra.mxu0 %v4210
  %4214 = vmatprep.subr.bf16.mxu0 0
  %4215 = vmatpush1.bf16.xpose.msra.mxu0 0
  %4216 = vmatprep.subr.bf16.mxu0 0
  %4217 = vmatpush1.bf16.xpose.msra.mxu0 0
  %4218 = vmatprep.subr.bf16.mxu0 0
  %4219 = vmatpush1.bf16.xpose.msra.mxu0 0
  %4220 = vmatprep.subr.bf16.mxu0 0
  %4221 = vmatpush1.bf16.xpose.msra.mxu0 0
  %4222 = vmatprep.subr.bf16.mxu0 0
  %4223 = vmatpush1.bf16.xpose.msra.mxu0 0
  %4224 = vmatprep.subr.bf16.mxu0 0
  %4225 = vmatpush1.bf16.xpose.msra.mxu0 0
  %4226 = vmatprep.subr.bf16.mxu0 0
  %4227 = vmatpush1.bf16.xpose.msra.mxu0 0
  %4228 = vmatprep.subr.bf16.mxu0 0
  %4229 = vmatpush1.bf16.xpose.msra.mxu0 0
  %4230 = vmatprep.subr.bf16.mxu0 0
  %4231 = vmatpush1.bf16.xpose.msra.mxu0 0
  %4232 = vmatprep.subr.bf16.mxu0 0
  %4233 = vmatpush1.bf16.xpose.msra.mxu0 0
  %4234 = vmatprep.subr.bf16.mxu0 0
  %4235 = vmatpush1.bf16.xpose.msra.mxu0 0
  %4236 = vmatprep.subr.bf16.mxu0 0
  %4237 = vmatpush1.bf16.xpose.msra.mxu0 0
  %4238 = vmatprep.subr.bf16.mxu0 0
  %4239 = vmatpush1.bf16.xpose.msra.mxu0 0
  %4240 = vmatprep.subr.bf16.mxu0 0
  %4241 = vmatpush1.bf16.xpose.msra.mxu0 0
  %4242 = vmatprep.subr.bf16.mxu0 0
  %4243 = vmatpush1.bf16.xpose.msra.mxu0 0
  %4244 = vmatprep.mubr.bf16.mxu0 0
  %4245 = vmatmul.mubr.bf16.gmra.mrb[0].mxu0 %v4207
  %v4246 = vpop.f32.mrb[0].mxu0
  %v4247 = vadd.f32 0.0, %v4246
  %v4248 = vpop.f32.mrb[0].mxu0
  %v4249 = vpop.f32.mrb[0].mxu0
  %v4250 = vpop.f32.mrb[0].mxu0
  %4251 = vdwg.mxu0
  %4252 = vrot.lane.b32.xlu0 %v191, 112
  %v4253 = vpop.permute.xlu0 %4252
  %4254 = vrot.lane.b32.xlu0 %v191, 80
  %v4255 = vpop.permute.xlu0 %4254
  %v4257 = vsel %vm199, %v4253, 0
  %v4260 = vsel %vm199, %v4255, 0
  %4262 = vmatprep.subr.bf16.mxu0 0
  %4263 = vmatpush1.bf16.xpose.msra.mxu0 %v4260
  %4264 = vmatprep.subr.bf16.mxu0 0
  %4265 = vmatpush1.bf16.xpose.msra.mxu0 0
  %4266 = vmatprep.subr.bf16.mxu0 0
  %4267 = vmatpush1.bf16.xpose.msra.mxu0 0
  %4268 = vmatprep.subr.bf16.mxu0 0
  %4269 = vmatpush1.bf16.xpose.msra.mxu0 0
  %4270 = vmatprep.subr.bf16.mxu0 0
  %4271 = vmatpush1.bf16.xpose.msra.mxu0 0
  %4272 = vmatprep.subr.bf16.mxu0 0
  %4273 = vmatpush1.bf16.xpose.msra.mxu0 0
  %4274 = vmatprep.subr.bf16.mxu0 0
  %4275 = vmatpush1.bf16.xpose.msra.mxu0 0
  %4276 = vmatprep.subr.bf16.mxu0 0
  %4277 = vmatpush1.bf16.xpose.msra.mxu0 0
  %4278 = vmatprep.subr.bf16.mxu0 0
  %4279 = vmatpush1.bf16.xpose.msra.mxu0 0
  %4280 = vmatprep.subr.bf16.mxu0 0
  %4281 = vmatpush1.bf16.xpose.msra.mxu0 0
  %4282 = vmatprep.subr.bf16.mxu0 0
  %4283 = vmatpush1.bf16.xpose.msra.mxu0 0
  %4284 = vmatprep.subr.bf16.mxu0 0
  %4285 = vmatpush1.bf16.xpose.msra.mxu0 0
  %4286 = vmatprep.subr.bf16.mxu0 0
  %4287 = vmatpush1.bf16.xpose.msra.mxu0 0
  %4288 = vmatprep.subr.bf16.mxu0 0
  %4289 = vmatpush1.bf16.xpose.msra.mxu0 0
  %4290 = vmatprep.subr.bf16.mxu0 0
  %4291 = vmatpush1.bf16.xpose.msra.mxu0 0
  %4292 = vmatprep.subr.bf16.mxu0 0
  %4293 = vmatpush1.bf16.xpose.msra.mxu0 0
  %4294 = vmatprep.mubr.bf16.mxu0 0
  %4295 = vmatmul.mubr.bf16.gmra.mrb[0].mxu0 %v4257
  %v4296 = vpop.f32.mrb[0].mxu0
  %v4297 = vadd.f32 0.0, %v4296
  %v4298 = vpop.f32.mrb[0].mxu0
  %v4299 = vpop.f32.mrb[0].mxu0
  %v4300 = vpop.f32.mrb[0].mxu0
  %4301 = vdwg.mxu0
  %4302 = vrot.lane.b32.xlu0 %v192, 112
  %v4303 = vpop.permute.xlu0 %4302
  %4304 = vrot.lane.b32.xlu0 %v192, 80
  %v4305 = vpop.permute.xlu0 %4304
  %v4307 = vsel %vm199, %v4303, 0
  %v4310 = vsel %vm199, %v4305, 0
  %4312 = vmatprep.subr.bf16.mxu0 0
  %4313 = vmatpush1.bf16.xpose.msra.mxu0 %v4310
  %4314 = vmatprep.subr.bf16.mxu0 0
  %4315 = vmatpush1.bf16.xpose.msra.mxu0 0
  %4316 = vmatprep.subr.bf16.mxu0 0
  %4317 = vmatpush1.bf16.xpose.msra.mxu0 0
  %4318 = vmatprep.subr.bf16.mxu0 0
  %4319 = vmatpush1.bf16.xpose.msra.mxu0 0
  %4320 = vmatprep.subr.bf16.mxu0 0
  %4321 = vmatpush1.bf16.xpose.msra.mxu0 0
  %4322 = vmatprep.subr.bf16.mxu0 0
  %4323 = vmatpush1.bf16.xpose.msra.mxu0 0
  %4324 = vmatprep.subr.bf16.mxu0 0
  %4325 = vmatpush1.bf16.xpose.msra.mxu0 0
  %4326 = vmatprep.subr.bf16.mxu0 0
  %4327 = vmatpush1.bf16.xpose.msra.mxu0 0
  %4328 = vmatprep.subr.bf16.mxu0 0
  %4329 = vmatpush1.bf16.xpose.msra.mxu0 0
  %4330 = vmatprep.subr.bf16.mxu0 0
  %4331 = vmatpush1.bf16.xpose.msra.mxu0 0
  %4332 = vmatprep.subr.bf16.mxu0 0
  %4333 = vmatpush1.bf16.xpose.msra.mxu0 0
  %4334 = vmatprep.subr.bf16.mxu0 0
  %4335 = vmatpush1.bf16.xpose.msra.mxu0 0
  %4336 = vmatprep.subr.bf16.mxu0 0
  %4337 = vmatpush1.bf16.xpose.msra.mxu0 0
  %4338 = vmatprep.subr.bf16.mxu0 0
  %4339 = vmatpush1.bf16.xpose.msra.mxu0 0
  %4340 = vmatprep.subr.bf16.mxu0 0
  %4341 = vmatpush1.bf16.xpose.msra.mxu0 0
  %4342 = vmatprep.subr.bf16.mxu0 0
  %4343 = vmatpush1.bf16.xpose.msra.mxu0 0
  %4344 = vmatprep.mubr.bf16.mxu0 0
  %4345 = vmatmul.mubr.bf16.gmra.mrb[0].mxu0 %v4307
  %v4346 = vpop.f32.mrb[0].mxu0
  %v4347 = vadd.f32 0.0, %v4346
  %v4348 = vpop.f32.mrb[0].mxu0
  %v4349 = vpop.f32.mrb[0].mxu0
  %v4350 = vpop.f32.mrb[0].mxu0
  %4351 = vdwg.mxu0
  %4352 = vrot.lane.b32.xlu0 %v193, 112
  %v4353 = vpop.permute.xlu0 %4352
  %4354 = vrot.lane.b32.xlu0 %v193, 80
  %v4355 = vpop.permute.xlu0 %4354
  %v4357 = vsel %vm199, %v4353, 0
  %v4360 = vsel %vm199, %v4355, 0
  %4362 = vmatprep.subr.bf16.mxu0 0
  %4363 = vmatpush1.bf16.xpose.msra.mxu0 %v4360
  %4364 = vmatprep.subr.bf16.mxu0 0
  %4365 = vmatpush1.bf16.xpose.msra.mxu0 0
  %4366 = vmatprep.subr.bf16.mxu0 0
  %4367 = vmatpush1.bf16.xpose.msra.mxu0 0
  %4368 = vmatprep.subr.bf16.mxu0 0
  %4369 = vmatpush1.bf16.xpose.msra.mxu0 0
  %4370 = vmatprep.subr.bf16.mxu0 0
  %4371 = vmatpush1.bf16.xpose.msra.mxu0 0
  %4372 = vmatprep.subr.bf16.mxu0 0
  %4373 = vmatpush1.bf16.xpose.msra.mxu0 0
  %4374 = vmatprep.subr.bf16.mxu0 0
  %4375 = vmatpush1.bf16.xpose.msra.mxu0 0
  %4376 = vmatprep.subr.bf16.mxu0 0
  %4377 = vmatpush1.bf16.xpose.msra.mxu0 0
  %4378 = vmatprep.subr.bf16.mxu0 0
  %4379 = vmatpush1.bf16.xpose.msra.mxu0 0
  %4380 = vmatprep.subr.bf16.mxu0 0
  %4381 = vmatpush1.bf16.xpose.msra.mxu0 0
  %4382 = vmatprep.subr.bf16.mxu0 0
  %4383 = vmatpush1.bf16.xpose.msra.mxu0 0
  %4384 = vmatprep.subr.bf16.mxu0 0
  %4385 = vmatpush1.bf16.xpose.msra.mxu0 0
  %4386 = vmatprep.subr.bf16.mxu0 0
  %4387 = vmatpush1.bf16.xpose.msra.mxu0 0
  %4388 = vmatprep.subr.bf16.mxu0 0
  %4389 = vmatpush1.bf16.xpose.msra.mxu0 0
  %4390 = vmatprep.subr.bf16.mxu0 0
  %4391 = vmatpush1.bf16.xpose.msra.mxu0 0
  %4392 = vmatprep.subr.bf16.mxu0 0
  %4393 = vmatpush1.bf16.xpose.msra.mxu0 0
  %4394 = vmatprep.mubr.bf16.mxu0 0
  %4395 = vmatmul.mubr.bf16.gmra.mrb[0].mxu0 %v4357
  %v4396 = vpop.f32.mrb[0].mxu0
  %v4397 = vadd.f32 0.0, %v4396
  %v4398 = vpop.f32.mrb[0].mxu0
  %v4399 = vpop.f32.mrb[0].mxu0
  %v4400 = vpop.f32.mrb[0].mxu0
  %4401 = vdwg.mxu0
  %4402 = vrot.lane.b32.xlu0 %v194, 112
  %v4403 = vpop.permute.xlu0 %4402
  %4404 = vrot.lane.b32.xlu0 %v194, 80
  %v4405 = vpop.permute.xlu0 %4404
  %v4407 = vsel %vm199, %v4403, 0
  %v4410 = vsel %vm199, %v4405, 0
  %4412 = vmatprep.subr.bf16.mxu0 0
  %4413 = vmatpush1.bf16.xpose.msra.mxu0 %v4410
  %4414 = vmatprep.subr.bf16.mxu0 0
  %4415 = vmatpush1.bf16.xpose.msra.mxu0 0
  %4416 = vmatprep.subr.bf16.mxu0 0
  %4417 = vmatpush1.bf16.xpose.msra.mxu0 0
  %4418 = vmatprep.subr.bf16.mxu0 0
  %4419 = vmatpush1.bf16.xpose.msra.mxu0 0
  %4420 = vmatprep.subr.bf16.mxu0 0
  %4421 = vmatpush1.bf16.xpose.msra.mxu0 0
  %4422 = vmatprep.subr.bf16.mxu0 0
  %4423 = vmatpush1.bf16.xpose.msra.mxu0 0
  %4424 = vmatprep.subr.bf16.mxu0 0
  %4425 = vmatpush1.bf16.xpose.msra.mxu0 0
  %4426 = vmatprep.subr.bf16.mxu0 0
  %4427 = vmatpush1.bf16.xpose.msra.mxu0 0
  %4428 = vmatprep.subr.bf16.mxu0 0
  %4429 = vmatpush1.bf16.xpose.msra.mxu0 0
  %4430 = vmatprep.subr.bf16.mxu0 0
  %4431 = vmatpush1.bf16.xpose.msra.mxu0 0
  %4432 = vmatprep.subr.bf16.mxu0 0
  %4433 = vmatpush1.bf16.xpose.msra.mxu0 0
  %4434 = vmatprep.subr.bf16.mxu0 0
  %4435 = vmatpush1.bf16.xpose.msra.mxu0 0
  %4436 = vmatprep.subr.bf16.mxu0 0
  %4437 = vmatpush1.bf16.xpose.msra.mxu0 0
  %4438 = vmatprep.subr.bf16.mxu0 0
  %4439 = vmatpush1.bf16.xpose.msra.mxu0 0
  %4440 = vmatprep.subr.bf16.mxu0 0
  %4441 = vmatpush1.bf16.xpose.msra.mxu0 0
  %4442 = vmatprep.subr.bf16.mxu0 0
  %4443 = vmatpush1.bf16.xpose.msra.mxu0 0
  %4444 = vmatprep.mubr.bf16.mxu0 0
  %4445 = vmatmul.mubr.bf16.gmra.mrb[0].mxu0 %v4407
  %v4446 = vpop.f32.mrb[0].mxu0
  %v4447 = vadd.f32 0.0, %v4446
  %v4448 = vpop.f32.mrb[0].mxu0
  %v4449 = vpop.f32.mrb[0].mxu0
  %v4450 = vpop.f32.mrb[0].mxu0
  %4451 = vdwg.mxu0
  %4452 = vrot.lane.b32.xlu0 %v195, 112
  %v4453 = vpop.permute.xlu0 %4452
  %4454 = vrot.lane.b32.xlu0 %v195, 80
  %v4455 = vpop.permute.xlu0 %4454
  %v4457 = vsel %vm199, %v4453, 0
  %v4460 = vsel %vm199, %v4455, 0
  %4462 = vmatprep.subr.bf16.mxu0 0
  %4463 = vmatpush1.bf16.xpose.msra.mxu0 %v4460
  %4464 = vmatprep.subr.bf16.mxu0 0
  %4465 = vmatpush1.bf16.xpose.msra.mxu0 0
  %4466 = vmatprep.subr.bf16.mxu0 0
  %4467 = vmatpush1.bf16.xpose.msra.mxu0 0
  %4468 = vmatprep.subr.bf16.mxu0 0
  %4469 = vmatpush1.bf16.xpose.msra.mxu0 0
  %4470 = vmatprep.subr.bf16.mxu0 0
  %4471 = vmatpush1.bf16.xpose.msra.mxu0 0
  %4472 = vmatprep.subr.bf16.mxu0 0
  %4473 = vmatpush1.bf16.xpose.msra.mxu0 0
  %4474 = vmatprep.subr.bf16.mxu0 0
  %4475 = vmatpush1.bf16.xpose.msra.mxu0 0
  %4476 = vmatprep.subr.bf16.mxu0 0
  %4477 = vmatpush1.bf16.xpose.msra.mxu0 0
  %4478 = vmatprep.subr.bf16.mxu0 0
  %4479 = vmatpush1.bf16.xpose.msra.mxu0 0
  %4480 = vmatprep.subr.bf16.mxu0 0
  %4481 = vmatpush1.bf16.xpose.msra.mxu0 0
  %4482 = vmatprep.subr.bf16.mxu0 0
  %4483 = vmatpush1.bf16.xpose.msra.mxu0 0
  %4484 = vmatprep.subr.bf16.mxu0 0
  %4485 = vmatpush1.bf16.xpose.msra.mxu0 0
  %4486 = vmatprep.subr.bf16.mxu0 0
  %4487 = vmatpush1.bf16.xpose.msra.mxu0 0
  %4488 = vmatprep.subr.bf16.mxu0 0
  %4489 = vmatpush1.bf16.xpose.msra.mxu0 0
  %4490 = vmatprep.subr.bf16.mxu0 0
  %4491 = vmatpush1.bf16.xpose.msra.mxu0 0
  %4492 = vmatprep.subr.bf16.mxu0 0
  %4493 = vmatpush1.bf16.xpose.msra.mxu0 0
  %4494 = vmatprep.mubr.bf16.mxu0 0
  %4495 = vmatmul.mubr.bf16.gmra.mrb[0].mxu0 %v4457
  %v4496 = vpop.f32.mrb[0].mxu0
  %v4497 = vadd.f32 0.0, %v4496
  %v4498 = vpop.f32.mrb[0].mxu0
  %v4499 = vpop.f32.mrb[0].mxu0
  %v4500 = vpop.f32.mrb[0].mxu0
  %4501 = vdwg.mxu0
  %v4502 = vsel %vm199, %v3747, -inf
  %4503 = vmax.xlane.f32.xlu0 %v4502
  %v4504 = vpop.xlane.xlu0 %4503
  %v4505 = vsel %vm199, %v3797, -inf
  %4506 = vmax.xlane.f32.xlu0 %v4505
  %v4507 = vpop.xlane.xlu0 %4506
  %v4508 = vsel %vm199, %v3847, -inf
  %4509 = vmax.xlane.f32.xlu0 %v4508
  %v4510 = vpop.xlane.xlu0 %4509
  %v4511 = vsel %vm199, %v3897, -inf
  %4512 = vmax.xlane.f32.xlu0 %v4511
  %v4513 = vpop.xlane.xlu0 %4512
  %v4514 = vsel %vm199, %v3947, -inf
  %4515 = vmax.xlane.f32.xlu0 %v4514
  %v4516 = vpop.xlane.xlu0 %4515
  %v4517 = vsel %vm199, %v3997, -inf
  %4518 = vmax.xlane.f32.xlu0 %v4517
  %v4519 = vpop.xlane.xlu0 %4518
  %v4520 = vsel %vm199, %v4047, -inf
  %4521 = vmax.xlane.f32.xlu0 %v4520
  %v4522 = vpop.xlane.xlu0 %4521
  %v4523 = vsel %vm199, %v4097, -inf
  %4524 = vmax.xlane.f32.xlu0 %v4523
  %v4525 = vpop.xlane.xlu0 %4524
  %v4526 = vsel %vm199, %v4147, -inf
  %4527 = vmax.xlane.f32.xlu0 %v4526
  %v4528 = vpop.xlane.xlu0 %4527
  %v4529 = vsel %vm199, %v4197, -inf
  %4530 = vmax.xlane.f32.xlu0 %v4529
  %v4531 = vpop.xlane.xlu0 %4530
  %v4532 = vsel %vm199, %v4247, -inf
  %4533 = vmax.xlane.f32.xlu0 %v4532
  %v4534 = vpop.xlane.xlu0 %4533
  %v4535 = vsel %vm199, %v4297, -inf
  %4536 = vmax.xlane.f32.xlu0 %v4535
  %v4537 = vpop.xlane.xlu0 %4536
  %v4538 = vsel %vm199, %v4347, -inf
  %4539 = vmax.xlane.f32.xlu0 %v4538
  %v4540 = vpop.xlane.xlu0 %4539
  %v4541 = vsel %vm199, %v4397, -inf
  %4542 = vmax.xlane.f32.xlu0 %v4541
  %v4543 = vpop.xlane.xlu0 %4542
  %v4544 = vsel %vm199, %v4447, -inf
  %4545 = vmax.xlane.f32.xlu0 %v4544
  %v4546 = vpop.xlane.xlu0 %4545
  %v4547 = vsel %vm199, %v4497, -inf
  %4548 = vmax.xlane.f32.xlu0 %v4547
  %v4549 = vpop.xlane.xlu0 %4548
  %v4550 = vsub.f32 %v3747, %v4504
  %v4551 = vsub.f32 %v3797, %v4507
  %v4552 = vsub.f32 %v3847, %v4510
  %v4553 = vsub.f32 %v3897, %v4513
  %v4554 = vsub.f32 %v3947, %v4516
  %v4555 = vsub.f32 %v3997, %v4519
  %v4556 = vsub.f32 %v4047, %v4522
  %v4557 = vsub.f32 %v4097, %v4525
  %v4558 = vsub.f32 %v4147, %v4528
  %v4559 = vsub.f32 %v4197, %v4531
  %v4560 = vsub.f32 %v4247, %v4534
  %v4561 = vsub.f32 %v4297, %v4537
  %v4562 = vsub.f32 %v4347, %v4540
  %v4563 = vsub.f32 %v4397, %v4543
  %v4564 = vsub.f32 %v4447, %v4546
  %v4565 = vsub.f32 %v4497, %v4549
  %v4566 = vmul.f32 %v4550, 1.442695
  %v4567 = vpow.pop %v4566
  %v4568 = vmul.f32 %v4551, 1.442695
  %v4569 = vpow.pop %v4568
  %v4570 = vmul.f32 %v4552, 1.442695
  %v4571 = vpow.pop %v4570
  %v4572 = vmul.f32 %v4553, 1.442695
  %v4573 = vpow.pop %v4572
  %v4574 = vmul.f32 %v4554, 1.442695
  %v4575 = vpow.pop %v4574
  %v4576 = vmul.f32 %v4555, 1.442695
  %v4577 = vpow.pop %v4576
  %v4578 = vmul.f32 %v4556, 1.442695
  %v4579 = vpow.pop %v4578
  %v4580 = vmul.f32 %v4557, 1.442695
  %v4581 = vpow.pop %v4580
  %v4582 = vmul.f32 %v4558, 1.442695
  %v4583 = vpow.pop %v4582
  %v4584 = vmul.f32 %v4559, 1.442695
  %v4585 = vpow.pop %v4584
  %v4586 = vmul.f32 %v4560, 1.442695
  %v4587 = vpow.pop %v4586
  %v4588 = vmul.f32 %v4561, 1.442695
  %v4589 = vpow.pop %v4588
  %v4590 = vmul.f32 %v4562, 1.442695
  %v4591 = vpow.pop %v4590
  %v4592 = vmul.f32 %v4563, 1.442695
  %v4593 = vpow.pop %v4592
  %v4594 = vmul.f32 %v4564, 1.442695
  %v4595 = vpow.pop %v4594
  %v4596 = vmul.f32 %v4565, 1.442695
  %v4597 = vpow.pop %v4596
  %v4598 = vsel %vm199, %v4567, 0.0
  %4599 = vadd.xlane.f32.xlu0 %v4598
  %v4600 = vpop.xlane.xlu0 %4599
  %v4601 = vsel %vm199, %v4569, 0.0
  %4602 = vadd.xlane.f32.xlu0 %v4601
  %v4603 = vpop.xlane.xlu0 %4602
  %v4604 = vsel %vm199, %v4571, 0.0
  %4605 = vadd.xlane.f32.xlu0 %v4604
  %v4606 = vpop.xlane.xlu0 %4605
  %v4607 = vsel %vm199, %v4573, 0.0
  %4608 = vadd.xlane.f32.xlu0 %v4607
  %v4609 = vpop.xlane.xlu0 %4608
  %v4610 = vsel %vm199, %v4575, 0.0
  %4611 = vadd.xlane.f32.xlu0 %v4610
  %v4612 = vpop.xlane.xlu0 %4611
  %v4613 = vsel %vm199, %v4577, 0.0
  %4614 = vadd.xlane.f32.xlu0 %v4613
  %v4615 = vpop.xlane.xlu0 %4614
  %v4616 = vsel %vm199, %v4579, 0.0
  %4617 = vadd.xlane.f32.xlu0 %v4616
  %v4618 = vpop.xlane.xlu0 %4617
  %v4619 = vsel %vm199, %v4581, 0.0
  %4620 = vadd.xlane.f32.xlu0 %v4619
  %v4621 = vpop.xlane.xlu0 %4620
  %v4622 = vsel %vm199, %v4583, 0.0
  %4623 = vadd.xlane.f32.xlu0 %v4622
  %v4624 = vpop.xlane.xlu0 %4623
  %v4625 = vsel %vm199, %v4585, 0.0
  %4626 = vadd.xlane.f32.xlu0 %v4625
  %v4627 = vpop.xlane.xlu0 %4626
  %v4628 = vsel %vm199, %v4587, 0.0
  %4629 = vadd.xlane.f32.xlu0 %v4628
  %v4630 = vpop.xlane.xlu0 %4629
  %v4631 = vsel %vm199, %v4589, 0.0
  %4632 = vadd.xlane.f32.xlu0 %v4631
  %v4633 = vpop.xlane.xlu0 %4632
  %v4634 = vsel %vm199, %v4591, 0.0
  %4635 = vadd.xlane.f32.xlu0 %v4634
  %v4636 = vpop.xlane.xlu0 %4635
  %v4637 = vsel %vm199, %v4593, 0.0
  %4638 = vadd.xlane.f32.xlu0 %v4637
  %v4639 = vpop.xlane.xlu0 %4638
  %v4640 = vsel %vm199, %v4595, 0.0
  %4641 = vadd.xlane.f32.xlu0 %v4640
  %v4642 = vpop.xlane.xlu0 %4641
  %v4643 = vsel %vm199, %v4597, 0.0
  %4644 = vadd.xlane.f32.xlu0 %v4643
  %v4645 = vpop.xlane.xlu0 %4644
  %v4646 = vrcp.pop %v4600
  %v4647 = vrcp.pop %v4603
  %v4648 = vrcp.pop %v4606
  %v4649 = vrcp.pop %v4609
  %v4650 = vrcp.pop %v4612
  %v4651 = vrcp.pop %v4615
  %v4652 = vrcp.pop %v4618
  %v4653 = vrcp.pop %v4621
  %v4654 = vrcp.pop %v4624
  %v4655 = vrcp.pop %v4627
  %v4656 = vrcp.pop %v4630
  %v4657 = vrcp.pop %v4633
  %v4658 = vrcp.pop %v4636
  %v4659 = vrcp.pop %v4639
  %v4660 = vrcp.pop %v4642
  %v4661 = vrcp.pop %v4645
  %v4662 = vmul.f32 %v4567, %v4646
  %v4663 = vmul.f32 %v4569, %v4647
  %v4664 = vmul.f32 %v4571, %v4648
  %v4665 = vmul.f32 %v4573, %v4649
  %v4666 = vmul.f32 %v4575, %v4650
  %v4667 = vmul.f32 %v4577, %v4651
  %v4668 = vmul.f32 %v4579, %v4652
  %v4669 = vmul.f32 %v4581, %v4653
  %v4670 = vmul.f32 %v4583, %v4654
  %v4671 = vmul.f32 %v4585, %v4655
  %v4672 = vmul.f32 %v4587, %v4656
  %v4673 = vmul.f32 %v4589, %v4657
  %v4674 = vmul.f32 %v4591, %v4658
  %v4675 = vmul.f32 %v4593, %v4659
  %v4676 = vmul.f32 %v4595, %v4660
  %v4677 = vmul.f32 %v4597, %v4661
  %v4678 = vpack.c.bf16 %v4662, %v4662
  %v4679 = vpack.c.bf16 %v4663, %v4663
  %v4680 = vpack.c.bf16 %v4664, %v4664
  %v4681 = vpack.c.bf16 %v4665, %v4665
  %v4682 = vpack.c.bf16 %v4666, %v4666
  %v4683 = vpack.c.bf16 %v4667, %v4667
  %v4684 = vpack.c.bf16 %v4668, %v4668
  %v4685 = vpack.c.bf16 %v4669, %v4669
  %v4686 = vpack.c.bf16 %v4670, %v4670
  %v4687 = vpack.c.bf16 %v4671, %v4671
  %v4688 = vpack.c.bf16 %v4672, %v4672
  %v4689 = vpack.c.bf16 %v4673, %v4673
  %v4690 = vpack.c.bf16 %v4674, %v4674
  %v4691 = vpack.c.bf16 %v4675, %v4675
  %v4692 = vpack.c.bf16 %v4676, %v4676
  %v4693 = vpack.c.bf16 %v4677, %v4677
  %4694 = vrot.lane.b32.xlu0 %v180, 48
  %v4695 = vpop.permute.xlu0 %4694
  %v4697 = vsel %vm199, %v4678, 0
  %v4700 = vsel %vm1178, %v4695, 0
  %4702 = vmatprep.subr.bf16.mxu0 0
  %4703 = vmatpush1.bf16.msra.mxu0 %v4700
  %4704 = vmatprep.subr.bf16.mxu0 0
  %4705 = vmatpush1.bf16.msra.mxu0 0
  %4706 = vmatprep.subr.bf16.mxu0 0
  %4707 = vmatpush1.bf16.msra.mxu0 0
  %4708 = vmatprep.subr.bf16.mxu0 0
  %4709 = vmatpush1.bf16.msra.mxu0 0
  %4710 = vmatprep.subr.bf16.mxu0 0
  %4711 = vmatpush1.bf16.msra.mxu0 0
  %4712 = vmatprep.subr.bf16.mxu0 0
  %4713 = vmatpush1.bf16.msra.mxu0 0
  %4714 = vmatprep.subr.bf16.mxu0 0
  %4715 = vmatpush1.bf16.msra.mxu0 0
  %4716 = vmatprep.subr.bf16.mxu0 0
  %4717 = vmatpush1.bf16.msra.mxu0 0
  %4718 = vmatprep.subr.bf16.mxu0 0
  %4719 = vmatpush1.bf16.msra.mxu0 0
  %4720 = vmatprep.subr.bf16.mxu0 0
  %4721 = vmatpush1.bf16.msra.mxu0 0
  %4722 = vmatprep.subr.bf16.mxu0 0
  %4723 = vmatpush1.bf16.msra.mxu0 0
  %4724 = vmatprep.subr.bf16.mxu0 0
  %4725 = vmatpush1.bf16.msra.mxu0 0
  %4726 = vmatprep.subr.bf16.mxu0 0
  %4727 = vmatpush1.bf16.msra.mxu0 0
  %4728 = vmatprep.subr.bf16.mxu0 0
  %4729 = vmatpush1.bf16.msra.mxu0 0
  %4730 = vmatprep.subr.bf16.mxu0 0
  %4731 = vmatpush1.bf16.msra.mxu0 0
  %4732 = vmatprep.subr.bf16.mxu0 0
  %4733 = vmatpush1.bf16.msra.mxu0 0
  %4734 = vmatprep.mubr.bf16.mxu0 0
  %4735 = vmatmul.mubr.bf16.gmra.mrb[0].mxu0 %v4697
  %v4736 = vpop.f32.mrb[0].mxu0
  %v4737 = vadd.f32 0.0, %v4736
  %v4738 = vpop.f32.mrb[0].mxu0
  %v4739 = vpop.f32.mrb[0].mxu0
  %v4740 = vpop.f32.mrb[0].mxu0
  %4741 = vdwg.mxu0
  %4742 = vrot.lane.b32.xlu0 %v181, 48
  %v4743 = vpop.permute.xlu0 %4742
  %v4745 = vsel %vm199, %v4679, 0
  %v4748 = vsel %vm1178, %v4743, 0
  %4750 = vmatprep.subr.bf16.mxu0 0
  %4751 = vmatpush1.bf16.msra.mxu0 %v4748
  %4752 = vmatprep.subr.bf16.mxu0 0
  %4753 = vmatpush1.bf16.msra.mxu0 0
  %4754 = vmatprep.subr.bf16.mxu0 0
  %4755 = vmatpush1.bf16.msra.mxu0 0
  %4756 = vmatprep.subr.bf16.mxu0 0
  %4757 = vmatpush1.bf16.msra.mxu0 0
  %4758 = vmatprep.subr.bf16.mxu0 0
  %4759 = vmatpush1.bf16.msra.mxu0 0
  %4760 = vmatprep.subr.bf16.mxu0 0
  %4761 = vmatpush1.bf16.msra.mxu0 0
  %4762 = vmatprep.subr.bf16.mxu0 0
  %4763 = vmatpush1.bf16.msra.mxu0 0
  %4764 = vmatprep.subr.bf16.mxu0 0
  %4765 = vmatpush1.bf16.msra.mxu0 0
  %4766 = vmatprep.subr.bf16.mxu0 0
  %4767 = vmatpush1.bf16.msra.mxu0 0
  %4768 = vmatprep.subr.bf16.mxu0 0
  %4769 = vmatpush1.bf16.msra.mxu0 0
  %4770 = vmatprep.subr.bf16.mxu0 0
  %4771 = vmatpush1.bf16.msra.mxu0 0
  %4772 = vmatprep.subr.bf16.mxu0 0
  %4773 = vmatpush1.bf16.msra.mxu0 0
  %4774 = vmatprep.subr.bf16.mxu0 0
  %4775 = vmatpush1.bf16.msra.mxu0 0
  %4776 = vmatprep.subr.bf16.mxu0 0
  %4777 = vmatpush1.bf16.msra.mxu0 0
  %4778 = vmatprep.subr.bf16.mxu0 0
  %4779 = vmatpush1.bf16.msra.mxu0 0
  %4780 = vmatprep.subr.bf16.mxu0 0
  %4781 = vmatpush1.bf16.msra.mxu0 0
  %4782 = vmatprep.mubr.bf16.mxu0 0
  %4783 = vmatmul.mubr.bf16.gmra.mrb[0].mxu0 %v4745
  %v4784 = vpop.f32.mrb[0].mxu0
  %v4785 = vadd.f32 0.0, %v4784
  %v4786 = vpop.f32.mrb[0].mxu0
  %v4787 = vpop.f32.mrb[0].mxu0
  %v4788 = vpop.f32.mrb[0].mxu0
  %4789 = vdwg.mxu0
  %4790 = vrot.lane.b32.xlu0 %v182, 48
  %v4791 = vpop.permute.xlu0 %4790
  %v4793 = vsel %vm199, %v4680, 0
  %v4796 = vsel %vm1178, %v4791, 0
  %4798 = vmatprep.subr.bf16.mxu0 0
  %4799 = vmatpush1.bf16.msra.mxu0 %v4796
  %4800 = vmatprep.subr.bf16.mxu0 0
  %4801 = vmatpush1.bf16.msra.mxu0 0
  %4802 = vmatprep.subr.bf16.mxu0 0
  %4803 = vmatpush1.bf16.msra.mxu0 0
  %4804 = vmatprep.subr.bf16.mxu0 0
  %4805 = vmatpush1.bf16.msra.mxu0 0
  %4806 = vmatprep.subr.bf16.mxu0 0
  %4807 = vmatpush1.bf16.msra.mxu0 0
  %4808 = vmatprep.subr.bf16.mxu0 0
  %4809 = vmatpush1.bf16.msra.mxu0 0
  %4810 = vmatprep.subr.bf16.mxu0 0
  %4811 = vmatpush1.bf16.msra.mxu0 0
  %4812 = vmatprep.subr.bf16.mxu0 0
  %4813 = vmatpush1.bf16.msra.mxu0 0
  %4814 = vmatprep.subr.bf16.mxu0 0
  %4815 = vmatpush1.bf16.msra.mxu0 0
  %4816 = vmatprep.subr.bf16.mxu0 0
  %4817 = vmatpush1.bf16.msra.mxu0 0
  %4818 = vmatprep.subr.bf16.mxu0 0
  %4819 = vmatpush1.bf16.msra.mxu0 0
  %4820 = vmatprep.subr.bf16.mxu0 0
  %4821 = vmatpush1.bf16.msra.mxu0 0
  %4822 = vmatprep.subr.bf16.mxu0 0
  %4823 = vmatpush1.bf16.msra.mxu0 0
  %4824 = vmatprep.subr.bf16.mxu0 0
  %4825 = vmatpush1.bf16.msra.mxu0 0
  %4826 = vmatprep.subr.bf16.mxu0 0
  %4827 = vmatpush1.bf16.msra.mxu0 0
  %4828 = vmatprep.subr.bf16.mxu0 0
  %4829 = vmatpush1.bf16.msra.mxu0 0
  %4830 = vmatprep.mubr.bf16.mxu0 0
  %4831 = vmatmul.mubr.bf16.gmra.mrb[0].mxu0 %v4793
  %v4832 = vpop.f32.mrb[0].mxu0
  %v4833 = vadd.f32 0.0, %v4832
  %v4834 = vpop.f32.mrb[0].mxu0
  %v4835 = vpop.f32.mrb[0].mxu0
  %v4836 = vpop.f32.mrb[0].mxu0
  %4837 = vdwg.mxu0
  %4838 = vrot.lane.b32.xlu0 %v183, 48
  %v4839 = vpop.permute.xlu0 %4838
  %v4841 = vsel %vm199, %v4681, 0
  %v4844 = vsel %vm1178, %v4839, 0
  %4846 = vmatprep.subr.bf16.mxu0 0
  %4847 = vmatpush1.bf16.msra.mxu0 %v4844
  %4848 = vmatprep.subr.bf16.mxu0 0
  %4849 = vmatpush1.bf16.msra.mxu0 0
  %4850 = vmatprep.subr.bf16.mxu0 0
  %4851 = vmatpush1.bf16.msra.mxu0 0
  %4852 = vmatprep.subr.bf16.mxu0 0
  %4853 = vmatpush1.bf16.msra.mxu0 0
  %4854 = vmatprep.subr.bf16.mxu0 0
  %4855 = vmatpush1.bf16.msra.mxu0 0
  %4856 = vmatprep.subr.bf16.mxu0 0
  %4857 = vmatpush1.bf16.msra.mxu0 0
  %4858 = vmatprep.subr.bf16.mxu0 0
  %4859 = vmatpush1.bf16.msra.mxu0 0
  %4860 = vmatprep.subr.bf16.mxu0 0
  %4861 = vmatpush1.bf16.msra.mxu0 0
  %4862 = vmatprep.subr.bf16.mxu0 0
  %4863 = vmatpush1.bf16.msra.mxu0 0
  %4864 = vmatprep.subr.bf16.mxu0 0
  %4865 = vmatpush1.bf16.msra.mxu0 0
  %4866 = vmatprep.subr.bf16.mxu0 0
  %4867 = vmatpush1.bf16.msra.mxu0 0
  %4868 = vmatprep.subr.bf16.mxu0 0
  %4869 = vmatpush1.bf16.msra.mxu0 0
  %4870 = vmatprep.subr.bf16.mxu0 0
  %4871 = vmatpush1.bf16.msra.mxu0 0
  %4872 = vmatprep.subr.bf16.mxu0 0
  %4873 = vmatpush1.bf16.msra.mxu0 0
  %4874 = vmatprep.subr.bf16.mxu0 0
  %4875 = vmatpush1.bf16.msra.mxu0 0
  %4876 = vmatprep.subr.bf16.mxu0 0
  %4877 = vmatpush1.bf16.msra.mxu0 0
  %4878 = vmatprep.mubr.bf16.mxu0 0
  %4879 = vmatmul.mubr.bf16.gmra.mrb[0].mxu0 %v4841
  %v4880 = vpop.f32.mrb[0].mxu0
  %v4881 = vadd.f32 0.0, %v4880
  %v4882 = vpop.f32.mrb[0].mxu0
  %v4883 = vpop.f32.mrb[0].mxu0
  %v4884 = vpop.f32.mrb[0].mxu0
  %4885 = vdwg.mxu0
  %4886 = vrot.lane.b32.xlu0 %v184, 48
  %v4887 = vpop.permute.xlu0 %4886
  %v4889 = vsel %vm199, %v4682, 0
  %v4892 = vsel %vm1178, %v4887, 0
  %4894 = vmatprep.subr.bf16.mxu0 0
  %4895 = vmatpush1.bf16.msra.mxu0 %v4892
  %4896 = vmatprep.subr.bf16.mxu0 0
  %4897 = vmatpush1.bf16.msra.mxu0 0
  %4898 = vmatprep.subr.bf16.mxu0 0
  %4899 = vmatpush1.bf16.msra.mxu0 0
  %4900 = vmatprep.subr.bf16.mxu0 0
  %4901 = vmatpush1.bf16.msra.mxu0 0
  %4902 = vmatprep.subr.bf16.mxu0 0
  %4903 = vmatpush1.bf16.msra.mxu0 0
  %4904 = vmatprep.subr.bf16.mxu0 0
  %4905 = vmatpush1.bf16.msra.mxu0 0
  %4906 = vmatprep.subr.bf16.mxu0 0
  %4907 = vmatpush1.bf16.msra.mxu0 0
  %4908 = vmatprep.subr.bf16.mxu0 0
  %4909 = vmatpush1.bf16.msra.mxu0 0
  %4910 = vmatprep.subr.bf16.mxu0 0
  %4911 = vmatpush1.bf16.msra.mxu0 0
  %4912 = vmatprep.subr.bf16.mxu0 0
  %4913 = vmatpush1.bf16.msra.mxu0 0
  %4914 = vmatprep.subr.bf16.mxu0 0
  %4915 = vmatpush1.bf16.msra.mxu0 0
  %4916 = vmatprep.subr.bf16.mxu0 0
  %4917 = vmatpush1.bf16.msra.mxu0 0
  %4918 = vmatprep.subr.bf16.mxu0 0
  %4919 = vmatpush1.bf16.msra.mxu0 0
  %4920 = vmatprep.subr.bf16.mxu0 0
  %4921 = vmatpush1.bf16.msra.mxu0 0
  %4922 = vmatprep.subr.bf16.mxu0 0
  %4923 = vmatpush1.bf16.msra.mxu0 0
  %4924 = vmatprep.subr.bf16.mxu0 0
  %4925 = vmatpush1.bf16.msra.mxu0 0
  %4926 = vmatprep.mubr.bf16.mxu0 0
  %4927 = vmatmul.mubr.bf16.gmra.mrb[0].mxu0 %v4889
  %v4928 = vpop.f32.mrb[0].mxu0
  %v4929 = vadd.f32 0.0, %v4928
  %v4930 = vpop.f32.mrb[0].mxu0
  %v4931 = vpop.f32.mrb[0].mxu0
  %v4932 = vpop.f32.mrb[0].mxu0
  %4933 = vdwg.mxu0
  %4934 = vrot.lane.b32.xlu0 %v185, 48
  %v4935 = vpop.permute.xlu0 %4934
  %v4937 = vsel %vm199, %v4683, 0
  %v4940 = vsel %vm1178, %v4935, 0
  %4942 = vmatprep.subr.bf16.mxu0 0
  %4943 = vmatpush1.bf16.msra.mxu0 %v4940
  %4944 = vmatprep.subr.bf16.mxu0 0
  %4945 = vmatpush1.bf16.msra.mxu0 0
  %4946 = vmatprep.subr.bf16.mxu0 0
  %4947 = vmatpush1.bf16.msra.mxu0 0
  %4948 = vmatprep.subr.bf16.mxu0 0
  %4949 = vmatpush1.bf16.msra.mxu0 0
  %4950 = vmatprep.subr.bf16.mxu0 0
  %4951 = vmatpush1.bf16.msra.mxu0 0
  %4952 = vmatprep.subr.bf16.mxu0 0
  %4953 = vmatpush1.bf16.msra.mxu0 0
  %4954 = vmatprep.subr.bf16.mxu0 0
  %4955 = vmatpush1.bf16.msra.mxu0 0
  %4956 = vmatprep.subr.bf16.mxu0 0
  %4957 = vmatpush1.bf16.msra.mxu0 0
  %4958 = vmatprep.subr.bf16.mxu0 0
  %4959 = vmatpush1.bf16.msra.mxu0 0
  %4960 = vmatprep.subr.bf16.mxu0 0
  %4961 = vmatpush1.bf16.msra.mxu0 0
  %4962 = vmatprep.subr.bf16.mxu0 0
  %4963 = vmatpush1.bf16.msra.mxu0 0
  %4964 = vmatprep.subr.bf16.mxu0 0
  %4965 = vmatpush1.bf16.msra.mxu0 0
  %4966 = vmatprep.subr.bf16.mxu0 0
  %4967 = vmatpush1.bf16.msra.mxu0 0
  %4968 = vmatprep.subr.bf16.mxu0 0
  %4969 = vmatpush1.bf16.msra.mxu0 0
  %4970 = vmatprep.subr.bf16.mxu0 0
  %4971 = vmatpush1.bf16.msra.mxu0 0
  %4972 = vmatprep.subr.bf16.mxu0 0
  %4973 = vmatpush1.bf16.msra.mxu0 0
  %4974 = vmatprep.mubr.bf16.mxu0 0
  %4975 = vmatmul.mubr.bf16.gmra.mrb[0].mxu0 %v4937
  %v4976 = vpop.f32.mrb[0].mxu0
  %v4977 = vadd.f32 0.0, %v4976
  %v4978 = vpop.f32.mrb[0].mxu0
  %v4979 = vpop.f32.mrb[0].mxu0
  %v4980 = vpop.f32.mrb[0].mxu0
  %4981 = vdwg.mxu0
  %4982 = vrot.lane.b32.xlu0 %v186, 48
  %v4983 = vpop.permute.xlu0 %4982
  %v4985 = vsel %vm199, %v4684, 0
  %v4988 = vsel %vm1178, %v4983, 0
  %4990 = vmatprep.subr.bf16.mxu0 0
  %4991 = vmatpush1.bf16.msra.mxu0 %v4988
  %4992 = vmatprep.subr.bf16.mxu0 0
  %4993 = vmatpush1.bf16.msra.mxu0 0
  %4994 = vmatprep.subr.bf16.mxu0 0
  %4995 = vmatpush1.bf16.msra.mxu0 0
  %4996 = vmatprep.subr.bf16.mxu0 0
  %4997 = vmatpush1.bf16.msra.mxu0 0
  %4998 = vmatprep.subr.bf16.mxu0 0
  %4999 = vmatpush1.bf16.msra.mxu0 0
  %5000 = vmatprep.subr.bf16.mxu0 0
  %5001 = vmatpush1.bf16.msra.mxu0 0
  %5002 = vmatprep.subr.bf16.mxu0 0
  %5003 = vmatpush1.bf16.msra.mxu0 0
  %5004 = vmatprep.subr.bf16.mxu0 0
  %5005 = vmatpush1.bf16.msra.mxu0 0
  %5006 = vmatprep.subr.bf16.mxu0 0
  %5007 = vmatpush1.bf16.msra.mxu0 0
  %5008 = vmatprep.subr.bf16.mxu0 0
  %5009 = vmatpush1.bf16.msra.mxu0 0
  %5010 = vmatprep.subr.bf16.mxu0 0
  %5011 = vmatpush1.bf16.msra.mxu0 0
  %5012 = vmatprep.subr.bf16.mxu0 0
  %5013 = vmatpush1.bf16.msra.mxu0 0
  %5014 = vmatprep.subr.bf16.mxu0 0
  %5015 = vmatpush1.bf16.msra.mxu0 0
  %5016 = vmatprep.subr.bf16.mxu0 0
  %5017 = vmatpush1.bf16.msra.mxu0 0
  %5018 = vmatprep.subr.bf16.mxu0 0
  %5019 = vmatpush1.bf16.msra.mxu0 0
  %5020 = vmatprep.subr.bf16.mxu0 0
  %5021 = vmatpush1.bf16.msra.mxu0 0
  %5022 = vmatprep.mubr.bf16.mxu0 0
  %5023 = vmatmul.mubr.bf16.gmra.mrb[0].mxu0 %v4985
  %v5024 = vpop.f32.mrb[0].mxu0
  %v5025 = vadd.f32 0.0, %v5024
  %v5026 = vpop.f32.mrb[0].mxu0
  %v5027 = vpop.f32.mrb[0].mxu0
  %v5028 = vpop.f32.mrb[0].mxu0
  %5029 = vdwg.mxu0
  %5030 = vrot.lane.b32.xlu0 %v187, 48
  %v5031 = vpop.permute.xlu0 %5030
  %v5033 = vsel %vm199, %v4685, 0
  %v5036 = vsel %vm1178, %v5031, 0
  %5038 = vmatprep.subr.bf16.mxu0 0
  %5039 = vmatpush1.bf16.msra.mxu0 %v5036
  %5040 = vmatprep.subr.bf16.mxu0 0
  %5041 = vmatpush1.bf16.msra.mxu0 0
  %5042 = vmatprep.subr.bf16.mxu0 0
  %5043 = vmatpush1.bf16.msra.mxu0 0
  %5044 = vmatprep.subr.bf16.mxu0 0
  %5045 = vmatpush1.bf16.msra.mxu0 0
  %5046 = vmatprep.subr.bf16.mxu0 0
  %5047 = vmatpush1.bf16.msra.mxu0 0
  %5048 = vmatprep.subr.bf16.mxu0 0
  %5049 = vmatpush1.bf16.msra.mxu0 0
  %5050 = vmatprep.subr.bf16.mxu0 0
  %5051 = vmatpush1.bf16.msra.mxu0 0
  %5052 = vmatprep.subr.bf16.mxu0 0
  %5053 = vmatpush1.bf16.msra.mxu0 0
  %5054 = vmatprep.subr.bf16.mxu0 0
  %5055 = vmatpush1.bf16.msra.mxu0 0
  %5056 = vmatprep.subr.bf16.mxu0 0
  %5057 = vmatpush1.bf16.msra.mxu0 0
  %5058 = vmatprep.subr.bf16.mxu0 0
  %5059 = vmatpush1.bf16.msra.mxu0 0
  %5060 = vmatprep.subr.bf16.mxu0 0
  %5061 = vmatpush1.bf16.msra.mxu0 0
  %5062 = vmatprep.subr.bf16.mxu0 0
  %5063 = vmatpush1.bf16.msra.mxu0 0
  %5064 = vmatprep.subr.bf16.mxu0 0
  %5065 = vmatpush1.bf16.msra.mxu0 0
  %5066 = vmatprep.subr.bf16.mxu0 0
  %5067 = vmatpush1.bf16.msra.mxu0 0
  %5068 = vmatprep.subr.bf16.mxu0 0
  %5069 = vmatpush1.bf16.msra.mxu0 0
  %5070 = vmatprep.mubr.bf16.mxu0 0
  %5071 = vmatmul.mubr.bf16.gmra.mrb[0].mxu0 %v5033
  %v5072 = vpop.f32.mrb[0].mxu0
  %v5073 = vadd.f32 0.0, %v5072
  %v5074 = vpop.f32.mrb[0].mxu0
  %v5075 = vpop.f32.mrb[0].mxu0
  %v5076 = vpop.f32.mrb[0].mxu0
  %5077 = vdwg.mxu0
  %5078 = vrot.lane.b32.xlu0 %v188, 48
  %v5079 = vpop.permute.xlu0 %5078
  %v5081 = vsel %vm199, %v4686, 0
  %v5084 = vsel %vm1178, %v5079, 0
  %5086 = vmatprep.subr.bf16.mxu0 0
  %5087 = vmatpush1.bf16.msra.mxu0 %v5084
  %5088 = vmatprep.subr.bf16.mxu0 0
  %5089 = vmatpush1.bf16.msra.mxu0 0
  %5090 = vmatprep.subr.bf16.mxu0 0
  %5091 = vmatpush1.bf16.msra.mxu0 0
  %5092 = vmatprep.subr.bf16.mxu0 0
  %5093 = vmatpush1.bf16.msra.mxu0 0
  %5094 = vmatprep.subr.bf16.mxu0 0
  %5095 = vmatpush1.bf16.msra.mxu0 0
  %5096 = vmatprep.subr.bf16.mxu0 0
  %5097 = vmatpush1.bf16.msra.mxu0 0
  %5098 = vmatprep.subr.bf16.mxu0 0
  %5099 = vmatpush1.bf16.msra.mxu0 0
  %5100 = vmatprep.subr.bf16.mxu0 0
  %5101 = vmatpush1.bf16.msra.mxu0 0
  %5102 = vmatprep.subr.bf16.mxu0 0
  %5103 = vmatpush1.bf16.msra.mxu0 0
  %5104 = vmatprep.subr.bf16.mxu0 0
  %5105 = vmatpush1.bf16.msra.mxu0 0
  %5106 = vmatprep.subr.bf16.mxu0 0
  %5107 = vmatpush1.bf16.msra.mxu0 0
  %5108 = vmatprep.subr.bf16.mxu0 0
  %5109 = vmatpush1.bf16.msra.mxu0 0
  %5110 = vmatprep.subr.bf16.mxu0 0
  %5111 = vmatpush1.bf16.msra.mxu0 0
  %5112 = vmatprep.subr.bf16.mxu0 0
  %5113 = vmatpush1.bf16.msra.mxu0 0
  %5114 = vmatprep.subr.bf16.mxu0 0
  %5115 = vmatpush1.bf16.msra.mxu0 0
  %5116 = vmatprep.subr.bf16.mxu0 0
  %5117 = vmatpush1.bf16.msra.mxu0 0
  %5118 = vmatprep.mubr.bf16.mxu0 0
  %5119 = vmatmul.mubr.bf16.gmra.mrb[0].mxu0 %v5081
  %v5120 = vpop.f32.mrb[0].mxu0
  %v5121 = vadd.f32 0.0, %v5120
  %v5122 = vpop.f32.mrb[0].mxu0
  %v5123 = vpop.f32.mrb[0].mxu0
  %v5124 = vpop.f32.mrb[0].mxu0
  %5125 = vdwg.mxu0
  %5126 = vrot.lane.b32.xlu0 %v189, 48
  %v5127 = vpop.permute.xlu0 %5126
  %v5129 = vsel %vm199, %v4687, 0
  %v5132 = vsel %vm1178, %v5127, 0
  %5134 = vmatprep.subr.bf16.mxu0 0
  %5135 = vmatpush1.bf16.msra.mxu0 %v5132
  %5136 = vmatprep.subr.bf16.mxu0 0
  %5137 = vmatpush1.bf16.msra.mxu0 0
  %5138 = vmatprep.subr.bf16.mxu0 0
  %5139 = vmatpush1.bf16.msra.mxu0 0
  %5140 = vmatprep.subr.bf16.mxu0 0
  %5141 = vmatpush1.bf16.msra.mxu0 0
  %5142 = vmatprep.subr.bf16.mxu0 0
  %5143 = vmatpush1.bf16.msra.mxu0 0
  %5144 = vmatprep.subr.bf16.mxu0 0
  %5145 = vmatpush1.bf16.msra.mxu0 0
  %5146 = vmatprep.subr.bf16.mxu0 0
  %5147 = vmatpush1.bf16.msra.mxu0 0
  %5148 = vmatprep.subr.bf16.mxu0 0
  %5149 = vmatpush1.bf16.msra.mxu0 0
  %5150 = vmatprep.subr.bf16.mxu0 0
  %5151 = vmatpush1.bf16.msra.mxu0 0
  %5152 = vmatprep.subr.bf16.mxu0 0
  %5153 = vmatpush1.bf16.msra.mxu0 0
  %5154 = vmatprep.subr.bf16.mxu0 0
  %5155 = vmatpush1.bf16.msra.mxu0 0
  %5156 = vmatprep.subr.bf16.mxu0 0
  %5157 = vmatpush1.bf16.msra.mxu0 0
  %5158 = vmatprep.subr.bf16.mxu0 0
  %5159 = vmatpush1.bf16.msra.mxu0 0
  %5160 = vmatprep.subr.bf16.mxu0 0
  %5161 = vmatpush1.bf16.msra.mxu0 0
  %5162 = vmatprep.subr.bf16.mxu0 0
  %5163 = vmatpush1.bf16.msra.mxu0 0
  %5164 = vmatprep.subr.bf16.mxu0 0
  %5165 = vmatpush1.bf16.msra.mxu0 0
  %5166 = vmatprep.mubr.bf16.mxu0 0
  %5167 = vmatmul.mubr.bf16.gmra.mrb[0].mxu0 %v5129
  %v5168 = vpop.f32.mrb[0].mxu0
  %v5169 = vadd.f32 0.0, %v5168
  %v5170 = vpop.f32.mrb[0].mxu0
  %v5171 = vpop.f32.mrb[0].mxu0
  %v5172 = vpop.f32.mrb[0].mxu0
  %5173 = vdwg.mxu0
  %5174 = vrot.lane.b32.xlu0 %v190, 48
  %v5175 = vpop.permute.xlu0 %5174
  %v5177 = vsel %vm199, %v4688, 0
  %v5180 = vsel %vm1178, %v5175, 0
  %5182 = vmatprep.subr.bf16.mxu0 0
  %5183 = vmatpush1.bf16.msra.mxu0 %v5180
  %5184 = vmatprep.subr.bf16.mxu0 0
  %5185 = vmatpush1.bf16.msra.mxu0 0
  %5186 = vmatprep.subr.bf16.mxu0 0
  %5187 = vmatpush1.bf16.msra.mxu0 0
  %5188 = vmatprep.subr.bf16.mxu0 0
  %5189 = vmatpush1.bf16.msra.mxu0 0
  %5190 = vmatprep.subr.bf16.mxu0 0
  %5191 = vmatpush1.bf16.msra.mxu0 0
  %5192 = vmatprep.subr.bf16.mxu0 0
  %5193 = vmatpush1.bf16.msra.mxu0 0
  %5194 = vmatprep.subr.bf16.mxu0 0
  %5195 = vmatpush1.bf16.msra.mxu0 0
  %5196 = vmatprep.subr.bf16.mxu0 0
  %5197 = vmatpush1.bf16.msra.mxu0 0
  %5198 = vmatprep.subr.bf16.mxu0 0
  %5199 = vmatpush1.bf16.msra.mxu0 0
  %5200 = vmatprep.subr.bf16.mxu0 0
  %5201 = vmatpush1.bf16.msra.mxu0 0
  %5202 = vmatprep.subr.bf16.mxu0 0
  %5203 = vmatpush1.bf16.msra.mxu0 0
  %5204 = vmatprep.subr.bf16.mxu0 0
  %5205 = vmatpush1.bf16.msra.mxu0 0
  %5206 = vmatprep.subr.bf16.mxu0 0
  %5207 = vmatpush1.bf16.msra.mxu0 0
  %5208 = vmatprep.subr.bf16.mxu0 0
  %5209 = vmatpush1.bf16.msra.mxu0 0
  %5210 = vmatprep.subr.bf16.mxu0 0
  %5211 = vmatpush1.bf16.msra.mxu0 0
  %5212 = vmatprep.subr.bf16.mxu0 0
  %5213 = vmatpush1.bf16.msra.mxu0 0
  %5214 = vmatprep.mubr.bf16.mxu0 0
  %5215 = vmatmul.mubr.bf16.gmra.mrb[0].mxu0 %v5177
  %v5216 = vpop.f32.mrb[0].mxu0
  %v5217 = vadd.f32 0.0, %v5216
  %v5218 = vpop.f32.mrb[0].mxu0
  %v5219 = vpop.f32.mrb[0].mxu0
  %v5220 = vpop.f32.mrb[0].mxu0
  %5221 = vdwg.mxu0
  %5222 = vrot.lane.b32.xlu0 %v191, 48
  %v5223 = vpop.permute.xlu0 %5222
  %v5225 = vsel %vm199, %v4689, 0
  %v5228 = vsel %vm1178, %v5223, 0
  %5230 = vmatprep.subr.bf16.mxu0 0
  %5231 = vmatpush1.bf16.msra.mxu0 %v5228
  %5232 = vmatprep.subr.bf16.mxu0 0
  %5233 = vmatpush1.bf16.msra.mxu0 0
  %5234 = vmatprep.subr.bf16.mxu0 0
  %5235 = vmatpush1.bf16.msra.mxu0 0
  %5236 = vmatprep.subr.bf16.mxu0 0
  %5237 = vmatpush1.bf16.msra.mxu0 0
  %5238 = vmatprep.subr.bf16.mxu0 0
  %5239 = vmatpush1.bf16.msra.mxu0 0
  %5240 = vmatprep.subr.bf16.mxu0 0
  %5241 = vmatpush1.bf16.msra.mxu0 0
  %5242 = vmatprep.subr.bf16.mxu0 0
  %5243 = vmatpush1.bf16.msra.mxu0 0
  %5244 = vmatprep.subr.bf16.mxu0 0
  %5245 = vmatpush1.bf16.msra.mxu0 0
  %5246 = vmatprep.subr.bf16.mxu0 0
  %5247 = vmatpush1.bf16.msra.mxu0 0
  %5248 = vmatprep.subr.bf16.mxu0 0
  %5249 = vmatpush1.bf16.msra.mxu0 0
  %5250 = vmatprep.subr.bf16.mxu0 0
  %5251 = vmatpush1.bf16.msra.mxu0 0
  %5252 = vmatprep.subr.bf16.mxu0 0
  %5253 = vmatpush1.bf16.msra.mxu0 0
  %5254 = vmatprep.subr.bf16.mxu0 0
  %5255 = vmatpush1.bf16.msra.mxu0 0
  %5256 = vmatprep.subr.bf16.mxu0 0
  %5257 = vmatpush1.bf16.msra.mxu0 0
  %5258 = vmatprep.subr.bf16.mxu0 0
  %5259 = vmatpush1.bf16.msra.mxu0 0
  %5260 = vmatprep.subr.bf16.mxu0 0
  %5261 = vmatpush1.bf16.msra.mxu0 0
  %5262 = vmatprep.mubr.bf16.mxu0 0
  %5263 = vmatmul.mubr.bf16.gmra.mrb[0].mxu0 %v5225
  %v5264 = vpop.f32.mrb[0].mxu0
  %v5265 = vadd.f32 0.0, %v5264
  %v5266 = vpop.f32.mrb[0].mxu0
  %v5267 = vpop.f32.mrb[0].mxu0
  %v5268 = vpop.f32.mrb[0].mxu0
  %5269 = vdwg.mxu0
  %5270 = vrot.lane.b32.xlu0 %v192, 48
  %v5271 = vpop.permute.xlu0 %5270
  %v5273 = vsel %vm199, %v4690, 0
  %v5276 = vsel %vm1178, %v5271, 0
  %5278 = vmatprep.subr.bf16.mxu0 0
  %5279 = vmatpush1.bf16.msra.mxu0 %v5276
  %5280 = vmatprep.subr.bf16.mxu0 0
  %5281 = vmatpush1.bf16.msra.mxu0 0
  %5282 = vmatprep.subr.bf16.mxu0 0
  %5283 = vmatpush1.bf16.msra.mxu0 0
  %5284 = vmatprep.subr.bf16.mxu0 0
  %5285 = vmatpush1.bf16.msra.mxu0 0
  %5286 = vmatprep.subr.bf16.mxu0 0
  %5287 = vmatpush1.bf16.msra.mxu0 0
  %5288 = vmatprep.subr.bf16.mxu0 0
  %5289 = vmatpush1.bf16.msra.mxu0 0
  %5290 = vmatprep.subr.bf16.mxu0 0
  %5291 = vmatpush1.bf16.msra.mxu0 0
  %5292 = vmatprep.subr.bf16.mxu0 0
  %5293 = vmatpush1.bf16.msra.mxu0 0
  %5294 = vmatprep.subr.bf16.mxu0 0
  %5295 = vmatpush1.bf16.msra.mxu0 0
  %5296 = vmatprep.subr.bf16.mxu0 0
  %5297 = vmatpush1.bf16.msra.mxu0 0
  %5298 = vmatprep.subr.bf16.mxu0 0
  %5299 = vmatpush1.bf16.msra.mxu0 0
  %5300 = vmatprep.subr.bf16.mxu0 0
  %5301 = vmatpush1.bf16.msra.mxu0 0
  %5302 = vmatprep.subr.bf16.mxu0 0
  %5303 = vmatpush1.bf16.msra.mxu0 0
  %5304 = vmatprep.subr.bf16.mxu0 0
  %5305 = vmatpush1.bf16.msra.mxu0 0
  %5306 = vmatprep.subr.bf16.mxu0 0
  %5307 = vmatpush1.bf16.msra.mxu0 0
  %5308 = vmatprep.subr.bf16.mxu0 0
  %5309 = vmatpush1.bf16.msra.mxu0 0
  %5310 = vmatprep.mubr.bf16.mxu0 0
  %5311 = vmatmul.mubr.bf16.gmra.mrb[0].mxu0 %v5273
  %v5312 = vpop.f32.mrb[0].mxu0
  %v5313 = vadd.f32 0.0, %v5312
  %v5314 = vpop.f32.mrb[0].mxu0
  %v5315 = vpop.f32.mrb[0].mxu0
  %v5316 = vpop.f32.mrb[0].mxu0
  %5317 = vdwg.mxu0
  %5318 = vrot.lane.b32.xlu0 %v193, 48
  %v5319 = vpop.permute.xlu0 %5318
  %v5321 = vsel %vm199, %v4691, 0
  %v5324 = vsel %vm1178, %v5319, 0
  %5326 = vmatprep.subr.bf16.mxu0 0
  %5327 = vmatpush1.bf16.msra.mxu0 %v5324
  %5328 = vmatprep.subr.bf16.mxu0 0
  %5329 = vmatpush1.bf16.msra.mxu0 0
  %5330 = vmatprep.subr.bf16.mxu0 0
  %5331 = vmatpush1.bf16.msra.mxu0 0
  %5332 = vmatprep.subr.bf16.mxu0 0
  %5333 = vmatpush1.bf16.msra.mxu0 0
  %5334 = vmatprep.subr.bf16.mxu0 0
  %5335 = vmatpush1.bf16.msra.mxu0 0
  %5336 = vmatprep.subr.bf16.mxu0 0
  %5337 = vmatpush1.bf16.msra.mxu0 0
  %5338 = vmatprep.subr.bf16.mxu0 0
  %5339 = vmatpush1.bf16.msra.mxu0 0
  %5340 = vmatprep.subr.bf16.mxu0 0
  %5341 = vmatpush1.bf16.msra.mxu0 0
  %5342 = vmatprep.subr.bf16.mxu0 0
  %5343 = vmatpush1.bf16.msra.mxu0 0
  %5344 = vmatprep.subr.bf16.mxu0 0
  %5345 = vmatpush1.bf16.msra.mxu0 0
  %5346 = vmatprep.subr.bf16.mxu0 0
  %5347 = vmatpush1.bf16.msra.mxu0 0
  %5348 = vmatprep.subr.bf16.mxu0 0
  %5349 = vmatpush1.bf16.msra.mxu0 0
  %5350 = vmatprep.subr.bf16.mxu0 0
  %5351 = vmatpush1.bf16.msra.mxu0 0
  %5352 = vmatprep.subr.bf16.mxu0 0
  %5353 = vmatpush1.bf16.msra.mxu0 0
  %5354 = vmatprep.subr.bf16.mxu0 0
  %5355 = vmatpush1.bf16.msra.mxu0 0
  %5356 = vmatprep.subr.bf16.mxu0 0
  %5357 = vmatpush1.bf16.msra.mxu0 0
  %5358 = vmatprep.mubr.bf16.mxu0 0
  %5359 = vmatmul.mubr.bf16.gmra.mrb[0].mxu0 %v5321
  %v5360 = vpop.f32.mrb[0].mxu0
  %v5361 = vadd.f32 0.0, %v5360
  %v5362 = vpop.f32.mrb[0].mxu0
  %v5363 = vpop.f32.mrb[0].mxu0
  %v5364 = vpop.f32.mrb[0].mxu0
  %5365 = vdwg.mxu0
  %5366 = vrot.lane.b32.xlu0 %v194, 48
  %v5367 = vpop.permute.xlu0 %5366
  %v5369 = vsel %vm199, %v4692, 0
  %v5372 = vsel %vm1178, %v5367, 0
  %5374 = vmatprep.subr.bf16.mxu0 0
  %5375 = vmatpush1.bf16.msra.mxu0 %v5372
  %5376 = vmatprep.subr.bf16.mxu0 0
  %5377 = vmatpush1.bf16.msra.mxu0 0
  %5378 = vmatprep.subr.bf16.mxu0 0
  %5379 = vmatpush1.bf16.msra.mxu0 0
  %5380 = vmatprep.subr.bf16.mxu0 0
  %5381 = vmatpush1.bf16.msra.mxu0 0
  %5382 = vmatprep.subr.bf16.mxu0 0
  %5383 = vmatpush1.bf16.msra.mxu0 0
  %5384 = vmatprep.subr.bf16.mxu0 0
  %5385 = vmatpush1.bf16.msra.mxu0 0
  %5386 = vmatprep.subr.bf16.mxu0 0
  %5387 = vmatpush1.bf16.msra.mxu0 0
  %5388 = vmatprep.subr.bf16.mxu0 0
  %5389 = vmatpush1.bf16.msra.mxu0 0
  %5390 = vmatprep.subr.bf16.mxu0 0
  %5391 = vmatpush1.bf16.msra.mxu0 0
  %5392 = vmatprep.subr.bf16.mxu0 0
  %5393 = vmatpush1.bf16.msra.mxu0 0
  %5394 = vmatprep.subr.bf16.mxu0 0
  %5395 = vmatpush1.bf16.msra.mxu0 0
  %5396 = vmatprep.subr.bf16.mxu0 0
  %5397 = vmatpush1.bf16.msra.mxu0 0
  %5398 = vmatprep.subr.bf16.mxu0 0
  %5399 = vmatpush1.bf16.msra.mxu0 0
  %5400 = vmatprep.subr.bf16.mxu0 0
  %5401 = vmatpush1.bf16.msra.mxu0 0
  %5402 = vmatprep.subr.bf16.mxu0 0
  %5403 = vmatpush1.bf16.msra.mxu0 0
  %5404 = vmatprep.subr.bf16.mxu0 0
  %5405 = vmatpush1.bf16.msra.mxu0 0
  %5406 = vmatprep.mubr.bf16.mxu0 0
  %5407 = vmatmul.mubr.bf16.gmra.mrb[0].mxu0 %v5369
  %v5408 = vpop.f32.mrb[0].mxu0
  %v5409 = vadd.f32 0.0, %v5408
  %v5410 = vpop.f32.mrb[0].mxu0
  %v5411 = vpop.f32.mrb[0].mxu0
  %v5412 = vpop.f32.mrb[0].mxu0
  %5413 = vdwg.mxu0
  %5414 = vrot.lane.b32.xlu0 %v195, 48
  %v5415 = vpop.permute.xlu0 %5414
  %v5417 = vsel %vm199, %v4693, 0
  %v5420 = vsel %vm1178, %v5415, 0
  %5422 = vmatprep.subr.bf16.mxu0 0
  %5423 = vmatpush1.bf16.msra.mxu0 %v5420
  %5424 = vmatprep.subr.bf16.mxu0 0
  %5425 = vmatpush1.bf16.msra.mxu0 0
  %5426 = vmatprep.subr.bf16.mxu0 0
  %5427 = vmatpush1.bf16.msra.mxu0 0
  %5428 = vmatprep.subr.bf16.mxu0 0
  %5429 = vmatpush1.bf16.msra.mxu0 0
  %5430 = vmatprep.subr.bf16.mxu0 0
  %5431 = vmatpush1.bf16.msra.mxu0 0
  %5432 = vmatprep.subr.bf16.mxu0 0
  %5433 = vmatpush1.bf16.msra.mxu0 0
  %5434 = vmatprep.subr.bf16.mxu0 0
  %5435 = vmatpush1.bf16.msra.mxu0 0
  %5436 = vmatprep.subr.bf16.mxu0 0
  %5437 = vmatpush1.bf16.msra.mxu0 0
  %5438 = vmatprep.subr.bf16.mxu0 0
  %5439 = vmatpush1.bf16.msra.mxu0 0
  %5440 = vmatprep.subr.bf16.mxu0 0
  %5441 = vmatpush1.bf16.msra.mxu0 0
  %5442 = vmatprep.subr.bf16.mxu0 0
  %5443 = vmatpush1.bf16.msra.mxu0 0
  %5444 = vmatprep.subr.bf16.mxu0 0
  %5445 = vmatpush1.bf16.msra.mxu0 0
  %5446 = vmatprep.subr.bf16.mxu0 0
  %5447 = vmatpush1.bf16.msra.mxu0 0
  %5448 = vmatprep.subr.bf16.mxu0 0
  %5449 = vmatpush1.bf16.msra.mxu0 0
  %5450 = vmatprep.subr.bf16.mxu0 0
  %5451 = vmatpush1.bf16.msra.mxu0 0
  %5452 = vmatprep.subr.bf16.mxu0 0
  %5453 = vmatpush1.bf16.msra.mxu0 0
  %5454 = vmatprep.mubr.bf16.mxu0 0
  %5455 = vmatmul.mubr.bf16.gmra.mrb[0].mxu0 %v5417
  %v5456 = vpop.f32.mrb[0].mxu0
  %v5457 = vadd.f32 0.0, %v5456
  %v5458 = vpop.f32.mrb[0].mxu0
  %v5459 = vpop.f32.mrb[0].mxu0
  %v5460 = vpop.f32.mrb[0].mxu0
  %5461 = vdwg.mxu0
  %5462 = vrot.lane.b32.xlu0 %v180, 104
  %v5463 = vpop.permute.xlu0 %5462
  %5464 = vrot.lane.b32.xlu0 %v180, 72
  %v5465 = vpop.permute.xlu0 %5464
  %v5467 = vsel %vm199, %v5463, 0
  %v5470 = vsel %vm199, %v5465, 0
  %5472 = vmatprep.subr.bf16.mxu0 0
  %5473 = vmatpush1.bf16.xpose.msra.mxu0 %v5470
  %5474 = vmatprep.subr.bf16.mxu0 0
  %5475 = vmatpush1.bf16.xpose.msra.mxu0 0
  %5476 = vmatprep.subr.bf16.mxu0 0
  %5477 = vmatpush1.bf16.xpose.msra.mxu0 0
  %5478 = vmatprep.subr.bf16.mxu0 0
  %5479 = vmatpush1.bf16.xpose.msra.mxu0 0
  %5480 = vmatprep.subr.bf16.mxu0 0
  %5481 = vmatpush1.bf16.xpose.msra.mxu0 0
  %5482 = vmatprep.subr.bf16.mxu0 0
  %5483 = vmatpush1.bf16.xpose.msra.mxu0 0
  %5484 = vmatprep.subr.bf16.mxu0 0
  %5485 = vmatpush1.bf16.xpose.msra.mxu0 0
  %5486 = vmatprep.subr.bf16.mxu0 0
  %5487 = vmatpush1.bf16.xpose.msra.mxu0 0
  %5488 = vmatprep.subr.bf16.mxu0 0
  %5489 = vmatpush1.bf16.xpose.msra.mxu0 0
  %5490 = vmatprep.subr.bf16.mxu0 0
  %5491 = vmatpush1.bf16.xpose.msra.mxu0 0
  %5492 = vmatprep.subr.bf16.mxu0 0
  %5493 = vmatpush1.bf16.xpose.msra.mxu0 0
  %5494 = vmatprep.subr.bf16.mxu0 0
  %5495 = vmatpush1.bf16.xpose.msra.mxu0 0
  %5496 = vmatprep.subr.bf16.mxu0 0
  %5497 = vmatpush1.bf16.xpose.msra.mxu0 0
  %5498 = vmatprep.subr.bf16.mxu0 0
  %5499 = vmatpush1.bf16.xpose.msra.mxu0 0
  %5500 = vmatprep.subr.bf16.mxu0 0
  %5501 = vmatpush1.bf16.xpose.msra.mxu0 0
  %5502 = vmatprep.subr.bf16.mxu0 0
  %5503 = vmatpush1.bf16.xpose.msra.mxu0 0
  %5504 = vmatprep.mubr.bf16.mxu0 0
  %5505 = vmatmul.mubr.bf16.gmra.mrb[0].mxu0 %v5467
  %v5506 = vpop.f32.mrb[0].mxu0
  %v5507 = vadd.f32 0.0, %v5506
  %v5508 = vpop.f32.mrb[0].mxu0
  %v5509 = vpop.f32.mrb[0].mxu0
  %v5510 = vpop.f32.mrb[0].mxu0
  %5511 = vdwg.mxu0
  %5512 = vrot.lane.b32.xlu0 %v181, 104
  %v5513 = vpop.permute.xlu0 %5512
  %5514 = vrot.lane.b32.xlu0 %v181, 72
  %v5515 = vpop.permute.xlu0 %5514
  %v5517 = vsel %vm199, %v5513, 0
  %v5520 = vsel %vm199, %v5515, 0
  %5522 = vmatprep.subr.bf16.mxu0 0
  %5523 = vmatpush1.bf16.xpose.msra.mxu0 %v5520
  %5524 = vmatprep.subr.bf16.mxu0 0
  %5525 = vmatpush1.bf16.xpose.msra.mxu0 0
  %5526 = vmatprep.subr.bf16.mxu0 0
  %5527 = vmatpush1.bf16.xpose.msra.mxu0 0
  %5528 = vmatprep.subr.bf16.mxu0 0
  %5529 = vmatpush1.bf16.xpose.msra.mxu0 0
  %5530 = vmatprep.subr.bf16.mxu0 0
  %5531 = vmatpush1.bf16.xpose.msra.mxu0 0
  %5532 = vmatprep.subr.bf16.mxu0 0
  %5533 = vmatpush1.bf16.xpose.msra.mxu0 0
  %5534 = vmatprep.subr.bf16.mxu0 0
  %5535 = vmatpush1.bf16.xpose.msra.mxu0 0
  %5536 = vmatprep.subr.bf16.mxu0 0
  %5537 = vmatpush1.bf16.xpose.msra.mxu0 0
  %5538 = vmatprep.subr.bf16.mxu0 0
  %5539 = vmatpush1.bf16.xpose.msra.mxu0 0
  %5540 = vmatprep.subr.bf16.mxu0 0
  %5541 = vmatpush1.bf16.xpose.msra.mxu0 0
  %5542 = vmatprep.subr.bf16.mxu0 0
  %5543 = vmatpush1.bf16.xpose.msra.mxu0 0
  %5544 = vmatprep.subr.bf16.mxu0 0
  %5545 = vmatpush1.bf16.xpose.msra.mxu0 0
  %5546 = vmatprep.subr.bf16.mxu0 0
  %5547 = vmatpush1.bf16.xpose.msra.mxu0 0
  %5548 = vmatprep.subr.bf16.mxu0 0
  %5549 = vmatpush1.bf16.xpose.msra.mxu0 0
  %5550 = vmatprep.subr.bf16.mxu0 0
  %5551 = vmatpush1.bf16.xpose.msra.mxu0 0
  %5552 = vmatprep.subr.bf16.mxu0 0
  %5553 = vmatpush1.bf16.xpose.msra.mxu0 0
  %5554 = vmatprep.mubr.bf16.mxu0 0
  %5555 = vmatmul.mubr.bf16.gmra.mrb[0].mxu0 %v5517
  %v5556 = vpop.f32.mrb[0].mxu0
  %v5557 = vadd.f32 0.0, %v5556
  %v5558 = vpop.f32.mrb[0].mxu0
  %v5559 = vpop.f32.mrb[0].mxu0
  %v5560 = vpop.f32.mrb[0].mxu0
  %5561 = vdwg.mxu0
  %5562 = vrot.lane.b32.xlu0 %v182, 104
  %v5563 = vpop.permute.xlu0 %5562
  %5564 = vrot.lane.b32.xlu0 %v182, 72
  %v5565 = vpop.permute.xlu0 %5564
  %v5567 = vsel %vm199, %v5563, 0
  %v5570 = vsel %vm199, %v5565, 0
  %5572 = vmatprep.subr.bf16.mxu0 0
  %5573 = vmatpush1.bf16.xpose.msra.mxu0 %v5570
  %5574 = vmatprep.subr.bf16.mxu0 0
  %5575 = vmatpush1.bf16.xpose.msra.mxu0 0
  %5576 = vmatprep.subr.bf16.mxu0 0
  %5577 = vmatpush1.bf16.xpose.msra.mxu0 0
  %5578 = vmatprep.subr.bf16.mxu0 0
  %5579 = vmatpush1.bf16.xpose.msra.mxu0 0
  %5580 = vmatprep.subr.bf16.mxu0 0
  %5581 = vmatpush1.bf16.xpose.msra.mxu0 0
  %5582 = vmatprep.subr.bf16.mxu0 0
  %5583 = vmatpush1.bf16.xpose.msra.mxu0 0
  %5584 = vmatprep.subr.bf16.mxu0 0
  %5585 = vmatpush1.bf16.xpose.msra.mxu0 0
  %5586 = vmatprep.subr.bf16.mxu0 0
  %5587 = vmatpush1.bf16.xpose.msra.mxu0 0
  %5588 = vmatprep.subr.bf16.mxu0 0
  %5589 = vmatpush1.bf16.xpose.msra.mxu0 0
  %5590 = vmatprep.subr.bf16.mxu0 0
  %5591 = vmatpush1.bf16.xpose.msra.mxu0 0
  %5592 = vmatprep.subr.bf16.mxu0 0
  %5593 = vmatpush1.bf16.xpose.msra.mxu0 0
  %5594 = vmatprep.subr.bf16.mxu0 0
  %5595 = vmatpush1.bf16.xpose.msra.mxu0 0
  %5596 = vmatprep.subr.bf16.mxu0 0
  %5597 = vmatpush1.bf16.xpose.msra.mxu0 0
  %5598 = vmatprep.subr.bf16.mxu0 0
  %5599 = vmatpush1.bf16.xpose.msra.mxu0 0
  %5600 = vmatprep.subr.bf16.mxu0 0
  %5601 = vmatpush1.bf16.xpose.msra.mxu0 0
  %5602 = vmatprep.subr.bf16.mxu0 0
  %5603 = vmatpush1.bf16.xpose.msra.mxu0 0
  %5604 = vmatprep.mubr.bf16.mxu0 0
  %5605 = vmatmul.mubr.bf16.gmra.mrb[0].mxu0 %v5567
  %v5606 = vpop.f32.mrb[0].mxu0
  %v5607 = vadd.f32 0.0, %v5606
  %v5608 = vpop.f32.mrb[0].mxu0
  %v5609 = vpop.f32.mrb[0].mxu0
  %v5610 = vpop.f32.mrb[0].mxu0
  %5611 = vdwg.mxu0
  %5612 = vrot.lane.b32.xlu0 %v183, 104
  %v5613 = vpop.permute.xlu0 %5612
  %5614 = vrot.lane.b32.xlu0 %v183, 72
  %v5615 = vpop.permute.xlu0 %5614
  %v5617 = vsel %vm199, %v5613, 0
  %v5620 = vsel %vm199, %v5615, 0
  %5622 = vmatprep.subr.bf16.mxu0 0
  %5623 = vmatpush1.bf16.xpose.msra.mxu0 %v5620
  %5624 = vmatprep.subr.bf16.mxu0 0
  %5625 = vmatpush1.bf16.xpose.msra.mxu0 0
  %5626 = vmatprep.subr.bf16.mxu0 0
  %5627 = vmatpush1.bf16.xpose.msra.mxu0 0
  %5628 = vmatprep.subr.bf16.mxu0 0
  %5629 = vmatpush1.bf16.xpose.msra.mxu0 0
  %5630 = vmatprep.subr.bf16.mxu0 0
  %5631 = vmatpush1.bf16.xpose.msra.mxu0 0
  %5632 = vmatprep.subr.bf16.mxu0 0
  %5633 = vmatpush1.bf16.xpose.msra.mxu0 0
  %5634 = vmatprep.subr.bf16.mxu0 0
  %5635 = vmatpush1.bf16.xpose.msra.mxu0 0
  %5636 = vmatprep.subr.bf16.mxu0 0
  %5637 = vmatpush1.bf16.xpose.msra.mxu0 0
  %5638 = vmatprep.subr.bf16.mxu0 0
  %5639 = vmatpush1.bf16.xpose.msra.mxu0 0
  %5640 = vmatprep.subr.bf16.mxu0 0
  %5641 = vmatpush1.bf16.xpose.msra.mxu0 0
  %5642 = vmatprep.subr.bf16.mxu0 0
  %5643 = vmatpush1.bf16.xpose.msra.mxu0 0
  %5644 = vmatprep.subr.bf16.mxu0 0
  %5645 = vmatpush1.bf16.xpose.msra.mxu0 0
  %5646 = vmatprep.subr.bf16.mxu0 0
  %5647 = vmatpush1.bf16.xpose.msra.mxu0 0
  %5648 = vmatprep.subr.bf16.mxu0 0
  %5649 = vmatpush1.bf16.xpose.msra.mxu0 0
  %5650 = vmatprep.subr.bf16.mxu0 0
  %5651 = vmatpush1.bf16.xpose.msra.mxu0 0
  %5652 = vmatprep.subr.bf16.mxu0 0
  %5653 = vmatpush1.bf16.xpose.msra.mxu0 0
  %5654 = vmatprep.mubr.bf16.mxu0 0
  %5655 = vmatmul.mubr.bf16.gmra.mrb[0].mxu0 %v5617
  %v5656 = vpop.f32.mrb[0].mxu0
  %v5657 = vadd.f32 0.0, %v5656
  %v5658 = vpop.f32.mrb[0].mxu0
  %v5659 = vpop.f32.mrb[0].mxu0
  %v5660 = vpop.f32.mrb[0].mxu0
  %5661 = vdwg.mxu0
  %5662 = vrot.lane.b32.xlu0 %v184, 104
  %v5663 = vpop.permute.xlu0 %5662
  %5664 = vrot.lane.b32.xlu0 %v184, 72
  %v5665 = vpop.permute.xlu0 %5664
  %v5667 = vsel %vm199, %v5663, 0
  %v5670 = vsel %vm199, %v5665, 0
  %5672 = vmatprep.subr.bf16.mxu0 0
  %5673 = vmatpush1.bf16.xpose.msra.mxu0 %v5670
  %5674 = vmatprep.subr.bf16.mxu0 0
  %5675 = vmatpush1.bf16.xpose.msra.mxu0 0
  %5676 = vmatprep.subr.bf16.mxu0 0
  %5677 = vmatpush1.bf16.xpose.msra.mxu0 0
  %5678 = vmatprep.subr.bf16.mxu0 0
  %5679 = vmatpush1.bf16.xpose.msra.mxu0 0
  %5680 = vmatprep.subr.bf16.mxu0 0
  %5681 = vmatpush1.bf16.xpose.msra.mxu0 0
  %5682 = vmatprep.subr.bf16.mxu0 0
  %5683 = vmatpush1.bf16.xpose.msra.mxu0 0
  %5684 = vmatprep.subr.bf16.mxu0 0
  %5685 = vmatpush1.bf16.xpose.msra.mxu0 0
  %5686 = vmatprep.subr.bf16.mxu0 0
  %5687 = vmatpush1.bf16.xpose.msra.mxu0 0
  %5688 = vmatprep.subr.bf16.mxu0 0
  %5689 = vmatpush1.bf16.xpose.msra.mxu0 0
  %5690 = vmatprep.subr.bf16.mxu0 0
  %5691 = vmatpush1.bf16.xpose.msra.mxu0 0
  %5692 = vmatprep.subr.bf16.mxu0 0
  %5693 = vmatpush1.bf16.xpose.msra.mxu0 0
  %5694 = vmatprep.subr.bf16.mxu0 0
  %5695 = vmatpush1.bf16.xpose.msra.mxu0 0
  %5696 = vmatprep.subr.bf16.mxu0 0
  %5697 = vmatpush1.bf16.xpose.msra.mxu0 0
  %5698 = vmatprep.subr.bf16.mxu0 0
  %5699 = vmatpush1.bf16.xpose.msra.mxu0 0
  %5700 = vmatprep.subr.bf16.mxu0 0
  %5701 = vmatpush1.bf16.xpose.msra.mxu0 0
  %5702 = vmatprep.subr.bf16.mxu0 0
  %5703 = vmatpush1.bf16.xpose.msra.mxu0 0
  %5704 = vmatprep.mubr.bf16.mxu0 0
  %5705 = vmatmul.mubr.bf16.gmra.mrb[0].mxu0 %v5667
  %v5706 = vpop.f32.mrb[0].mxu0
  %v5707 = vadd.f32 0.0, %v5706
  %v5708 = vpop.f32.mrb[0].mxu0
  %v5709 = vpop.f32.mrb[0].mxu0
  %v5710 = vpop.f32.mrb[0].mxu0
  %5711 = vdwg.mxu0
  %5712 = vrot.lane.b32.xlu0 %v185, 104
  %v5713 = vpop.permute.xlu0 %5712
  %5714 = vrot.lane.b32.xlu0 %v185, 72
  %v5715 = vpop.permute.xlu0 %5714
  %v5717 = vsel %vm199, %v5713, 0
  %v5720 = vsel %vm199, %v5715, 0
  %5722 = vmatprep.subr.bf16.mxu0 0
  %5723 = vmatpush1.bf16.xpose.msra.mxu0 %v5720
  %5724 = vmatprep.subr.bf16.mxu0 0
  %5725 = vmatpush1.bf16.xpose.msra.mxu0 0
  %5726 = vmatprep.subr.bf16.mxu0 0
  %5727 = vmatpush1.bf16.xpose.msra.mxu0 0
  %5728 = vmatprep.subr.bf16.mxu0 0
  %5729 = vmatpush1.bf16.xpose.msra.mxu0 0
  %5730 = vmatprep.subr.bf16.mxu0 0
  %5731 = vmatpush1.bf16.xpose.msra.mxu0 0
  %5732 = vmatprep.subr.bf16.mxu0 0
  %5733 = vmatpush1.bf16.xpose.msra.mxu0 0
  %5734 = vmatprep.subr.bf16.mxu0 0
  %5735 = vmatpush1.bf16.xpose.msra.mxu0 0
  %5736 = vmatprep.subr.bf16.mxu0 0
  %5737 = vmatpush1.bf16.xpose.msra.mxu0 0
  %5738 = vmatprep.subr.bf16.mxu0 0
  %5739 = vmatpush1.bf16.xpose.msra.mxu0 0
  %5740 = vmatprep.subr.bf16.mxu0 0
  %5741 = vmatpush1.bf16.xpose.msra.mxu0 0
  %5742 = vmatprep.subr.bf16.mxu0 0
  %5743 = vmatpush1.bf16.xpose.msra.mxu0 0
  %5744 = vmatprep.subr.bf16.mxu0 0
  %5745 = vmatpush1.bf16.xpose.msra.mxu0 0
  %5746 = vmatprep.subr.bf16.mxu0 0
  %5747 = vmatpush1.bf16.xpose.msra.mxu0 0
  %5748 = vmatprep.subr.bf16.mxu0 0
  %5749 = vmatpush1.bf16.xpose.msra.mxu0 0
  %5750 = vmatprep.subr.bf16.mxu0 0
  %5751 = vmatpush1.bf16.xpose.msra.mxu0 0
  %5752 = vmatprep.subr.bf16.mxu0 0
  %5753 = vmatpush1.bf16.xpose.msra.mxu0 0
  %5754 = vmatprep.mubr.bf16.mxu0 0
  %5755 = vmatmul.mubr.bf16.gmra.mrb[0].mxu0 %v5717
  %v5756 = vpop.f32.mrb[0].mxu0
  %v5757 = vadd.f32 0.0, %v5756
  %v5758 = vpop.f32.mrb[0].mxu0
  %v5759 = vpop.f32.mrb[0].mxu0
  %v5760 = vpop.f32.mrb[0].mxu0
  %5761 = vdwg.mxu0
  %5762 = vrot.lane.b32.xlu0 %v186, 104
  %v5763 = vpop.permute.xlu0 %5762
  %5764 = vrot.lane.b32.xlu0 %v186, 72
  %v5765 = vpop.permute.xlu0 %5764
  %v5767 = vsel %vm199, %v5763, 0
  %v5770 = vsel %vm199, %v5765, 0
  %5772 = vmatprep.subr.bf16.mxu0 0
  %5773 = vmatpush1.bf16.xpose.msra.mxu0 %v5770
  %5774 = vmatprep.subr.bf16.mxu0 0
  %5775 = vmatpush1.bf16.xpose.msra.mxu0 0
  %5776 = vmatprep.subr.bf16.mxu0 0
  %5777 = vmatpush1.bf16.xpose.msra.mxu0 0
  %5778 = vmatprep.subr.bf16.mxu0 0
  %5779 = vmatpush1.bf16.xpose.msra.mxu0 0
  %5780 = vmatprep.subr.bf16.mxu0 0
  %5781 = vmatpush1.bf16.xpose.msra.mxu0 0
  %5782 = vmatprep.subr.bf16.mxu0 0
  %5783 = vmatpush1.bf16.xpose.msra.mxu0 0
  %5784 = vmatprep.subr.bf16.mxu0 0
  %5785 = vmatpush1.bf16.xpose.msra.mxu0 0
  %5786 = vmatprep.subr.bf16.mxu0 0
  %5787 = vmatpush1.bf16.xpose.msra.mxu0 0
  %5788 = vmatprep.subr.bf16.mxu0 0
  %5789 = vmatpush1.bf16.xpose.msra.mxu0 0
  %5790 = vmatprep.subr.bf16.mxu0 0
  %5791 = vmatpush1.bf16.xpose.msra.mxu0 0
  %5792 = vmatprep.subr.bf16.mxu0 0
  %5793 = vmatpush1.bf16.xpose.msra.mxu0 0
  %5794 = vmatprep.subr.bf16.mxu0 0
  %5795 = vmatpush1.bf16.xpose.msra.mxu0 0
  %5796 = vmatprep.subr.bf16.mxu0 0
  %5797 = vmatpush1.bf16.xpose.msra.mxu0 0
  %5798 = vmatprep.subr.bf16.mxu0 0
  %5799 = vmatpush1.bf16.xpose.msra.mxu0 0
  %5800 = vmatprep.subr.bf16.mxu0 0
  %5801 = vmatpush1.bf16.xpose.msra.mxu0 0
  %5802 = vmatprep.subr.bf16.mxu0 0
  %5803 = vmatpush1.bf16.xpose.msra.mxu0 0
  %5804 = vmatprep.mubr.bf16.mxu0 0
  %5805 = vmatmul.mubr.bf16.gmra.mrb[0].mxu0 %v5767
  %v5806 = vpop.f32.mrb[0].mxu0
  %v5807 = vadd.f32 0.0, %v5806
  %v5808 = vpop.f32.mrb[0].mxu0
  %v5809 = vpop.f32.mrb[0].mxu0
  %v5810 = vpop.f32.mrb[0].mxu0
  %5811 = vdwg.mxu0
  %5812 = vrot.lane.b32.xlu0 %v187, 104
  %v5813 = vpop.permute.xlu0 %5812
  %5814 = vrot.lane.b32.xlu0 %v187, 72
  %v5815 = vpop.permute.xlu0 %5814
  %v5817 = vsel %vm199, %v5813, 0
  %v5820 = vsel %vm199, %v5815, 0
  %5822 = vmatprep.subr.bf16.mxu0 0
  %5823 = vmatpush1.bf16.xpose.msra.mxu0 %v5820
  %5824 = vmatprep.subr.bf16.mxu0 0
  %5825 = vmatpush1.bf16.xpose.msra.mxu0 0
  %5826 = vmatprep.subr.bf16.mxu0 0
  %5827 = vmatpush1.bf16.xpose.msra.mxu0 0
  %5828 = vmatprep.subr.bf16.mxu0 0
  %5829 = vmatpush1.bf16.xpose.msra.mxu0 0
  %5830 = vmatprep.subr.bf16.mxu0 0
  %5831 = vmatpush1.bf16.xpose.msra.mxu0 0
  %5832 = vmatprep.subr.bf16.mxu0 0
  %5833 = vmatpush1.bf16.xpose.msra.mxu0 0
  %5834 = vmatprep.subr.bf16.mxu0 0
  %5835 = vmatpush1.bf16.xpose.msra.mxu0 0
  %5836 = vmatprep.subr.bf16.mxu0 0
  %5837 = vmatpush1.bf16.xpose.msra.mxu0 0
  %5838 = vmatprep.subr.bf16.mxu0 0
  %5839 = vmatpush1.bf16.xpose.msra.mxu0 0
  %5840 = vmatprep.subr.bf16.mxu0 0
  %5841 = vmatpush1.bf16.xpose.msra.mxu0 0
  %5842 = vmatprep.subr.bf16.mxu0 0
  %5843 = vmatpush1.bf16.xpose.msra.mxu0 0
  %5844 = vmatprep.subr.bf16.mxu0 0
  %5845 = vmatpush1.bf16.xpose.msra.mxu0 0
  %5846 = vmatprep.subr.bf16.mxu0 0
  %5847 = vmatpush1.bf16.xpose.msra.mxu0 0
  %5848 = vmatprep.subr.bf16.mxu0 0
  %5849 = vmatpush1.bf16.xpose.msra.mxu0 0
  %5850 = vmatprep.subr.bf16.mxu0 0
  %5851 = vmatpush1.bf16.xpose.msra.mxu0 0
  %5852 = vmatprep.subr.bf16.mxu0 0
  %5853 = vmatpush1.bf16.xpose.msra.mxu0 0
  %5854 = vmatprep.mubr.bf16.mxu0 0
  %5855 = vmatmul.mubr.bf16.gmra.mrb[0].mxu0 %v5817
  %v5856 = vpop.f32.mrb[0].mxu0
  %v5857 = vadd.f32 0.0, %v5856
  %v5858 = vpop.f32.mrb[0].mxu0
  %v5859 = vpop.f32.mrb[0].mxu0
  %v5860 = vpop.f32.mrb[0].mxu0
  %5861 = vdwg.mxu0
  %5862 = vrot.lane.b32.xlu0 %v188, 104
  %v5863 = vpop.permute.xlu0 %5862
  %5864 = vrot.lane.b32.xlu0 %v188, 72
  %v5865 = vpop.permute.xlu0 %5864
  %v5867 = vsel %vm199, %v5863, 0
  %v5870 = vsel %vm199, %v5865, 0
  %5872 = vmatprep.subr.bf16.mxu0 0
  %5873 = vmatpush1.bf16.xpose.msra.mxu0 %v5870
  %5874 = vmatprep.subr.bf16.mxu0 0
  %5875 = vmatpush1.bf16.xpose.msra.mxu0 0
  %5876 = vmatprep.subr.bf16.mxu0 0
  %5877 = vmatpush1.bf16.xpose.msra.mxu0 0
  %5878 = vmatprep.subr.bf16.mxu0 0
  %5879 = vmatpush1.bf16.xpose.msra.mxu0 0
  %5880 = vmatprep.subr.bf16.mxu0 0
  %5881 = vmatpush1.bf16.xpose.msra.mxu0 0
  %5882 = vmatprep.subr.bf16.mxu0 0
  %5883 = vmatpush1.bf16.xpose.msra.mxu0 0
  %5884 = vmatprep.subr.bf16.mxu0 0
  %5885 = vmatpush1.bf16.xpose.msra.mxu0 0
  %5886 = vmatprep.subr.bf16.mxu0 0
  %5887 = vmatpush1.bf16.xpose.msra.mxu0 0
  %5888 = vmatprep.subr.bf16.mxu0 0
  %5889 = vmatpush1.bf16.xpose.msra.mxu0 0
  %5890 = vmatprep.subr.bf16.mxu0 0
  %5891 = vmatpush1.bf16.xpose.msra.mxu0 0
  %5892 = vmatprep.subr.bf16.mxu0 0
  %5893 = vmatpush1.bf16.xpose.msra.mxu0 0
  %5894 = vmatprep.subr.bf16.mxu0 0
  %5895 = vmatpush1.bf16.xpose.msra.mxu0 0
  %5896 = vmatprep.subr.bf16.mxu0 0
  %5897 = vmatpush1.bf16.xpose.msra.mxu0 0
  %5898 = vmatprep.subr.bf16.mxu0 0
  %5899 = vmatpush1.bf16.xpose.msra.mxu0 0
  %5900 = vmatprep.subr.bf16.mxu0 0
  %5901 = vmatpush1.bf16.xpose.msra.mxu0 0
  %5902 = vmatprep.subr.bf16.mxu0 0
  %5903 = vmatpush1.bf16.xpose.msra.mxu0 0
  %5904 = vmatprep.mubr.bf16.mxu0 0
  %5905 = vmatmul.mubr.bf16.gmra.mrb[0].mxu0 %v5867
  %v5906 = vpop.f32.mrb[0].mxu0
  %v5907 = vadd.f32 0.0, %v5906
  %v5908 = vpop.f32.mrb[0].mxu0
  %v5909 = vpop.f32.mrb[0].mxu0
  %v5910 = vpop.f32.mrb[0].mxu0
  %5911 = vdwg.mxu0
  %5912 = vrot.lane.b32.xlu0 %v189, 104
  %v5913 = vpop.permute.xlu0 %5912
  %5914 = vrot.lane.b32.xlu0 %v189, 72
  %v5915 = vpop.permute.xlu0 %5914
  %v5917 = vsel %vm199, %v5913, 0
  %v5920 = vsel %vm199, %v5915, 0
  %5922 = vmatprep.subr.bf16.mxu0 0
  %5923 = vmatpush1.bf16.xpose.msra.mxu0 %v5920
  %5924 = vmatprep.subr.bf16.mxu0 0
  %5925 = vmatpush1.bf16.xpose.msra.mxu0 0
  %5926 = vmatprep.subr.bf16.mxu0 0
  %5927 = vmatpush1.bf16.xpose.msra.mxu0 0
  %5928 = vmatprep.subr.bf16.mxu0 0
  %5929 = vmatpush1.bf16.xpose.msra.mxu0 0
  %5930 = vmatprep.subr.bf16.mxu0 0
  %5931 = vmatpush1.bf16.xpose.msra.mxu0 0
  %5932 = vmatprep.subr.bf16.mxu0 0
  %5933 = vmatpush1.bf16.xpose.msra.mxu0 0
  %5934 = vmatprep.subr.bf16.mxu0 0
  %5935 = vmatpush1.bf16.xpose.msra.mxu0 0
  %5936 = vmatprep.subr.bf16.mxu0 0
  %5937 = vmatpush1.bf16.xpose.msra.mxu0 0
  %5938 = vmatprep.subr.bf16.mxu0 0
  %5939 = vmatpush1.bf16.xpose.msra.mxu0 0
  %5940 = vmatprep.subr.bf16.mxu0 0
  %5941 = vmatpush1.bf16.xpose.msra.mxu0 0
  %5942 = vmatprep.subr.bf16.mxu0 0
  %5943 = vmatpush1.bf16.xpose.msra.mxu0 0
  %5944 = vmatprep.subr.bf16.mxu0 0
  %5945 = vmatpush1.bf16.xpose.msra.mxu0 0
  %5946 = vmatprep.subr.bf16.mxu0 0
  %5947 = vmatpush1.bf16.xpose.msra.mxu0 0
  %5948 = vmatprep.subr.bf16.mxu0 0
  %5949 = vmatpush1.bf16.xpose.msra.mxu0 0
  %5950 = vmatprep.subr.bf16.mxu0 0
  %5951 = vmatpush1.bf16.xpose.msra.mxu0 0
  %5952 = vmatprep.subr.bf16.mxu0 0
  %5953 = vmatpush1.bf16.xpose.msra.mxu0 0
  %5954 = vmatprep.mubr.bf16.mxu0 0
  %5955 = vmatmul.mubr.bf16.gmra.mrb[0].mxu0 %v5917
  %v5956 = vpop.f32.mrb[0].mxu0
  %v5957 = vadd.f32 0.0, %v5956
  %v5958 = vpop.f32.mrb[0].mxu0
  %v5959 = vpop.f32.mrb[0].mxu0
  %v5960 = vpop.f32.mrb[0].mxu0
  %5961 = vdwg.mxu0
  %5962 = vrot.lane.b32.xlu0 %v190, 104
  %v5963 = vpop.permute.xlu0 %5962
  %5964 = vrot.lane.b32.xlu0 %v190, 72
  %v5965 = vpop.permute.xlu0 %5964
  %v5967 = vsel %vm199, %v5963, 0
  %v5970 = vsel %vm199, %v5965, 0
  %5972 = vmatprep.subr.bf16.mxu0 0
  %5973 = vmatpush1.bf16.xpose.msra.mxu0 %v5970
  %5974 = vmatprep.subr.bf16.mxu0 0
  %5975 = vmatpush1.bf16.xpose.msra.mxu0 0
  %5976 = vmatprep.subr.bf16.mxu0 0
  %5977 = vmatpush1.bf16.xpose.msra.mxu0 0
  %5978 = vmatprep.subr.bf16.mxu0 0
  %5979 = vmatpush1.bf16.xpose.msra.mxu0 0
  %5980 = vmatprep.subr.bf16.mxu0 0
  %5981 = vmatpush1.bf16.xpose.msra.mxu0 0
  %5982 = vmatprep.subr.bf16.mxu0 0
  %5983 = vmatpush1.bf16.xpose.msra.mxu0 0
  %5984 = vmatprep.subr.bf16.mxu0 0
  %5985 = vmatpush1.bf16.xpose.msra.mxu0 0
  %5986 = vmatprep.subr.bf16.mxu0 0
  %5987 = vmatpush1.bf16.xpose.msra.mxu0 0
  %5988 = vmatprep.subr.bf16.mxu0 0
  %5989 = vmatpush1.bf16.xpose.msra.mxu0 0
  %5990 = vmatprep.subr.bf16.mxu0 0
  %5991 = vmatpush1.bf16.xpose.msra.mxu0 0
  %5992 = vmatprep.subr.bf16.mxu0 0
  %5993 = vmatpush1.bf16.xpose.msra.mxu0 0
  %5994 = vmatprep.subr.bf16.mxu0 0
  %5995 = vmatpush1.bf16.xpose.msra.mxu0 0
  %5996 = vmatprep.subr.bf16.mxu0 0
  %5997 = vmatpush1.bf16.xpose.msra.mxu0 0
  %5998 = vmatprep.subr.bf16.mxu0 0
  %5999 = vmatpush1.bf16.xpose.msra.mxu0 0
  %6000 = vmatprep.subr.bf16.mxu0 0
  %6001 = vmatpush1.bf16.xpose.msra.mxu0 0
  %6002 = vmatprep.subr.bf16.mxu0 0
  %6003 = vmatpush1.bf16.xpose.msra.mxu0 0
  %6004 = vmatprep.mubr.bf16.mxu0 0
  %6005 = vmatmul.mubr.bf16.gmra.mrb[0].mxu0 %v5967
  %v6006 = vpop.f32.mrb[0].mxu0
  %v6007 = vadd.f32 0.0, %v6006
  %v6008 = vpop.f32.mrb[0].mxu0
  %v6009 = vpop.f32.mrb[0].mxu0
  %v6010 = vpop.f32.mrb[0].mxu0
  %6011 = vdwg.mxu0
  %6012 = vrot.lane.b32.xlu0 %v191, 104
  %v6013 = vpop.permute.xlu0 %6012
  %6014 = vrot.lane.b32.xlu0 %v191, 72
  %v6015 = vpop.permute.xlu0 %6014
  %v6017 = vsel %vm199, %v6013, 0
  %v6020 = vsel %vm199, %v6015, 0
  %6022 = vmatprep.subr.bf16.mxu0 0
  %6023 = vmatpush1.bf16.xpose.msra.mxu0 %v6020
  %6024 = vmatprep.subr.bf16.mxu0 0
  %6025 = vmatpush1.bf16.xpose.msra.mxu0 0
  %6026 = vmatprep.subr.bf16.mxu0 0
  %6027 = vmatpush1.bf16.xpose.msra.mxu0 0
  %6028 = vmatprep.subr.bf16.mxu0 0
  %6029 = vmatpush1.bf16.xpose.msra.mxu0 0
  %6030 = vmatprep.subr.bf16.mxu0 0
  %6031 = vmatpush1.bf16.xpose.msra.mxu0 0
  %6032 = vmatprep.subr.bf16.mxu0 0
  %6033 = vmatpush1.bf16.xpose.msra.mxu0 0
  %6034 = vmatprep.subr.bf16.mxu0 0
  %6035 = vmatpush1.bf16.xpose.msra.mxu0 0
  %6036 = vmatprep.subr.bf16.mxu0 0
  %6037 = vmatpush1.bf16.xpose.msra.mxu0 0
  %6038 = vmatprep.subr.bf16.mxu0 0
  %6039 = vmatpush1.bf16.xpose.msra.mxu0 0
  %6040 = vmatprep.subr.bf16.mxu0 0
  %6041 = vmatpush1.bf16.xpose.msra.mxu0 0
  %6042 = vmatprep.subr.bf16.mxu0 0
  %6043 = vmatpush1.bf16.xpose.msra.mxu0 0
  %6044 = vmatprep.subr.bf16.mxu0 0
  %6045 = vmatpush1.bf16.xpose.msra.mxu0 0
  %6046 = vmatprep.subr.bf16.mxu0 0
  %6047 = vmatpush1.bf16.xpose.msra.mxu0 0
  %6048 = vmatprep.subr.bf16.mxu0 0
  %6049 = vmatpush1.bf16.xpose.msra.mxu0 0
  %6050 = vmatprep.subr.bf16.mxu0 0
  %6051 = vmatpush1.bf16.xpose.msra.mxu0 0
  %6052 = vmatprep.subr.bf16.mxu0 0
  %6053 = vmatpush1.bf16.xpose.msra.mxu0 0
  %6054 = vmatprep.mubr.bf16.mxu0 0
  %6055 = vmatmul.mubr.bf16.gmra.mrb[0].mxu0 %v6017
  %v6056 = vpop.f32.mrb[0].mxu0
  %v6057 = vadd.f32 0.0, %v6056
  %v6058 = vpop.f32.mrb[0].mxu0
  %v6059 = vpop.f32.mrb[0].mxu0
  %v6060 = vpop.f32.mrb[0].mxu0
  %6061 = vdwg.mxu0
  %6062 = vrot.lane.b32.xlu0 %v192, 104
  %v6063 = vpop.permute.xlu0 %6062
  %6064 = vrot.lane.b32.xlu0 %v192, 72
  %v6065 = vpop.permute.xlu0 %6064
  %v6067 = vsel %vm199, %v6063, 0
  %v6070 = vsel %vm199, %v6065, 0
  %6072 = vmatprep.subr.bf16.mxu0 0
  %6073 = vmatpush1.bf16.xpose.msra.mxu0 %v6070
  %6074 = vmatprep.subr.bf16.mxu0 0
  %6075 = vmatpush1.bf16.xpose.msra.mxu0 0
  %6076 = vmatprep.subr.bf16.mxu0 0
  %6077 = vmatpush1.bf16.xpose.msra.mxu0 0
  %6078 = vmatprep.subr.bf16.mxu0 0
  %6079 = vmatpush1.bf16.xpose.msra.mxu0 0
  %6080 = vmatprep.subr.bf16.mxu0 0
  %6081 = vmatpush1.bf16.xpose.msra.mxu0 0
  %6082 = vmatprep.subr.bf16.mxu0 0
  %6083 = vmatpush1.bf16.xpose.msra.mxu0 0
  %6084 = vmatprep.subr.bf16.mxu0 0
  %6085 = vmatpush1.bf16.xpose.msra.mxu0 0
  %6086 = vmatprep.subr.bf16.mxu0 0
  %6087 = vmatpush1.bf16.xpose.msra.mxu0 0
  %6088 = vmatprep.subr.bf16.mxu0 0
  %6089 = vmatpush1.bf16.xpose.msra.mxu0 0
  %6090 = vmatprep.subr.bf16.mxu0 0
  %6091 = vmatpush1.bf16.xpose.msra.mxu0 0
  %6092 = vmatprep.subr.bf16.mxu0 0
  %6093 = vmatpush1.bf16.xpose.msra.mxu0 0
  %6094 = vmatprep.subr.bf16.mxu0 0
  %6095 = vmatpush1.bf16.xpose.msra.mxu0 0
  %6096 = vmatprep.subr.bf16.mxu0 0
  %6097 = vmatpush1.bf16.xpose.msra.mxu0 0
  %6098 = vmatprep.subr.bf16.mxu0 0
  %6099 = vmatpush1.bf16.xpose.msra.mxu0 0
  %6100 = vmatprep.subr.bf16.mxu0 0
  %6101 = vmatpush1.bf16.xpose.msra.mxu0 0
  %6102 = vmatprep.subr.bf16.mxu0 0
  %6103 = vmatpush1.bf16.xpose.msra.mxu0 0
  %6104 = vmatprep.mubr.bf16.mxu0 0
  %6105 = vmatmul.mubr.bf16.gmra.mrb[0].mxu0 %v6067
  %v6106 = vpop.f32.mrb[0].mxu0
  %v6107 = vadd.f32 0.0, %v6106
  %v6108 = vpop.f32.mrb[0].mxu0
  %v6109 = vpop.f32.mrb[0].mxu0
  %v6110 = vpop.f32.mrb[0].mxu0
  %6111 = vdwg.mxu0
  %6112 = vrot.lane.b32.xlu0 %v193, 104
  %v6113 = vpop.permute.xlu0 %6112
  %6114 = vrot.lane.b32.xlu0 %v193, 72
  %v6115 = vpop.permute.xlu0 %6114
  %v6117 = vsel %vm199, %v6113, 0
  %v6120 = vsel %vm199, %v6115, 0
  %6122 = vmatprep.subr.bf16.mxu0 0
  %6123 = vmatpush1.bf16.xpose.msra.mxu0 %v6120
  %6124 = vmatprep.subr.bf16.mxu0 0
  %6125 = vmatpush1.bf16.xpose.msra.mxu0 0
  %6126 = vmatprep.subr.bf16.mxu0 0
  %6127 = vmatpush1.bf16.xpose.msra.mxu0 0
  %6128 = vmatprep.subr.bf16.mxu0 0
  %6129 = vmatpush1.bf16.xpose.msra.mxu0 0
  %6130 = vmatprep.subr.bf16.mxu0 0
  %6131 = vmatpush1.bf16.xpose.msra.mxu0 0
  %6132 = vmatprep.subr.bf16.mxu0 0
  %6133 = vmatpush1.bf16.xpose.msra.mxu0 0
  %6134 = vmatprep.subr.bf16.mxu0 0
  %6135 = vmatpush1.bf16.xpose.msra.mxu0 0
  %6136 = vmatprep.subr.bf16.mxu0 0
  %6137 = vmatpush1.bf16.xpose.msra.mxu0 0
  %6138 = vmatprep.subr.bf16.mxu0 0
  %6139 = vmatpush1.bf16.xpose.msra.mxu0 0
  %6140 = vmatprep.subr.bf16.mxu0 0
  %6141 = vmatpush1.bf16.xpose.msra.mxu0 0
  %6142 = vmatprep.subr.bf16.mxu0 0
  %6143 = vmatpush1.bf16.xpose.msra.mxu0 0
  %6144 = vmatprep.subr.bf16.mxu0 0
  %6145 = vmatpush1.bf16.xpose.msra.mxu0 0
  %6146 = vmatprep.subr.bf16.mxu0 0
  %6147 = vmatpush1.bf16.xpose.msra.mxu0 0
  %6148 = vmatprep.subr.bf16.mxu0 0
  %6149 = vmatpush1.bf16.xpose.msra.mxu0 0
  %6150 = vmatprep.subr.bf16.mxu0 0
  %6151 = vmatpush1.bf16.xpose.msra.mxu0 0
  %6152 = vmatprep.subr.bf16.mxu0 0
  %6153 = vmatpush1.bf16.xpose.msra.mxu0 0
  %6154 = vmatprep.mubr.bf16.mxu0 0
  %6155 = vmatmul.mubr.bf16.gmra.mrb[0].mxu0 %v6117
  %v6156 = vpop.f32.mrb[0].mxu0
  %v6157 = vadd.f32 0.0, %v6156
  %v6158 = vpop.f32.mrb[0].mxu0
  %v6159 = vpop.f32.mrb[0].mxu0
  %v6160 = vpop.f32.mrb[0].mxu0
  %6161 = vdwg.mxu0
  %6162 = vrot.lane.b32.xlu0 %v194, 104
  %v6163 = vpop.permute.xlu0 %6162
  %6164 = vrot.lane.b32.xlu0 %v194, 72
  %v6165 = vpop.permute.xlu0 %6164
  %v6167 = vsel %vm199, %v6163, 0
  %v6170 = vsel %vm199, %v6165, 0
  %6172 = vmatprep.subr.bf16.mxu0 0
  %6173 = vmatpush1.bf16.xpose.msra.mxu0 %v6170
  %6174 = vmatprep.subr.bf16.mxu0 0
  %6175 = vmatpush1.bf16.xpose.msra.mxu0 0
  %6176 = vmatprep.subr.bf16.mxu0 0
  %6177 = vmatpush1.bf16.xpose.msra.mxu0 0
  %6178 = vmatprep.subr.bf16.mxu0 0
  %6179 = vmatpush1.bf16.xpose.msra.mxu0 0
  %6180 = vmatprep.subr.bf16.mxu0 0
  %6181 = vmatpush1.bf16.xpose.msra.mxu0 0
  %6182 = vmatprep.subr.bf16.mxu0 0
  %6183 = vmatpush1.bf16.xpose.msra.mxu0 0
  %6184 = vmatprep.subr.bf16.mxu0 0
  %6185 = vmatpush1.bf16.xpose.msra.mxu0 0
  %6186 = vmatprep.subr.bf16.mxu0 0
  %6187 = vmatpush1.bf16.xpose.msra.mxu0 0
  %6188 = vmatprep.subr.bf16.mxu0 0
  %6189 = vmatpush1.bf16.xpose.msra.mxu0 0
  %6190 = vmatprep.subr.bf16.mxu0 0
  %6191 = vmatpush1.bf16.xpose.msra.mxu0 0
  %6192 = vmatprep.subr.bf16.mxu0 0
  %6193 = vmatpush1.bf16.xpose.msra.mxu0 0
  %6194 = vmatprep.subr.bf16.mxu0 0
  %6195 = vmatpush1.bf16.xpose.msra.mxu0 0
  %6196 = vmatprep.subr.bf16.mxu0 0
  %6197 = vmatpush1.bf16.xpose.msra.mxu0 0
  %6198 = vmatprep.subr.bf16.mxu0 0
  %6199 = vmatpush1.bf16.xpose.msra.mxu0 0
  %6200 = vmatprep.subr.bf16.mxu0 0
  %6201 = vmatpush1.bf16.xpose.msra.mxu0 0
  %6202 = vmatprep.subr.bf16.mxu0 0
  %6203 = vmatpush1.bf16.xpose.msra.mxu0 0
  %6204 = vmatprep.mubr.bf16.mxu0 0
  %6205 = vmatmul.mubr.bf16.gmra.mrb[0].mxu0 %v6167
  %v6206 = vpop.f32.mrb[0].mxu0
  %v6207 = vadd.f32 0.0, %v6206
  %v6208 = vpop.f32.mrb[0].mxu0
  %v6209 = vpop.f32.mrb[0].mxu0
  %v6210 = vpop.f32.mrb[0].mxu0
  %6211 = vdwg.mxu0
  %6212 = vrot.lane.b32.xlu0 %v195, 104
  %v6213 = vpop.permute.xlu0 %6212
  %6214 = vrot.lane.b32.xlu0 %v195, 72
  %v6215 = vpop.permute.xlu0 %6214
  %v6217 = vsel %vm199, %v6213, 0
  %v6220 = vsel %vm199, %v6215, 0
  %6222 = vmatprep.subr.bf16.mxu0 0
  %6223 = vmatpush1.bf16.xpose.msra.mxu0 %v6220
  %6224 = vmatprep.subr.bf16.mxu0 0
  %6225 = vmatpush1.bf16.xpose.msra.mxu0 0
  %6226 = vmatprep.subr.bf16.mxu0 0
  %6227 = vmatpush1.bf16.xpose.msra.mxu0 0
  %6228 = vmatprep.subr.bf16.mxu0 0
  %6229 = vmatpush1.bf16.xpose.msra.mxu0 0
  %6230 = vmatprep.subr.bf16.mxu0 0
  %6231 = vmatpush1.bf16.xpose.msra.mxu0 0
  %6232 = vmatprep.subr.bf16.mxu0 0
  %6233 = vmatpush1.bf16.xpose.msra.mxu0 0
  %6234 = vmatprep.subr.bf16.mxu0 0
  %6235 = vmatpush1.bf16.xpose.msra.mxu0 0
  %6236 = vmatprep.subr.bf16.mxu0 0
  %6237 = vmatpush1.bf16.xpose.msra.mxu0 0
  %6238 = vmatprep.subr.bf16.mxu0 0
  %6239 = vmatpush1.bf16.xpose.msra.mxu0 0
  %6240 = vmatprep.subr.bf16.mxu0 0
  %6241 = vmatpush1.bf16.xpose.msra.mxu0 0
  %6242 = vmatprep.subr.bf16.mxu0 0
  %6243 = vmatpush1.bf16.xpose.msra.mxu0 0
  %6244 = vmatprep.subr.bf16.mxu0 0
  %6245 = vmatpush1.bf16.xpose.msra.mxu0 0
  %6246 = vmatprep.subr.bf16.mxu0 0
  %6247 = vmatpush1.bf16.xpose.msra.mxu0 0
  %6248 = vmatprep.subr.bf16.mxu0 0
  %6249 = vmatpush1.bf16.xpose.msra.mxu0 0
  %6250 = vmatprep.subr.bf16.mxu0 0
  %6251 = vmatpush1.bf16.xpose.msra.mxu0 0
  %6252 = vmatprep.subr.bf16.mxu0 0
  %6253 = vmatpush1.bf16.xpose.msra.mxu0 0
  %6254 = vmatprep.mubr.bf16.mxu0 0
  %6255 = vmatmul.mubr.bf16.gmra.mrb[0].mxu0 %v6217
  %v6256 = vpop.f32.mrb[0].mxu0
  %v6257 = vadd.f32 0.0, %v6256
  %v6258 = vpop.f32.mrb[0].mxu0
  %v6259 = vpop.f32.mrb[0].mxu0
  %v6260 = vpop.f32.mrb[0].mxu0
  %6261 = vdwg.mxu0
  %v6262 = vsel %vm199, %v5507, -inf
  %6263 = vmax.xlane.f32.xlu0 %v6262
  %v6264 = vpop.xlane.xlu0 %6263
  %v6265 = vsel %vm199, %v5557, -inf
  %6266 = vmax.xlane.f32.xlu0 %v6265
  %v6267 = vpop.xlane.xlu0 %6266
  %v6268 = vsel %vm199, %v5607, -inf
  %6269 = vmax.xlane.f32.xlu0 %v6268
  %v6270 = vpop.xlane.xlu0 %6269
  %v6271 = vsel %vm199, %v5657, -inf
  %6272 = vmax.xlane.f32.xlu0 %v6271
  %v6273 = vpop.xlane.xlu0 %6272
  %v6274 = vsel %vm199, %v5707, -inf
  %6275 = vmax.xlane.f32.xlu0 %v6274
  %v6276 = vpop.xlane.xlu0 %6275
  %v6277 = vsel %vm199, %v5757, -inf
  %6278 = vmax.xlane.f32.xlu0 %v6277
  %v6279 = vpop.xlane.xlu0 %6278
  %v6280 = vsel %vm199, %v5807, -inf
  %6281 = vmax.xlane.f32.xlu0 %v6280
  %v6282 = vpop.xlane.xlu0 %6281
  %v6283 = vsel %vm199, %v5857, -inf
  %6284 = vmax.xlane.f32.xlu0 %v6283
  %v6285 = vpop.xlane.xlu0 %6284
  %v6286 = vsel %vm199, %v5907, -inf
  %6287 = vmax.xlane.f32.xlu0 %v6286
  %v6288 = vpop.xlane.xlu0 %6287
  %v6289 = vsel %vm199, %v5957, -inf
  %6290 = vmax.xlane.f32.xlu0 %v6289
  %v6291 = vpop.xlane.xlu0 %6290
  %v6292 = vsel %vm199, %v6007, -inf
  %6293 = vmax.xlane.f32.xlu0 %v6292
  %v6294 = vpop.xlane.xlu0 %6293
  %v6295 = vsel %vm199, %v6057, -inf
  %6296 = vmax.xlane.f32.xlu0 %v6295
  %v6297 = vpop.xlane.xlu0 %6296
  %v6298 = vsel %vm199, %v6107, -inf
  %6299 = vmax.xlane.f32.xlu0 %v6298
  %v6300 = vpop.xlane.xlu0 %6299
  %v6301 = vsel %vm199, %v6157, -inf
  %6302 = vmax.xlane.f32.xlu0 %v6301
  %v6303 = vpop.xlane.xlu0 %6302
  %v6304 = vsel %vm199, %v6207, -inf
  %6305 = vmax.xlane.f32.xlu0 %v6304
  %v6306 = vpop.xlane.xlu0 %6305
  %v6307 = vsel %vm199, %v6257, -inf
  %6308 = vmax.xlane.f32.xlu0 %v6307
  %v6309 = vpop.xlane.xlu0 %6308
  %v6310 = vsub.f32 %v5507, %v6264
  %v6311 = vsub.f32 %v5557, %v6267
  %v6312 = vsub.f32 %v5607, %v6270
  %v6313 = vsub.f32 %v5657, %v6273
  %v6314 = vsub.f32 %v5707, %v6276
  %v6315 = vsub.f32 %v5757, %v6279
  %v6316 = vsub.f32 %v5807, %v6282
  %v6317 = vsub.f32 %v5857, %v6285
  %v6318 = vsub.f32 %v5907, %v6288
  %v6319 = vsub.f32 %v5957, %v6291
  %v6320 = vsub.f32 %v6007, %v6294
  %v6321 = vsub.f32 %v6057, %v6297
  %v6322 = vsub.f32 %v6107, %v6300
  %v6323 = vsub.f32 %v6157, %v6303
  %v6324 = vsub.f32 %v6207, %v6306
  %v6325 = vsub.f32 %v6257, %v6309
  %v6326 = vmul.f32 %v6310, 1.442695
  %v6327 = vpow.pop %v6326
  %v6328 = vmul.f32 %v6311, 1.442695
  %v6329 = vpow.pop %v6328
  %v6330 = vmul.f32 %v6312, 1.442695
  %v6331 = vpow.pop %v6330
  %v6332 = vmul.f32 %v6313, 1.442695
  %v6333 = vpow.pop %v6332
  %v6334 = vmul.f32 %v6314, 1.442695
  %v6335 = vpow.pop %v6334
  %v6336 = vmul.f32 %v6315, 1.442695
  %v6337 = vpow.pop %v6336
  %v6338 = vmul.f32 %v6316, 1.442695
  %v6339 = vpow.pop %v6338
  %v6340 = vmul.f32 %v6317, 1.442695
  %v6341 = vpow.pop %v6340
  %v6342 = vmul.f32 %v6318, 1.442695
  %v6343 = vpow.pop %v6342
  %v6344 = vmul.f32 %v6319, 1.442695
  %v6345 = vpow.pop %v6344
  %v6346 = vmul.f32 %v6320, 1.442695
  %v6347 = vpow.pop %v6346
  %v6348 = vmul.f32 %v6321, 1.442695
  %v6349 = vpow.pop %v6348
  %v6350 = vmul.f32 %v6322, 1.442695
  %v6351 = vpow.pop %v6350
  %v6352 = vmul.f32 %v6323, 1.442695
  %v6353 = vpow.pop %v6352
  %v6354 = vmul.f32 %v6324, 1.442695
  %v6355 = vpow.pop %v6354
  %v6356 = vmul.f32 %v6325, 1.442695
  %v6357 = vpow.pop %v6356
  %v6358 = vsel %vm199, %v6327, 0.0
  %6359 = vadd.xlane.f32.xlu0 %v6358
  %v6360 = vpop.xlane.xlu0 %6359
  %v6361 = vsel %vm199, %v6329, 0.0
  %6362 = vadd.xlane.f32.xlu0 %v6361
  %v6363 = vpop.xlane.xlu0 %6362
  %v6364 = vsel %vm199, %v6331, 0.0
  %6365 = vadd.xlane.f32.xlu0 %v6364
  %v6366 = vpop.xlane.xlu0 %6365
  %v6367 = vsel %vm199, %v6333, 0.0
  %6368 = vadd.xlane.f32.xlu0 %v6367
  %v6369 = vpop.xlane.xlu0 %6368
  %v6370 = vsel %vm199, %v6335, 0.0
  %6371 = vadd.xlane.f32.xlu0 %v6370
  %v6372 = vpop.xlane.xlu0 %6371
  %v6373 = vsel %vm199, %v6337, 0.0
  %6374 = vadd.xlane.f32.xlu0 %v6373
  %v6375 = vpop.xlane.xlu0 %6374
  %v6376 = vsel %vm199, %v6339, 0.0
  %6377 = vadd.xlane.f32.xlu0 %v6376
  %v6378 = vpop.xlane.xlu0 %6377
  %v6379 = vsel %vm199, %v6341, 0.0
  %6380 = vadd.xlane.f32.xlu0 %v6379
  %v6381 = vpop.xlane.xlu0 %6380
  %v6382 = vsel %vm199, %v6343, 0.0
  %6383 = vadd.xlane.f32.xlu0 %v6382
  %v6384 = vpop.xlane.xlu0 %6383
  %v6385 = vsel %vm199, %v6345, 0.0
  %6386 = vadd.xlane.f32.xlu0 %v6385
  %v6387 = vpop.xlane.xlu0 %6386
  %v6388 = vsel %vm199, %v6347, 0.0
  %6389 = vadd.xlane.f32.xlu0 %v6388
  %v6390 = vpop.xlane.xlu0 %6389
  %v6391 = vsel %vm199, %v6349, 0.0
  %6392 = vadd.xlane.f32.xlu0 %v6391
  %v6393 = vpop.xlane.xlu0 %6392
  %v6394 = vsel %vm199, %v6351, 0.0
  %6395 = vadd.xlane.f32.xlu0 %v6394
  %v6396 = vpop.xlane.xlu0 %6395
  %v6397 = vsel %vm199, %v6353, 0.0
  %6398 = vadd.xlane.f32.xlu0 %v6397
  %v6399 = vpop.xlane.xlu0 %6398
  %v6400 = vsel %vm199, %v6355, 0.0
  %6401 = vadd.xlane.f32.xlu0 %v6400
  %v6402 = vpop.xlane.xlu0 %6401
  %v6403 = vsel %vm199, %v6357, 0.0
  %6404 = vadd.xlane.f32.xlu0 %v6403
  %v6405 = vpop.xlane.xlu0 %6404
  %v6406 = vrcp.pop %v6360
  %v6407 = vrcp.pop %v6363
  %v6408 = vrcp.pop %v6366
  %v6409 = vrcp.pop %v6369
  %v6410 = vrcp.pop %v6372
  %v6411 = vrcp.pop %v6375
  %v6412 = vrcp.pop %v6378
  %v6413 = vrcp.pop %v6381
  %v6414 = vrcp.pop %v6384
  %v6415 = vrcp.pop %v6387
  %v6416 = vrcp.pop %v6390
  %v6417 = vrcp.pop %v6393
  %v6418 = vrcp.pop %v6396
  %v6419 = vrcp.pop %v6399
  %v6420 = vrcp.pop %v6402
  %v6421 = vrcp.pop %v6405
  %v6422 = vmul.f32 %v6327, %v6406
  %v6423 = vmul.f32 %v6329, %v6407
  %v6424 = vmul.f32 %v6331, %v6408
  %v6425 = vmul.f32 %v6333, %v6409
  %v6426 = vmul.f32 %v6335, %v6410
  %v6427 = vmul.f32 %v6337, %v6411
  %v6428 = vmul.f32 %v6339, %v6412
  %v6429 = vmul.f32 %v6341, %v6413
  %v6430 = vmul.f32 %v6343, %v6414
  %v6431 = vmul.f32 %v6345, %v6415
  %v6432 = vmul.f32 %v6347, %v6416
  %v6433 = vmul.f32 %v6349, %v6417
  %v6434 = vmul.f32 %v6351, %v6418
  %v6435 = vmul.f32 %v6353, %v6419
  %v6436 = vmul.f32 %v6355, %v6420
  %v6437 = vmul.f32 %v6357, %v6421
  %v6438 = vpack.c.bf16 %v6422, %v6422
  %v6439 = vpack.c.bf16 %v6423, %v6423
  %v6440 = vpack.c.bf16 %v6424, %v6424
  %v6441 = vpack.c.bf16 %v6425, %v6425
  %v6442 = vpack.c.bf16 %v6426, %v6426
  %v6443 = vpack.c.bf16 %v6427, %v6427
  %v6444 = vpack.c.bf16 %v6428, %v6428
  %v6445 = vpack.c.bf16 %v6429, %v6429
  %v6446 = vpack.c.bf16 %v6430, %v6430
  %v6447 = vpack.c.bf16 %v6431, %v6431
  %v6448 = vpack.c.bf16 %v6432, %v6432
  %v6449 = vpack.c.bf16 %v6433, %v6433
  %v6450 = vpack.c.bf16 %v6434, %v6434
  %v6451 = vpack.c.bf16 %v6435, %v6435
  %v6452 = vpack.c.bf16 %v6436, %v6436
  %v6453 = vpack.c.bf16 %v6437, %v6437
  %6454 = vrot.lane.b32.xlu0 %v180, 40
  %v6455 = vpop.permute.xlu0 %6454
  %v6457 = vsel %vm199, %v6438, 0
  %v6460 = vsel %vm1178, %v6455, 0
  %6462 = vmatprep.subr.bf16.mxu0 0
  %6463 = vmatpush1.bf16.msra.mxu0 %v6460
  %6464 = vmatprep.subr.bf16.mxu0 0
  %6465 = vmatpush1.bf16.msra.mxu0 0
  %6466 = vmatprep.subr.bf16.mxu0 0
  %6467 = vmatpush1.bf16.msra.mxu0 0
  %6468 = vmatprep.subr.bf16.mxu0 0
  %6469 = vmatpush1.bf16.msra.mxu0 0
  %6470 = vmatprep.subr.bf16.mxu0 0
  %6471 = vmatpush1.bf16.msra.mxu0 0
  %6472 = vmatprep.subr.bf16.mxu0 0
  %6473 = vmatpush1.bf16.msra.mxu0 0
  %6474 = vmatprep.subr.bf16.mxu0 0
  %6475 = vmatpush1.bf16.msra.mxu0 0
  %6476 = vmatprep.subr.bf16.mxu0 0
  %6477 = vmatpush1.bf16.msra.mxu0 0
  %6478 = vmatprep.subr.bf16.mxu0 0
  %6479 = vmatpush1.bf16.msra.mxu0 0
  %6480 = vmatprep.subr.bf16.mxu0 0
  %6481 = vmatpush1.bf16.msra.mxu0 0
  %6482 = vmatprep.subr.bf16.mxu0 0
  %6483 = vmatpush1.bf16.msra.mxu0 0
  %6484 = vmatprep.subr.bf16.mxu0 0
  %6485 = vmatpush1.bf16.msra.mxu0 0
  %6486 = vmatprep.subr.bf16.mxu0 0
  %6487 = vmatpush1.bf16.msra.mxu0 0
  %6488 = vmatprep.subr.bf16.mxu0 0
  %6489 = vmatpush1.bf16.msra.mxu0 0
  %6490 = vmatprep.subr.bf16.mxu0 0
  %6491 = vmatpush1.bf16.msra.mxu0 0
  %6492 = vmatprep.subr.bf16.mxu0 0
  %6493 = vmatpush1.bf16.msra.mxu0 0
  %6494 = vmatprep.mubr.bf16.mxu0 0
  %6495 = vmatmul.mubr.bf16.gmra.mrb[0].mxu0 %v6457
  %v6496 = vpop.f32.mrb[0].mxu0
  %v6497 = vadd.f32 0.0, %v6496
  %v6498 = vpop.f32.mrb[0].mxu0
  %v6499 = vpop.f32.mrb[0].mxu0
  %v6500 = vpop.f32.mrb[0].mxu0
  %6501 = vdwg.mxu0
  %6502 = vrot.lane.b32.xlu0 %v181, 40
  %v6503 = vpop.permute.xlu0 %6502
  %v6505 = vsel %vm199, %v6439, 0
  %v6508 = vsel %vm1178, %v6503, 0
  %6510 = vmatprep.subr.bf16.mxu0 0
  %6511 = vmatpush1.bf16.msra.mxu0 %v6508
  %6512 = vmatprep.subr.bf16.mxu0 0
  %6513 = vmatpush1.bf16.msra.mxu0 0
  %6514 = vmatprep.subr.bf16.mxu0 0
  %6515 = vmatpush1.bf16.msra.mxu0 0
  %6516 = vmatprep.subr.bf16.mxu0 0
  %6517 = vmatpush1.bf16.msra.mxu0 0
  %6518 = vmatprep.subr.bf16.mxu0 0
  %6519 = vmatpush1.bf16.msra.mxu0 0
  %6520 = vmatprep.subr.bf16.mxu0 0
  %6521 = vmatpush1.bf16.msra.mxu0 0
  %6522 = vmatprep.subr.bf16.mxu0 0
  %6523 = vmatpush1.bf16.msra.mxu0 0
  %6524 = vmatprep.subr.bf16.mxu0 0
  %6525 = vmatpush1.bf16.msra.mxu0 0
  %6526 = vmatprep.subr.bf16.mxu0 0
  %6527 = vmatpush1.bf16.msra.mxu0 0
  %6528 = vmatprep.subr.bf16.mxu0 0
  %6529 = vmatpush1.bf16.msra.mxu0 0
  %6530 = vmatprep.subr.bf16.mxu0 0
  %6531 = vmatpush1.bf16.msra.mxu0 0
  %6532 = vmatprep.subr.bf16.mxu0 0
  %6533 = vmatpush1.bf16.msra.mxu0 0
  %6534 = vmatprep.subr.bf16.mxu0 0
  %6535 = vmatpush1.bf16.msra.mxu0 0
  %6536 = vmatprep.subr.bf16.mxu0 0
  %6537 = vmatpush1.bf16.msra.mxu0 0
  %6538 = vmatprep.subr.bf16.mxu0 0
  %6539 = vmatpush1.bf16.msra.mxu0 0
  %6540 = vmatprep.subr.bf16.mxu0 0
  %6541 = vmatpush1.bf16.msra.mxu0 0
  %6542 = vmatprep.mubr.bf16.mxu0 0
  %6543 = vmatmul.mubr.bf16.gmra.mrb[0].mxu0 %v6505
  %v6544 = vpop.f32.mrb[0].mxu0
  %v6545 = vadd.f32 0.0, %v6544
  %v6546 = vpop.f32.mrb[0].mxu0
  %v6547 = vpop.f32.mrb[0].mxu0
  %v6548 = vpop.f32.mrb[0].mxu0
  %6549 = vdwg.mxu0
  %6550 = vrot.lane.b32.xlu0 %v182, 40
  %v6551 = vpop.permute.xlu0 %6550
  %v6553 = vsel %vm199, %v6440, 0
  %v6556 = vsel %vm1178, %v6551, 0
  %6558 = vmatprep.subr.bf16.mxu0 0
  %6559 = vmatpush1.bf16.msra.mxu0 %v6556
  %6560 = vmatprep.subr.bf16.mxu0 0
  %6561 = vmatpush1.bf16.msra.mxu0 0
  %6562 = vmatprep.subr.bf16.mxu0 0
  %6563 = vmatpush1.bf16.msra.mxu0 0
  %6564 = vmatprep.subr.bf16.mxu0 0
  %6565 = vmatpush1.bf16.msra.mxu0 0
  %6566 = vmatprep.subr.bf16.mxu0 0
  %6567 = vmatpush1.bf16.msra.mxu0 0
  %6568 = vmatprep.subr.bf16.mxu0 0
  %6569 = vmatpush1.bf16.msra.mxu0 0
  %6570 = vmatprep.subr.bf16.mxu0 0
  %6571 = vmatpush1.bf16.msra.mxu0 0
  %6572 = vmatprep.subr.bf16.mxu0 0
  %6573 = vmatpush1.bf16.msra.mxu0 0
  %6574 = vmatprep.subr.bf16.mxu0 0
  %6575 = vmatpush1.bf16.msra.mxu0 0
  %6576 = vmatprep.subr.bf16.mxu0 0
  %6577 = vmatpush1.bf16.msra.mxu0 0
  %6578 = vmatprep.subr.bf16.mxu0 0
  %6579 = vmatpush1.bf16.msra.mxu0 0
  %6580 = vmatprep.subr.bf16.mxu0 0
  %6581 = vmatpush1.bf16.msra.mxu0 0
  %6582 = vmatprep.subr.bf16.mxu0 0
  %6583 = vmatpush1.bf16.msra.mxu0 0
  %6584 = vmatprep.subr.bf16.mxu0 0
  %6585 = vmatpush1.bf16.msra.mxu0 0
  %6586 = vmatprep.subr.bf16.mxu0 0
  %6587 = vmatpush1.bf16.msra.mxu0 0
  %6588 = vmatprep.subr.bf16.mxu0 0
  %6589 = vmatpush1.bf16.msra.mxu0 0
  %6590 = vmatprep.mubr.bf16.mxu0 0
  %6591 = vmatmul.mubr.bf16.gmra.mrb[0].mxu0 %v6553
  %v6592 = vpop.f32.mrb[0].mxu0
  %v6593 = vadd.f32 0.0, %v6592
  %v6594 = vpop.f32.mrb[0].mxu0
  %v6595 = vpop.f32.mrb[0].mxu0
  %v6596 = vpop.f32.mrb[0].mxu0
  %6597 = vdwg.mxu0
  %6598 = vrot.lane.b32.xlu0 %v183, 40
  %v6599 = vpop.permute.xlu0 %6598
  %v6601 = vsel %vm199, %v6441, 0
  %v6604 = vsel %vm1178, %v6599, 0
  %6606 = vmatprep.subr.bf16.mxu0 0
  %6607 = vmatpush1.bf16.msra.mxu0 %v6604
  %6608 = vmatprep.subr.bf16.mxu0 0
  %6609 = vmatpush1.bf16.msra.mxu0 0
  %6610 = vmatprep.subr.bf16.mxu0 0
  %6611 = vmatpush1.bf16.msra.mxu0 0
  %6612 = vmatprep.subr.bf16.mxu0 0
  %6613 = vmatpush1.bf16.msra.mxu0 0
  %6614 = vmatprep.subr.bf16.mxu0 0
  %6615 = vmatpush1.bf16.msra.mxu0 0
  %6616 = vmatprep.subr.bf16.mxu0 0
  %6617 = vmatpush1.bf16.msra.mxu0 0
  %6618 = vmatprep.subr.bf16.mxu0 0
  %6619 = vmatpush1.bf16.msra.mxu0 0
  %6620 = vmatprep.subr.bf16.mxu0 0
  %6621 = vmatpush1.bf16.msra.mxu0 0
  %6622 = vmatprep.subr.bf16.mxu0 0
  %6623 = vmatpush1.bf16.msra.mxu0 0
  %6624 = vmatprep.subr.bf16.mxu0 0
  %6625 = vmatpush1.bf16.msra.mxu0 0
  %6626 = vmatprep.subr.bf16.mxu0 0
  %6627 = vmatpush1.bf16.msra.mxu0 0
  %6628 = vmatprep.subr.bf16.mxu0 0
  %6629 = vmatpush1.bf16.msra.mxu0 0
  %6630 = vmatprep.subr.bf16.mxu0 0
  %6631 = vmatpush1.bf16.msra.mxu0 0
  %6632 = vmatprep.subr.bf16.mxu0 0
  %6633 = vmatpush1.bf16.msra.mxu0 0
  %6634 = vmatprep.subr.bf16.mxu0 0
  %6635 = vmatpush1.bf16.msra.mxu0 0
  %6636 = vmatprep.subr.bf16.mxu0 0
  %6637 = vmatpush1.bf16.msra.mxu0 0
  %6638 = vmatprep.mubr.bf16.mxu0 0
  %6639 = vmatmul.mubr.bf16.gmra.mrb[0].mxu0 %v6601
  %v6640 = vpop.f32.mrb[0].mxu0
  %v6641 = vadd.f32 0.0, %v6640
  %v6642 = vpop.f32.mrb[0].mxu0
  %v6643 = vpop.f32.mrb[0].mxu0
  %v6644 = vpop.f32.mrb[0].mxu0
  %6645 = vdwg.mxu0
  %6646 = vrot.lane.b32.xlu0 %v184, 40
  %v6647 = vpop.permute.xlu0 %6646
  %v6649 = vsel %vm199, %v6442, 0
  %v6652 = vsel %vm1178, %v6647, 0
  %6654 = vmatprep.subr.bf16.mxu0 0
  %6655 = vmatpush1.bf16.msra.mxu0 %v6652
  %6656 = vmatprep.subr.bf16.mxu0 0
  %6657 = vmatpush1.bf16.msra.mxu0 0
  %6658 = vmatprep.subr.bf16.mxu0 0
  %6659 = vmatpush1.bf16.msra.mxu0 0
  %6660 = vmatprep.subr.bf16.mxu0 0
  %6661 = vmatpush1.bf16.msra.mxu0 0
  %6662 = vmatprep.subr.bf16.mxu0 0
  %6663 = vmatpush1.bf16.msra.mxu0 0
  %6664 = vmatprep.subr.bf16.mxu0 0
  %6665 = vmatpush1.bf16.msra.mxu0 0
  %6666 = vmatprep.subr.bf16.mxu0 0
  %6667 = vmatpush1.bf16.msra.mxu0 0
  %6668 = vmatprep.subr.bf16.mxu0 0
  %6669 = vmatpush1.bf16.msra.mxu0 0
  %6670 = vmatprep.subr.bf16.mxu0 0
  %6671 = vmatpush1.bf16.msra.mxu0 0
  %6672 = vmatprep.subr.bf16.mxu0 0
  %6673 = vmatpush1.bf16.msra.mxu0 0
  %6674 = vmatprep.subr.bf16.mxu0 0
  %6675 = vmatpush1.bf16.msra.mxu0 0
  %6676 = vmatprep.subr.bf16.mxu0 0
  %6677 = vmatpush1.bf16.msra.mxu0 0
  %6678 = vmatprep.subr.bf16.mxu0 0
  %6679 = vmatpush1.bf16.msra.mxu0 0
  %6680 = vmatprep.subr.bf16.mxu0 0
  %6681 = vmatpush1.bf16.msra.mxu0 0
  %6682 = vmatprep.subr.bf16.mxu0 0
  %6683 = vmatpush1.bf16.msra.mxu0 0
  %6684 = vmatprep.subr.bf16.mxu0 0
  %6685 = vmatpush1.bf16.msra.mxu0 0
  %6686 = vmatprep.mubr.bf16.mxu0 0
  %6687 = vmatmul.mubr.bf16.gmra.mrb[0].mxu0 %v6649
  %v6688 = vpop.f32.mrb[0].mxu0
  %v6689 = vadd.f32 0.0, %v6688
  %v6690 = vpop.f32.mrb[0].mxu0
  %v6691 = vpop.f32.mrb[0].mxu0
  %v6692 = vpop.f32.mrb[0].mxu0
  %6693 = vdwg.mxu0
  %6694 = vrot.lane.b32.xlu0 %v185, 40
  %v6695 = vpop.permute.xlu0 %6694
  %v6697 = vsel %vm199, %v6443, 0
  %v6700 = vsel %vm1178, %v6695, 0
  %6702 = vmatprep.subr.bf16.mxu0 0
  %6703 = vmatpush1.bf16.msra.mxu0 %v6700
  %6704 = vmatprep.subr.bf16.mxu0 0
  %6705 = vmatpush1.bf16.msra.mxu0 0
  %6706 = vmatprep.subr.bf16.mxu0 0
  %6707 = vmatpush1.bf16.msra.mxu0 0
  %6708 = vmatprep.subr.bf16.mxu0 0
  %6709 = vmatpush1.bf16.msra.mxu0 0
  %6710 = vmatprep.subr.bf16.mxu0 0
  %6711 = vmatpush1.bf16.msra.mxu0 0
  %6712 = vmatprep.subr.bf16.mxu0 0
  %6713 = vmatpush1.bf16.msra.mxu0 0
  %6714 = vmatprep.subr.bf16.mxu0 0
  %6715 = vmatpush1.bf16.msra.mxu0 0
  %6716 = vmatprep.subr.bf16.mxu0 0
  %6717 = vmatpush1.bf16.msra.mxu0 0
  %6718 = vmatprep.subr.bf16.mxu0 0
  %6719 = vmatpush1.bf16.msra.mxu0 0
  %6720 = vmatprep.subr.bf16.mxu0 0
  %6721 = vmatpush1.bf16.msra.mxu0 0
  %6722 = vmatprep.subr.bf16.mxu0 0
  %6723 = vmatpush1.bf16.msra.mxu0 0
  %6724 = vmatprep.subr.bf16.mxu0 0
  %6725 = vmatpush1.bf16.msra.mxu0 0
  %6726 = vmatprep.subr.bf16.mxu0 0
  %6727 = vmatpush1.bf16.msra.mxu0 0
  %6728 = vmatprep.subr.bf16.mxu0 0
  %6729 = vmatpush1.bf16.msra.mxu0 0
  %6730 = vmatprep.subr.bf16.mxu0 0
  %6731 = vmatpush1.bf16.msra.mxu0 0
  %6732 = vmatprep.subr.bf16.mxu0 0
  %6733 = vmatpush1.bf16.msra.mxu0 0
  %6734 = vmatprep.mubr.bf16.mxu0 0
  %6735 = vmatmul.mubr.bf16.gmra.mrb[0].mxu0 %v6697
  %v6736 = vpop.f32.mrb[0].mxu0
  %v6737 = vadd.f32 0.0, %v6736
  %v6738 = vpop.f32.mrb[0].mxu0
  %v6739 = vpop.f32.mrb[0].mxu0
  %v6740 = vpop.f32.mrb[0].mxu0
  %6741 = vdwg.mxu0
  %6742 = vrot.lane.b32.xlu0 %v186, 40
  %v6743 = vpop.permute.xlu0 %6742
  %v6745 = vsel %vm199, %v6444, 0
  %v6748 = vsel %vm1178, %v6743, 0
  %6750 = vmatprep.subr.bf16.mxu0 0
  %6751 = vmatpush1.bf16.msra.mxu0 %v6748
  %6752 = vmatprep.subr.bf16.mxu0 0
  %6753 = vmatpush1.bf16.msra.mxu0 0
  %6754 = vmatprep.subr.bf16.mxu0 0
  %6755 = vmatpush1.bf16.msra.mxu0 0
  %6756 = vmatprep.subr.bf16.mxu0 0
  %6757 = vmatpush1.bf16.msra.mxu0 0
  %6758 = vmatprep.subr.bf16.mxu0 0
  %6759 = vmatpush1.bf16.msra.mxu0 0
  %6760 = vmatprep.subr.bf16.mxu0 0
  %6761 = vmatpush1.bf16.msra.mxu0 0
  %6762 = vmatprep.subr.bf16.mxu0 0
  %6763 = vmatpush1.bf16.msra.mxu0 0
  %6764 = vmatprep.subr.bf16.mxu0 0
  %6765 = vmatpush1.bf16.msra.mxu0 0
  %6766 = vmatprep.subr.bf16.mxu0 0
  %6767 = vmatpush1.bf16.msra.mxu0 0
  %6768 = vmatprep.subr.bf16.mxu0 0
  %6769 = vmatpush1.bf16.msra.mxu0 0
  %6770 = vmatprep.subr.bf16.mxu0 0
  %6771 = vmatpush1.bf16.msra.mxu0 0
  %6772 = vmatprep.subr.bf16.mxu0 0
  %6773 = vmatpush1.bf16.msra.mxu0 0
  %6774 = vmatprep.subr.bf16.mxu0 0
  %6775 = vmatpush1.bf16.msra.mxu0 0
  %6776 = vmatprep.subr.bf16.mxu0 0
  %6777 = vmatpush1.bf16.msra.mxu0 0
  %6778 = vmatprep.subr.bf16.mxu0 0
  %6779 = vmatpush1.bf16.msra.mxu0 0
  %6780 = vmatprep.subr.bf16.mxu0 0
  %6781 = vmatpush1.bf16.msra.mxu0 0
  %6782 = vmatprep.mubr.bf16.mxu0 0
  %6783 = vmatmul.mubr.bf16.gmra.mrb[0].mxu0 %v6745
  %v6784 = vpop.f32.mrb[0].mxu0
  %v6785 = vadd.f32 0.0, %v6784
  %v6786 = vpop.f32.mrb[0].mxu0
  %v6787 = vpop.f32.mrb[0].mxu0
  %v6788 = vpop.f32.mrb[0].mxu0
  %6789 = vdwg.mxu0
  %6790 = vrot.lane.b32.xlu0 %v187, 40
  %v6791 = vpop.permute.xlu0 %6790
  %v6793 = vsel %vm199, %v6445, 0
  %v6796 = vsel %vm1178, %v6791, 0
  %6798 = vmatprep.subr.bf16.mxu0 0
  %6799 = vmatpush1.bf16.msra.mxu0 %v6796
  %6800 = vmatprep.subr.bf16.mxu0 0
  %6801 = vmatpush1.bf16.msra.mxu0 0
  %6802 = vmatprep.subr.bf16.mxu0 0
  %6803 = vmatpush1.bf16.msra.mxu0 0
  %6804 = vmatprep.subr.bf16.mxu0 0
  %6805 = vmatpush1.bf16.msra.mxu0 0
  %6806 = vmatprep.subr.bf16.mxu0 0
  %6807 = vmatpush1.bf16.msra.mxu0 0
  %6808 = vmatprep.subr.bf16.mxu0 0
  %6809 = vmatpush1.bf16.msra.mxu0 0
  %6810 = vmatprep.subr.bf16.mxu0 0
  %6811 = vmatpush1.bf16.msra.mxu0 0
  %6812 = vmatprep.subr.bf16.mxu0 0
  %6813 = vmatpush1.bf16.msra.mxu0 0
  %6814 = vmatprep.subr.bf16.mxu0 0
  %6815 = vmatpush1.bf16.msra.mxu0 0
  %6816 = vmatprep.subr.bf16.mxu0 0
  %6817 = vmatpush1.bf16.msra.mxu0 0
  %6818 = vmatprep.subr.bf16.mxu0 0
  %6819 = vmatpush1.bf16.msra.mxu0 0
  %6820 = vmatprep.subr.bf16.mxu0 0
  %6821 = vmatpush1.bf16.msra.mxu0 0
  %6822 = vmatprep.subr.bf16.mxu0 0
  %6823 = vmatpush1.bf16.msra.mxu0 0
  %6824 = vmatprep.subr.bf16.mxu0 0
  %6825 = vmatpush1.bf16.msra.mxu0 0
  %6826 = vmatprep.subr.bf16.mxu0 0
  %6827 = vmatpush1.bf16.msra.mxu0 0
  %6828 = vmatprep.subr.bf16.mxu0 0
  %6829 = vmatpush1.bf16.msra.mxu0 0
  %6830 = vmatprep.mubr.bf16.mxu0 0
  %6831 = vmatmul.mubr.bf16.gmra.mrb[0].mxu0 %v6793
  %v6832 = vpop.f32.mrb[0].mxu0
  %v6833 = vadd.f32 0.0, %v6832
  %v6834 = vpop.f32.mrb[0].mxu0
  %v6835 = vpop.f32.mrb[0].mxu0
  %v6836 = vpop.f32.mrb[0].mxu0
  %6837 = vdwg.mxu0
  %6838 = vrot.lane.b32.xlu0 %v188, 40
  %v6839 = vpop.permute.xlu0 %6838
  %v6841 = vsel %vm199, %v6446, 0
  %v6844 = vsel %vm1178, %v6839, 0
  %6846 = vmatprep.subr.bf16.mxu0 0
  %6847 = vmatpush1.bf16.msra.mxu0 %v6844
  %6848 = vmatprep.subr.bf16.mxu0 0
  %6849 = vmatpush1.bf16.msra.mxu0 0
  %6850 = vmatprep.subr.bf16.mxu0 0
  %6851 = vmatpush1.bf16.msra.mxu0 0
  %6852 = vmatprep.subr.bf16.mxu0 0
  %6853 = vmatpush1.bf16.msra.mxu0 0
  %6854 = vmatprep.subr.bf16.mxu0 0
  %6855 = vmatpush1.bf16.msra.mxu0 0
  %6856 = vmatprep.subr.bf16.mxu0 0
  %6857 = vmatpush1.bf16.msra.mxu0 0
  %6858 = vmatprep.subr.bf16.mxu0 0
  %6859 = vmatpush1.bf16.msra.mxu0 0
  %6860 = vmatprep.subr.bf16.mxu0 0
  %6861 = vmatpush1.bf16.msra.mxu0 0
  %6862 = vmatprep.subr.bf16.mxu0 0
  %6863 = vmatpush1.bf16.msra.mxu0 0
  %6864 = vmatprep.subr.bf16.mxu0 0
  %6865 = vmatpush1.bf16.msra.mxu0 0
  %6866 = vmatprep.subr.bf16.mxu0 0
  %6867 = vmatpush1.bf16.msra.mxu0 0
  %6868 = vmatprep.subr.bf16.mxu0 0
  %6869 = vmatpush1.bf16.msra.mxu0 0
  %6870 = vmatprep.subr.bf16.mxu0 0
  %6871 = vmatpush1.bf16.msra.mxu0 0
  %6872 = vmatprep.subr.bf16.mxu0 0
  %6873 = vmatpush1.bf16.msra.mxu0 0
  %6874 = vmatprep.subr.bf16.mxu0 0
  %6875 = vmatpush1.bf16.msra.mxu0 0
  %6876 = vmatprep.subr.bf16.mxu0 0
  %6877 = vmatpush1.bf16.msra.mxu0 0
  %6878 = vmatprep.mubr.bf16.mxu0 0
  %6879 = vmatmul.mubr.bf16.gmra.mrb[0].mxu0 %v6841
  %v6880 = vpop.f32.mrb[0].mxu0
  %v6881 = vadd.f32 0.0, %v6880
  %v6882 = vpop.f32.mrb[0].mxu0
  %v6883 = vpop.f32.mrb[0].mxu0
  %v6884 = vpop.f32.mrb[0].mxu0
  %6885 = vdwg.mxu0
  %6886 = vrot.lane.b32.xlu0 %v189, 40
  %v6887 = vpop.permute.xlu0 %6886
  %v6889 = vsel %vm199, %v6447, 0
  %v6892 = vsel %vm1178, %v6887, 0
  %6894 = vmatprep.subr.bf16.mxu0 0
  %6895 = vmatpush1.bf16.msra.mxu0 %v6892
  %6896 = vmatprep.subr.bf16.mxu0 0
  %6897 = vmatpush1.bf16.msra.mxu0 0
  %6898 = vmatprep.subr.bf16.mxu0 0
  %6899 = vmatpush1.bf16.msra.mxu0 0
  %6900 = vmatprep.subr.bf16.mxu0 0
  %6901 = vmatpush1.bf16.msra.mxu0 0
  %6902 = vmatprep.subr.bf16.mxu0 0
  %6903 = vmatpush1.bf16.msra.mxu0 0
  %6904 = vmatprep.subr.bf16.mxu0 0
  %6905 = vmatpush1.bf16.msra.mxu0 0
  %6906 = vmatprep.subr.bf16.mxu0 0
  %6907 = vmatpush1.bf16.msra.mxu0 0
  %6908 = vmatprep.subr.bf16.mxu0 0
  %6909 = vmatpush1.bf16.msra.mxu0 0
  %6910 = vmatprep.subr.bf16.mxu0 0
  %6911 = vmatpush1.bf16.msra.mxu0 0
  %6912 = vmatprep.subr.bf16.mxu0 0
  %6913 = vmatpush1.bf16.msra.mxu0 0
  %6914 = vmatprep.subr.bf16.mxu0 0
  %6915 = vmatpush1.bf16.msra.mxu0 0
  %6916 = vmatprep.subr.bf16.mxu0 0
  %6917 = vmatpush1.bf16.msra.mxu0 0
  %6918 = vmatprep.subr.bf16.mxu0 0
  %6919 = vmatpush1.bf16.msra.mxu0 0
  %6920 = vmatprep.subr.bf16.mxu0 0
  %6921 = vmatpush1.bf16.msra.mxu0 0
  %6922 = vmatprep.subr.bf16.mxu0 0
  %6923 = vmatpush1.bf16.msra.mxu0 0
  %6924 = vmatprep.subr.bf16.mxu0 0
  %6925 = vmatpush1.bf16.msra.mxu0 0
  %6926 = vmatprep.mubr.bf16.mxu0 0
  %6927 = vmatmul.mubr.bf16.gmra.mrb[0].mxu0 %v6889
  %v6928 = vpop.f32.mrb[0].mxu0
  %v6929 = vadd.f32 0.0, %v6928
  %v6930 = vpop.f32.mrb[0].mxu0
  %v6931 = vpop.f32.mrb[0].mxu0
  %v6932 = vpop.f32.mrb[0].mxu0
  %6933 = vdwg.mxu0
  %6934 = vrot.lane.b32.xlu0 %v190, 40
  %v6935 = vpop.permute.xlu0 %6934
  %v6937 = vsel %vm199, %v6448, 0
  %v6940 = vsel %vm1178, %v6935, 0
  %6942 = vmatprep.subr.bf16.mxu0 0
  %6943 = vmatpush1.bf16.msra.mxu0 %v6940
  %6944 = vmatprep.subr.bf16.mxu0 0
  %6945 = vmatpush1.bf16.msra.mxu0 0
  %6946 = vmatprep.subr.bf16.mxu0 0
  %6947 = vmatpush1.bf16.msra.mxu0 0
  %6948 = vmatprep.subr.bf16.mxu0 0
  %6949 = vmatpush1.bf16.msra.mxu0 0
  %6950 = vmatprep.subr.bf16.mxu0 0
  %6951 = vmatpush1.bf16.msra.mxu0 0
  %6952 = vmatprep.subr.bf16.mxu0 0
  %6953 = vmatpush1.bf16.msra.mxu0 0
  %6954 = vmatprep.subr.bf16.mxu0 0
  %6955 = vmatpush1.bf16.msra.mxu0 0
  %6956 = vmatprep.subr.bf16.mxu0 0
  %6957 = vmatpush1.bf16.msra.mxu0 0
  %6958 = vmatprep.subr.bf16.mxu0 0
  %6959 = vmatpush1.bf16.msra.mxu0 0
  %6960 = vmatprep.subr.bf16.mxu0 0
  %6961 = vmatpush1.bf16.msra.mxu0 0
  %6962 = vmatprep.subr.bf16.mxu0 0
  %6963 = vmatpush1.bf16.msra.mxu0 0
  %6964 = vmatprep.subr.bf16.mxu0 0
  %6965 = vmatpush1.bf16.msra.mxu0 0
  %6966 = vmatprep.subr.bf16.mxu0 0
  %6967 = vmatpush1.bf16.msra.mxu0 0
  %6968 = vmatprep.subr.bf16.mxu0 0
  %6969 = vmatpush1.bf16.msra.mxu0 0
  %6970 = vmatprep.subr.bf16.mxu0 0
  %6971 = vmatpush1.bf16.msra.mxu0 0
  %6972 = vmatprep.subr.bf16.mxu0 0
  %6973 = vmatpush1.bf16.msra.mxu0 0
  %6974 = vmatprep.mubr.bf16.mxu0 0
  %6975 = vmatmul.mubr.bf16.gmra.mrb[0].mxu0 %v6937
  %v6976 = vpop.f32.mrb[0].mxu0
  %v6977 = vadd.f32 0.0, %v6976
  %v6978 = vpop.f32.mrb[0].mxu0
  %v6979 = vpop.f32.mrb[0].mxu0
  %v6980 = vpop.f32.mrb[0].mxu0
  %6981 = vdwg.mxu0
  %6982 = vrot.lane.b32.xlu0 %v191, 40
  %v6983 = vpop.permute.xlu0 %6982
  %v6985 = vsel %vm199, %v6449, 0
  %v6988 = vsel %vm1178, %v6983, 0
  %6990 = vmatprep.subr.bf16.mxu0 0
  %6991 = vmatpush1.bf16.msra.mxu0 %v6988
  %6992 = vmatprep.subr.bf16.mxu0 0
  %6993 = vmatpush1.bf16.msra.mxu0 0
  %6994 = vmatprep.subr.bf16.mxu0 0
  %6995 = vmatpush1.bf16.msra.mxu0 0
  %6996 = vmatprep.subr.bf16.mxu0 0
  %6997 = vmatpush1.bf16.msra.mxu0 0
  %6998 = vmatprep.subr.bf16.mxu0 0
  %6999 = vmatpush1.bf16.msra.mxu0 0
  %7000 = vmatprep.subr.bf16.mxu0 0
  %7001 = vmatpush1.bf16.msra.mxu0 0
  %7002 = vmatprep.subr.bf16.mxu0 0
  %7003 = vmatpush1.bf16.msra.mxu0 0
  %7004 = vmatprep.subr.bf16.mxu0 0
  %7005 = vmatpush1.bf16.msra.mxu0 0
  %7006 = vmatprep.subr.bf16.mxu0 0
  %7007 = vmatpush1.bf16.msra.mxu0 0
  %7008 = vmatprep.subr.bf16.mxu0 0
  %7009 = vmatpush1.bf16.msra.mxu0 0
  %7010 = vmatprep.subr.bf16.mxu0 0
  %7011 = vmatpush1.bf16.msra.mxu0 0
  %7012 = vmatprep.subr.bf16.mxu0 0
  %7013 = vmatpush1.bf16.msra.mxu0 0
  %7014 = vmatprep.subr.bf16.mxu0 0
  %7015 = vmatpush1.bf16.msra.mxu0 0
  %7016 = vmatprep.subr.bf16.mxu0 0
  %7017 = vmatpush1.bf16.msra.mxu0 0
  %7018 = vmatprep.subr.bf16.mxu0 0
  %7019 = vmatpush1.bf16.msra.mxu0 0
  %7020 = vmatprep.subr.bf16.mxu0 0
  %7021 = vmatpush1.bf16.msra.mxu0 0
  %7022 = vmatprep.mubr.bf16.mxu0 0
  %7023 = vmatmul.mubr.bf16.gmra.mrb[0].mxu0 %v6985
  %v7024 = vpop.f32.mrb[0].mxu0
  %v7025 = vadd.f32 0.0, %v7024
  %v7026 = vpop.f32.mrb[0].mxu0
  %v7027 = vpop.f32.mrb[0].mxu0
  %v7028 = vpop.f32.mrb[0].mxu0
  %7029 = vdwg.mxu0
  %7030 = vrot.lane.b32.xlu0 %v192, 40
  %v7031 = vpop.permute.xlu0 %7030
  %v7033 = vsel %vm199, %v6450, 0
  %v7036 = vsel %vm1178, %v7031, 0
  %7038 = vmatprep.subr.bf16.mxu0 0
  %7039 = vmatpush1.bf16.msra.mxu0 %v7036
  %7040 = vmatprep.subr.bf16.mxu0 0
  %7041 = vmatpush1.bf16.msra.mxu0 0
  %7042 = vmatprep.subr.bf16.mxu0 0
  %7043 = vmatpush1.bf16.msra.mxu0 0
  %7044 = vmatprep.subr.bf16.mxu0 0
  %7045 = vmatpush1.bf16.msra.mxu0 0
  %7046 = vmatprep.subr.bf16.mxu0 0
  %7047 = vmatpush1.bf16.msra.mxu0 0
  %7048 = vmatprep.subr.bf16.mxu0 0
  %7049 = vmatpush1.bf16.msra.mxu0 0
  %7050 = vmatprep.subr.bf16.mxu0 0
  %7051 = vmatpush1.bf16.msra.mxu0 0
  %7052 = vmatprep.subr.bf16.mxu0 0
  %7053 = vmatpush1.bf16.msra.mxu0 0
  %7054 = vmatprep.subr.bf16.mxu0 0
  %7055 = vmatpush1.bf16.msra.mxu0 0
  %7056 = vmatprep.subr.bf16.mxu0 0
  %7057 = vmatpush1.bf16.msra.mxu0 0
  %7058 = vmatprep.subr.bf16.mxu0 0
  %7059 = vmatpush1.bf16.msra.mxu0 0
  %7060 = vmatprep.subr.bf16.mxu0 0
  %7061 = vmatpush1.bf16.msra.mxu0 0
  %7062 = vmatprep.subr.bf16.mxu0 0
  %7063 = vmatpush1.bf16.msra.mxu0 0
  %7064 = vmatprep.subr.bf16.mxu0 0
  %7065 = vmatpush1.bf16.msra.mxu0 0
  %7066 = vmatprep.subr.bf16.mxu0 0
  %7067 = vmatpush1.bf16.msra.mxu0 0
  %7068 = vmatprep.subr.bf16.mxu0 0
  %7069 = vmatpush1.bf16.msra.mxu0 0
  %7070 = vmatprep.mubr.bf16.mxu0 0
  %7071 = vmatmul.mubr.bf16.gmra.mrb[0].mxu0 %v7033
  %v7072 = vpop.f32.mrb[0].mxu0
  %v7073 = vadd.f32 0.0, %v7072
  %v7074 = vpop.f32.mrb[0].mxu0
  %v7075 = vpop.f32.mrb[0].mxu0
  %v7076 = vpop.f32.mrb[0].mxu0
  %7077 = vdwg.mxu0
  %7078 = vrot.lane.b32.xlu0 %v193, 40
  %v7079 = vpop.permute.xlu0 %7078
  %v7081 = vsel %vm199, %v6451, 0
  %v7084 = vsel %vm1178, %v7079, 0
  %7086 = vmatprep.subr.bf16.mxu0 0
  %7087 = vmatpush1.bf16.msra.mxu0 %v7084
  %7088 = vmatprep.subr.bf16.mxu0 0
  %7089 = vmatpush1.bf16.msra.mxu0 0
  %7090 = vmatprep.subr.bf16.mxu0 0
  %7091 = vmatpush1.bf16.msra.mxu0 0
  %7092 = vmatprep.subr.bf16.mxu0 0
  %7093 = vmatpush1.bf16.msra.mxu0 0
  %7094 = vmatprep.subr.bf16.mxu0 0
  %7095 = vmatpush1.bf16.msra.mxu0 0
  %7096 = vmatprep.subr.bf16.mxu0 0
  %7097 = vmatpush1.bf16.msra.mxu0 0
  %7098 = vmatprep.subr.bf16.mxu0 0
  %7099 = vmatpush1.bf16.msra.mxu0 0
  %7100 = vmatprep.subr.bf16.mxu0 0
  %7101 = vmatpush1.bf16.msra.mxu0 0
  %7102 = vmatprep.subr.bf16.mxu0 0
  %7103 = vmatpush1.bf16.msra.mxu0 0
  %7104 = vmatprep.subr.bf16.mxu0 0
  %7105 = vmatpush1.bf16.msra.mxu0 0
  %7106 = vmatprep.subr.bf16.mxu0 0
  %7107 = vmatpush1.bf16.msra.mxu0 0
  %7108 = vmatprep.subr.bf16.mxu0 0
  %7109 = vmatpush1.bf16.msra.mxu0 0
  %7110 = vmatprep.subr.bf16.mxu0 0
  %7111 = vmatpush1.bf16.msra.mxu0 0
  %7112 = vmatprep.subr.bf16.mxu0 0
  %7113 = vmatpush1.bf16.msra.mxu0 0
  %7114 = vmatprep.subr.bf16.mxu0 0
  %7115 = vmatpush1.bf16.msra.mxu0 0
  %7116 = vmatprep.subr.bf16.mxu0 0
  %7117 = vmatpush1.bf16.msra.mxu0 0
  %7118 = vmatprep.mubr.bf16.mxu0 0
  %7119 = vmatmul.mubr.bf16.gmra.mrb[0].mxu0 %v7081
  %v7120 = vpop.f32.mrb[0].mxu0
  %v7121 = vadd.f32 0.0, %v7120
  %v7122 = vpop.f32.mrb[0].mxu0
  %v7123 = vpop.f32.mrb[0].mxu0
  %v7124 = vpop.f32.mrb[0].mxu0
  %7125 = vdwg.mxu0
  %7126 = vrot.lane.b32.xlu0 %v194, 40
  %v7127 = vpop.permute.xlu0 %7126
  %v7129 = vsel %vm199, %v6452, 0
  %v7132 = vsel %vm1178, %v7127, 0
  %7134 = vmatprep.subr.bf16.mxu0 0
  %7135 = vmatpush1.bf16.msra.mxu0 %v7132
  %7136 = vmatprep.subr.bf16.mxu0 0
  %7137 = vmatpush1.bf16.msra.mxu0 0
  %7138 = vmatprep.subr.bf16.mxu0 0
  %7139 = vmatpush1.bf16.msra.mxu0 0
  %7140 = vmatprep.subr.bf16.mxu0 0
  %7141 = vmatpush1.bf16.msra.mxu0 0
  %7142 = vmatprep.subr.bf16.mxu0 0
  %7143 = vmatpush1.bf16.msra.mxu0 0
  %7144 = vmatprep.subr.bf16.mxu0 0
  %7145 = vmatpush1.bf16.msra.mxu0 0
  %7146 = vmatprep.subr.bf16.mxu0 0
  %7147 = vmatpush1.bf16.msra.mxu0 0
  %7148 = vmatprep.subr.bf16.mxu0 0
  %7149 = vmatpush1.bf16.msra.mxu0 0
  %7150 = vmatprep.subr.bf16.mxu0 0
  %7151 = vmatpush1.bf16.msra.mxu0 0
  %7152 = vmatprep.subr.bf16.mxu0 0
  %7153 = vmatpush1.bf16.msra.mxu0 0
  %7154 = vmatprep.subr.bf16.mxu0 0
  %7155 = vmatpush1.bf16.msra.mxu0 0
  %7156 = vmatprep.subr.bf16.mxu0 0
  %7157 = vmatpush1.bf16.msra.mxu0 0
  %7158 = vmatprep.subr.bf16.mxu0 0
  %7159 = vmatpush1.bf16.msra.mxu0 0
  %7160 = vmatprep.subr.bf16.mxu0 0
  %7161 = vmatpush1.bf16.msra.mxu0 0
  %7162 = vmatprep.subr.bf16.mxu0 0
  %7163 = vmatpush1.bf16.msra.mxu0 0
  %7164 = vmatprep.subr.bf16.mxu0 0
  %7165 = vmatpush1.bf16.msra.mxu0 0
  %7166 = vmatprep.mubr.bf16.mxu0 0
  %7167 = vmatmul.mubr.bf16.gmra.mrb[0].mxu0 %v7129
  %v7168 = vpop.f32.mrb[0].mxu0
  %v7169 = vadd.f32 0.0, %v7168
  %v7170 = vpop.f32.mrb[0].mxu0
  %v7171 = vpop.f32.mrb[0].mxu0
  %v7172 = vpop.f32.mrb[0].mxu0
  %7173 = vdwg.mxu0
  %7174 = vrot.lane.b32.xlu0 %v195, 40
  %v7175 = vpop.permute.xlu0 %7174
  %v7177 = vsel %vm199, %v6453, 0
  %v7180 = vsel %vm1178, %v7175, 0
  %7182 = vmatprep.subr.bf16.mxu0 0
  %7183 = vmatpush1.bf16.msra.mxu0 %v7180
  %7184 = vmatprep.subr.bf16.mxu0 0
  %7185 = vmatpush1.bf16.msra.mxu0 0
  %7186 = vmatprep.subr.bf16.mxu0 0
  %7187 = vmatpush1.bf16.msra.mxu0 0
  %7188 = vmatprep.subr.bf16.mxu0 0
  %7189 = vmatpush1.bf16.msra.mxu0 0
  %7190 = vmatprep.subr.bf16.mxu0 0
  %7191 = vmatpush1.bf16.msra.mxu0 0
  %7192 = vmatprep.subr.bf16.mxu0 0
  %7193 = vmatpush1.bf16.msra.mxu0 0
  %7194 = vmatprep.subr.bf16.mxu0 0
  %7195 = vmatpush1.bf16.msra.mxu0 0
  %7196 = vmatprep.subr.bf16.mxu0 0
  %7197 = vmatpush1.bf16.msra.mxu0 0
  %7198 = vmatprep.subr.bf16.mxu0 0
  %7199 = vmatpush1.bf16.msra.mxu0 0
  %7200 = vmatprep.subr.bf16.mxu0 0
  %7201 = vmatpush1.bf16.msra.mxu0 0
  %7202 = vmatprep.subr.bf16.mxu0 0
  %7203 = vmatpush1.bf16.msra.mxu0 0
  %7204 = vmatprep.subr.bf16.mxu0 0
  %7205 = vmatpush1.bf16.msra.mxu0 0
  %7206 = vmatprep.subr.bf16.mxu0 0
  %7207 = vmatpush1.bf16.msra.mxu0 0
  %7208 = vmatprep.subr.bf16.mxu0 0
  %7209 = vmatpush1.bf16.msra.mxu0 0
  %7210 = vmatprep.subr.bf16.mxu0 0
  %7211 = vmatpush1.bf16.msra.mxu0 0
  %7212 = vmatprep.subr.bf16.mxu0 0
  %7213 = vmatpush1.bf16.msra.mxu0 0
  %7214 = vmatprep.mubr.bf16.mxu0 0
  %7215 = vmatmul.mubr.bf16.gmra.mrb[0].mxu0 %v7177
  %v7216 = vpop.f32.mrb[0].mxu0
  %v7217 = vadd.f32 0.0, %v7216
  %v7218 = vpop.f32.mrb[0].mxu0
  %v7219 = vpop.f32.mrb[0].mxu0
  %v7220 = vpop.f32.mrb[0].mxu0
  %7221 = vdwg.mxu0
  %7238 = vrot.lane.b32.xlu0 %v2977, 8
  %v7239 = vpop.permute.xlu0 %7238
  %7240 = vrot.lane.b32.xlu0 %v3025, 8
  %v7241 = vpop.permute.xlu0 %7240
  %7242 = vrot.lane.b32.xlu0 %v3073, 8
  %v7243 = vpop.permute.xlu0 %7242
  %7244 = vrot.lane.b32.xlu0 %v3121, 8
  %v7245 = vpop.permute.xlu0 %7244
  %7246 = vrot.lane.b32.xlu0 %v3169, 8
  %v7247 = vpop.permute.xlu0 %7246
  %7248 = vrot.lane.b32.xlu0 %v3217, 8
  %v7249 = vpop.permute.xlu0 %7248
  %7250 = vrot.lane.b32.xlu0 %v3265, 8
  %v7251 = vpop.permute.xlu0 %7250
  %7252 = vrot.lane.b32.xlu0 %v3313, 8
  %v7253 = vpop.permute.xlu0 %7252
  %7254 = vrot.lane.b32.xlu0 %v3361, 8
  %v7255 = vpop.permute.xlu0 %7254
  %7256 = vrot.lane.b32.xlu0 %v3409, 8
  %v7257 = vpop.permute.xlu0 %7256
  %7258 = vrot.lane.b32.xlu0 %v3457, 8
  %v7259 = vpop.permute.xlu0 %7258
  %7260 = vrot.lane.b32.xlu0 %v3505, 8
  %v7261 = vpop.permute.xlu0 %7260
  %7262 = vrot.lane.b32.xlu0 %v3553, 8
  %v7263 = vpop.permute.xlu0 %7262
  %7264 = vrot.lane.b32.xlu0 %v3601, 8
  %v7265 = vpop.permute.xlu0 %7264
  %7266 = vrot.lane.b32.xlu0 %v3649, 8
  %v7267 = vpop.permute.xlu0 %7266
  %7268 = vrot.lane.b32.xlu0 %v3697, 8
  %v7269 = vpop.permute.xlu0 %7268
  %7302 = vrot.lane.b32.xlu0 %v4737, 16
  %v7303 = vpop.permute.xlu0 %7302
  %7304 = vrot.lane.b32.xlu0 %v4785, 16
  %v7305 = vpop.permute.xlu0 %7304
  %7306 = vrot.lane.b32.xlu0 %v4833, 16
  %v7307 = vpop.permute.xlu0 %7306
  %7308 = vrot.lane.b32.xlu0 %v4881, 16
  %v7309 = vpop.permute.xlu0 %7308
  %7310 = vrot.lane.b32.xlu0 %v4929, 16
  %v7311 = vpop.permute.xlu0 %7310
  %7312 = vrot.lane.b32.xlu0 %v4977, 16
  %v7313 = vpop.permute.xlu0 %7312
  %7314 = vrot.lane.b32.xlu0 %v5025, 16
  %v7315 = vpop.permute.xlu0 %7314
  %7316 = vrot.lane.b32.xlu0 %v5073, 16
  %v7317 = vpop.permute.xlu0 %7316
  %7318 = vrot.lane.b32.xlu0 %v5121, 16
  %v7319 = vpop.permute.xlu0 %7318
  %7320 = vrot.lane.b32.xlu0 %v5169, 16
  %v7321 = vpop.permute.xlu0 %7320
  %7322 = vrot.lane.b32.xlu0 %v5217, 16
  %v7323 = vpop.permute.xlu0 %7322
  %7324 = vrot.lane.b32.xlu0 %v5265, 16
  %v7325 = vpop.permute.xlu0 %7324
  %7326 = vrot.lane.b32.xlu0 %v5313, 16
  %v7327 = vpop.permute.xlu0 %7326
  %7328 = vrot.lane.b32.xlu0 %v5361, 16
  %v7329 = vpop.permute.xlu0 %7328
  %7330 = vrot.lane.b32.xlu0 %v5409, 16
  %v7331 = vpop.permute.xlu0 %7330
  %7332 = vrot.lane.b32.xlu0 %v5457, 16
  %v7333 = vpop.permute.xlu0 %7332
  %7366 = vrot.lane.b32.xlu0 %v6497, 24
  %v7367 = vpop.permute.xlu0 %7366
  %7368 = vrot.lane.b32.xlu0 %v6545, 24
  %v7369 = vpop.permute.xlu0 %7368
  %7370 = vrot.lane.b32.xlu0 %v6593, 24
  %v7371 = vpop.permute.xlu0 %7370
  %7372 = vrot.lane.b32.xlu0 %v6641, 24
  %v7373 = vpop.permute.xlu0 %7372
  %7374 = vrot.lane.b32.xlu0 %v6689, 24
  %v7375 = vpop.permute.xlu0 %7374
  %7376 = vrot.lane.b32.xlu0 %v6737, 24
  %v7377 = vpop.permute.xlu0 %7376
  %7378 = vrot.lane.b32.xlu0 %v6785, 24
  %v7379 = vpop.permute.xlu0 %7378
  %7380 = vrot.lane.b32.xlu0 %v6833, 24
  %v7381 = vpop.permute.xlu0 %7380
  %7382 = vrot.lane.b32.xlu0 %v6881, 24
  %v7383 = vpop.permute.xlu0 %7382
  %7384 = vrot.lane.b32.xlu0 %v6929, 24
  %v7385 = vpop.permute.xlu0 %7384
  %7386 = vrot.lane.b32.xlu0 %v6977, 24
  %v7387 = vpop.permute.xlu0 %7386
  %7388 = vrot.lane.b32.xlu0 %v7025, 24
  %v7389 = vpop.permute.xlu0 %7388
  %7390 = vrot.lane.b32.xlu0 %v7073, 24
  %v7391 = vpop.permute.xlu0 %7390
  %7392 = vrot.lane.b32.xlu0 %v7121, 24
  %v7393 = vpop.permute.xlu0 %7392
  %7394 = vrot.lane.b32.xlu0 %v7169, 24
  %v7395 = vpop.permute.xlu0 %7394
  %7396 = vrot.lane.b32.xlu0 %v7217, 24
  %v7397 = vpop.permute.xlu0 %7396
  %v7414 = vsel %vm199, %v1217, %v7239
  %v7415 = vsel %vm199, %v1265, %v7241
  %v7416 = vsel %vm199, %v1313, %v7243
  %v7417 = vsel %vm199, %v1361, %v7245
  %v7418 = vsel %vm199, %v1409, %v7247
  %v7419 = vsel %vm199, %v1457, %v7249
  %v7420 = vsel %vm199, %v1505, %v7251
  %v7421 = vsel %vm199, %v1553, %v7253
  %v7422 = vsel %vm199, %v1601, %v7255
  %v7423 = vsel %vm199, %v1649, %v7257
  %v7424 = vsel %vm199, %v1697, %v7259
  %v7425 = vsel %vm199, %v1745, %v7261
  %v7426 = vsel %vm199, %v1793, %v7263
  %v7427 = vsel %vm199, %v1841, %v7265
  %v7428 = vsel %vm199, %v1889, %v7267
  %v7429 = vsel %vm199, %v1937, %v7269
  %vm7430 = vcmask 130048
  %v7431 = vsel %vm7430, %v7414, %v7303
  %v7432 = vsel %vm7430, %v7415, %v7305
  %v7433 = vsel %vm7430, %v7416, %v7307
  %v7434 = vsel %vm7430, %v7417, %v7309
  %v7435 = vsel %vm7430, %v7418, %v7311
  %v7436 = vsel %vm7430, %v7419, %v7313
  %v7437 = vsel %vm7430, %v7420, %v7315
  %v7438 = vsel %vm7430, %v7421, %v7317
  %v7439 = vsel %vm7430, %v7422, %v7319
  %v7440 = vsel %vm7430, %v7423, %v7321
  %v7441 = vsel %vm7430, %v7424, %v7323
  %v7442 = vsel %vm7430, %v7425, %v7325
  %v7443 = vsel %vm7430, %v7426, %v7327
  %v7444 = vsel %vm7430, %v7427, %v7329
  %v7445 = vsel %vm7430, %v7428, %v7331
  %v7446 = vsel %vm7430, %v7429, %v7333
  %vm7447 = vcmask 195584
  %v7448 = vsel %vm7447, %v7431, %v7367
  %v7449 = vsel %vm7447, %v7432, %v7369
  %v7450 = vsel %vm7447, %v7433, %v7371
  %v7451 = vsel %vm7447, %v7434, %v7373
  %v7452 = vsel %vm7447, %v7435, %v7375
  %v7453 = vsel %vm7447, %v7436, %v7377
  %v7454 = vsel %vm7447, %v7437, %v7379
  %v7455 = vsel %vm7447, %v7438, %v7381
  %v7456 = vsel %vm7447, %v7439, %v7383
  %v7457 = vsel %vm7447, %v7440, %v7385
  %v7458 = vsel %vm7447, %v7441, %v7387
  %v7459 = vsel %vm7447, %v7442, %v7389
  %v7460 = vsel %vm7447, %v7443, %v7391
  %v7461 = vsel %vm7447, %v7444, %v7393
  %v7462 = vsel %vm7447, %v7445, %v7395
  %v7463 = vsel %vm7447, %v7446, %v7397
  %v7464 = vpack.c.bf16 %v7449, %v7448
  %v7465 = vpack.c.bf16 %v7451, %v7450
  %v7466 = vpack.c.bf16 %v7453, %v7452
  %v7467 = vpack.c.bf16 %v7455, %v7454
  %v7468 = vpack.c.bf16 %v7457, %v7456
  %v7469 = vpack.c.bf16 %v7459, %v7458
  %v7470 = vpack.c.bf16 %v7461, %v7460
  %v7471 = vpack.c.bf16 %v7463, %v7462
  %v7472 = vld [vmem:[%s3] sm:$0xff]
  %v7473 = vld [vmem:[%s3 + $0x8] sm:$0xff]
  %v7474 = vld [vmem:[%s3 + $0x10] sm:$0xff]
  %v7475 = vld [vmem:[%s3 + $0x18] sm:$0xff]
  %v7476 = vpack.c.bf16 %v7473, %v7472
  %v7477 = vpack.c.bf16 %v7475, %v7474
  %v7478 = vld [vmem:[%s4] sm:$0x1]
  %v7480 = vlaneseq
  %v7481 = vshrl.u32 %v7480, 7
  %v7482 = vsub.s32 0, %v7481
  %v7483 = vrot.slane %v7478, %v7482
  %v7486 = vsel %vm58, %v7464, 0
  %v7489 = vsel %vm58, %v7465, 0
  %v7492 = vsel %vm58, %v7466, 0
  %v7495 = vsel %vm58, %v7467, 0
  %v7498 = vsel %vm58, %v7468, 0
  %v7501 = vsel %vm58, %v7469, 0
  %v7504 = vsel %vm58, %v7470, 0
  %v7507 = vsel %vm58, %v7471, 0
  %7509 = vmatprep.subr.bf16.mxu0 0
  %7510 = vmatpush1.bf16.msra.mxu0 %v7476
  %7511 = vmatprep.subr.bf16.mxu0 0
  %7512 = vmatpush1.bf16.msra.mxu0 %v7477
  %7513 = vmatprep.subr.bf16.mxu0 0
  %7514 = vmatpush1.bf16.msra.mxu0 0
  %7515 = vmatprep.subr.bf16.mxu0 0
  %7516 = vmatpush1.bf16.msra.mxu0 0
  %7517 = vmatprep.subr.bf16.mxu0 0
  %7518 = vmatpush1.bf16.msra.mxu0 0
  %7519 = vmatprep.subr.bf16.mxu0 0
  %7520 = vmatpush1.bf16.msra.mxu0 0
  %7521 = vmatprep.subr.bf16.mxu0 0
  %7522 = vmatpush1.bf16.msra.mxu0 0
  %7523 = vmatprep.subr.bf16.mxu0 0
  %7524 = vmatpush1.bf16.msra.mxu0 0
  %7525 = vmatprep.subr.bf16.mxu0 0
  %7526 = vmatpush1.bf16.msra.mxu0 0
  %7527 = vmatprep.subr.bf16.mxu0 0
  %7528 = vmatpush1.bf16.msra.mxu0 0
  %7529 = vmatprep.subr.bf16.mxu0 0
  %7530 = vmatpush1.bf16.msra.mxu0 0
  %7531 = vmatprep.subr.bf16.mxu0 0
  %7532 = vmatpush1.bf16.msra.mxu0 0
  %7533 = vmatprep.subr.bf16.mxu0 0
  %7534 = vmatpush1.bf16.msra.mxu0 0
  %7535 = vmatprep.subr.bf16.mxu0 0
  %7536 = vmatpush1.bf16.msra.mxu0 0
  %7537 = vmatprep.subr.bf16.mxu0 0
  %7538 = vmatpush1.bf16.msra.mxu0 0
  %7539 = vmatprep.subr.bf16.mxu0 0
  %7540 = vmatpush1.bf16.msra.mxu0 0
  %7541 = vmatprep.mubr.bf16.mxu0 0
  %7542 = vmatmul.mubr.bf16.gmra.mrb[0].mxu0 %v7486
  %v7543 = vpop.f32.mrb[0].mxu0
  %v7544 = vadd.f32 %v7483, %v7543
  %v7545 = vpop.f32.mrb[0].mxu0
  %v7546 = vpop.f32.mrb[0].mxu0
  %v7547 = vadd.f32 %v7483, %v7546
  %v7548 = vpop.f32.mrb[0].mxu0
  %7549 = vmatprep.mubr.bf16.mxu0 0
  %7550 = vmatmul.mubr.bf16.gmra.mrb[0].mxu0 %v7489
  %v7551 = vpop.f32.mrb[0].mxu0
  %v7552 = vadd.f32 %v7483, %v7551
  %v7553 = vpop.f32.mrb[0].mxu0
  %v7554 = vpop.f32.mrb[0].mxu0
  %v7555 = vadd.f32 %v7483, %v7554
  %v7556 = vpop.f32.mrb[0].mxu0
  %7557 = vmatprep.mubr.bf16.mxu0 0
  %7558 = vmatmul.mubr.bf16.gmra.mrb[0].mxu0 %v7492
  %v7559 = vpop.f32.mrb[0].mxu0
  %v7560 = vadd.f32 %v7483, %v7559
  %v7561 = vpop.f32.mrb[0].mxu0
  %v7562 = vpop.f32.mrb[0].mxu0
  %v7563 = vadd.f32 %v7483, %v7562
  %v7564 = vpop.f32.mrb[0].mxu0
  %7565 = vmatprep.mubr.bf16.mxu0 0
  %7566 = vmatmul.mubr.bf16.gmra.mrb[0].mxu0 %v7495
  %v7567 = vpop.f32.mrb[0].mxu0
  %v7568 = vadd.f32 %v7483, %v7567
  %v7569 = vpop.f32.mrb[0].mxu0
  %v7570 = vpop.f32.mrb[0].mxu0
  %v7571 = vadd.f32 %v7483, %v7570
  %v7572 = vpop.f32.mrb[0].mxu0
  %7573 = vmatprep.mubr.bf16.mxu0 0
  %7574 = vmatmul.mubr.bf16.gmra.mrb[0].mxu0 %v7498
  %v7575 = vpop.f32.mrb[0].mxu0
  %v7576 = vadd.f32 %v7483, %v7575
  %v7577 = vpop.f32.mrb[0].mxu0
  %v7578 = vpop.f32.mrb[0].mxu0
  %v7579 = vadd.f32 %v7483, %v7578
  %v7580 = vpop.f32.mrb[0].mxu0
  %7581 = vmatprep.mubr.bf16.mxu0 0
  %7582 = vmatmul.mubr.bf16.gmra.mrb[0].mxu0 %v7501
  %v7583 = vpop.f32.mrb[0].mxu0
  %v7584 = vadd.f32 %v7483, %v7583
  %v7585 = vpop.f32.mrb[0].mxu0
  %v7586 = vpop.f32.mrb[0].mxu0
  %v7587 = vadd.f32 %v7483, %v7586
  %v7588 = vpop.f32.mrb[0].mxu0
  %7589 = vmatprep.mubr.bf16.mxu0 0
  %7590 = vmatmul.mubr.bf16.gmra.mrb[0].mxu0 %v7504
  %v7591 = vpop.f32.mrb[0].mxu0
  %v7592 = vadd.f32 %v7483, %v7591
  %v7593 = vpop.f32.mrb[0].mxu0
  %v7594 = vpop.f32.mrb[0].mxu0
  %v7595 = vadd.f32 %v7483, %v7594
  %v7596 = vpop.f32.mrb[0].mxu0
  %7597 = vmatprep.mubr.bf16.mxu0 0
  %7598 = vmatmul.mubr.bf16.gmra.mrb[0].mxu0 %v7507
  %v7599 = vpop.f32.mrb[0].mxu0
  %v7600 = vadd.f32 %v7483, %v7599
  %v7601 = vpop.f32.mrb[0].mxu0
  %v7602 = vpop.f32.mrb[0].mxu0
  %v7603 = vadd.f32 %v7483, %v7602
  %v7604 = vpop.f32.mrb[0].mxu0
  %7605 = vdwg.mxu0
  %v7606 = vtanh.pop %v7544
  %v7607 = vtanh.pop %v7547
  %v7608 = vtanh.pop %v7552
  %v7609 = vtanh.pop %v7555
  %v7610 = vtanh.pop %v7560
  %v7611 = vtanh.pop %v7563
  %v7612 = vtanh.pop %v7568
  %v7613 = vtanh.pop %v7571
  %v7614 = vtanh.pop %v7576
  %v7615 = vtanh.pop %v7579
  %v7616 = vtanh.pop %v7584
  %v7617 = vtanh.pop %v7587
  %v7618 = vtanh.pop %v7592
  %v7619 = vtanh.pop %v7595
  %v7620 = vtanh.pop %v7600
  %v7621 = vtanh.pop %v7603
  %7622 = vst.msk [vmem:[%s5] sm:$0xff] %vm58, %v7606
  %7623 = vst.msk [vmem:[%s5 + $0x8] sm:$0xff] %vm58, %v7607
  %7624 = vst.msk [vmem:[%s5 + $0x10] sm:$0xff] %vm58, %v7608
  %7625 = vst.msk [vmem:[%s5 + $0x18] sm:$0xff] %vm58, %v7609
  %7626 = vst.msk [vmem:[%s5 + $0x20] sm:$0xff] %vm58, %v7610
  %7627 = vst.msk [vmem:[%s5 + $0x28] sm:$0xff] %vm58, %v7611
  %7628 = vst.msk [vmem:[%s5 + $0x30] sm:$0xff] %vm58, %v7612
  %7629 = vst.msk [vmem:[%s5 + $0x38] sm:$0xff] %vm58, %v7613
  %7630 = vst.msk [vmem:[%s5 + $0x40] sm:$0xff] %vm58, %v7614
  %7631 = vst.msk [vmem:[%s5 + $0x48] sm:$0xff] %vm58, %v7615
  %7632 = vst.msk [vmem:[%s5 + $0x50] sm:$0xff] %vm58, %v7616
  %7633 = vst.msk [vmem:[%s5 + $0x58] sm:$0xff] %vm58, %v7617
  %7634 = vst.msk [vmem:[%s5 + $0x60] sm:$0xff] %vm58, %v7618
  %7635 = vst.msk [vmem:[%s5 + $0x68] sm:$0xff] %vm58, %v7619
  %7636 = vst.msk [vmem:[%s5 + $0x70] sm:$0xff] %vm58, %v7620
  %7637 = vst.msk [vmem:[%s5 + $0x78] sm:$0xff] %vm58, %v7621
  // Predicated region
  $region22: #{tpu_custom_call.1} parent=0 // pred_check
    _
  $region23: #{tpu_custom_call.1} parent=0 // pred_check_branch
    %7639 = sbr.rel (0) target = $region25
  $region24: #{tpu_custom_call.1} parent=0 // pred_region
    _
  $region25: #{tpu_custom_call.1} parent=0 // pred_fallthru
    _
  // Predicated region
  $region26: #{tpu_custom_call.1} parent=0 // pred_check
    _
  $region27: #{tpu_custom_call.1} parent=0 // pred_check_branch
    %7641 = sbr.rel (0) target = $region29
  $region28: #{tpu_custom_call.1} parent=0 // pred_region
    _
  $region29: #{tpu_custom_call.1} parent=0 // pred_fallthru
    _

</llo_original>
